<compile_context>
chip_gen: v7x
topology: tpu7x:2x2x1
jax: 0.10.0
libtpu: 0.0.40
codegen_flags: <defaults>
</compile_context>

<pallas_src>
import jax
import jax.numpy as jnp
from jax.experimental import pallas as pl
from jax.experimental.pallas import tpu as pltpu  # noqa: F401

# ---- small model dims consistent with the module's forward ----
B = 2          # batch
S = 8          # encoder ("tokenized text") sequence length
T = 6          # decoder / labels sequence length
H = 32         # hidden_dim (stand-in for 768)
NH = 4         # attention heads
DH = H // NH
F = 64         # feed-forward width (t5 d_ff stand-in)
V = 128        # vocab size stand-in (128 -> lane-dense logits output)
NTYPE = 8      # nn.Embedding(8, hidden_dim)
NLOC = 4       # nn.Linear(4, hidden_dim)
NAPP = 100     # nn.Linear(100, hidden_dim)
NCAT = NLOC + NTYPE + NAPP     # 112: fused extra-feature width
N_ENC_LAYERS = 2
N_DEC_LAYERS = 2
EPS = 1e-6
NEG = -1e9
MXU_DTYPE = jnp.bfloat16       # MXU inputs; accumulation + elementwise stay f32

# lane offsets inside the per-layer packed weight slabs
# encoder slab (H, 256): [ wqkv(3H) | wo(H) | wi(F) | wo2^T(F) ]
E_QKV, E_WO, E_WI, E_WO2T, E_END = 0, 3 * H, 4 * H, 4 * H + F, 4 * H + 2 * F
# decoder slab (H, 384): [ sqkv(3H) | so(H) | wi(F) | wo2^T(F) | cq(H) | ckv(2H) | co(H) ]
D_SQKV, D_SO, D_WI, D_WO2T = 0, 3 * H, 4 * H, 4 * H + F
D_CQ, D_CKV, D_CO, D_END = 4 * H + 2 * F, 5 * H + 2 * F, 7 * H + 2 * F, 8 * H + 2 * F

# RMSNorm row indices inside the single (12, H) LN table
ENC_FINAL_LN = 2 * N_ENC_LAYERS                      # rows 2l, 2l+1 per enc layer
DEC_LN_BASE = ENC_FINAL_LN + 1                       # rows base+3l+{0,1,2} per dec layer
DEC_FINAL_LN = DEC_LN_BASE + 3 * N_DEC_LAYERS
N_LN = DEC_FINAL_LN + 1                              # 12


# ---------------------------------------------------------------------------
# in-kernel helpers (pure jnp on values already loaded from VMEM refs)
# ---------------------------------------------------------------------------
def _dot(a, b):
    # bf16 MXU inputs, f32 accumulation.
    return jnp.dot(a.astype(MXU_DTYPE), b.astype(MXU_DTYPE),
                   preferred_element_type=jnp.float32)


def _dot_nt(a, b):
    # a:(M,K) @ b:(N,K)^T -> (M,N) without an explicit in-kernel transpose.
    return jax.lax.dot_general(a.astype(MXU_DTYPE), b.astype(MXU_DTYPE),
                               (((1,), (1,)), ((), ())),
                               preferred_element_type=jnp.float32)


def _rms_norm(x, w):
    # T5 LayerNorm: no mean subtraction, no bias (f32 throughout).
    var = jnp.mean(x * x, axis=-1, keepdims=True)
    return x * jax.lax.rsqrt(var + EPS) * w


def _mha(q, k, v, wo, bias):
    """Batch-fused multi-head attention core (T5: no 1/sqrt(d) scaling).

    q: (Nq, H), k/v: (Nk, H) already projected; bias: (Nq, Nk) additive mask
    (batch-block / key-padding / causal). Heads are a static 4-way unroll; the
    per-head contexts stay in vregs and are lane-concatenated (no VMEM scratch).
    """
    ctx_heads = []
    for h in range(NH):                                  # NH = 4, static unroll
        sl = slice(h * DH, (h + 1) * DH)
        s = _dot_nt(q[:, sl], k[:, sl]) + bias           # (Nq, Nk)
        s = s - jnp.max(s, axis=-1, keepdims=True)
        e = jnp.exp(s)
        p = e * pl.reciprocal(jnp.sum(e, axis=-1, keepdims=True), approx=True)
        ctx_heads.append(_dot(p, v[:, sl]))              # (Nq, DH)
    ctx = jnp.concatenate(ctx_heads, axis=-1)            # (Nq, H), in vregs
    return _dot(ctx, wo)


def _self_attn(xn, wqkv, wo, bias):
    qkv = _dot(xn, wqkv)                                 # one fused (H,3H) matmul
    return _mha(qkv[:, 0:H], qkv[:, H:2 * H], qkv[:, 2 * H:3 * H], wo, bias)


def _cross_attn(yn, enc, wq, wkv, wo, bias):
    q = _dot(yn, wq)
    kv = _dot(enc, wkv)                                  # one fused (H,2H) matmul
    return _mha(q, kv[:, 0:H], kv[:, H:2 * H], wo, bias)


# ---------------------------------------------------------------------------
# the single fused kernel: embeddings -> encoder -> decoder -> LM head -> loss
# ---------------------------------------------------------------------------
def chart_t5_kernel(
        # activations / precomputed glue tensors
        tok_ref, cat_ref, wcat_ref, dec_tok_ref,
        encb_ref, crossb_ref, decb_ref,
        # packed weights
        ln_ref, ew_ref, dw_ref, embT_ref, laboh_ref,
        # outputs
        enc_out_ref, logits_ref, loss_ref):
    # ---- combined_embeds = text(+biases) + [loc|type|appearance] @ w_cat ----
    x = tok_ref[...] + _dot(cat_ref[...], wcat_ref[...])   # (B*S, H), K=112 fused

    enc_bias = encb_ref[...]                               # (B*S, B*S)
    cross_bias = crossb_ref[...]                           # (B*T, B*S)
    dec_bias = decb_ref[...]                               # (B*T, B*T)

    # ---- T5 encoder stack (pre-RMSNorm self-attn + pre-RMSNorm ReLU FFN) ----
    for l in range(N_ENC_LAYERS):
        w = ew_ref[l]                                      # (H, 256) bf16 slab
        xn = _rms_norm(x, ln_ref[2 * l:2 * l + 1, :])
        x = x + _self_attn(xn, w[:, E_QKV:E_WO], w[:, E_WO:E_WI], enc_bias)
        xn = _rms_norm(x, ln_ref[2 * l + 1:2 * l + 2, :])
        x = x + _dot_nt(jnp.maximum(_dot(xn, w[:, E_WI:E_WO2T]), 0.0),
                        w[:, E_WO2T:E_END])
    enc = _rms_norm(x, ln_ref[ENC_FINAL_LN:ENC_FINAL_LN + 1, :])
    # TODO(synk): (16,32) writeback is 32-lane masked; lane-dense repacking only
    #             pays off once S/H scale up.
    enc_out_ref[...] = enc                                 # (B*S, H)

    # ---- T5 decoder stack (causal self-attn + cross-attn + ReLU FFN) ----
    y = dec_tok_ref[...]                                   # (B*T, H)
    for l in range(N_DEC_LAYERS):
        w = dw_ref[l]                                      # (H, 384) bf16 slab
        b = DEC_LN_BASE + 3 * l
        yn = _rms_norm(y, ln_ref[b:b + 1, :])
        y = y + _self_attn(yn, w[:, D_SQKV:D_SO], w[:, D_SO:D_WI], dec_bias)
        yn = _rms_norm(y, ln_ref[b + 1:b + 2, :])
        y = y + _cross_attn(yn, enc, w[:, D_CQ:D_CKV], w[:, D_CKV:D_CO],
                            w[:, D_CO:D_END], cross_bias)
        yn = _rms_norm(y, ln_ref[b + 2:b + 3, :])
        y = y + _dot_nt(jnp.maximum(_dot(yn, w[:, D_WI:D_WO2T]), 0.0),
                        w[:, D_WO2T:D_CQ])
    y = _rms_norm(y, ln_ref[DEC_FINAL_LN:DEC_FINAL_LN + 1, :])

    # ---- tied LM head + masked cross entropy ----
    logits = _dot(y * (H ** -0.5), embT_ref[...])          # (B*T, V) lane-dense
    logits_ref[...] = logits
    laboh = laboh_ref[...]                                 # (B*T, V) one-hot
    labw = jnp.sum(laboh, axis=-1, keepdims=True)          # 0 where label == -100
    m = jnp.max(logits, axis=-1, keepdims=True)
    lse = m + jnp.log(jnp.sum(jnp.exp(logits - m), axis=-1, keepdims=True))
    tgt = jnp.sum(logits * laboh, axis=-1, keepdims=True)
    nll = (lse - tgt) * labw
    num = jnp.sum(nll, axis=0, keepdims=True)              # (1, 1)
    den = jnp.maximum(jnp.sum(labw, axis=0, keepdims=True), 1.0)
    # TODO(synk): (1,1) scalar stays a VMEM output; SMEM scalar out is a further
    #             micro-opt once anything here is measurable.
    loss_ref[...] = num / den


# ---------------------------------------------------------------------------
# full forward (mirrors ChartReaderT5.forward) — glue builds gathers / masks /
# packed operands, one pallas_call runs the whole network.
# ---------------------------------------------------------------------------
def chart_reader_t5_forward(params, input_ids, attention_mask,
                            bbox, comp_type, appearance_feat, labels):
    embed = params["embed"]                                        # (V, H)

    # token-id gathers + one-hot construction stay in glue JAX
    text_embeds = jnp.take(embed, input_ids, axis=0).reshape(B * S, H)
    type_oh = jax.nn.one_hot(comp_type, NTYPE, dtype=jnp.float32)  # (B, NTYPE)

    # fused extra-feature operand: [bbox | type_oh | appearance] row-repeated,
    # fused weight (112, H), biases pre-summed into the token operand.
    cat = jnp.concatenate([bbox, type_oh, appearance_feat], axis=-1)   # (B, 112)
    cat_rep = jnp.repeat(cat, S, axis=0)                               # (B*S, 112)
    w_cat = jnp.concatenate([params["w_loc"], params["type_tab"], params["w_app"]],
                            axis=0).astype(MXU_DTYPE)                  # (112, H)
    tok = text_embeds + (params["b_loc"] + params["b_app"])            # (B*S, H)

    # decoder_input_ids = shift_right(labels), decoder_start_token_id = 0
    dec_in = jnp.concatenate([jnp.zeros((B, 1), labels.dtype), labels[:, :-1]], axis=1)
    dec_in = jnp.where(dec_in == -100, 0, dec_in)
    dec_embeds = jnp.take(embed, dec_in, axis=0).reshape(B * T, H)

    # additive attention biases, hoisted out of the kernel (batch-block + pad + causal)
    qb_e = jnp.repeat(jnp.arange(B), S)
    qb_d = jnp.repeat(jnp.arange(B), T)
    k_valid = attention_mask.reshape(-1) > 0.5
    same_ee = qb_e[:, None] == qb_e[None, :]
    enc_bias = jnp.where(same_ee & k_valid[None, :], 0.0, NEG).astype(jnp.float32)
    same_de = qb_d[:, None] == qb_e[None, :]
    cross_bias = jnp.where(same_de & k_valid[None, :], 0.0, NEG).astype(jnp.float32)
    tpos = jnp.tile(jnp.arange(T), B)
    same_dd = qb_d[:, None] == qb_d[None, :]
    causal = tpos[:, None] >= tpos[None, :]
    dec_bias = jnp.where(same_dd & causal, 0.0, NEG).astype(jnp.float32)

    # loss targets: one-hot labels (ignore_index=-100 rows become all-zero)
    labels_oh = jax.nn.one_hot(labels, V, dtype=jnp.float32).reshape(B * T, V)

    # single RMSNorm table (12, H)
    ln_rows = []
    for l in range(N_ENC_LAYERS):
        ln_rows += [params["e_ln1"][l], params["e_ln2"][l]]
    ln_rows += [params["enc_final_ln"]]
    for l in range(N_DEC_LAYERS):
        ln_rows += [params["d_ln1"][l], params["d_ln2"][l], params["d_ln3"][l]]
    ln_rows += [params["dec_final_ln"]]
    ln_all = jnp.concatenate(ln_rows, axis=0)                          # (N_LN, H)

    # lane-packed per-layer weight slabs (bf16 MXU operands)
    def enc_slab(l):
        wqkv = jnp.concatenate([params["e_wq"][l], params["e_wk"][l],
                                params["e_wv"][l]], axis=1)            # (H, 3H)
        return jnp.concatenate([wqkv, params["e_wo"][l], params["e_wi"][l],
                                params["e_wo2"][l].T], axis=1)         # (H, 256)

    def dec_slab(l):
        sqkv = jnp.concatenate([params["d_sq"][l], params["d_sk"][l],
                                params["d_sv"][l]], axis=1)            # (H, 3H)
        ckv = jnp.concatenate([params["d_ck"][l], params["d_cv"][l]], axis=1)
        return jnp.concatenate([sqkv, params["d_so"][l], params["d_wi"][l],
                                params["d_wo2"][l].T, params["d_cq"][l],
                                ckv, params["d_co"][l]], axis=1)       # (H, 384)

    e_w = jnp.stack([enc_slab(l) for l in range(N_ENC_LAYERS)], axis=0).astype(MXU_DTYPE)
    d_w = jnp.stack([dec_slab(l) for l in range(N_DEC_LAYERS)], axis=0).astype(MXU_DTYPE)

    emb_T = embed.T.astype(MXU_DTYPE)                                  # (H, V)

    inputs = (tok, cat_rep, w_cat, dec_embeds,
              enc_bias, cross_bias, dec_bias,
              ln_all, e_w, d_w, emb_T, labels_oh)                      # 12 operands

    enc_out, logits, loss = pl.pallas_call(
        chart_t5_kernel,
        out_shape=(jax.ShapeDtypeStruct((B * S, H), jnp.float32),   # encoder hidden states
                   jax.ShapeDtypeStruct((B * T, V), jnp.float32),   # LM logits (lane-dense)
                   jax.ShapeDtypeStruct((1, 1), jnp.float32)),      # masked-mean CE loss
    )(*inputs)

    return loss[0, 0], logits.reshape(B, T, V), enc_out.reshape(B, S, H)


# ---------------------------------------------------------------------------
# deterministic parameter init (natural per-layer shapes; packed in the glue)
# ---------------------------------------------------------------------------
def init_params(key):
    keys = iter(jax.random.split(key, 64))

    def nrm(shape, scale=0.05):
        return scale * jax.random.normal(next(keys), shape, dtype=jnp.float32)

    def ones(*shape):
        return jnp.ones(shape, jnp.float32)

    p = {
        "embed": nrm((V, H), 1.0),
        "w_loc": nrm((NLOC, H)), "b_loc": nrm((1, H)),
        "type_tab": nrm((NTYPE, H), 1.0),
        "w_app": nrm((NAPP, H)), "b_app": nrm((1, H)),
        # encoder (stacked over layers)
        "e_wq": nrm((N_ENC_LAYERS, H, H)), "e_wk": nrm((N_ENC_LAYERS, H, H)),
        "e_wv": nrm((N_ENC_LAYERS, H, H)), "e_wo": nrm((N_ENC_LAYERS, H, H)),
        "e_ln1": ones(N_ENC_LAYERS, 1, H), "e_ln2": ones(N_ENC_LAYERS, 1, H),
        "e_wi": nrm((N_ENC_LAYERS, H, F)), "e_wo2": nrm((N_ENC_LAYERS, F, H)),
        "enc_final_ln": ones(1, H),
        # decoder (stacked over layers)
        "d_sq": nrm((N_DEC_LAYERS, H, H)), "d_sk": nrm((N_DEC_LAYERS, H, H)),
        "d_sv": nrm((N_DEC_LAYERS, H, H)), "d_so": nrm((N_DEC_LAYERS, H, H)),
        "d_cq": nrm((N_DEC_LAYERS, H, H)), "d_ck": nrm((N_DEC_LAYERS, H, H)),
        "d_cv": nrm((N_DEC_LAYERS, H, H)), "d_co": nrm((N_DEC_LAYERS, H, H)),
        "d_ln1": ones(N_DEC_LAYERS, 1, H), "d_ln2": ones(N_DEC_LAYERS, 1, H),
        "d_ln3": ones(N_DEC_LAYERS, 1, H),
        "d_wi": nrm((N_DEC_LAYERS, H, F)), "d_wo2": nrm((N_DEC_LAYERS, F, H)),
        "dec_final_ln": ones(1, H),
    }
    return p


if __name__ == "__main__":
    root = jax.random.PRNGKey(0)
    kp, k1, k2, k3, k4, k5 = jax.random.split(root, 6)
    params = init_params(kp)

    # synthetic stand-in for tokenizer(text_input) -> input_ids / attention_mask
    input_ids = jax.random.randint(k1, (B, S), 0, V, dtype=jnp.int32)
    attention_mask = jnp.concatenate(
        [jnp.ones((B, S - 2), jnp.float32), jnp.zeros((B, 2), jnp.float32)], axis=1)

    bbox = jax.random.uniform(k2, (B, NLOC), dtype=jnp.float32)
    comp_type = jax.random.randint(k3, (B,), 0, NTYPE, dtype=jnp.int32)
    appearance_feat = jax.random.normal(k4, (B, NAPP), dtype=jnp.float32)
    labels = jax.random.randint(k5, (B, T), 1, V, dtype=jnp.int32)

    fwd = jax.jit(chart_reader_t5_forward)
    loss, logits, enc_out = fwd(params, input_ids, attention_mask,
                                bbox, comp_type, appearance_feat, labels)
    jax.block_until_ready((loss, logits, enc_out))

    assert logits.shape == (B, T, V) and enc_out.shape == (B, S, H)
    assert bool(jnp.isfinite(loss))
    print("KERNEL_OK")
</pallas_src>

<mosaic_0001>
module attributes {stable_mosaic.version = 11 : i64} {
  func.func @chart_t5_kernel(%arg0: memref<16x32xf32, #tpu.memory_space<vmem>>, %arg1: memref<16x112xf32, #tpu.memory_space<vmem>>, %arg2: memref<112x32xbf16, #tpu.memory_space<vmem>>, %arg3: memref<12x32xf32, #tpu.memory_space<vmem>>, %arg4: memref<16x16xf32, #tpu.memory_space<vmem>>, %arg5: memref<12x16xf32, #tpu.memory_space<vmem>>, %arg6: memref<12x12xf32, #tpu.memory_space<vmem>>, %arg7: memref<12x32xf32, #tpu.memory_space<vmem>>, %arg8: memref<2x32x256xbf16, #tpu.memory_space<vmem>>, %arg9: memref<2x32x384xbf16, #tpu.memory_space<vmem>>, %arg10: memref<32x128xbf16, #tpu.memory_space<vmem>>, %arg11: memref<12x128xf32, #tpu.memory_space<vmem>>, %arg12: memref<16x32xf32, #tpu.memory_space<vmem>>, %arg13: memref<12x128xf32, #tpu.memory_space<vmem>>, %arg14: memref<1x1xf32, #tpu.memory_space<vmem>>) attributes {dimension_semantics = [], scalar_prefetch = 0 : i64, scratch_operands = 0 : i64, tpu.core_type = #tpu.core_type<tc>} {
    %c0 = arith.constant 0 : index
    %c0_0 = arith.constant 0 : index
    %0 = vector.load %arg0[%c0, %c0_0] : memref<16x32xf32, #tpu.memory_space<vmem>>, vector<16x32xf32>
    %c0_1 = arith.constant 0 : index
    %c0_2 = arith.constant 0 : index
    %1 = vector.load %arg1[%c0_1, %c0_2] : memref<16x112xf32, #tpu.memory_space<vmem>>, vector<16x112xf32>
    %c0_3 = arith.constant 0 : index
    %c0_4 = arith.constant 0 : index
    %2 = vector.load %arg2[%c0_3, %c0_4] : memref<112x32xbf16, #tpu.memory_space<vmem>>, vector<112x32xbf16>
    %3 = arith.truncf %1 : vector<16x112xf32> to vector<16x112xbf16>
    %cst = arith.constant dense<0.000000e+00> : vector<16x32xf32>
    %4 = tpu.matmul %3, %2, %cst {dimension_numbers = #tpu.dot_dimension_numbers<[1], [0], [0], [1], [0, 0, 1, 1], [], []>} : vector<16x112xbf16>, vector<112x32xbf16>, vector<16x32xf32> -> vector<16x32xf32>
    %5 = arith.addf %0, %4 : vector<16x32xf32>
    %c0_5 = arith.constant 0 : index
    %c0_6 = arith.constant 0 : index
    %6 = vector.load %arg4[%c0_5, %c0_6] : memref<16x16xf32, #tpu.memory_space<vmem>>, vector<16x16xf32>
    %c0_7 = arith.constant 0 : index
    %c0_8 = arith.constant 0 : index
    %7 = vector.load %arg5[%c0_7, %c0_8] : memref<12x16xf32, #tpu.memory_space<vmem>>, vector<12x16xf32>
    %c0_9 = arith.constant 0 : index
    %c0_10 = arith.constant 0 : index
    %8 = vector.load %arg6[%c0_9, %c0_10] : memref<12x12xf32, #tpu.memory_space<vmem>>, vector<12x12xf32>
    %c0_11 = arith.constant 0 : index
    %c0_12 = arith.constant 0 : index
    %c0_13 = arith.constant 0 : index
    %9 = vector.load %arg8[%c0_11, %c0_12, %c0_13] : memref<2x32x256xbf16, #tpu.memory_space<vmem>>, vector<1x32x256xbf16>
    %10 = vector.shape_cast %9 : vector<1x32x256xbf16> to vector<32x256xbf16>
    %c0_14 = arith.constant 0 : index
    %c0_15 = arith.constant 0 : index
    %11 = vector.load %arg7[%c0_14, %c0_15] : memref<12x32xf32, #tpu.memory_space<vmem>>, vector<1x32xf32>
    %12 = arith.mulf %5, %5 : vector<16x32xf32>
    %cst_16 = arith.constant dense<0.000000e+00> : vector<16xf32>
    %13 = vector.multi_reduction <add>, %12, %cst_16 [1] : vector<16x32xf32> to vector<16xf32>
    %14 = vector.shape_cast %13 : vector<16xf32> to vector<16x1xf32>
    %cst_17 = arith.constant 3.200000e+01 : f32
    %15 = vector.broadcast %cst_17 : f32 to vector<16x1xf32>
    %16 = arith.divf %14, %15 : vector<16x1xf32>
    %cst_18 = arith.constant 9.99999997E-7 : f32
    %17 = vector.broadcast %cst_18 : f32 to vector<16x1xf32>
    %18 = arith.addf %16, %17 : vector<16x1xf32>
    %19 = math.rsqrt %18 : vector<16x1xf32>
    %20 = vector.broadcast %19 : vector<16x1xf32> to vector<16x32xf32>
    %21 = arith.mulf %5, %20 : vector<16x32xf32>
    %22 = vector.broadcast %11 : vector<1x32xf32> to vector<16x32xf32>
    %23 = arith.mulf %21, %22 : vector<16x32xf32>
    %24 = vector.extract_strided_slice %10 {offsets = [0, 0], sizes = [32, 96], strides = [1, 1]} : vector<32x256xbf16> to vector<32x96xbf16>
    %25 = vector.extract_strided_slice %10 {offsets = [0, 96], sizes = [32, 32], strides = [1, 1]} : vector<32x256xbf16> to vector<32x32xbf16>
    %26 = arith.truncf %23 : vector<16x32xf32> to vector<16x32xbf16>
    %cst_19 = arith.constant dense<0.000000e+00> : vector<16x96xf32>
    %27 = tpu.matmul %26, %24, %cst_19 {dimension_numbers = #tpu.dot_dimension_numbers<[1], [0], [0], [1], [0, 0, 1, 1], [], []>} : vector<16x32xbf16>, vector<32x96xbf16>, vector<16x96xf32> -> vector<16x96xf32>
    %28 = vector.extract_strided_slice %27 {offsets = [0, 0], sizes = [16, 32], strides = [1, 1]} : vector<16x96xf32> to vector<16x32xf32>
    %29 = vector.extract_strided_slice %27 {offsets = [0, 32], sizes = [16, 32], strides = [1, 1]} : vector<16x96xf32> to vector<16x32xf32>
    %30 = vector.extract_strided_slice %27 {offsets = [0, 64], sizes = [16, 32], strides = [1, 1]} : vector<16x96xf32> to vector<16x32xf32>
    %31 = vector.extract_strided_slice %28 {offsets = [0, 0], sizes = [16, 8], strides = [1, 1]} : vector<16x32xf32> to vector<16x8xf32>
    %32 = vector.extract_strided_slice %29 {offsets = [0, 0], sizes = [16, 8], strides = [1, 1]} : vector<16x32xf32> to vector<16x8xf32>
    %33 = arith.truncf %31 : vector<16x8xf32> to vector<16x8xbf16>
    %34 = arith.truncf %32 : vector<16x8xf32> to vector<16x8xbf16>
    %cst_20 = arith.constant dense<0.000000e+00> : vector<16x16xf32>
    %35 = tpu.matmul %33, %34, %cst_20 {dimension_numbers = #tpu.dot_dimension_numbers<[1], [1], [0], [0], [0, 0, 1, 0], [], []>} : vector<16x8xbf16>, vector<16x8xbf16>, vector<16x16xf32> -> vector<16x16xf32>
    %36 = arith.addf %35, %6 : vector<16x16xf32>
    %cst_21 = arith.constant dense<0xFF800000> : vector<16xf32>
    %37 = vector.multi_reduction <maximumf>, %36, %cst_21 [1] : vector<16x16xf32> to vector<16xf32>
    %38 = vector.shape_cast %37 : vector<16xf32> to vector<16x1xf32>
    %39 = vector.broadcast %38 : vector<16x1xf32> to vector<16x16xf32>
    %40 = arith.subf %36, %39 : vector<16x16xf32>
    %41 = math.exp %40 : vector<16x16xf32>
    %cst_22 = arith.constant dense<0.000000e+00> : vector<16xf32>
    %42 = vector.multi_reduction <add>, %41, %cst_22 [1] : vector<16x16xf32> to vector<16xf32>
    %43 = vector.shape_cast %42 : vector<16xf32> to vector<16x1xf32>
    %44 = tpu.reciprocal %43 {approx = true} : vector<16x1xf32> -> vector<16x1xf32>
    %45 = vector.broadcast %44 : vector<16x1xf32> to vector<16x16xf32>
    %46 = arith.mulf %41, %45 : vector<16x16xf32>
    %47 = vector.extract_strided_slice %30 {offsets = [0, 0], sizes = [16, 8], strides = [1, 1]} : vector<16x32xf32> to vector<16x8xf32>
    %48 = arith.truncf %46 : vector<16x16xf32> to vector<16x16xbf16>
    %49 = arith.truncf %47 : vector<16x8xf32> to vector<16x8xbf16>
    %cst_23 = arith.constant dense<0.000000e+00> : vector<16x8xf32>
    %50 = tpu.matmul %48, %49, %cst_23 {dimension_numbers = #tpu.dot_dimension_numbers<[1], [0], [0], [1], [0, 0, 1, 1], [], []>} : vector<16x16xbf16>, vector<16x8xbf16>, vector<16x8xf32> -> vector<16x8xf32>
    %51 = vector.extract_strided_slice %28 {offsets = [0, 8], sizes = [16, 8], strides = [1, 1]} : vector<16x32xf32> to vector<16x8xf32>
    %52 = vector.extract_strided_slice %29 {offsets = [0, 8], sizes = [16, 8], strides = [1, 1]} : vector<16x32xf32> to vector<16x8xf32>
    %53 = arith.truncf %51 : vector<16x8xf32> to vector<16x8xbf16>
    %54 = arith.truncf %52 : vector<16x8xf32> to vector<16x8xbf16>
    %cst_24 = arith.constant dense<0.000000e+00> : vector<16x16xf32>
    %55 = tpu.matmul %53, %54, %cst_24 {dimension_numbers = #tpu.dot_dimension_numbers<[1], [1], [0], [0], [0, 0, 1, 0], [], []>} : vector<16x8xbf16>, vector<16x8xbf16>, vector<16x16xf32> -> vector<16x16xf32>
    %56 = arith.addf %55, %6 : vector<16x16xf32>
    %cst_25 = arith.constant dense<0xFF800000> : vector<16xf32>
    %57 = vector.multi_reduction <maximumf>, %56, %cst_25 [1] : vector<16x16xf32> to vector<16xf32>
    %58 = vector.shape_cast %57 : vector<16xf32> to vector<16x1xf32>
    %59 = vector.broadcast %58 : vector<16x1xf32> to vector<16x16xf32>
    %60 = arith.subf %56, %59 : vector<16x16xf32>
    %61 = math.exp %60 : vector<16x16xf32>
    %cst_26 = arith.constant dense<0.000000e+00> : vector<16xf32>
    %62 = vector.multi_reduction <add>, %61, %cst_26 [1] : vector<16x16xf32> to vector<16xf32>
    %63 = vector.shape_cast %62 : vector<16xf32> to vector<16x1xf32>
    %64 = tpu.reciprocal %63 {approx = true} : vector<16x1xf32> -> vector<16x1xf32>
    %65 = vector.broadcast %64 : vector<16x1xf32> to vector<16x16xf32>
    %66 = arith.mulf %61, %65 : vector<16x16xf32>
    %67 = vector.extract_strided_slice %30 {offsets = [0, 8], sizes = [16, 8], strides = [1, 1]} : vector<16x32xf32> to vector<16x8xf32>
    %68 = arith.truncf %66 : vector<16x16xf32> to vector<16x16xbf16>
    %69 = arith.truncf %67 : vector<16x8xf32> to vector<16x8xbf16>
    %cst_27 = arith.constant dense<0.000000e+00> : vector<16x8xf32>
    %70 = tpu.matmul %68, %69, %cst_27 {dimension_numbers = #tpu.dot_dimension_numbers<[1], [0], [0], [1], [0, 0, 1, 1], [], []>} : vector<16x16xbf16>, vector<16x8xbf16>, vector<16x8xf32> -> vector<16x8xf32>
    %71 = vector.extract_strided_slice %28 {offsets = [0, 16], sizes = [16, 8], strides = [1, 1]} : vector<16x32xf32> to vector<16x8xf32>
    %72 = vector.extract_strided_slice %29 {offsets = [0, 16], sizes = [16, 8], strides = [1, 1]} : vector<16x32xf32> to vector<16x8xf32>
    %73 = arith.truncf %71 : vector<16x8xf32> to vector<16x8xbf16>
    %74 = arith.truncf %72 : vector<16x8xf32> to vector<16x8xbf16>
    %cst_28 = arith.constant dense<0.000000e+00> : vector<16x16xf32>
    %75 = tpu.matmul %73, %74, %cst_28 {dimension_numbers = #tpu.dot_dimension_numbers<[1], [1], [0], [0], [0, 0, 1, 0], [], []>} : vector<16x8xbf16>, vector<16x8xbf16>, vector<16x16xf32> -> vector<16x16xf32>
    %76 = arith.addf %75, %6 : vector<16x16xf32>
    %cst_29 = arith.constant dense<0xFF800000> : vector<16xf32>
    %77 = vector.multi_reduction <maximumf>, %76, %cst_29 [1] : vector<16x16xf32> to vector<16xf32>
    %78 = vector.shape_cast %77 : vector<16xf32> to vector<16x1xf32>
    %79 = vector.broadcast %78 : vector<16x1xf32> to vector<16x16xf32>
    %80 = arith.subf %76, %79 : vector<16x16xf32>
    %81 = math.exp %80 : vector<16x16xf32>
    %cst_30 = arith.constant dense<0.000000e+00> : vector<16xf32>
    %82 = vector.multi_reduction <add>, %81, %cst_30 [1] : vector<16x16xf32> to vector<16xf32>
    %83 = vector.shape_cast %82 : vector<16xf32> to vector<16x1xf32>
    %84 = tpu.reciprocal %83 {approx = true} : vector<16x1xf32> -> vector<16x1xf32>
    %85 = vector.broadcast %84 : vector<16x1xf32> to vector<16x16xf32>
    %86 = arith.mulf %81, %85 : vector<16x16xf32>
    %87 = vector.extract_strided_slice %30 {offsets = [0, 16], sizes = [16, 8], strides = [1, 1]} : vector<16x32xf32> to vector<16x8xf32>
    %88 = arith.truncf %86 : vector<16x16xf32> to vector<16x16xbf16>
    %89 = arith.truncf %87 : vector<16x8xf32> to vector<16x8xbf16>
    %cst_31 = arith.constant dense<0.000000e+00> : vector<16x8xf32>
    %90 = tpu.matmul %88, %89, %cst_31 {dimension_numbers = #tpu.dot_dimension_numbers<[1], [0], [0], [1], [0, 0, 1, 1], [], []>} : vector<16x16xbf16>, vector<16x8xbf16>, vector<16x8xf32> -> vector<16x8xf32>
    %91 = vector.extract_strided_slice %28 {offsets = [0, 24], sizes = [16, 8], strides = [1, 1]} : vector<16x32xf32> to vector<16x8xf32>
    %92 = vector.extract_strided_slice %29 {offsets = [0, 24], sizes = [16, 8], strides = [1, 1]} : vector<16x32xf32> to vector<16x8xf32>
    %93 = arith.truncf %91 : vector<16x8xf32> to vector<16x8xbf16>
    %94 = arith.truncf %92 : vector<16x8xf32> to vector<16x8xbf16>
    %cst_32 = arith.constant dense<0.000000e+00> : vector<16x16xf32>
    %95 = tpu.matmul %93, %94, %cst_32 {dimension_numbers = #tpu.dot_dimension_numbers<[1], [1], [0], [0], [0, 0, 1, 0], [], []>} : vector<16x8xbf16>, vector<16x8xbf16>, vector<16x16xf32> -> vector<16x16xf32>
    %96 = arith.addf %95, %6 : vector<16x16xf32>
    %cst_33 = arith.constant dense<0xFF800000> : vector<16xf32>
    %97 = vector.multi_reduction <maximumf>, %96, %cst_33 [1] : vector<16x16xf32> to vector<16xf32>
    %98 = vector.shape_cast %97 : vector<16xf32> to vector<16x1xf32>
    %99 = vector.broadcast %98 : vector<16x1xf32> to vector<16x16xf32>
    %100 = arith.subf %96, %99 : vector<16x16xf32>
    %101 = math.exp %100 : vector<16x16xf32>
    %cst_34 = arith.constant dense<0.000000e+00> : vector<16xf32>
    %102 = vector.multi_reduction <add>, %101, %cst_34 [1] : vector<16x16xf32> to vector<16xf32>
    %103 = vector.shape_cast %102 : vector<16xf32> to vector<16x1xf32>
    %104 = tpu.reciprocal %103 {approx = true} : vector<16x1xf32> -> vector<16x1xf32>
    %105 = vector.broadcast %104 : vector<16x1xf32> to vector<16x16xf32>
    %106 = arith.mulf %101, %105 : vector<16x16xf32>
    %107 = vector.extract_strided_slice %30 {offsets = [0, 24], sizes = [16, 8], strides = [1, 1]} : vector<16x32xf32> to vector<16x8xf32>
    %108 = arith.truncf %106 : vector<16x16xf32> to vector<16x16xbf16>
    %109 = arith.truncf %107 : vector<16x8xf32> to vector<16x8xbf16>
    %cst_35 = arith.constant dense<0.000000e+00> : vector<16x8xf32>
    %110 = tpu.matmul %108, %109, %cst_35 {dimension_numbers = #tpu.dot_dimension_numbers<[1], [0], [0], [1], [0, 0, 1, 1], [], []>} : vector<16x16xbf16>, vector<16x8xbf16>, vector<16x8xf32> -> vector<16x8xf32>
    %111 = tpu.concatenate %50, %70, %90, %110 in 1 : vector<16x8xf32>, vector<16x8xf32>, vector<16x8xf32>, vector<16x8xf32> -> vector<16x32xf32>
    %112 = arith.truncf %111 : vector<16x32xf32> to vector<16x32xbf16>
    %cst_36 = arith.constant dense<0.000000e+00> : vector<16x32xf32>
    %113 = tpu.matmul %112, %25, %cst_36 {dimension_numbers = #tpu.dot_dimension_numbers<[1], [0], [0], [1], [0, 0, 1, 1], [], []>} : vector<16x32xbf16>, vector<32x32xbf16>, vector<16x32xf32> -> vector<16x32xf32>
    %114 = arith.addf %5, %113 : vector<16x32xf32>
    %c1 = arith.constant 1 : index
    %c0_37 = arith.constant 0 : index
    %115 = vector.load %arg7[%c1, %c0_37] : memref<12x32xf32, #tpu.memory_space<vmem>>, vector<1x32xf32>
    %116 = arith.mulf %114, %114 : vector<16x32xf32>
    %cst_38 = arith.constant dense<0.000000e+00> : vector<16xf32>
    %117 = vector.multi_reduction <add>, %116, %cst_38 [1] : vector<16x32xf32> to vector<16xf32>
    %118 = vector.shape_cast %117 : vector<16xf32> to vector<16x1xf32>
    %cst_39 = arith.constant 3.200000e+01 : f32
    %119 = vector.broadcast %cst_39 : f32 to vector<16x1xf32>
    %120 = arith.divf %118, %119 : vector<16x1xf32>
    %cst_40 = arith.constant 9.99999997E-7 : f32
    %121 = vector.broadcast %cst_40 : f32 to vector<16x1xf32>
    %122 = arith.addf %120, %121 : vector<16x1xf32>
    %123 = math.rsqrt %122 : vector<16x1xf32>
    %124 = vector.broadcast %123 : vector<16x1xf32> to vector<16x32xf32>
    %125 = arith.mulf %114, %124 : vector<16x32xf32>
    %126 = vector.broadcast %115 : vector<1x32xf32> to vector<16x32xf32>
    %127 = arith.mulf %125, %126 : vector<16x32xf32>
    %128 = vector.extract_strided_slice %10 {offsets = [0, 128], sizes = [32, 64], strides = [1, 1]} : vector<32x256xbf16> to vector<32x64xbf16>
    %129 = arith.truncf %127 : vector<16x32xf32> to vector<16x32xbf16>
    %cst_41 = arith.constant dense<0.000000e+00> : vector<16x64xf32>
    %130 = tpu.matmul %129, %128, %cst_41 {dimension_numbers = #tpu.dot_dimension_numbers<[1], [0], [0], [1], [0, 0, 1, 1], [], []>} : vector<16x32xbf16>, vector<32x64xbf16>, vector<16x64xf32> -> vector<16x64xf32>
    %cst_42 = arith.constant 0.000000e+00 : f32
    %131 = vector.broadcast %cst_42 : f32 to vector<16x64xf32>
    %132 = arith.maximumf %130, %131 : vector<16x64xf32>
    %133 = vector.extract_strided_slice %10 {offsets = [0, 192], sizes = [32, 64], strides = [1, 1]} : vector<32x256xbf16> to vector<32x64xbf16>
    %134 = arith.truncf %132 : vector<16x64xf32> to vector<16x64xbf16>
    %cst_43 = arith.constant dense<0.000000e+00> : vector<16x32xf32>
    %135 = tpu.matmul %134, %133, %cst_43 {dimension_numbers = #tpu.dot_dimension_numbers<[1], [1], [0], [0], [0, 0, 1, 0], [], []>} : vector<16x64xbf16>, vector<32x64xbf16>, vector<16x32xf32> -> vector<16x32xf32>
    %136 = arith.addf %114, %135 : vector<16x32xf32>
    %c1_44 = arith.constant 1 : index
    %c0_45 = arith.constant 0 : index
    %c0_46 = arith.constant 0 : index
    %137 = vector.load %arg8[%c1_44, %c0_45, %c0_46] : memref<2x32x256xbf16, #tpu.memory_space<vmem>>, vector<1x32x256xbf16>
    %138 = vector.shape_cast %137 : vector<1x32x256xbf16> to vector<32x256xbf16>
    %c2 = arith.constant 2 : index
    %c0_47 = arith.constant 0 : index
    %139 = vector.load %arg7[%c2, %c0_47] : memref<12x32xf32, #tpu.memory_space<vmem>>, vector<1x32xf32>
    %140 = arith.mulf %136, %136 : vector<16x32xf32>
    %cst_48 = arith.constant dense<0.000000e+00> : vector<16xf32>
    %141 = vector.multi_reduction <add>, %140, %cst_48 [1] : vector<16x32xf32> to vector<16xf32>
    %142 = vector.shape_cast %141 : vector<16xf32> to vector<16x1xf32>
    %cst_49 = arith.constant 3.200000e+01 : f32
    %143 = vector.broadcast %cst_49 : f32 to vector<16x1xf32>
    %144 = arith.divf %142, %143 : vector<16x1xf32>
    %cst_50 = arith.constant 9.99999997E-7 : f32
    %145 = vector.broadcast %cst_50 : f32 to vector<16x1xf32>
    %146 = arith.addf %144, %145 : vector<16x1xf32>
    %147 = math.rsqrt %146 : vector<16x1xf32>
    %148 = vector.broadcast %147 : vector<16x1xf32> to vector<16x32xf32>
    %149 = arith.mulf %136, %148 : vector<16x32xf32>
    %150 = vector.broadcast %139 : vector<1x32xf32> to vector<16x32xf32>
    %151 = arith.mulf %149, %150 : vector<16x32xf32>
    %152 = vector.extract_strided_slice %138 {offsets = [0, 0], sizes = [32, 96], strides = [1, 1]} : vector<32x256xbf16> to vector<32x96xbf16>
    %153 = vector.extract_strided_slice %138 {offsets = [0, 96], sizes = [32, 32], strides = [1, 1]} : vector<32x256xbf16> to vector<32x32xbf16>
    %154 = arith.truncf %151 : vector<16x32xf32> to vector<16x32xbf16>
    %cst_51 = arith.constant dense<0.000000e+00> : vector<16x96xf32>
    %155 = tpu.matmul %154, %152, %cst_51 {dimension_numbers = #tpu.dot_dimension_numbers<[1], [0], [0], [1], [0, 0, 1, 1], [], []>} : vector<16x32xbf16>, vector<32x96xbf16>, vector<16x96xf32> -> vector<16x96xf32>
    %156 = vector.extract_strided_slice %155 {offsets = [0, 0], sizes = [16, 32], strides = [1, 1]} : vector<16x96xf32> to vector<16x32xf32>
    %157 = vector.extract_strided_slice %155 {offsets = [0, 32], sizes = [16, 32], strides = [1, 1]} : vector<16x96xf32> to vector<16x32xf32>
    %158 = vector.extract_strided_slice %155 {offsets = [0, 64], sizes = [16, 32], strides = [1, 1]} : vector<16x96xf32> to vector<16x32xf32>
    %159 = vector.extract_strided_slice %156 {offsets = [0, 0], sizes = [16, 8], strides = [1, 1]} : vector<16x32xf32> to vector<16x8xf32>
    %160 = vector.extract_strided_slice %157 {offsets = [0, 0], sizes = [16, 8], strides = [1, 1]} : vector<16x32xf32> to vector<16x8xf32>
    %161 = arith.truncf %159 : vector<16x8xf32> to vector<16x8xbf16>
    %162 = arith.truncf %160 : vector<16x8xf32> to vector<16x8xbf16>
    %cst_52 = arith.constant dense<0.000000e+00> : vector<16x16xf32>
    %163 = tpu.matmul %161, %162, %cst_52 {dimension_numbers = #tpu.dot_dimension_numbers<[1], [1], [0], [0], [0, 0, 1, 0], [], []>} : vector<16x8xbf16>, vector<16x8xbf16>, vector<16x16xf32> -> vector<16x16xf32>
    %164 = arith.addf %163, %6 : vector<16x16xf32>
    %cst_53 = arith.constant dense<0xFF800000> : vector<16xf32>
    %165 = vector.multi_reduction <maximumf>, %164, %cst_53 [1] : vector<16x16xf32> to vector<16xf32>
    %166 = vector.shape_cast %165 : vector<16xf32> to vector<16x1xf32>
    %167 = vector.broadcast %166 : vector<16x1xf32> to vector<16x16xf32>
    %168 = arith.subf %164, %167 : vector<16x16xf32>
    %169 = math.exp %168 : vector<16x16xf32>
    %cst_54 = arith.constant dense<0.000000e+00> : vector<16xf32>
    %170 = vector.multi_reduction <add>, %169, %cst_54 [1] : vector<16x16xf32> to vector<16xf32>
    %171 = vector.shape_cast %170 : vector<16xf32> to vector<16x1xf32>
    %172 = tpu.reciprocal %171 {approx = true} : vector<16x1xf32> -> vector<16x1xf32>
    %173 = vector.broadcast %172 : vector<16x1xf32> to vector<16x16xf32>
    %174 = arith.mulf %169, %173 : vector<16x16xf32>
    %175 = vector.extract_strided_slice %158 {offsets = [0, 0], sizes = [16, 8], strides = [1, 1]} : vector<16x32xf32> to vector<16x8xf32>
    %176 = arith.truncf %174 : vector<16x16xf32> to vector<16x16xbf16>
    %177 = arith.truncf %175 : vector<16x8xf32> to vector<16x8xbf16>
    %cst_55 = arith.constant dense<0.000000e+00> : vector<16x8xf32>
    %178 = tpu.matmul %176, %177, %cst_55 {dimension_numbers = #tpu.dot_dimension_numbers<[1], [0], [0], [1], [0, 0, 1, 1], [], []>} : vector<16x16xbf16>, vector<16x8xbf16>, vector<16x8xf32> -> vector<16x8xf32>
    %179 = vector.extract_strided_slice %156 {offsets = [0, 8], sizes = [16, 8], strides = [1, 1]} : vector<16x32xf32> to vector<16x8xf32>
    %180 = vector.extract_strided_slice %157 {offsets = [0, 8], sizes = [16, 8], strides = [1, 1]} : vector<16x32xf32> to vector<16x8xf32>
    %181 = arith.truncf %179 : vector<16x8xf32> to vector<16x8xbf16>
    %182 = arith.truncf %180 : vector<16x8xf32> to vector<16x8xbf16>
    %cst_56 = arith.constant dense<0.000000e+00> : vector<16x16xf32>
    %183 = tpu.matmul %181, %182, %cst_56 {dimension_numbers = #tpu.dot_dimension_numbers<[1], [1], [0], [0], [0, 0, 1, 0], [], []>} : vector<16x8xbf16>, vector<16x8xbf16>, vector<16x16xf32> -> vector<16x16xf32>
    %184 = arith.addf %183, %6 : vector<16x16xf32>
    %cst_57 = arith.constant dense<0xFF800000> : vector<16xf32>
    %185 = vector.multi_reduction <maximumf>, %184, %cst_57 [1] : vector<16x16xf32> to vector<16xf32>
    %186 = vector.shape_cast %185 : vector<16xf32> to vector<16x1xf32>
    %187 = vector.broadcast %186 : vector<16x1xf32> to vector<16x16xf32>
    %188 = arith.subf %184, %187 : vector<16x16xf32>
    %189 = math.exp %188 : vector<16x16xf32>
    %cst_58 = arith.constant dense<0.000000e+00> : vector<16xf32>
    %190 = vector.multi_reduction <add>, %189, %cst_58 [1] : vector<16x16xf32> to vector<16xf32>
    %191 = vector.shape_cast %190 : vector<16xf32> to vector<16x1xf32>
    %192 = tpu.reciprocal %191 {approx = true} : vector<16x1xf32> -> vector<16x1xf32>
    %193 = vector.broadcast %192 : vector<16x1xf32> to vector<16x16xf32>
    %194 = arith.mulf %189, %193 : vector<16x16xf32>
    %195 = vector.extract_strided_slice %158 {offsets = [0, 8], sizes = [16, 8], strides = [1, 1]} : vector<16x32xf32> to vector<16x8xf32>
    %196 = arith.truncf %194 : vector<16x16xf32> to vector<16x16xbf16>
    %197 = arith.truncf %195 : vector<16x8xf32> to vector<16x8xbf16>
    %cst_59 = arith.constant dense<0.000000e+00> : vector<16x8xf32>
    %198 = tpu.matmul %196, %197, %cst_59 {dimension_numbers = #tpu.dot_dimension_numbers<[1], [0], [0], [1], [0, 0, 1, 1], [], []>} : vector<16x16xbf16>, vector<16x8xbf16>, vector<16x8xf32> -> vector<16x8xf32>
    %199 = vector.extract_strided_slice %156 {offsets = [0, 16], sizes = [16, 8], strides = [1, 1]} : vector<16x32xf32> to vector<16x8xf32>
    %200 = vector.extract_strided_slice %157 {offsets = [0, 16], sizes = [16, 8], strides = [1, 1]} : vector<16x32xf32> to vector<16x8xf32>
    %201 = arith.truncf %199 : vector<16x8xf32> to vector<16x8xbf16>
    %202 = arith.truncf %200 : vector<16x8xf32> to vector<16x8xbf16>
    %cst_60 = arith.constant dense<0.000000e+00> : vector<16x16xf32>
    %203 = tpu.matmul %201, %202, %cst_60 {dimension_numbers = #tpu.dot_dimension_numbers<[1], [1], [0], [0], [0, 0, 1, 0], [], []>} : vector<16x8xbf16>, vector<16x8xbf16>, vector<16x16xf32> -> vector<16x16xf32>
    %204 = arith.addf %203, %6 : vector<16x16xf32>
    %cst_61 = arith.constant dense<0xFF800000> : vector<16xf32>
    %205 = vector.multi_reduction <maximumf>, %204, %cst_61 [1] : vector<16x16xf32> to vector<16xf32>
    %206 = vector.shape_cast %205 : vector<16xf32> to vector<16x1xf32>
    %207 = vector.broadcast %206 : vector<16x1xf32> to vector<16x16xf32>
    %208 = arith.subf %204, %207 : vector<16x16xf32>
    %209 = math.exp %208 : vector<16x16xf32>
    %cst_62 = arith.constant dense<0.000000e+00> : vector<16xf32>
    %210 = vector.multi_reduction <add>, %209, %cst_62 [1] : vector<16x16xf32> to vector<16xf32>
    %211 = vector.shape_cast %210 : vector<16xf32> to vector<16x1xf32>
    %212 = tpu.reciprocal %211 {approx = true} : vector<16x1xf32> -> vector<16x1xf32>
    %213 = vector.broadcast %212 : vector<16x1xf32> to vector<16x16xf32>
    %214 = arith.mulf %209, %213 : vector<16x16xf32>
    %215 = vector.extract_strided_slice %158 {offsets = [0, 16], sizes = [16, 8], strides = [1, 1]} : vector<16x32xf32> to vector<16x8xf32>
    %216 = arith.truncf %214 : vector<16x16xf32> to vector<16x16xbf16>
    %217 = arith.truncf %215 : vector<16x8xf32> to vector<16x8xbf16>
    %cst_63 = arith.constant dense<0.000000e+00> : vector<16x8xf32>
    %218 = tpu.matmul %216, %217, %cst_63 {dimension_numbers = #tpu.dot_dimension_numbers<[1], [0], [0], [1], [0, 0, 1, 1], [], []>} : vector<16x16xbf16>, vector<16x8xbf16>, vector<16x8xf32> -> vector<16x8xf32>
    %219 = vector.extract_strided_slice %156 {offsets = [0, 24], sizes = [16, 8], strides = [1, 1]} : vector<16x32xf32> to vector<16x8xf32>
    %220 = vector.extract_strided_slice %157 {offsets = [0, 24], sizes = [16, 8], strides = [1, 1]} : vector<16x32xf32> to vector<16x8xf32>
    %221 = arith.truncf %219 : vector<16x8xf32> to vector<16x8xbf16>
    %222 = arith.truncf %220 : vector<16x8xf32> to vector<16x8xbf16>
    %cst_64 = arith.constant dense<0.000000e+00> : vector<16x16xf32>
    %223 = tpu.matmul %221, %222, %cst_64 {dimension_numbers = #tpu.dot_dimension_numbers<[1], [1], [0], [0], [0, 0, 1, 0], [], []>} : vector<16x8xbf16>, vector<16x8xbf16>, vector<16x16xf32> -> vector<16x16xf32>
    %224 = arith.addf %223, %6 : vector<16x16xf32>
    %cst_65 = arith.constant dense<0xFF800000> : vector<16xf32>
    %225 = vector.multi_reduction <maximumf>, %224, %cst_65 [1] : vector<16x16xf32> to vector<16xf32>
    %226 = vector.shape_cast %225 : vector<16xf32> to vector<16x1xf32>
    %227 = vector.broadcast %226 : vector<16x1xf32> to vector<16x16xf32>
    %228 = arith.subf %224, %227 : vector<16x16xf32>
    %229 = math.exp %228 : vector<16x16xf32>
    %cst_66 = arith.constant dense<0.000000e+00> : vector<16xf32>
    %230 = vector.multi_reduction <add>, %229, %cst_66 [1] : vector<16x16xf32> to vector<16xf32>
    %231 = vector.shape_cast %230 : vector<16xf32> to vector<16x1xf32>
    %232 = tpu.reciprocal %231 {approx = true} : vector<16x1xf32> -> vector<16x1xf32>
    %233 = vector.broadcast %232 : vector<16x1xf32> to vector<16x16xf32>
    %234 = arith.mulf %229, %233 : vector<16x16xf32>
    %235 = vector.extract_strided_slice %158 {offsets = [0, 24], sizes = [16, 8], strides = [1, 1]} : vector<16x32xf32> to vector<16x8xf32>
    %236 = arith.truncf %234 : vector<16x16xf32> to vector<16x16xbf16>
    %237 = arith.truncf %235 : vector<16x8xf32> to vector<16x8xbf16>
    %cst_67 = arith.constant dense<0.000000e+00> : vector<16x8xf32>
    %238 = tpu.matmul %236, %237, %cst_67 {dimension_numbers = #tpu.dot_dimension_numbers<[1], [0], [0], [1], [0, 0, 1, 1], [], []>} : vector<16x16xbf16>, vector<16x8xbf16>, vector<16x8xf32> -> vector<16x8xf32>
    %239 = tpu.concatenate %178, %198, %218, %238 in 1 : vector<16x8xf32>, vector<16x8xf32>, vector<16x8xf32>, vector<16x8xf32> -> vector<16x32xf32>
    %240 = arith.truncf %239 : vector<16x32xf32> to vector<16x32xbf16>
    %cst_68 = arith.constant dense<0.000000e+00> : vector<16x32xf32>
    %241 = tpu.matmul %240, %153, %cst_68 {dimension_numbers = #tpu.dot_dimension_numbers<[1], [0], [0], [1], [0, 0, 1, 1], [], []>} : vector<16x32xbf16>, vector<32x32xbf16>, vector<16x32xf32> -> vector<16x32xf32>
    %242 = arith.addf %136, %241 : vector<16x32xf32>
    %c3 = arith.constant 3 : index
    %c0_69 = arith.constant 0 : index
    %243 = vector.load %arg7[%c3, %c0_69] : memref<12x32xf32, #tpu.memory_space<vmem>>, vector<1x32xf32>
    %244 = arith.mulf %242, %242 : vector<16x32xf32>
    %cst_70 = arith.constant dense<0.000000e+00> : vector<16xf32>
    %245 = vector.multi_reduction <add>, %244, %cst_70 [1] : vector<16x32xf32> to vector<16xf32>
    %246 = vector.shape_cast %245 : vector<16xf32> to vector<16x1xf32>
    %cst_71 = arith.constant 3.200000e+01 : f32
    %247 = vector.broadcast %cst_71 : f32 to vector<16x1xf32>
    %248 = arith.divf %246, %247 : vector<16x1xf32>
    %cst_72 = arith.constant 9.99999997E-7 : f32
    %249 = vector.broadcast %cst_72 : f32 to vector<16x1xf32>
    %250 = arith.addf %248, %249 : vector<16x1xf32>
    %251 = math.rsqrt %250 : vector<16x1xf32>
    %252 = vector.broadcast %251 : vector<16x1xf32> to vector<16x32xf32>
    %253 = arith.mulf %242, %252 : vector<16x32xf32>
    %254 = vector.broadcast %243 : vector<1x32xf32> to vector<16x32xf32>
    %255 = arith.mulf %253, %254 : vector<16x32xf32>
    %256 = vector.extract_strided_slice %138 {offsets = [0, 128], sizes = [32, 64], strides = [1, 1]} : vector<32x256xbf16> to vector<32x64xbf16>
    %257 = arith.truncf %255 : vector<16x32xf32> to vector<16x32xbf16>
    %cst_73 = arith.constant dense<0.000000e+00> : vector<16x64xf32>
    %258 = tpu.matmul %257, %256, %cst_73 {dimension_numbers = #tpu.dot_dimension_numbers<[1], [0], [0], [1], [0, 0, 1, 1], [], []>} : vector<16x32xbf16>, vector<32x64xbf16>, vector<16x64xf32> -> vector<16x64xf32>
    %cst_74 = arith.constant 0.000000e+00 : f32
    %259 = vector.broadcast %cst_74 : f32 to vector<16x64xf32>
    %260 = arith.maximumf %258, %259 : vector<16x64xf32>
    %261 = vector.extract_strided_slice %138 {offsets = [0, 192], sizes = [32, 64], strides = [1, 1]} : vector<32x256xbf16> to vector<32x64xbf16>
    %262 = arith.truncf %260 : vector<16x64xf32> to vector<16x64xbf16>
    %cst_75 = arith.constant dense<0.000000e+00> : vector<16x32xf32>
    %263 = tpu.matmul %262, %261, %cst_75 {dimension_numbers = #tpu.dot_dimension_numbers<[1], [1], [0], [0], [0, 0, 1, 0], [], []>} : vector<16x64xbf16>, vector<32x64xbf16>, vector<16x32xf32> -> vector<16x32xf32>
    %264 = arith.addf %242, %263 : vector<16x32xf32>
    %c4 = arith.constant 4 : index
    %c0_76 = arith.constant 0 : index
    %265 = vector.load %arg7[%c4, %c0_76] : memref<12x32xf32, #tpu.memory_space<vmem>>, vector<1x32xf32>
    %266 = arith.mulf %264, %264 : vector<16x32xf32>
    %cst_77 = arith.constant dense<0.000000e+00> : vector<16xf32>
    %267 = vector.multi_reduction <add>, %266, %cst_77 [1] : vector<16x32xf32> to vector<16xf32>
    %268 = vector.shape_cast %267 : vector<16xf32> to vector<16x1xf32>
    %cst_78 = arith.constant 3.200000e+01 : f32
    %269 = vector.broadcast %cst_78 : f32 to vector<16x1xf32>
    %270 = arith.divf %268, %269 : vector<16x1xf32>
    %cst_79 = arith.constant 9.99999997E-7 : f32
    %271 = vector.broadcast %cst_79 : f32 to vector<16x1xf32>
    %272 = arith.addf %270, %271 : vector<16x1xf32>
    %273 = math.rsqrt %272 : vector<16x1xf32>
    %274 = vector.broadcast %273 : vector<16x1xf32> to vector<16x32xf32>
    %275 = arith.mulf %264, %274 : vector<16x32xf32>
    %276 = vector.broadcast %265 : vector<1x32xf32> to vector<16x32xf32>
    %277 = arith.mulf %275, %276 : vector<16x32xf32>
    %c0_80 = arith.constant 0 : index
    %c0_81 = arith.constant 0 : index
    %278 = vector.load %arg12[%c0_80, %c0_81] : memref<16x32xf32, #tpu.memory_space<vmem>>, vector<16x32xf32>
    tpu.vector_store %arg12[%c0_80, %c0_81], %277 {strides = array<i32>} : memref<16x32xf32, #tpu.memory_space<vmem>>, vector<16x32xf32>,
    %c0_82 = arith.constant 0 : index
    %c0_83 = arith.constant 0 : index
    %279 = vector.load %arg3[%c0_82, %c0_83] : memref<12x32xf32, #tpu.memory_space<vmem>>, vector<12x32xf32>
    %c0_84 = arith.constant 0 : index
    %c0_85 = arith.constant 0 : index
    %c0_86 = arith.constant 0 : index
    %280 = vector.load %arg9[%c0_84, %c0_85, %c0_86] : memref<2x32x384xbf16, #tpu.memory_space<vmem>>, vector<1x32x384xbf16>
    %281 = vector.shape_cast %280 : vector<1x32x384xbf16> to vector<32x384xbf16>
    %c5 = arith.constant 5 : index
    %c0_87 = arith.constant 0 : index
    %282 = vector.load %arg7[%c5, %c0_87] : memref<12x32xf32, #tpu.memory_space<vmem>>, vector<1x32xf32>
    %283 = arith.mulf %279, %279 : vector<12x32xf32>
    %cst_88 = arith.constant dense<0.000000e+00> : vector<12xf32>
    %284 = vector.multi_reduction <add>, %283, %cst_88 [1] : vector<12x32xf32> to vector<12xf32>
    %285 = vector.shape_cast %284 : vector<12xf32> to vector<12x1xf32>
    %cst_89 = arith.constant 3.200000e+01 : f32
    %286 = vector.broadcast %cst_89 : f32 to vector<12x1xf32>
    %287 = arith.divf %285, %286 : vector<12x1xf32>
    %cst_90 = arith.constant 9.99999997E-7 : f32
    %288 = vector.broadcast %cst_90 : f32 to vector<12x1xf32>
    %289 = arith.addf %287, %288 : vector<12x1xf32>
    %290 = math.rsqrt %289 : vector<12x1xf32>
    %291 = vector.broadcast %290 : vector<12x1xf32> to vector<12x32xf32>
    %292 = arith.mulf %279, %291 : vector<12x32xf32>
    %293 = vector.broadcast %282 : vector<1x32xf32> to vector<12x32xf32>
    %294 = arith.mulf %292, %293 : vector<12x32xf32>
    %295 = vector.extract_strided_slice %281 {offsets = [0, 0], sizes = [32, 96], strides = [1, 1]} : vector<32x384xbf16> to vector<32x96xbf16>
    %296 = vector.extract_strided_slice %281 {offsets = [0, 96], sizes = [32, 32], strides = [1, 1]} : vector<32x384xbf16> to vector<32x32xbf16>
    %297 = arith.truncf %294 : vector<12x32xf32> to vector<12x32xbf16>
    %cst_91 = arith.constant dense<0.000000e+00> : vector<12x96xf32>
    %298 = tpu.matmul %297, %295, %cst_91 {dimension_numbers = #tpu.dot_dimension_numbers<[1], [0], [0], [1], [0, 0, 1, 1], [], []>} : vector<12x32xbf16>, vector<32x96xbf16>, vector<12x96xf32> -> vector<12x96xf32>
    %299 = vector.extract_strided_slice %298 {offsets = [0, 0], sizes = [12, 32], strides = [1, 1]} : vector<12x96xf32> to vector<12x32xf32>
    %300 = vector.extract_strided_slice %298 {offsets = [0, 32], sizes = [12, 32], strides = [1, 1]} : vector<12x96xf32> to vector<12x32xf32>
    %301 = vector.extract_strided_slice %298 {offsets = [0, 64], sizes = [12, 32], strides = [1, 1]} : vector<12x96xf32> to vector<12x32xf32>
    %302 = vector.extract_strided_slice %299 {offsets = [0, 0], sizes = [12, 8], strides = [1, 1]} : vector<12x32xf32> to vector<12x8xf32>
    %303 = vector.extract_strided_slice %300 {offsets = [0, 0], sizes = [12, 8], strides = [1, 1]} : vector<12x32xf32> to vector<12x8xf32>
    %304 = arith.truncf %302 : vector<12x8xf32> to vector<12x8xbf16>
    %305 = arith.truncf %303 : vector<12x8xf32> to vector<12x8xbf16>
    %cst_92 = arith.constant dense<0.000000e+00> : vector<12x12xf32>
    %306 = tpu.matmul %304, %305, %cst_92 {dimension_numbers = #tpu.dot_dimension_numbers<[1], [1], [0], [0], [0, 0, 1, 0], [], []>} : vector<12x8xbf16>, vector<12x8xbf16>, vector<12x12xf32> -> vector<12x12xf32>
    %307 = arith.addf %306, %8 : vector<12x12xf32>
    %cst_93 = arith.constant dense<0xFF800000> : vector<12xf32>
    %308 = vector.multi_reduction <maximumf>, %307, %cst_93 [1] : vector<12x12xf32> to vector<12xf32>
    %309 = vector.shape_cast %308 : vector<12xf32> to vector<12x1xf32>
    %310 = vector.broadcast %309 : vector<12x1xf32> to vector<12x12xf32>
    %311 = arith.subf %307, %310 : vector<12x12xf32>
    %312 = math.exp %311 : vector<12x12xf32>
    %cst_94 = arith.constant dense<0.000000e+00> : vector<12xf32>
    %313 = vector.multi_reduction <add>, %312, %cst_94 [1] : vector<12x12xf32> to vector<12xf32>
    %314 = vector.shape_cast %313 : vector<12xf32> to vector<12x1xf32>
    %315 = tpu.reciprocal %314 {approx = true} : vector<12x1xf32> -> vector<12x1xf32>
    %316 = vector.broadcast %315 : vector<12x1xf32> to vector<12x12xf32>
    %317 = arith.mulf %312, %316 : vector<12x12xf32>
    %318 = vector.extract_strided_slice %301 {offsets = [0, 0], sizes = [12, 8], strides = [1, 1]} : vector<12x32xf32> to vector<12x8xf32>
    %319 = arith.truncf %317 : vector<12x12xf32> to vector<12x12xbf16>
    %320 = arith.truncf %318 : vector<12x8xf32> to vector<12x8xbf16>
    %cst_95 = arith.constant dense<0.000000e+00> : vector<12x8xf32>
    %321 = tpu.matmul %319, %320, %cst_95 {dimension_numbers = #tpu.dot_dimension_numbers<[1], [0], [0], [1], [0, 0, 1, 1], [], []>} : vector<12x12xbf16>, vector<12x8xbf16>, vector<12x8xf32> -> vector<12x8xf32>
    %322 = vector.extract_strided_slice %299 {offsets = [0, 8], sizes = [12, 8], strides = [1, 1]} : vector<12x32xf32> to vector<12x8xf32>
    %323 = vector.extract_strided_slice %300 {offsets = [0, 8], sizes = [12, 8], strides = [1, 1]} : vector<12x32xf32> to vector<12x8xf32>
    %324 = arith.truncf %322 : vector<12x8xf32> to vector<12x8xbf16>
    %325 = arith.truncf %323 : vector<12x8xf32> to vector<12x8xbf16>
    %cst_96 = arith.constant dense<0.000000e+00> : vector<12x12xf32>
    %326 = tpu.matmul %324, %325, %cst_96 {dimension_numbers = #tpu.dot_dimension_numbers<[1], [1], [0], [0], [0, 0, 1, 0], [], []>} : vector<12x8xbf16>, vector<12x8xbf16>, vector<12x12xf32> -> vector<12x12xf32>
    %327 = arith.addf %326, %8 : vector<12x12xf32>
    %cst_97 = arith.constant dense<0xFF800000> : vector<12xf32>
    %328 = vector.multi_reduction <maximumf>, %327, %cst_97 [1] : vector<12x12xf32> to vector<12xf32>
    %329 = vector.shape_cast %328 : vector<12xf32> to vector<12x1xf32>
    %330 = vector.broadcast %329 : vector<12x1xf32> to vector<12x12xf32>
    %331 = arith.subf %327, %330 : vector<12x12xf32>
    %332 = math.exp %331 : vector<12x12xf32>
    %cst_98 = arith.constant dense<0.000000e+00> : vector<12xf32>
    %333 = vector.multi_reduction <add>, %332, %cst_98 [1] : vector<12x12xf32> to vector<12xf32>
    %334 = vector.shape_cast %333 : vector<12xf32> to vector<12x1xf32>
    %335 = tpu.reciprocal %334 {approx = true} : vector<12x1xf32> -> vector<12x1xf32>
    %336 = vector.broadcast %335 : vector<12x1xf32> to vector<12x12xf32>
    %337 = arith.mulf %332, %336 : vector<12x12xf32>
    %338 = vector.extract_strided_slice %301 {offsets = [0, 8], sizes = [12, 8], strides = [1, 1]} : vector<12x32xf32> to vector<12x8xf32>
    %339 = arith.truncf %337 : vector<12x12xf32> to vector<12x12xbf16>
    %340 = arith.truncf %338 : vector<12x8xf32> to vector<12x8xbf16>
    %cst_99 = arith.constant dense<0.000000e+00> : vector<12x8xf32>
    %341 = tpu.matmul %339, %340, %cst_99 {dimension_numbers = #tpu.dot_dimension_numbers<[1], [0], [0], [1], [0, 0, 1, 1], [], []>} : vector<12x12xbf16>, vector<12x8xbf16>, vector<12x8xf32> -> vector<12x8xf32>
    %342 = vector.extract_strided_slice %299 {offsets = [0, 16], sizes = [12, 8], strides = [1, 1]} : vector<12x32xf32> to vector<12x8xf32>
    %343 = vector.extract_strided_slice %300 {offsets = [0, 16], sizes = [12, 8], strides = [1, 1]} : vector<12x32xf32> to vector<12x8xf32>
    %344 = arith.truncf %342 : vector<12x8xf32> to vector<12x8xbf16>
    %345 = arith.truncf %343 : vector<12x8xf32> to vector<12x8xbf16>
    %cst_100 = arith.constant dense<0.000000e+00> : vector<12x12xf32>
    %346 = tpu.matmul %344, %345, %cst_100 {dimension_numbers = #tpu.dot_dimension_numbers<[1], [1], [0], [0], [0, 0, 1, 0], [], []>} : vector<12x8xbf16>, vector<12x8xbf16>, vector<12x12xf32> -> vector<12x12xf32>
    %347 = arith.addf %346, %8 : vector<12x12xf32>
    %cst_101 = arith.constant dense<0xFF800000> : vector<12xf32>
    %348 = vector.multi_reduction <maximumf>, %347, %cst_101 [1] : vector<12x12xf32> to vector<12xf32>
    %349 = vector.shape_cast %348 : vector<12xf32> to vector<12x1xf32>
    %350 = vector.broadcast %349 : vector<12x1xf32> to vector<12x12xf32>
    %351 = arith.subf %347, %350 : vector<12x12xf32>
    %352 = math.exp %351 : vector<12x12xf32>
    %cst_102 = arith.constant dense<0.000000e+00> : vector<12xf32>
    %353 = vector.multi_reduction <add>, %352, %cst_102 [1] : vector<12x12xf32> to vector<12xf32>
    %354 = vector.shape_cast %353 : vector<12xf32> to vector<12x1xf32>
    %355 = tpu.reciprocal %354 {approx = true} : vector<12x1xf32> -> vector<12x1xf32>
    %356 = vector.broadcast %355 : vector<12x1xf32> to vector<12x12xf32>
    %357 = arith.mulf %352, %356 : vector<12x12xf32>
    %358 = vector.extract_strided_slice %301 {offsets = [0, 16], sizes = [12, 8], strides = [1, 1]} : vector<12x32xf32> to vector<12x8xf32>
    %359 = arith.truncf %357 : vector<12x12xf32> to vector<12x12xbf16>
    %360 = arith.truncf %358 : vector<12x8xf32> to vector<12x8xbf16>
    %cst_103 = arith.constant dense<0.000000e+00> : vector<12x8xf32>
    %361 = tpu.matmul %359, %360, %cst_103 {dimension_numbers = #tpu.dot_dimension_numbers<[1], [0], [0], [1], [0, 0, 1, 1], [], []>} : vector<12x12xbf16>, vector<12x8xbf16>, vector<12x8xf32> -> vector<12x8xf32>
    %362 = vector.extract_strided_slice %299 {offsets = [0, 24], sizes = [12, 8], strides = [1, 1]} : vector<12x32xf32> to vector<12x8xf32>
    %363 = vector.extract_strided_slice %300 {offsets = [0, 24], sizes = [12, 8], strides = [1, 1]} : vector<12x32xf32> to vector<12x8xf32>
    %364 = arith.truncf %362 : vector<12x8xf32> to vector<12x8xbf16>
    %365 = arith.truncf %363 : vector<12x8xf32> to vector<12x8xbf16>
    %cst_104 = arith.constant dense<0.000000e+00> : vector<12x12xf32>
    %366 = tpu.matmul %364, %365, %cst_104 {dimension_numbers = #tpu.dot_dimension_numbers<[1], [1], [0], [0], [0, 0, 1, 0], [], []>} : vector<12x8xbf16>, vector<12x8xbf16>, vector<12x12xf32> -> vector<12x12xf32>
    %367 = arith.addf %366, %8 : vector<12x12xf32>
    %cst_105 = arith.constant dense<0xFF800000> : vector<12xf32>
    %368 = vector.multi_reduction <maximumf>, %367, %cst_105 [1] : vector<12x12xf32> to vector<12xf32>
    %369 = vector.shape_cast %368 : vector<12xf32> to vector<12x1xf32>
    %370 = vector.broadcast %369 : vector<12x1xf32> to vector<12x12xf32>
    %371 = arith.subf %367, %370 : vector<12x12xf32>
    %372 = math.exp %371 : vector<12x12xf32>
    %cst_106 = arith.constant dense<0.000000e+00> : vector<12xf32>
    %373 = vector.multi_reduction <add>, %372, %cst_106 [1] : vector<12x12xf32> to vector<12xf32>
    %374 = vector.shape_cast %373 : vector<12xf32> to vector<12x1xf32>
    %375 = tpu.reciprocal %374 {approx = true} : vector<12x1xf32> -> vector<12x1xf32>
    %376 = vector.broadcast %375 : vector<12x1xf32> to vector<12x12xf32>
    %377 = arith.mulf %372, %376 : vector<12x12xf32>
    %378 = vector.extract_strided_slice %301 {offsets = [0, 24], sizes = [12, 8], strides = [1, 1]} : vector<12x32xf32> to vector<12x8xf32>
    %379 = arith.truncf %377 : vector<12x12xf32> to vector<12x12xbf16>
    %380 = arith.truncf %378 : vector<12x8xf32> to vector<12x8xbf16>
    %cst_107 = arith.constant dense<0.000000e+00> : vector<12x8xf32>
    %381 = tpu.matmul %379, %380, %cst_107 {dimension_numbers = #tpu.dot_dimension_numbers<[1], [0], [0], [1], [0, 0, 1, 1], [], []>} : vector<12x12xbf16>, vector<12x8xbf16>, vector<12x8xf32> -> vector<12x8xf32>
    %382 = tpu.concatenate %321, %341, %361, %381 in 1 : vector<12x8xf32>, vector<12x8xf32>, vector<12x8xf32>, vector<12x8xf32> -> vector<12x32xf32>
    %383 = arith.truncf %382 : vector<12x32xf32> to vector<12x32xbf16>
    %cst_108 = arith.constant dense<0.000000e+00> : vector<12x32xf32>
    %384 = tpu.matmul %383, %296, %cst_108 {dimension_numbers = #tpu.dot_dimension_numbers<[1], [0], [0], [1], [0, 0, 1, 1], [], []>} : vector<12x32xbf16>, vector<32x32xbf16>, vector<12x32xf32> -> vector<12x32xf32>
    %385 = arith.addf %279, %384 : vector<12x32xf32>
    %c6 = arith.constant 6 : index
    %c0_109 = arith.constant 0 : index
    %386 = vector.load %arg7[%c6, %c0_109] : memref<12x32xf32, #tpu.memory_space<vmem>>, vector<1x32xf32>
    %387 = arith.mulf %385, %385 : vector<12x32xf32>
    %cst_110 = arith.constant dense<0.000000e+00> : vector<12xf32>
    %388 = vector.multi_reduction <add>, %387, %cst_110 [1] : vector<12x32xf32> to vector<12xf32>
    %389 = vector.shape_cast %388 : vector<12xf32> to vector<12x1xf32>
    %cst_111 = arith.constant 3.200000e+01 : f32
    %390 = vector.broadcast %cst_111 : f32 to vector<12x1xf32>
    %391 = arith.divf %389, %390 : vector<12x1xf32>
    %cst_112 = arith.constant 9.99999997E-7 : f32
    %392 = vector.broadcast %cst_112 : f32 to vector<12x1xf32>
    %393 = arith.addf %391, %392 : vector<12x1xf32>
    %394 = math.rsqrt %393 : vector<12x1xf32>
    %395 = vector.broadcast %394 : vector<12x1xf32> to vector<12x32xf32>
    %396 = arith.mulf %385, %395 : vector<12x32xf32>
    %397 = vector.broadcast %386 : vector<1x32xf32> to vector<12x32xf32>
    %398 = arith.mulf %396, %397 : vector<12x32xf32>
    %399 = vector.extract_strided_slice %281 {offsets = [0, 256], sizes = [32, 32], strides = [1, 1]} : vector<32x384xbf16> to vector<32x32xbf16>
    %400 = vector.extract_strided_slice %281 {offsets = [0, 288], sizes = [32, 64], strides = [1, 1]} : vector<32x384xbf16> to vector<32x64xbf16>
    %401 = vector.extract_strided_slice %281 {offsets = [0, 352], sizes = [32, 32], strides = [1, 1]} : vector<32x384xbf16> to vector<32x32xbf16>
    %402 = arith.truncf %398 : vector<12x32xf32> to vector<12x32xbf16>
    %cst_113 = arith.constant dense<0.000000e+00> : vector<12x32xf32>
    %403 = tpu.matmul %402, %399, %cst_113 {dimension_numbers = #tpu.dot_dimension_numbers<[1], [0], [0], [1], [0, 0, 1, 1], [], []>} : vector<12x32xbf16>, vector<32x32xbf16>, vector<12x32xf32> -> vector<12x32xf32>
    %404 = arith.truncf %277 : vector<16x32xf32> to vector<16x32xbf16>
    %cst_114 = arith.constant dense<0.000000e+00> : vector<16x64xf32>
    %405 = tpu.matmul %404, %400, %cst_114 {dimension_numbers = #tpu.dot_dimension_numbers<[1], [0], [0], [1], [0, 0, 1, 1], [], []>} : vector<16x32xbf16>, vector<32x64xbf16>, vector<16x64xf32> -> vector<16x64xf32>
    %406 = vector.extract_strided_slice %405 {offsets = [0, 0], sizes = [16, 32], strides = [1, 1]} : vector<16x64xf32> to vector<16x32xf32>
    %407 = vector.extract_strided_slice %405 {offsets = [0, 32], sizes = [16, 32], strides = [1, 1]} : vector<16x64xf32> to vector<16x32xf32>
    %408 = vector.extract_strided_slice %403 {offsets = [0, 0], sizes = [12, 8], strides = [1, 1]} : vector<12x32xf32> to vector<12x8xf32>
    %409 = vector.extract_strided_slice %406 {offsets = [0, 0], sizes = [16, 8], strides = [1, 1]} : vector<16x32xf32> to vector<16x8xf32>
    %410 = arith.truncf %408 : vector<12x8xf32> to vector<12x8xbf16>
    %411 = arith.truncf %409 : vector<16x8xf32> to vector<16x8xbf16>
    %cst_115 = arith.constant dense<0.000000e+00> : vector<12x16xf32>
    %412 = tpu.matmul %410, %411, %cst_115 {dimension_numbers = #tpu.dot_dimension_numbers<[1], [1], [0], [0], [0, 0, 1, 0], [], []>} : vector<12x8xbf16>, vector<16x8xbf16>, vector<12x16xf32> -> vector<12x16xf32>
    %413 = arith.addf %412, %7 : vector<12x16xf32>
    %cst_116 = arith.constant dense<0xFF800000> : vector<12xf32>
    %414 = vector.multi_reduction <maximumf>, %413, %cst_116 [1] : vector<12x16xf32> to vector<12xf32>
    %415 = vector.shape_cast %414 : vector<12xf32> to vector<12x1xf32>
    %416 = vector.broadcast %415 : vector<12x1xf32> to vector<12x16xf32>
    %417 = arith.subf %413, %416 : vector<12x16xf32>
    %418 = math.exp %417 : vector<12x16xf32>
    %cst_117 = arith.constant dense<0.000000e+00> : vector<12xf32>
    %419 = vector.multi_reduction <add>, %418, %cst_117 [1] : vector<12x16xf32> to vector<12xf32>
    %420 = vector.shape_cast %419 : vector<12xf32> to vector<12x1xf32>
    %421 = tpu.reciprocal %420 {approx = true} : vector<12x1xf32> -> vector<12x1xf32>
    %422 = vector.broadcast %421 : vector<12x1xf32> to vector<12x16xf32>
    %423 = arith.mulf %418, %422 : vector<12x16xf32>
    %424 = vector.extract_strided_slice %407 {offsets = [0, 0], sizes = [16, 8], strides = [1, 1]} : vector<16x32xf32> to vector<16x8xf32>
    %425 = arith.truncf %423 : vector<12x16xf32> to vector<12x16xbf16>
    %426 = arith.truncf %424 : vector<16x8xf32> to vector<16x8xbf16>
    %cst_118 = arith.constant dense<0.000000e+00> : vector<12x8xf32>
    %427 = tpu.matmul %425, %426, %cst_118 {dimension_numbers = #tpu.dot_dimension_numbers<[1], [0], [0], [1], [0, 0, 1, 1], [], []>} : vector<12x16xbf16>, vector<16x8xbf16>, vector<12x8xf32> -> vector<12x8xf32>
    %428 = vector.extract_strided_slice %403 {offsets = [0, 8], sizes = [12, 8], strides = [1, 1]} : vector<12x32xf32> to vector<12x8xf32>
    %429 = vector.extract_strided_slice %406 {offsets = [0, 8], sizes = [16, 8], strides = [1, 1]} : vector<16x32xf32> to vector<16x8xf32>
    %430 = arith.truncf %428 : vector<12x8xf32> to vector<12x8xbf16>
    %431 = arith.truncf %429 : vector<16x8xf32> to vector<16x8xbf16>
    %cst_119 = arith.constant dense<0.000000e+00> : vector<12x16xf32>
    %432 = tpu.matmul %430, %431, %cst_119 {dimension_numbers = #tpu.dot_dimension_numbers<[1], [1], [0], [0], [0, 0, 1, 0], [], []>} : vector<12x8xbf16>, vector<16x8xbf16>, vector<12x16xf32> -> vector<12x16xf32>
    %433 = arith.addf %432, %7 : vector<12x16xf32>
    %cst_120 = arith.constant dense<0xFF800000> : vector<12xf32>
    %434 = vector.multi_reduction <maximumf>, %433, %cst_120 [1] : vector<12x16xf32> to vector<12xf32>
    %435 = vector.shape_cast %434 : vector<12xf32> to vector<12x1xf32>
    %436 = vector.broadcast %435 : vector<12x1xf32> to vector<12x16xf32>
    %437 = arith.subf %433, %436 : vector<12x16xf32>
    %438 = math.exp %437 : vector<12x16xf32>
    %cst_121 = arith.constant dense<0.000000e+00> : vector<12xf32>
    %439 = vector.multi_reduction <add>, %438, %cst_121 [1] : vector<12x16xf32> to vector<12xf32>
    %440 = vector.shape_cast %439 : vector<12xf32> to vector<12x1xf32>
    %441 = tpu.reciprocal %440 {approx = true} : vector<12x1xf32> -> vector<12x1xf32>
    %442 = vector.broadcast %441 : vector<12x1xf32> to vector<12x16xf32>
    %443 = arith.mulf %438, %442 : vector<12x16xf32>
    %444 = vector.extract_strided_slice %407 {offsets = [0, 8], sizes = [16, 8], strides = [1, 1]} : vector<16x32xf32> to vector<16x8xf32>
    %445 = arith.truncf %443 : vector<12x16xf32> to vector<12x16xbf16>
    %446 = arith.truncf %444 : vector<16x8xf32> to vector<16x8xbf16>
    %cst_122 = arith.constant dense<0.000000e+00> : vector<12x8xf32>
    %447 = tpu.matmul %445, %446, %cst_122 {dimension_numbers = #tpu.dot_dimension_numbers<[1], [0], [0], [1], [0, 0, 1, 1], [], []>} : vector<12x16xbf16>, vector<16x8xbf16>, vector<12x8xf32> -> vector<12x8xf32>
    %448 = vector.extract_strided_slice %403 {offsets = [0, 16], sizes = [12, 8], strides = [1, 1]} : vector<12x32xf32> to vector<12x8xf32>
    %449 = vector.extract_strided_slice %406 {offsets = [0, 16], sizes = [16, 8], strides = [1, 1]} : vector<16x32xf32> to vector<16x8xf32>
    %450 = arith.truncf %448 : vector<12x8xf32> to vector<12x8xbf16>
    %451 = arith.truncf %449 : vector<16x8xf32> to vector<16x8xbf16>
    %cst_123 = arith.constant dense<0.000000e+00> : vector<12x16xf32>
    %452 = tpu.matmul %450, %451, %cst_123 {dimension_numbers = #tpu.dot_dimension_numbers<[1], [1], [0], [0], [0, 0, 1, 0], [], []>} : vector<12x8xbf16>, vector<16x8xbf16>, vector<12x16xf32> -> vector<12x16xf32>
    %453 = arith.addf %452, %7 : vector<12x16xf32>
    %cst_124 = arith.constant dense<0xFF800000> : vector<12xf32>
    %454 = vector.multi_reduction <maximumf>, %453, %cst_124 [1] : vector<12x16xf32> to vector<12xf32>
    %455 = vector.shape_cast %454 : vector<12xf32> to vector<12x1xf32>
    %456 = vector.broadcast %455 : vector<12x1xf32> to vector<12x16xf32>
    %457 = arith.subf %453, %456 : vector<12x16xf32>
    %458 = math.exp %457 : vector<12x16xf32>
    %cst_125 = arith.constant dense<0.000000e+00> : vector<12xf32>
    %459 = vector.multi_reduction <add>, %458, %cst_125 [1] : vector<12x16xf32> to vector<12xf32>
    %460 = vector.shape_cast %459 : vector<12xf32> to vector<12x1xf32>
    %461 = tpu.reciprocal %460 {approx = true} : vector<12x1xf32> -> vector<12x1xf32>
    %462 = vector.broadcast %461 : vector<12x1xf32> to vector<12x16xf32>
    %463 = arith.mulf %458, %462 : vector<12x16xf32>
    %464 = vector.extract_strided_slice %407 {offsets = [0, 16], sizes = [16, 8], strides = [1, 1]} : vector<16x32xf32> to vector<16x8xf32>
    %465 = arith.truncf %463 : vector<12x16xf32> to vector<12x16xbf16>
    %466 = arith.truncf %464 : vector<16x8xf32> to vector<16x8xbf16>
    %cst_126 = arith.constant dense<0.000000e+00> : vector<12x8xf32>
    %467 = tpu.matmul %465, %466, %cst_126 {dimension_numbers = #tpu.dot_dimension_numbers<[1], [0], [0], [1], [0, 0, 1, 1], [], []>} : vector<12x16xbf16>, vector<16x8xbf16>, vector<12x8xf32> -> vector<12x8xf32>
    %468 = vector.extract_strided_slice %403 {offsets = [0, 24], sizes = [12, 8], strides = [1, 1]} : vector<12x32xf32> to vector<12x8xf32>
    %469 = vector.extract_strided_slice %406 {offsets = [0, 24], sizes = [16, 8], strides = [1, 1]} : vector<16x32xf32> to vector<16x8xf32>
    %470 = arith.truncf %468 : vector<12x8xf32> to vector<12x8xbf16>
    %471 = arith.truncf %469 : vector<16x8xf32> to vector<16x8xbf16>
    %cst_127 = arith.constant dense<0.000000e+00> : vector<12x16xf32>
    %472 = tpu.matmul %470, %471, %cst_127 {dimension_numbers = #tpu.dot_dimension_numbers<[1], [1], [0], [0], [0, 0, 1, 0], [], []>} : vector<12x8xbf16>, vector<16x8xbf16>, vector<12x16xf32> -> vector<12x16xf32>
    %473 = arith.addf %472, %7 : vector<12x16xf32>
    %cst_128 = arith.constant dense<0xFF800000> : vector<12xf32>
    %474 = vector.multi_reduction <maximumf>, %473, %cst_128 [1] : vector<12x16xf32> to vector<12xf32>
    %475 = vector.shape_cast %474 : vector<12xf32> to vector<12x1xf32>
    %476 = vector.broadcast %475 : vector<12x1xf32> to vector<12x16xf32>
    %477 = arith.subf %473, %476 : vector<12x16xf32>
    %478 = math.exp %477 : vector<12x16xf32>
    %cst_129 = arith.constant dense<0.000000e+00> : vector<12xf32>
    %479 = vector.multi_reduction <add>, %478, %cst_129 [1] : vector<12x16xf32> to vector<12xf32>
    %480 = vector.shape_cast %479 : vector<12xf32> to vector<12x1xf32>
    %481 = tpu.reciprocal %480 {approx = true} : vector<12x1xf32> -> vector<12x1xf32>
    %482 = vector.broadcast %481 : vector<12x1xf32> to vector<12x16xf32>
    %483 = arith.mulf %478, %482 : vector<12x16xf32>
    %484 = vector.extract_strided_slice %407 {offsets = [0, 24], sizes = [16, 8], strides = [1, 1]} : vector<16x32xf32> to vector<16x8xf32>
    %485 = arith.truncf %483 : vector<12x16xf32> to vector<12x16xbf16>
    %486 = arith.truncf %484 : vector<16x8xf32> to vector<16x8xbf16>
    %cst_130 = arith.constant dense<0.000000e+00> : vector<12x8xf32>
    %487 = tpu.matmul %485, %486, %cst_130 {dimension_numbers = #tpu.dot_dimension_numbers<[1], [0], [0], [1], [0, 0, 1, 1], [], []>} : vector<12x16xbf16>, vector<16x8xbf16>, vector<12x8xf32> -> vector<12x8xf32>
    %488 = tpu.concatenate %427, %447, %467, %487 in 1 : vector<12x8xf32>, vector<12x8xf32>, vector<12x8xf32>, vector<12x8xf32> -> vector<12x32xf32>
    %489 = arith.truncf %488 : vector<12x32xf32> to vector<12x32xbf16>
    %cst_131 = arith.constant dense<0.000000e+00> : vector<12x32xf32>
    %490 = tpu.matmul %489, %401, %cst_131 {dimension_numbers = #tpu.dot_dimension_numbers<[1], [0], [0], [1], [0, 0, 1, 1], [], []>} : vector<12x32xbf16>, vector<32x32xbf16>, vector<12x32xf32> -> vector<12x32xf32>
    %491 = arith.addf %385, %490 : vector<12x32xf32>
    %c7 = arith.constant 7 : index
    %c0_132 = arith.constant 0 : index
    %492 = vector.load %arg7[%c7, %c0_132] : memref<12x32xf32, #tpu.memory_space<vmem>>, vector<1x32xf32>
    %493 = arith.mulf %491, %491 : vector<12x32xf32>
    %cst_133 = arith.constant dense<0.000000e+00> : vector<12xf32>
    %494 = vector.multi_reduction <add>, %493, %cst_133 [1] : vector<12x32xf32> to vector<12xf32>
    %495 = vector.shape_cast %494 : vector<12xf32> to vector<12x1xf32>
    %cst_134 = arith.constant 3.200000e+01 : f32
    %496 = vector.broadcast %cst_134 : f32 to vector<12x1xf32>
    %497 = arith.divf %495, %496 : vector<12x1xf32>
    %cst_135 = arith.constant 9.99999997E-7 : f32
    %498 = vector.broadcast %cst_135 : f32 to vector<12x1xf32>
    %499 = arith.addf %497, %498 : vector<12x1xf32>
    %500 = math.rsqrt %499 : vector<12x1xf32>
    %501 = vector.broadcast %500 : vector<12x1xf32> to vector<12x32xf32>
    %502 = arith.mulf %491, %501 : vector<12x32xf32>
    %503 = vector.broadcast %492 : vector<1x32xf32> to vector<12x32xf32>
    %504 = arith.mulf %502, %503 : vector<12x32xf32>
    %505 = vector.extract_strided_slice %281 {offsets = [0, 128], sizes = [32, 64], strides = [1, 1]} : vector<32x384xbf16> to vector<32x64xbf16>
    %506 = arith.truncf %504 : vector<12x32xf32> to vector<12x32xbf16>
    %cst_136 = arith.constant dense<0.000000e+00> : vector<12x64xf32>
    %507 = tpu.matmul %506, %505, %cst_136 {dimension_numbers = #tpu.dot_dimension_numbers<[1], [0], [0], [1], [0, 0, 1, 1], [], []>} : vector<12x32xbf16>, vector<32x64xbf16>, vector<12x64xf32> -> vector<12x64xf32>
    %cst_137 = arith.constant 0.000000e+00 : f32
    %508 = vector.broadcast %cst_137 : f32 to vector<12x64xf32>
    %509 = arith.maximumf %507, %508 : vector<12x64xf32>
    %510 = vector.extract_strided_slice %281 {offsets = [0, 192], sizes = [32, 64], strides = [1, 1]} : vector<32x384xbf16> to vector<32x64xbf16>
    %511 = arith.truncf %509 : vector<12x64xf32> to vector<12x64xbf16>
    %cst_138 = arith.constant dense<0.000000e+00> : vector<12x32xf32>
    %512 = tpu.matmul %511, %510, %cst_138 {dimension_numbers = #tpu.dot_dimension_numbers<[1], [1], [0], [0], [0, 0, 1, 0], [], []>} : vector<12x64xbf16>, vector<32x64xbf16>, vector<12x32xf32> -> vector<12x32xf32>
    %513 = arith.addf %491, %512 : vector<12x32xf32>
    %c1_139 = arith.constant 1 : index
    %c0_140 = arith.constant 0 : index
    %c0_141 = arith.constant 0 : index
    %514 = vector.load %arg9[%c1_139, %c0_140, %c0_141] : memref<2x32x384xbf16, #tpu.memory_space<vmem>>, vector<1x32x384xbf16>
    %515 = vector.shape_cast %514 : vector<1x32x384xbf16> to vector<32x384xbf16>
    %c8 = arith.constant 8 : index
    %c0_142 = arith.constant 0 : index
    %516 = vector.load %arg7[%c8, %c0_142] : memref<12x32xf32, #tpu.memory_space<vmem>>, vector<1x32xf32>
    %517 = arith.mulf %513, %513 : vector<12x32xf32>
    %cst_143 = arith.constant dense<0.000000e+00> : vector<12xf32>
    %518 = vector.multi_reduction <add>, %517, %cst_143 [1] : vector<12x32xf32> to vector<12xf32>
    %519 = vector.shape_cast %518 : vector<12xf32> to vector<12x1xf32>
    %cst_144 = arith.constant 3.200000e+01 : f32
    %520 = vector.broadcast %cst_144 : f32 to vector<12x1xf32>
    %521 = arith.divf %519, %520 : vector<12x1xf32>
    %cst_145 = arith.constant 9.99999997E-7 : f32
    %522 = vector.broadcast %cst_145 : f32 to vector<12x1xf32>
    %523 = arith.addf %521, %522 : vector<12x1xf32>
    %524 = math.rsqrt %523 : vector<12x1xf32>
    %525 = vector.broadcast %524 : vector<12x1xf32> to vector<12x32xf32>
    %526 = arith.mulf %513, %525 : vector<12x32xf32>
    %527 = vector.broadcast %516 : vector<1x32xf32> to vector<12x32xf32>
    %528 = arith.mulf %526, %527 : vector<12x32xf32>
    %529 = vector.extract_strided_slice %515 {offsets = [0, 0], sizes = [32, 96], strides = [1, 1]} : vector<32x384xbf16> to vector<32x96xbf16>
    %530 = vector.extract_strided_slice %515 {offsets = [0, 96], sizes = [32, 32], strides = [1, 1]} : vector<32x384xbf16> to vector<32x32xbf16>
    %531 = arith.truncf %528 : vector<12x32xf32> to vector<12x32xbf16>
    %cst_146 = arith.constant dense<0.000000e+00> : vector<12x96xf32>
    %532 = tpu.matmul %531, %529, %cst_146 {dimension_numbers = #tpu.dot_dimension_numbers<[1], [0], [0], [1], [0, 0, 1, 1], [], []>} : vector<12x32xbf16>, vector<32x96xbf16>, vector<12x96xf32> -> vector<12x96xf32>
    %533 = vector.extract_strided_slice %532 {offsets = [0, 0], sizes = [12, 32], strides = [1, 1]} : vector<12x96xf32> to vector<12x32xf32>
    %534 = vector.extract_strided_slice %532 {offsets = [0, 32], sizes = [12, 32], strides = [1, 1]} : vector<12x96xf32> to vector<12x32xf32>
    %535 = vector.extract_strided_slice %532 {offsets = [0, 64], sizes = [12, 32], strides = [1, 1]} : vector<12x96xf32> to vector<12x32xf32>
    %536 = vector.extract_strided_slice %533 {offsets = [0, 0], sizes = [12, 8], strides = [1, 1]} : vector<12x32xf32> to vector<12x8xf32>
    %537 = vector.extract_strided_slice %534 {offsets = [0, 0], sizes = [12, 8], strides = [1, 1]} : vector<12x32xf32> to vector<12x8xf32>
    %538 = arith.truncf %536 : vector<12x8xf32> to vector<12x8xbf16>
    %539 = arith.truncf %537 : vector<12x8xf32> to vector<12x8xbf16>
    %cst_147 = arith.constant dense<0.000000e+00> : vector<12x12xf32>
    %540 = tpu.matmul %538, %539, %cst_147 {dimension_numbers = #tpu.dot_dimension_numbers<[1], [1], [0], [0], [0, 0, 1, 0], [], []>} : vector<12x8xbf16>, vector<12x8xbf16>, vector<12x12xf32> -> vector<12x12xf32>
    %541 = arith.addf %540, %8 : vector<12x12xf32>
    %cst_148 = arith.constant dense<0xFF800000> : vector<12xf32>
    %542 = vector.multi_reduction <maximumf>, %541, %cst_148 [1] : vector<12x12xf32> to vector<12xf32>
    %543 = vector.shape_cast %542 : vector<12xf32> to vector<12x1xf32>
    %544 = vector.broadcast %543 : vector<12x1xf32> to vector<12x12xf32>
    %545 = arith.subf %541, %544 : vector<12x12xf32>
    %546 = math.exp %545 : vector<12x12xf32>
    %cst_149 = arith.constant dense<0.000000e+00> : vector<12xf32>
    %547 = vector.multi_reduction <add>, %546, %cst_149 [1] : vector<12x12xf32> to vector<12xf32>
    %548 = vector.shape_cast %547 : vector<12xf32> to vector<12x1xf32>
    %549 = tpu.reciprocal %548 {approx = true} : vector<12x1xf32> -> vector<12x1xf32>
    %550 = vector.broadcast %549 : vector<12x1xf32> to vector<12x12xf32>
    %551 = arith.mulf %546, %550 : vector<12x12xf32>
    %552 = vector.extract_strided_slice %535 {offsets = [0, 0], sizes = [12, 8], strides = [1, 1]} : vector<12x32xf32> to vector<12x8xf32>
    %553 = arith.truncf %551 : vector<12x12xf32> to vector<12x12xbf16>
    %554 = arith.truncf %552 : vector<12x8xf32> to vector<12x8xbf16>
    %cst_150 = arith.constant dense<0.000000e+00> : vector<12x8xf32>
    %555 = tpu.matmul %553, %554, %cst_150 {dimension_numbers = #tpu.dot_dimension_numbers<[1], [0], [0], [1], [0, 0, 1, 1], [], []>} : vector<12x12xbf16>, vector<12x8xbf16>, vector<12x8xf32> -> vector<12x8xf32>
    %556 = vector.extract_strided_slice %533 {offsets = [0, 8], sizes = [12, 8], strides = [1, 1]} : vector<12x32xf32> to vector<12x8xf32>
    %557 = vector.extract_strided_slice %534 {offsets = [0, 8], sizes = [12, 8], strides = [1, 1]} : vector<12x32xf32> to vector<12x8xf32>
    %558 = arith.truncf %556 : vector<12x8xf32> to vector<12x8xbf16>
    %559 = arith.truncf %557 : vector<12x8xf32> to vector<12x8xbf16>
    %cst_151 = arith.constant dense<0.000000e+00> : vector<12x12xf32>
    %560 = tpu.matmul %558, %559, %cst_151 {dimension_numbers = #tpu.dot_dimension_numbers<[1], [1], [0], [0], [0, 0, 1, 0], [], []>} : vector<12x8xbf16>, vector<12x8xbf16>, vector<12x12xf32> -> vector<12x12xf32>
    %561 = arith.addf %560, %8 : vector<12x12xf32>
    %cst_152 = arith.constant dense<0xFF800000> : vector<12xf32>
    %562 = vector.multi_reduction <maximumf>, %561, %cst_152 [1] : vector<12x12xf32> to vector<12xf32>
    %563 = vector.shape_cast %562 : vector<12xf32> to vector<12x1xf32>
    %564 = vector.broadcast %563 : vector<12x1xf32> to vector<12x12xf32>
    %565 = arith.subf %561, %564 : vector<12x12xf32>
    %566 = math.exp %565 : vector<12x12xf32>
    %cst_153 = arith.constant dense<0.000000e+00> : vector<12xf32>
    %567 = vector.multi_reduction <add>, %566, %cst_153 [1] : vector<12x12xf32> to vector<12xf32>
    %568 = vector.shape_cast %567 : vector<12xf32> to vector<12x1xf32>
    %569 = tpu.reciprocal %568 {approx = true} : vector<12x1xf32> -> vector<12x1xf32>
    %570 = vector.broadcast %569 : vector<12x1xf32> to vector<12x12xf32>
    %571 = arith.mulf %566, %570 : vector<12x12xf32>
    %572 = vector.extract_strided_slice %535 {offsets = [0, 8], sizes = [12, 8], strides = [1, 1]} : vector<12x32xf32> to vector<12x8xf32>
    %573 = arith.truncf %571 : vector<12x12xf32> to vector<12x12xbf16>
    %574 = arith.truncf %572 : vector<12x8xf32> to vector<12x8xbf16>
    %cst_154 = arith.constant dense<0.000000e+00> : vector<12x8xf32>
    %575 = tpu.matmul %573, %574, %cst_154 {dimension_numbers = #tpu.dot_dimension_numbers<[1], [0], [0], [1], [0, 0, 1, 1], [], []>} : vector<12x12xbf16>, vector<12x8xbf16>, vector<12x8xf32> -> vector<12x8xf32>
    %576 = vector.extract_strided_slice %533 {offsets = [0, 16], sizes = [12, 8], strides = [1, 1]} : vector<12x32xf32> to vector<12x8xf32>
    %577 = vector.extract_strided_slice %534 {offsets = [0, 16], sizes = [12, 8], strides = [1, 1]} : vector<12x32xf32> to vector<12x8xf32>
    %578 = arith.truncf %576 : vector<12x8xf32> to vector<12x8xbf16>
    %579 = arith.truncf %577 : vector<12x8xf32> to vector<12x8xbf16>
    %cst_155 = arith.constant dense<0.000000e+00> : vector<12x12xf32>
    %580 = tpu.matmul %578, %579, %cst_155 {dimension_numbers = #tpu.dot_dimension_numbers<[1], [1], [0], [0], [0, 0, 1, 0], [], []>} : vector<12x8xbf16>, vector<12x8xbf16>, vector<12x12xf32> -> vector<12x12xf32>
    %581 = arith.addf %580, %8 : vector<12x12xf32>
    %cst_156 = arith.constant dense<0xFF800000> : vector<12xf32>
    %582 = vector.multi_reduction <maximumf>, %581, %cst_156 [1] : vector<12x12xf32> to vector<12xf32>
    %583 = vector.shape_cast %582 : vector<12xf32> to vector<12x1xf32>
    %584 = vector.broadcast %583 : vector<12x1xf32> to vector<12x12xf32>
    %585 = arith.subf %581, %584 : vector<12x12xf32>
    %586 = math.exp %585 : vector<12x12xf32>
    %cst_157 = arith.constant dense<0.000000e+00> : vector<12xf32>
    %587 = vector.multi_reduction <add>, %586, %cst_157 [1] : vector<12x12xf32> to vector<12xf32>
    %588 = vector.shape_cast %587 : vector<12xf32> to vector<12x1xf32>
    %589 = tpu.reciprocal %588 {approx = true} : vector<12x1xf32> -> vector<12x1xf32>
    %590 = vector.broadcast %589 : vector<12x1xf32> to vector<12x12xf32>
    %591 = arith.mulf %586, %590 : vector<12x12xf32>
    %592 = vector.extract_strided_slice %535 {offsets = [0, 16], sizes = [12, 8], strides = [1, 1]} : vector<12x32xf32> to vector<12x8xf32>
    %593 = arith.truncf %591 : vector<12x12xf32> to vector<12x12xbf16>
    %594 = arith.truncf %592 : vector<12x8xf32> to vector<12x8xbf16>
    %cst_158 = arith.constant dense<0.000000e+00> : vector<12x8xf32>
    %595 = tpu.matmul %593, %594, %cst_158 {dimension_numbers = #tpu.dot_dimension_numbers<[1], [0], [0], [1], [0, 0, 1, 1], [], []>} : vector<12x12xbf16>, vector<12x8xbf16>, vector<12x8xf32> -> vector<12x8xf32>
    %596 = vector.extract_strided_slice %533 {offsets = [0, 24], sizes = [12, 8], strides = [1, 1]} : vector<12x32xf32> to vector<12x8xf32>
    %597 = vector.extract_strided_slice %534 {offsets = [0, 24], sizes = [12, 8], strides = [1, 1]} : vector<12x32xf32> to vector<12x8xf32>
    %598 = arith.truncf %596 : vector<12x8xf32> to vector<12x8xbf16>
    %599 = arith.truncf %597 : vector<12x8xf32> to vector<12x8xbf16>
    %cst_159 = arith.constant dense<0.000000e+00> : vector<12x12xf32>
    %600 = tpu.matmul %598, %599, %cst_159 {dimension_numbers = #tpu.dot_dimension_numbers<[1], [1], [0], [0], [0, 0, 1, 0], [], []>} : vector<12x8xbf16>, vector<12x8xbf16>, vector<12x12xf32> -> vector<12x12xf32>
    %601 = arith.addf %600, %8 : vector<12x12xf32>
    %cst_160 = arith.constant dense<0xFF800000> : vector<12xf32>
    %602 = vector.multi_reduction <maximumf>, %601, %cst_160 [1] : vector<12x12xf32> to vector<12xf32>
    %603 = vector.shape_cast %602 : vector<12xf32> to vector<12x1xf32>
    %604 = vector.broadcast %603 : vector<12x1xf32> to vector<12x12xf32>
    %605 = arith.subf %601, %604 : vector<12x12xf32>
    %606 = math.exp %605 : vector<12x12xf32>
    %cst_161 = arith.constant dense<0.000000e+00> : vector<12xf32>
    %607 = vector.multi_reduction <add>, %606, %cst_161 [1] : vector<12x12xf32> to vector<12xf32>
    %608 = vector.shape_cast %607 : vector<12xf32> to vector<12x1xf32>
    %609 = tpu.reciprocal %608 {approx = true} : vector<12x1xf32> -> vector<12x1xf32>
    %610 = vector.broadcast %609 : vector<12x1xf32> to vector<12x12xf32>
    %611 = arith.mulf %606, %610 : vector<12x12xf32>
    %612 = vector.extract_strided_slice %535 {offsets = [0, 24], sizes = [12, 8], strides = [1, 1]} : vector<12x32xf32> to vector<12x8xf32>
    %613 = arith.truncf %611 : vector<12x12xf32> to vector<12x12xbf16>
    %614 = arith.truncf %612 : vector<12x8xf32> to vector<12x8xbf16>
    %cst_162 = arith.constant dense<0.000000e+00> : vector<12x8xf32>
    %615 = tpu.matmul %613, %614, %cst_162 {dimension_numbers = #tpu.dot_dimension_numbers<[1], [0], [0], [1], [0, 0, 1, 1], [], []>} : vector<12x12xbf16>, vector<12x8xbf16>, vector<12x8xf32> -> vector<12x8xf32>
    %616 = tpu.concatenate %555, %575, %595, %615 in 1 : vector<12x8xf32>, vector<12x8xf32>, vector<12x8xf32>, vector<12x8xf32> -> vector<12x32xf32>
    %617 = arith.truncf %616 : vector<12x32xf32> to vector<12x32xbf16>
    %cst_163 = arith.constant dense<0.000000e+00> : vector<12x32xf32>
    %618 = tpu.matmul %617, %530, %cst_163 {dimension_numbers = #tpu.dot_dimension_numbers<[1], [0], [0], [1], [0, 0, 1, 1], [], []>} : vector<12x32xbf16>, vector<32x32xbf16>, vector<12x32xf32> -> vector<12x32xf32>
    %619 = arith.addf %513, %618 : vector<12x32xf32>
    %c9 = arith.constant 9 : index
    %c0_164 = arith.constant 0 : index
    %620 = vector.load %arg7[%c9, %c0_164] : memref<12x32xf32, #tpu.memory_space<vmem>>, vector<1x32xf32>
    %621 = arith.mulf %619, %619 : vector<12x32xf32>
    %cst_165 = arith.constant dense<0.000000e+00> : vector<12xf32>
    %622 = vector.multi_reduction <add>, %621, %cst_165 [1] : vector<12x32xf32> to vector<12xf32>
    %623 = vector.shape_cast %622 : vector<12xf32> to vector<12x1xf32>
    %cst_166 = arith.constant 3.200000e+01 : f32
    %624 = vector.broadcast %cst_166 : f32 to vector<12x1xf32>
    %625 = arith.divf %623, %624 : vector<12x1xf32>
    %cst_167 = arith.constant 9.99999997E-7 : f32
    %626 = vector.broadcast %cst_167 : f32 to vector<12x1xf32>
    %627 = arith.addf %625, %626 : vector<12x1xf32>
    %628 = math.rsqrt %627 : vector<12x1xf32>
    %629 = vector.broadcast %628 : vector<12x1xf32> to vector<12x32xf32>
    %630 = arith.mulf %619, %629 : vector<12x32xf32>
    %631 = vector.broadcast %620 : vector<1x32xf32> to vector<12x32xf32>
    %632 = arith.mulf %630, %631 : vector<12x32xf32>
    %633 = vector.extract_strided_slice %515 {offsets = [0, 256], sizes = [32, 32], strides = [1, 1]} : vector<32x384xbf16> to vector<32x32xbf16>
    %634 = vector.extract_strided_slice %515 {offsets = [0, 288], sizes = [32, 64], strides = [1, 1]} : vector<32x384xbf16> to vector<32x64xbf16>
    %635 = vector.extract_strided_slice %515 {offsets = [0, 352], sizes = [32, 32], strides = [1, 1]} : vector<32x384xbf16> to vector<32x32xbf16>
    %636 = arith.truncf %632 : vector<12x32xf32> to vector<12x32xbf16>
    %cst_168 = arith.constant dense<0.000000e+00> : vector<12x32xf32>
    %637 = tpu.matmul %636, %633, %cst_168 {dimension_numbers = #tpu.dot_dimension_numbers<[1], [0], [0], [1], [0, 0, 1, 1], [], []>} : vector<12x32xbf16>, vector<32x32xbf16>, vector<12x32xf32> -> vector<12x32xf32>
    %638 = arith.truncf %277 : vector<16x32xf32> to vector<16x32xbf16>
    %cst_169 = arith.constant dense<0.000000e+00> : vector<16x64xf32>
    %639 = tpu.matmul %638, %634, %cst_169 {dimension_numbers = #tpu.dot_dimension_numbers<[1], [0], [0], [1], [0, 0, 1, 1], [], []>} : vector<16x32xbf16>, vector<32x64xbf16>, vector<16x64xf32> -> vector<16x64xf32>
    %640 = vector.extract_strided_slice %639 {offsets = [0, 0], sizes = [16, 32], strides = [1, 1]} : vector<16x64xf32> to vector<16x32xf32>
    %641 = vector.extract_strided_slice %639 {offsets = [0, 32], sizes = [16, 32], strides = [1, 1]} : vector<16x64xf32> to vector<16x32xf32>
    %642 = vector.extract_strided_slice %637 {offsets = [0, 0], sizes = [12, 8], strides = [1, 1]} : vector<12x32xf32> to vector<12x8xf32>
    %643 = vector.extract_strided_slice %640 {offsets = [0, 0], sizes = [16, 8], strides = [1, 1]} : vector<16x32xf32> to vector<16x8xf32>
    %644 = arith.truncf %642 : vector<12x8xf32> to vector<12x8xbf16>
    %645 = arith.truncf %643 : vector<16x8xf32> to vector<16x8xbf16>
    %cst_170 = arith.constant dense<0.000000e+00> : vector<12x16xf32>
    %646 = tpu.matmul %644, %645, %cst_170 {dimension_numbers = #tpu.dot_dimension_numbers<[1], [1], [0], [0], [0, 0, 1, 0], [], []>} : vector<12x8xbf16>, vector<16x8xbf16>, vector<12x16xf32> -> vector<12x16xf32>
    %647 = arith.addf %646, %7 : vector<12x16xf32>
    %cst_171 = arith.constant dense<0xFF800000> : vector<12xf32>
    %648 = vector.multi_reduction <maximumf>, %647, %cst_171 [1] : vector<12x16xf32> to vector<12xf32>
    %649 = vector.shape_cast %648 : vector<12xf32> to vector<12x1xf32>
    %650 = vector.broadcast %649 : vector<12x1xf32> to vector<12x16xf32>
    %651 = arith.subf %647, %650 : vector<12x16xf32>
    %652 = math.exp %651 : vector<12x16xf32>
    %cst_172 = arith.constant dense<0.000000e+00> : vector<12xf32>
    %653 = vector.multi_reduction <add>, %652, %cst_172 [1] : vector<12x16xf32> to vector<12xf32>
    %654 = vector.shape_cast %653 : vector<12xf32> to vector<12x1xf32>
    %655 = tpu.reciprocal %654 {approx = true} : vector<12x1xf32> -> vector<12x1xf32>
    %656 = vector.broadcast %655 : vector<12x1xf32> to vector<12x16xf32>
    %657 = arith.mulf %652, %656 : vector<12x16xf32>
    %658 = vector.extract_strided_slice %641 {offsets = [0, 0], sizes = [16, 8], strides = [1, 1]} : vector<16x32xf32> to vector<16x8xf32>
    %659 = arith.truncf %657 : vector<12x16xf32> to vector<12x16xbf16>
    %660 = arith.truncf %658 : vector<16x8xf32> to vector<16x8xbf16>
    %cst_173 = arith.constant dense<0.000000e+00> : vector<12x8xf32>
    %661 = tpu.matmul %659, %660, %cst_173 {dimension_numbers = #tpu.dot_dimension_numbers<[1], [0], [0], [1], [0, 0, 1, 1], [], []>} : vector<12x16xbf16>, vector<16x8xbf16>, vector<12x8xf32> -> vector<12x8xf32>
    %662 = vector.extract_strided_slice %637 {offsets = [0, 8], sizes = [12, 8], strides = [1, 1]} : vector<12x32xf32> to vector<12x8xf32>
    %663 = vector.extract_strided_slice %640 {offsets = [0, 8], sizes = [16, 8], strides = [1, 1]} : vector<16x32xf32> to vector<16x8xf32>
    %664 = arith.truncf %662 : vector<12x8xf32> to vector<12x8xbf16>
    %665 = arith.truncf %663 : vector<16x8xf32> to vector<16x8xbf16>
    %cst_174 = arith.constant dense<0.000000e+00> : vector<12x16xf32>
    %666 = tpu.matmul %664, %665, %cst_174 {dimension_numbers = #tpu.dot_dimension_numbers<[1], [1], [0], [0], [0, 0, 1, 0], [], []>} : vector<12x8xbf16>, vector<16x8xbf16>, vector<12x16xf32> -> vector<12x16xf32>
    %667 = arith.addf %666, %7 : vector<12x16xf32>
    %cst_175 = arith.constant dense<0xFF800000> : vector<12xf32>
    %668 = vector.multi_reduction <maximumf>, %667, %cst_175 [1] : vector<12x16xf32> to vector<12xf32>
    %669 = vector.shape_cast %668 : vector<12xf32> to vector<12x1xf32>
    %670 = vector.broadcast %669 : vector<12x1xf32> to vector<12x16xf32>
    %671 = arith.subf %667, %670 : vector<12x16xf32>
    %672 = math.exp %671 : vector<12x16xf32>
    %cst_176 = arith.constant dense<0.000000e+00> : vector<12xf32>
    %673 = vector.multi_reduction <add>, %672, %cst_176 [1] : vector<12x16xf32> to vector<12xf32>
    %674 = vector.shape_cast %673 : vector<12xf32> to vector<12x1xf32>
    %675 = tpu.reciprocal %674 {approx = true} : vector<12x1xf32> -> vector<12x1xf32>
    %676 = vector.broadcast %675 : vector<12x1xf32> to vector<12x16xf32>
    %677 = arith.mulf %672, %676 : vector<12x16xf32>
    %678 = vector.extract_strided_slice %641 {offsets = [0, 8], sizes = [16, 8], strides = [1, 1]} : vector<16x32xf32> to vector<16x8xf32>
    %679 = arith.truncf %677 : vector<12x16xf32> to vector<12x16xbf16>
    %680 = arith.truncf %678 : vector<16x8xf32> to vector<16x8xbf16>
    %cst_177 = arith.constant dense<0.000000e+00> : vector<12x8xf32>
    %681 = tpu.matmul %679, %680, %cst_177 {dimension_numbers = #tpu.dot_dimension_numbers<[1], [0], [0], [1], [0, 0, 1, 1], [], []>} : vector<12x16xbf16>, vector<16x8xbf16>, vector<12x8xf32> -> vector<12x8xf32>
    %682 = vector.extract_strided_slice %637 {offsets = [0, 16], sizes = [12, 8], strides = [1, 1]} : vector<12x32xf32> to vector<12x8xf32>
    %683 = vector.extract_strided_slice %640 {offsets = [0, 16], sizes = [16, 8], strides = [1, 1]} : vector<16x32xf32> to vector<16x8xf32>
    %684 = arith.truncf %682 : vector<12x8xf32> to vector<12x8xbf16>
    %685 = arith.truncf %683 : vector<16x8xf32> to vector<16x8xbf16>
    %cst_178 = arith.constant dense<0.000000e+00> : vector<12x16xf32>
    %686 = tpu.matmul %684, %685, %cst_178 {dimension_numbers = #tpu.dot_dimension_numbers<[1], [1], [0], [0], [0, 0, 1, 0], [], []>} : vector<12x8xbf16>, vector<16x8xbf16>, vector<12x16xf32> -> vector<12x16xf32>
    %687 = arith.addf %686, %7 : vector<12x16xf32>
    %cst_179 = arith.constant dense<0xFF800000> : vector<12xf32>
    %688 = vector.multi_reduction <maximumf>, %687, %cst_179 [1] : vector<12x16xf32> to vector<12xf32>
    %689 = vector.shape_cast %688 : vector<12xf32> to vector<12x1xf32>
    %690 = vector.broadcast %689 : vector<12x1xf32> to vector<12x16xf32>
    %691 = arith.subf %687, %690 : vector<12x16xf32>
    %692 = math.exp %691 : vector<12x16xf32>
    %cst_180 = arith.constant dense<0.000000e+00> : vector<12xf32>
    %693 = vector.multi_reduction <add>, %692, %cst_180 [1] : vector<12x16xf32> to vector<12xf32>
    %694 = vector.shape_cast %693 : vector<12xf32> to vector<12x1xf32>
    %695 = tpu.reciprocal %694 {approx = true} : vector<12x1xf32> -> vector<12x1xf32>
    %696 = vector.broadcast %695 : vector<12x1xf32> to vector<12x16xf32>
    %697 = arith.mulf %692, %696 : vector<12x16xf32>
    %698 = vector.extract_strided_slice %641 {offsets = [0, 16], sizes = [16, 8], strides = [1, 1]} : vector<16x32xf32> to vector<16x8xf32>
    %699 = arith.truncf %697 : vector<12x16xf32> to vector<12x16xbf16>
    %700 = arith.truncf %698 : vector<16x8xf32> to vector<16x8xbf16>
    %cst_181 = arith.constant dense<0.000000e+00> : vector<12x8xf32>
    %701 = tpu.matmul %699, %700, %cst_181 {dimension_numbers = #tpu.dot_dimension_numbers<[1], [0], [0], [1], [0, 0, 1, 1], [], []>} : vector<12x16xbf16>, vector<16x8xbf16>, vector<12x8xf32> -> vector<12x8xf32>
    %702 = vector.extract_strided_slice %637 {offsets = [0, 24], sizes = [12, 8], strides = [1, 1]} : vector<12x32xf32> to vector<12x8xf32>
    %703 = vector.extract_strided_slice %640 {offsets = [0, 24], sizes = [16, 8], strides = [1, 1]} : vector<16x32xf32> to vector<16x8xf32>
    %704 = arith.truncf %702 : vector<12x8xf32> to vector<12x8xbf16>
    %705 = arith.truncf %703 : vector<16x8xf32> to vector<16x8xbf16>
    %cst_182 = arith.constant dense<0.000000e+00> : vector<12x16xf32>
    %706 = tpu.matmul %704, %705, %cst_182 {dimension_numbers = #tpu.dot_dimension_numbers<[1], [1], [0], [0], [0, 0, 1, 0], [], []>} : vector<12x8xbf16>, vector<16x8xbf16>, vector<12x16xf32> -> vector<12x16xf32>
    %707 = arith.addf %706, %7 : vector<12x16xf32>
    %cst_183 = arith.constant dense<0xFF800000> : vector<12xf32>
    %708 = vector.multi_reduction <maximumf>, %707, %cst_183 [1] : vector<12x16xf32> to vector<12xf32>
    %709 = vector.shape_cast %708 : vector<12xf32> to vector<12x1xf32>
    %710 = vector.broadcast %709 : vector<12x1xf32> to vector<12x16xf32>
    %711 = arith.subf %707, %710 : vector<12x16xf32>
    %712 = math.exp %711 : vector<12x16xf32>
    %cst_184 = arith.constant dense<0.000000e+00> : vector<12xf32>
    %713 = vector.multi_reduction <add>, %712, %cst_184 [1] : vector<12x16xf32> to vector<12xf32>
    %714 = vector.shape_cast %713 : vector<12xf32> to vector<12x1xf32>
    %715 = tpu.reciprocal %714 {approx = true} : vector<12x1xf32> -> vector<12x1xf32>
    %716 = vector.broadcast %715 : vector<12x1xf32> to vector<12x16xf32>
    %717 = arith.mulf %712, %716 : vector<12x16xf32>
    %718 = vector.extract_strided_slice %641 {offsets = [0, 24], sizes = [16, 8], strides = [1, 1]} : vector<16x32xf32> to vector<16x8xf32>
    %719 = arith.truncf %717 : vector<12x16xf32> to vector<12x16xbf16>
    %720 = arith.truncf %718 : vector<16x8xf32> to vector<16x8xbf16>
    %cst_185 = arith.constant dense<0.000000e+00> : vector<12x8xf32>
    %721 = tpu.matmul %719, %720, %cst_185 {dimension_numbers = #tpu.dot_dimension_numbers<[1], [0], [0], [1], [0, 0, 1, 1], [], []>} : vector<12x16xbf16>, vector<16x8xbf16>, vector<12x8xf32> -> vector<12x8xf32>
    %722 = tpu.concatenate %661, %681, %701, %721 in 1 : vector<12x8xf32>, vector<12x8xf32>, vector<12x8xf32>, vector<12x8xf32> -> vector<12x32xf32>
    %723 = arith.truncf %722 : vector<12x32xf32> to vector<12x32xbf16>
    %cst_186 = arith.constant dense<0.000000e+00> : vector<12x32xf32>
    %724 = tpu.matmul %723, %635, %cst_186 {dimension_numbers = #tpu.dot_dimension_numbers<[1], [0], [0], [1], [0, 0, 1, 1], [], []>} : vector<12x32xbf16>, vector<32x32xbf16>, vector<12x32xf32> -> vector<12x32xf32>
    %725 = arith.addf %619, %724 : vector<12x32xf32>
    %c10 = arith.constant 10 : index
    %c0_187 = arith.constant 0 : index
    %726 = vector.load %arg7[%c10, %c0_187] : memref<12x32xf32, #tpu.memory_space<vmem>>, vector<1x32xf32>
    %727 = arith.mulf %725, %725 : vector<12x32xf32>
    %cst_188 = arith.constant dense<0.000000e+00> : vector<12xf32>
    %728 = vector.multi_reduction <add>, %727, %cst_188 [1] : vector<12x32xf32> to vector<12xf32>
    %729 = vector.shape_cast %728 : vector<12xf32> to vector<12x1xf32>
    %cst_189 = arith.constant 3.200000e+01 : f32
    %730 = vector.broadcast %cst_189 : f32 to vector<12x1xf32>
    %731 = arith.divf %729, %730 : vector<12x1xf32>
    %cst_190 = arith.constant 9.99999997E-7 : f32
    %732 = vector.broadcast %cst_190 : f32 to vector<12x1xf32>
    %733 = arith.addf %731, %732 : vector<12x1xf32>
    %734 = math.rsqrt %733 : vector<12x1xf32>
    %735 = vector.broadcast %734 : vector<12x1xf32> to vector<12x32xf32>
    %736 = arith.mulf %725, %735 : vector<12x32xf32>
    %737 = vector.broadcast %726 : vector<1x32xf32> to vector<12x32xf32>
    %738 = arith.mulf %736, %737 : vector<12x32xf32>
    %739 = vector.extract_strided_slice %515 {offsets = [0, 128], sizes = [32, 64], strides = [1, 1]} : vector<32x384xbf16> to vector<32x64xbf16>
    %740 = arith.truncf %738 : vector<12x32xf32> to vector<12x32xbf16>
    %cst_191 = arith.constant dense<0.000000e+00> : vector<12x64xf32>
    %741 = tpu.matmul %740, %739, %cst_191 {dimension_numbers = #tpu.dot_dimension_numbers<[1], [0], [0], [1], [0, 0, 1, 1], [], []>} : vector<12x32xbf16>, vector<32x64xbf16>, vector<12x64xf32> -> vector<12x64xf32>
    %cst_192 = arith.constant 0.000000e+00 : f32
    %742 = vector.broadcast %cst_192 : f32 to vector<12x64xf32>
    %743 = arith.maximumf %741, %742 : vector<12x64xf32>
    %744 = vector.extract_strided_slice %515 {offsets = [0, 192], sizes = [32, 64], strides = [1, 1]} : vector<32x384xbf16> to vector<32x64xbf16>
    %745 = arith.truncf %743 : vector<12x64xf32> to vector<12x64xbf16>
    %cst_193 = arith.constant dense<0.000000e+00> : vector<12x32xf32>
    %746 = tpu.matmul %745, %744, %cst_193 {dimension_numbers = #tpu.dot_dimension_numbers<[1], [1], [0], [0], [0, 0, 1, 0], [], []>} : vector<12x64xbf16>, vector<32x64xbf16>, vector<12x32xf32> -> vector<12x32xf32>
    %747 = arith.addf %725, %746 : vector<12x32xf32>
    %c11 = arith.constant 11 : index
    %c0_194 = arith.constant 0 : index
    %748 = vector.load %arg7[%c11, %c0_194] : memref<12x32xf32, #tpu.memory_space<vmem>>, vector<1x32xf32>
    %749 = arith.mulf %747, %747 : vector<12x32xf32>
    %cst_195 = arith.constant dense<0.000000e+00> : vector<12xf32>
    %750 = vector.multi_reduction <add>, %749, %cst_195 [1] : vector<12x32xf32> to vector<12xf32>
    %751 = vector.shape_cast %750 : vector<12xf32> to vector<12x1xf32>
    %cst_196 = arith.constant 3.200000e+01 : f32
    %752 = vector.broadcast %cst_196 : f32 to vector<12x1xf32>
    %753 = arith.divf %751, %752 : vector<12x1xf32>
    %cst_197 = arith.constant 9.99999997E-7 : f32
    %754 = vector.broadcast %cst_197 : f32 to vector<12x1xf32>
    %755 = arith.addf %753, %754 : vector<12x1xf32>
    %756 = math.rsqrt %755 : vector<12x1xf32>
    %757 = vector.broadcast %756 : vector<12x1xf32> to vector<12x32xf32>
    %758 = arith.mulf %747, %757 : vector<12x32xf32>
    %759 = vector.broadcast %748 : vector<1x32xf32> to vector<12x32xf32>
    %760 = arith.mulf %758, %759 : vector<12x32xf32>
    %cst_198 = arith.constant 0.176776692 : f32
    %761 = vector.broadcast %cst_198 : f32 to vector<12x32xf32>
    %762 = arith.mulf %760, %761 : vector<12x32xf32>
    %c0_199 = arith.constant 0 : index
    %c0_200 = arith.constant 0 : index
    %763 = vector.load %arg10[%c0_199, %c0_200] : memref<32x128xbf16, #tpu.memory_space<vmem>>, vector<32x128xbf16>
    %764 = arith.truncf %762 : vector<12x32xf32> to vector<12x32xbf16>
    %cst_201 = arith.constant dense<0.000000e+00> : vector<12x128xf32>
    %765 = tpu.matmul %764, %763, %cst_201 {dimension_numbers = #tpu.dot_dimension_numbers<[1], [0], [0], [1], [0, 0, 1, 1], [], []>} : vector<12x32xbf16>, vector<32x128xbf16>, vector<12x128xf32> -> vector<12x128xf32>
    %c0_202 = arith.constant 0 : index
    %c0_203 = arith.constant 0 : index
    %766 = vector.load %arg13[%c0_202, %c0_203] : memref<12x128xf32, #tpu.memory_space<vmem>>, vector<12x128xf32>
    tpu.vector_store %arg13[%c0_202, %c0_203], %765 {strides = array<i32>} : memref<12x128xf32, #tpu.memory_space<vmem>>, vector<12x128xf32>,
    %c0_204 = arith.constant 0 : index
    %c0_205 = arith.constant 0 : index
    %767 = vector.load %arg11[%c0_204, %c0_205] : memref<12x128xf32, #tpu.memory_space<vmem>>, vector<12x128xf32>
    %cst_206 = arith.constant dense<0.000000e+00> : vector<12xf32>
    %768 = vector.multi_reduction <add>, %767, %cst_206 [1] : vector<12x128xf32> to vector<12xf32>
    %769 = vector.shape_cast %768 : vector<12xf32> to vector<12x1xf32>
    %cst_207 = arith.constant dense<0xFF800000> : vector<12xf32>
    %770 = vector.multi_reduction <maximumf>, %765, %cst_207 [1] : vector<12x128xf32> to vector<12xf32>
    %771 = vector.shape_cast %770 : vector<12xf32> to vector<12x1xf32>
    %772 = vector.broadcast %771 : vector<12x1xf32> to vector<12x128xf32>
    %773 = arith.subf %765, %772 : vector<12x128xf32>
    %774 = math.exp %773 : vector<12x128xf32>
    %cst_208 = arith.constant dense<0.000000e+00> : vector<12xf32>
    %775 = vector.multi_reduction <add>, %774, %cst_208 [1] : vector<12x128xf32> to vector<12xf32>
    %776 = vector.shape_cast %775 : vector<12xf32> to vector<12x1xf32>
    %777 = math.log %776 : vector<12x1xf32>
    %778 = arith.addf %771, %777 : vector<12x1xf32>
    %779 = arith.mulf %765, %767 : vector<12x128xf32>
    %cst_209 = arith.constant dense<0.000000e+00> : vector<12xf32>
    %780 = vector.multi_reduction <add>, %779, %cst_209 [1] : vector<12x128xf32> to vector<12xf32>
    %781 = vector.shape_cast %780 : vector<12xf32> to vector<12x1xf32>
    %782 = arith.subf %778, %781 : vector<12x1xf32>
    %783 = arith.mulf %782, %769 : vector<12x1xf32>
    %cst_210 = arith.constant dense<0.000000e+00> : vector<1xf32>
    %784 = vector.multi_reduction <add>, %783, %cst_210 [0] : vector<12x1xf32> to vector<1xf32>
    %785 = vector.shape_cast %784 : vector<1xf32> to vector<1x1xf32>
    %cst_211 = arith.constant dense<0.000000e+00> : vector<1xf32>
    %786 = vector.multi_reduction <add>, %769, %cst_211 [0] : vector<12x1xf32> to vector<1xf32>
    %787 = vector.shape_cast %786 : vector<1xf32> to vector<1x1xf32>
    %cst_212 = arith.constant 1.000000e+00 : f32
    %788 = vector.broadcast %cst_212 : f32 to vector<1x1xf32>
    %789 = arith.maximumf %787, %788 : vector<1x1xf32>
    %790 = arith.divf %785, %789 : vector<1x1xf32>
    %c0_213 = arith.constant 0 : index
    %c0_214 = arith.constant 0 : index
    %791 = vector.load %arg14[%c0_213, %c0_214] : memref<1x1xf32, #tpu.memory_space<vmem>>, vector<1x1xf32>
    tpu.vector_store %arg14[%c0_213, %c0_214], %790 {strides = array<i32>} : memref<1x1xf32, #tpu.memory_space<vmem>>, vector<1x1xf32>,
    return
  }
}

</mosaic_0001>

<llo_original>
// kernel: eq.52
$region0: #{eq.52}
  %s0 = inlined_call_operand.vmem [shape: s32[2,8], index: 0, kind: input, shape index: {}]
  %s1 = inlined_call_operand.vmem [shape: s32[16], index: 1, kind: output, shape index: {}]
  $region1: #{eq.52} parent=0
    #allocation0 [shape = 'u8[4096]{0}', space=vmem, size = 0x1000, scoped, tag = 'scoped mem for output reshape']
    #allocation1 [shape = 'u8[4096]{0}', space=vmem, size = 0x1000, scoped, tag = 'scoped mem for input reshape']
    %s3 = sshllo.u32 0, 2
    %v4 = vld [vmem:[%s0] sm:%s3]
    %5 = vst [vmem:[#allocation1] sm:%s3] %v4
    %v6 = vld [vmem:[#allocation1] sm:$0x1]
    %vm7 = vcmask 64512
    %8 = vst.msk [vmem:[#allocation0] sm:$0x1] %vm7, %v6
    %s9 = scalar_lea.vmem [#allocation1], 1
    %v10 = vld [vmem:[%s9] sm:$0x1]
    %11 = vrot.lane.b32.xlu0 %v10, 8
    %v12 = vpop.permute.xlu0 %11
    %vm13 = vcmask 130112
    %14 = vst.msk [vmem:[#allocation0] sm:$0x1] %vm13, %v12
    %s16 = sshllo.u32 0, 1
    %v18 = vld [vmem:[#allocation0] sm:%s16]
    %s19 = sshllo.u32 0, 1
    %20 = vst [vmem:[%s1] sm:%s19] %v18

// kernel: chart_reader_t5_forward.1
$region0: #{chart_reader_t5_forward.1}
  #allocation0 [shape = 'u32[]', space=smem, size = 0x4, offset = 0x4, fixed_abs, tag = 'smem constant byte address 0x4 - core index']
  #allocation1 [shape = 'u32[144,128]{1,0:T(1,128)}', space=vmem, size = 0x12000, scoped, tag = 'internal scratch']
  %s0 = inlined_call_operand.vmem [shape: f32[16,32], index: 0, kind: input, shape index: {}]
  %s1 = inlined_call_operand.vmem [shape: f32[16,112], index: 1, kind: input, shape index: {}]
  %s2 = inlined_call_operand.vmem [shape: bf16[112,32], index: 2, kind: input, shape index: {}]
  %s3 = inlined_call_operand.vmem [shape: f32[12,32], index: 3, kind: input, shape index: {}]
  %s4 = inlined_call_operand.vmem [shape: f32[16,16], index: 4, kind: input, shape index: {}]
  %s5 = inlined_call_operand.vmem [shape: f32[12,16], index: 5, kind: input, shape index: {}]
  %s6 = inlined_call_operand.vmem [shape: f32[12,12], index: 6, kind: input, shape index: {}]
  %s7 = inlined_call_operand.vmem [shape: f32[12,32], index: 7, kind: input, shape index: {}]
  %s8 = inlined_call_operand.vmem [shape: bf16[2,32,256], index: 8, kind: input, shape index: {}]
  %s9 = inlined_call_operand.vmem [shape: bf16[2,32,384], index: 9, kind: input, shape index: {}]
  %s10 = inlined_call_operand.vmem [shape: bf16[32,128], index: 10, kind: input, shape index: {}]
  %s11 = inlined_call_operand.vmem [shape: f32[12,128], index: 11, kind: input, shape index: {}]
  %s12 = inlined_call_operand.hbm [shape: f32[16,32], index: 12, kind: output, shape index: {0}]
  %s13 = inlined_call_operand.vmem [shape: f32[12,128], index: 13, kind: output, shape index: {1}]
  %s14 = inlined_call_operand.hbm [shape: f32[1,1], index: 14, kind: output, shape index: {2}]
  %15 = xla_tuple %s12, %s13, %s14
  %s16 = sld [smem:[#allocation0]]
  $region74: #{chart_reader_t5_forward.1} parent=0
    _
  %s18 = ssub.s32 1, %s16
  %s19 = scalar_select 0, %s18, %s16
  $region1: #{chart_reader_t5_forward.1} parent=0
    #allocation2 [shape = 'u8[8192]{0}', space=vmem, size = 0x2000, scoped, tag = 'output window, operand 0, single buffered']
    #allocation3 [shape = 's32[1]{0}', space=sflag, size = 0x4, scoped, tag = 'scoped memory for chart_reader_t5_forward.1']
    #allocation4 [shape = 'u8[512]{0}', space=vmem, size = 0x400, scoped, tag = 'output window, operand 2, single buffered']
    #allocation5 [shape = 's32[1]{0}', space=sflag, size = 0x4, scoped, tag = 'scoped memory for chart_reader_t5_forward.1']
    %20 = vsyncpa [#allocation3], 0
    %21 = vsyncpa [#allocation5], 0
    // Predicated region
    $region2: #{chart_reader_t5_forward.1} parent=1 // pred_check
      _
    $region3: #{chart_reader_t5_forward.1} parent=1 // pred_check_branch
      %23 = sbr.rel (0) target = $region5
    $region4: #{chart_reader_t5_forward.1} parent=1 // pred_region
      _
    $region5: #{chart_reader_t5_forward.1} parent=1 // pred_fallthru
      _
    // Predicated region
    $region6: #{chart_reader_t5_forward.1} parent=1 // pred_check
      _
    $region7: #{chart_reader_t5_forward.1} parent=1 // pred_check_branch
      %25 = sbr.rel (0) target = $region9
    $region8: #{chart_reader_t5_forward.1} parent=1 // pred_region
      _
    $region9: #{chart_reader_t5_forward.1} parent=1 // pred_fallthru
      _
    // Predicated region
    $region10: #{chart_reader_t5_forward.1} parent=1 // pred_check
      _
    $region11: #{chart_reader_t5_forward.1} parent=1 // pred_check_branch
      %27 = sbr.rel (0) target = $region13
    $region12: #{chart_reader_t5_forward.1} parent=1 // pred_region
      _
    $region13: #{chart_reader_t5_forward.1} parent=1 // pred_fallthru
      _
    // Predicated region
    $region14: #{chart_reader_t5_forward.1} parent=1 // pred_check
      _
    $region15: #{chart_reader_t5_forward.1} parent=1 // pred_check_branch
      %29 = sbr.rel (0) target = $region17
    $region16: #{chart_reader_t5_forward.1} parent=1 // pred_region
      _
    $region17: #{chart_reader_t5_forward.1} parent=1 // pred_fallthru
      _
    // Predicated region
    $region18: #{chart_reader_t5_forward.1} parent=1 // pred_check
      _
    $region19: #{chart_reader_t5_forward.1} parent=1 // pred_check_branch
      %31 = sbr.rel (0) target = $region21
    $region20: #{chart_reader_t5_forward.1} parent=1 // pred_region
      _
    $region21: #{chart_reader_t5_forward.1} parent=1 // pred_fallthru
      _
    // Predicated region
    $region22: #{chart_reader_t5_forward.1} parent=1 // pred_check
      _
    $region23: #{chart_reader_t5_forward.1} parent=1 // pred_check_branch
      %33 = sbr.rel (0) target = $region25
    $region24: #{chart_reader_t5_forward.1} parent=1 // pred_region
      _
    $region25: #{chart_reader_t5_forward.1} parent=1 // pred_fallthru
      _
    // Predicated region
    $region26: #{chart_reader_t5_forward.1} parent=1 // pred_check
      _
    $region27: #{chart_reader_t5_forward.1} parent=1 // pred_check_branch
      %35 = sbr.rel (0) target = $region29
    $region28: #{chart_reader_t5_forward.1} parent=1 // pred_region
      _
    $region29: #{chart_reader_t5_forward.1} parent=1 // pred_fallthru
      _
    // Predicated region
    $region30: #{chart_reader_t5_forward.1} parent=1 // pred_check
      _
    $region31: #{chart_reader_t5_forward.1} parent=1 // pred_check_branch
      %37 = sbr.rel (0) target = $region33
    $region32: #{chart_reader_t5_forward.1} parent=1 // pred_region
      _
    $region33: #{chart_reader_t5_forward.1} parent=1 // pred_fallthru
      _
    // Predicated region
    $region34: #{chart_reader_t5_forward.1} parent=1 // pred_check
      _
    $region35: #{chart_reader_t5_forward.1} parent=1 // pred_check_branch
      %39 = sbr.rel (0) target = $region37
    $region36: #{chart_reader_t5_forward.1} parent=1 // pred_region
      _
    $region37: #{chart_reader_t5_forward.1} parent=1 // pred_fallthru
      _
    // Predicated region
    $region38: #{chart_reader_t5_forward.1} parent=1 // pred_check
      _
    $region39: #{chart_reader_t5_forward.1} parent=1 // pred_check_branch
      %41 = sbr.rel (0) target = $region41
    $region40: #{chart_reader_t5_forward.1} parent=1 // pred_region
      _
    $region41: #{chart_reader_t5_forward.1} parent=1 // pred_fallthru
      _
    // Predicated region
    $region42: #{chart_reader_t5_forward.1} parent=1 // pred_check
      _
    $region43: #{chart_reader_t5_forward.1} parent=1 // pred_check_branch
      %43 = sbr.rel (0) target = $region45
    $region44: #{chart_reader_t5_forward.1} parent=1 // pred_region
      _
    $region45: #{chart_reader_t5_forward.1} parent=1 // pred_fallthru
      _
    // Predicated region
    $region46: #{chart_reader_t5_forward.1} parent=1 // pred_check
      _
    $region47: #{chart_reader_t5_forward.1} parent=1 // pred_check_branch
      %45 = sbr.rel (0) target = $region49
    $region48: #{chart_reader_t5_forward.1} parent=1 // pred_region
      _
    $region49: #{chart_reader_t5_forward.1} parent=1 // pred_fallthru
      _
    %v47 = vld [vmem:[%s0] sm:$0xff]
    %v48 = vld [vmem:[%s0 + $0x8] sm:$0xff]
    %v49 = vld [vmem:[%s1] sm:$0xff]
    %v50 = vld [vmem:[%s1 + $0x8] sm:$0xff]
    %v51 = vld [vmem:[%s2] sm:$0xf]
    %v52 = vld [vmem:[%s2 + $0x4] sm:$0xf]
    %v53 = vld [vmem:[%s2 + $0x8] sm:$0xf]
    %v54 = vld [vmem:[%s2 + $0xc] sm:$0xf]
    %v55 = vld [vmem:[%s2 + $0x10] sm:$0xf]
    %v56 = vld [vmem:[%s2 + $0x14] sm:$0xf]
    %v57 = vld [vmem:[%s2 + $0x18] sm:$0xf]
    %v58 = vld [vmem:[%s2 + $0x1c] sm:$0xf]
    %v59 = vld [vmem:[%s2 + $0x20] sm:$0xf]
    %v60 = vld [vmem:[%s2 + $0x24] sm:$0xf]
    %v61 = vld [vmem:[%s2 + $0x28] sm:$0xf]
    %v62 = vld [vmem:[%s2 + $0x2c] sm:$0xf]
    %v63 = vld [vmem:[%s2 + $0x30] sm:$0xf]
    %v64 = vld [vmem:[%s2 + $0x34] sm:$0xf]
    %v65 = vpack.c.bf16 %v50, %v49
    %v80 = vunpack.c.l.b16 %v51
    %v81 = vunpack.c.l.b16 %v52
    %v82 = vunpack.c.l.b16 %v53
    %v83 = vunpack.c.l.b16 %v54
    %v84 = vunpack.c.l.b16 %v55
    %v85 = vunpack.c.l.b16 %v56
    %v86 = vunpack.c.l.b16 %v57
    %v87 = vunpack.c.l.b16 %v58
    %v88 = vunpack.c.l.b16 %v59
    %v89 = vunpack.c.l.b16 %v60
    %v90 = vunpack.c.l.b16 %v61
    %v91 = vunpack.c.l.b16 %v62
    %v92 = vunpack.c.l.b16 %v63
    %v93 = vunpack.c.l.b16 %v64
    %v94 = vpack.c.b16 %v81, %v80
    %v95 = vpack.c.b16 %v83, %v82
    %v96 = vpack.c.b16 %v85, %v84
    %v97 = vpack.c.b16 %v87, %v86
    %v98 = vpack.c.b16 %v89, %v88
    %v99 = vpack.c.b16 %v91, %v90
    %v100 = vpack.c.b16 %v93, %v92
    %vm108 = vcmask 916480
    %v110 = vsel %vm108, %v65, 0
    %112 = vmatprep.subr.bf16.mxu0 0
    %113 = vmatpush1.bf16.msra.mxu0 %v94
    %114 = vmatprep.subr.bf16.mxu0 0
    %115 = vmatpush1.bf16.msra.mxu0 %v95
    %116 = vmatprep.subr.bf16.mxu0 0
    %117 = vmatpush1.bf16.msra.mxu0 %v96
    %118 = vmatprep.subr.bf16.mxu0 0
    %119 = vmatpush1.bf16.msra.mxu0 %v97
    %120 = vmatprep.subr.bf16.mxu0 0
    %121 = vmatpush1.bf16.msra.mxu0 %v98
    %122 = vmatprep.subr.bf16.mxu0 0
    %123 = vmatpush1.bf16.msra.mxu0 %v99
    %124 = vmatprep.subr.bf16.mxu0 0
    %125 = vmatpush1.bf16.msra.mxu0 %v100
    %126 = vmatprep.subr.bf16.mxu0 0
    %127 = vmatpush1.bf16.msra.mxu0 0
    %128 = vmatprep.subr.bf16.mxu0 0
    %129 = vmatpush1.bf16.msra.mxu0 0
    %130 = vmatprep.subr.bf16.mxu0 0
    %131 = vmatpush1.bf16.msra.mxu0 0
    %132 = vmatprep.subr.bf16.mxu0 0
    %133 = vmatpush1.bf16.msra.mxu0 0
    %134 = vmatprep.subr.bf16.mxu0 0
    %135 = vmatpush1.bf16.msra.mxu0 0
    %136 = vmatprep.subr.bf16.mxu0 0
    %137 = vmatpush1.bf16.msra.mxu0 0
    %138 = vmatprep.subr.bf16.mxu0 0
    %139 = vmatpush1.bf16.msra.mxu0 0
    %140 = vmatprep.subr.bf16.mxu0 0
    %141 = vmatpush1.bf16.msra.mxu0 0
    %142 = vmatprep.subr.bf16.mxu0 0
    %143 = vmatpush1.bf16.msra.mxu0 0
    %144 = vmatprep.mubr.bf16.mxu0 0
    %145 = vmatmul.mubr.bf16.gmra.mrb[0].mxu0 %v110
    %v146 = vpop.f32.mrb[0].mxu0
    %v147 = vadd.f32 0.0, %v146
    %v148 = vpop.f32.mrb[0].mxu0
    %v149 = vpop.f32.mrb[0].mxu0
    %v150 = vadd.f32 0.0, %v149
    %v151 = vpop.f32.mrb[0].mxu0
    %152 = vdwg.mxu0
    %v153 = vadd.f32 %v47, %v147
    %v154 = vadd.f32 %v48, %v150
    %v155 = vld [vmem:[%s4] sm:$0xff]
    %v156 = vld [vmem:[%s4 + $0x8] sm:$0xff]
    %v157 = vld [vmem:[%s5] sm:$0xff]
    %v158 = vld [vmem:[%s5 + $0x8] sm:$0xf]
    %v159 = vld [vmem:[%s6] sm:$0xff]
    %v160 = vld [vmem:[%s6 + $0x8] sm:$0xf]
    %v161 = vld [vmem:[%s8] sm:$0xff]
    %v162 = vld [vmem:[%s8 + $0x8] sm:$0xff]
    %v163 = vld [vmem:[%s8 + $0x10] sm:$0xff]
    %v164 = vld [vmem:[%s8 + $0x18] sm:$0xff]
    %v165 = vld [vmem:[%s7] sm:$0x1]
    %v166 = vmul.f32 %v153, %v153
    %v167 = vmul.f32 %v154, %v154
    %vm168 = vcmask 261120
    %v169 = vsel %vm168, %v166, 0.0
    %170 = vadd.xlane.f32.xlu0 %v169
    %v171 = vpop.xlane.xlu0 %170
    %v172 = vsel %vm168, %v167, 0.0
    %173 = vadd.xlane.f32.xlu0 %v172
    %v174 = vpop.xlane.xlu0 %173
    %v175 = vrcp.pop 32.0
    %v176 = vmul.f32 %v171, %v175
    %v177 = vmul.f32 %v174, %v175
    %v178 = vadd.f32 %v176, 1e-06
    %v179 = vadd.f32 %v177, 1e-06
    %v180 = vrsqrt.pop %v178
    %v181 = vrsqrt.pop %v179
    %v182 = vmul.f32 %v153, %v180
    %v183 = vmul.f32 %v154, %v181
    %v184 = vlaneseq
    %v185 = vshrl.u32 %v184, 7
    %v186 = vsub.s32 0, %v185
    %v187 = vrot.slane %v165, %v186
    %v188 = vmul.f32 %v182, %v187
    %v189 = vmul.f32 %v183, %v187
    %v190 = vpack.c.bf16 %v189, %v188
    %v195 = vunpack.c.l.b16 %v161
    %v196 = vunpack.c.l.b16 %v162
    %v197 = vunpack.c.l.b16 %v163
    %v198 = vunpack.c.l.b16 %v164
    %v199 = vpack.c.b16 %v196, %v195
    %v200 = vpack.c.b16 %v198, %v197
    %v204 = vsel %vm168, %v190, 0
    %206 = vmatprep.subr.bf16.mxu0 0
    %207 = vmatpush1.bf16.msra.mxu0 %v199
    %208 = vmatprep.subr.bf16.mxu0 0
    %209 = vmatpush1.bf16.msra.mxu0 %v200
    %210 = vmatprep.subr.bf16.mxu0 0
    %211 = vmatpush1.bf16.msra.mxu0 0
    %212 = vmatprep.subr.bf16.mxu0 0
    %213 = vmatpush1.bf16.msra.mxu0 0
    %214 = vmatprep.subr.bf16.mxu0 0
    %215 = vmatpush1.bf16.msra.mxu0 0
    %216 = vmatprep.subr.bf16.mxu0 0
    %217 = vmatpush1.bf16.msra.mxu0 0
    %218 = vmatprep.subr.bf16.mxu0 0
    %219 = vmatpush1.bf16.msra.mxu0 0
    %220 = vmatprep.subr.bf16.mxu0 0
    %221 = vmatpush1.bf16.msra.mxu0 0
    %222 = vmatprep.subr.bf16.mxu0 0
    %223 = vmatpush1.bf16.msra.mxu0 0
    %224 = vmatprep.subr.bf16.mxu0 0
    %225 = vmatpush1.bf16.msra.mxu0 0
    %226 = vmatprep.subr.bf16.mxu0 0
    %227 = vmatpush1.bf16.msra.mxu0 0
    %228 = vmatprep.subr.bf16.mxu0 0
    %229 = vmatpush1.bf16.msra.mxu0 0
    %230 = vmatprep.subr.bf16.mxu0 0
    %231 = vmatpush1.bf16.msra.mxu0 0
    %232 = vmatprep.subr.bf16.mxu0 0
    %233 = vmatpush1.bf16.msra.mxu0 0
    %234 = vmatprep.subr.bf16.mxu0 0
    %235 = vmatpush1.bf16.msra.mxu0 0
    %236 = vmatprep.subr.bf16.mxu0 0
    %237 = vmatpush1.bf16.msra.mxu0 0
    %238 = vmatprep.mubr.bf16.mxu0 0
    %239 = vmatmul.mubr.bf16.gmra.mrb[0].mxu0 %v204
    %v240 = vpop.f32.mrb[0].mxu0
    %v241 = vadd.f32 0.0, %v240
    %v242 = vpop.f32.mrb[0].mxu0
    %v243 = vpop.f32.mrb[0].mxu0
    %v244 = vadd.f32 0.0, %v243
    %v245 = vpop.f32.mrb[0].mxu0
    %246 = vdwg.mxu0
    %v247 = vpack.c.bf16 %v244, %v241
    %249 = vrot.lane.b32.xlu0 %v247, 96
    %v250 = vpop.permute.xlu0 %249
    %vm251 = vcmask 64512
    %v253 = vsel %vm251, %v247, 0
    %v256 = vsel %vm251, %v250, 0
    %258 = vmatprep.subr.bf16.mxu0 0
    %259 = vmatpush1.bf16.xpose.msra.mxu0 %v256
    %260 = vmatprep.subr.bf16.mxu0 0
    %261 = vmatpush1.bf16.xpose.msra.mxu0 0
    %262 = vmatprep.subr.bf16.mxu0 0
    %263 = vmatpush1.bf16.xpose.msra.mxu0 0
    %264 = vmatprep.subr.bf16.mxu0 0
    %265 = vmatpush1.bf16.xpose.msra.mxu0 0
    %266 = vmatprep.subr.bf16.mxu0 0
    %267 = vmatpush1.bf16.xpose.msra.mxu0 0
    %268 = vmatprep.subr.bf16.mxu0 0
    %269 = vmatpush1.bf16.xpose.msra.mxu0 0
    %270 = vmatprep.subr.bf16.mxu0 0
    %271 = vmatpush1.bf16.xpose.msra.mxu0 0
    %272 = vmatprep.subr.bf16.mxu0 0
    %273 = vmatpush1.bf16.xpose.msra.mxu0 0
    %274 = vmatprep.subr.bf16.mxu0 0
    %275 = vmatpush1.bf16.xpose.msra.mxu0 0
    %276 = vmatprep.subr.bf16.mxu0 0
    %277 = vmatpush1.bf16.xpose.msra.mxu0 0
    %278 = vmatprep.subr.bf16.mxu0 0
    %279 = vmatpush1.bf16.xpose.msra.mxu0 0
    %280 = vmatprep.subr.bf16.mxu0 0
    %281 = vmatpush1.bf16.xpose.msra.mxu0 0
    %282 = vmatprep.subr.bf16.mxu0 0
    %283 = vmatpush1.bf16.xpose.msra.mxu0 0
    %284 = vmatprep.subr.bf16.mxu0 0
    %285 = vmatpush1.bf16.xpose.msra.mxu0 0
    %286 = vmatprep.subr.bf16.mxu0 0
    %287 = vmatpush1.bf16.xpose.msra.mxu0 0
    %288 = vmatprep.subr.bf16.mxu0 0
    %289 = vmatpush1.bf16.xpose.msra.mxu0 0
    %290 = vmatprep.mubr.bf16.mxu0 0
    %291 = vmatmul.mubr.bf16.gmra.mrb[0].mxu0 %v253
    %v292 = vpop.f32.mrb[0].mxu0
    %v293 = vadd.f32 %v155, %v292
    %v294 = vpop.f32.mrb[0].mxu0
    %v295 = vpop.f32.mrb[0].mxu0
    %v296 = vadd.f32 %v156, %v295
    %v297 = vpop.f32.mrb[0].mxu0
    %298 = vdwg.mxu0
    %vm299 = vcmask 130048
    %v300 = vsel %vm299, %v293, -inf
    %301 = vmax.xlane.f32.xlu0 %v300
    %v302 = vpop.xlane.xlu0 %301
    %v303 = vsel %vm299, %v296, -inf
    %304 = vmax.xlane.f32.xlu0 %v303
    %v305 = vpop.xlane.xlu0 %304
    %v306 = vsub.f32 %v293, %v302
    %v307 = vsub.f32 %v296, %v305
    %v308 = vmul.f32 %v306, 1.442695
    %v309 = vpow.pop %v308
    %v310 = vmul.f32 %v307, 1.442695
    %v311 = vpow.pop %v310
    %v312 = vsel %vm299, %v309, 0.0
    %313 = vadd.xlane.f32.xlu0 %v312
    %v314 = vpop.xlane.xlu0 %313
    %v315 = vsel %vm299, %v311, 0.0
    %316 = vadd.xlane.f32.xlu0 %v315
    %v317 = vpop.xlane.xlu0 %316
    %v318 = vrcp.pop %v314
    %v319 = vrcp.pop %v317
    %v320 = vmul.f32 %v309, %v318
    %v321 = vmul.f32 %v311, %v319
    %v322 = vpack.c.bf16 %v321, %v320
    %323 = vrot.lane.b32.xlu0 %v247, 64
    %v324 = vpop.permute.xlu0 %323
    %v327 = vsel %vm299, %v322, 0
    %329 = vmatprep.subr.bf16.mxu0 0
    %330 = vmatpush1.bf16.msra.mxu0 %v324
    %331 = vmatprep.subr.bf16.mxu0 0
    %332 = vmatpush1.bf16.msra.mxu0 0
    %333 = vmatprep.subr.bf16.mxu0 0
    %334 = vmatpush1.bf16.msra.mxu0 0
    %335 = vmatprep.subr.bf16.mxu0 0
    %336 = vmatpush1.bf16.msra.mxu0 0
    %337 = vmatprep.subr.bf16.mxu0 0
    %338 = vmatpush1.bf16.msra.mxu0 0
    %339 = vmatprep.subr.bf16.mxu0 0
    %340 = vmatpush1.bf16.msra.mxu0 0
    %341 = vmatprep.subr.bf16.mxu0 0
    %342 = vmatpush1.bf16.msra.mxu0 0
    %343 = vmatprep.subr.bf16.mxu0 0
    %344 = vmatpush1.bf16.msra.mxu0 0
    %345 = vmatprep.subr.bf16.mxu0 0
    %346 = vmatpush1.bf16.msra.mxu0 0
    %347 = vmatprep.subr.bf16.mxu0 0
    %348 = vmatpush1.bf16.msra.mxu0 0
    %349 = vmatprep.subr.bf16.mxu0 0
    %350 = vmatpush1.bf16.msra.mxu0 0
    %351 = vmatprep.subr.bf16.mxu0 0
    %352 = vmatpush1.bf16.msra.mxu0 0
    %353 = vmatprep.subr.bf16.mxu0 0
    %354 = vmatpush1.bf16.msra.mxu0 0
    %355 = vmatprep.subr.bf16.mxu0 0
    %356 = vmatpush1.bf16.msra.mxu0 0
    %357 = vmatprep.subr.bf16.mxu0 0
    %358 = vmatpush1.bf16.msra.mxu0 0
    %359 = vmatprep.subr.bf16.mxu0 0
    %360 = vmatpush1.bf16.msra.mxu0 0
    %361 = vmatprep.mubr.bf16.mxu0 0
    %362 = vmatmul.mubr.bf16.gmra.mrb[0].mxu0 %v327
    %v363 = vpop.f32.mrb[0].mxu0
    %v364 = vadd.f32 0.0, %v363
    %v365 = vpop.f32.mrb[0].mxu0
    %v366 = vpop.f32.mrb[0].mxu0
    %v367 = vadd.f32 0.0, %v366
    %v368 = vpop.f32.mrb[0].mxu0
    %369 = vdwg.mxu0
    %370 = vrot.lane.b32.xlu0 %v247, 120
    %v371 = vpop.permute.xlu0 %370
    %372 = vrot.lane.b32.xlu0 %v247, 88
    %v373 = vpop.permute.xlu0 %372
    %v375 = vsel %vm251, %v371, 0
    %v378 = vsel %vm251, %v373, 0
    %380 = vmatprep.subr.bf16.mxu0 0
    %381 = vmatpush1.bf16.xpose.msra.mxu0 %v378
    %382 = vmatprep.subr.bf16.mxu0 0
    %383 = vmatpush1.bf16.xpose.msra.mxu0 0
    %384 = vmatprep.subr.bf16.mxu0 0
    %385 = vmatpush1.bf16.xpose.msra.mxu0 0
    %386 = vmatprep.subr.bf16.mxu0 0
    %387 = vmatpush1.bf16.xpose.msra.mxu0 0
    %388 = vmatprep.subr.bf16.mxu0 0
    %389 = vmatpush1.bf16.xpose.msra.mxu0 0
    %390 = vmatprep.subr.bf16.mxu0 0
    %391 = vmatpush1.bf16.xpose.msra.mxu0 0
    %392 = vmatprep.subr.bf16.mxu0 0
    %393 = vmatpush1.bf16.xpose.msra.mxu0 0
    %394 = vmatprep.subr.bf16.mxu0 0
    %395 = vmatpush1.bf16.xpose.msra.mxu0 0
    %396 = vmatprep.subr.bf16.mxu0 0
    %397 = vmatpush1.bf16.xpose.msra.mxu0 0
    %398 = vmatprep.subr.bf16.mxu0 0
    %399 = vmatpush1.bf16.xpose.msra.mxu0 0
    %400 = vmatprep.subr.bf16.mxu0 0
    %401 = vmatpush1.bf16.xpose.msra.mxu0 0
    %402 = vmatprep.subr.bf16.mxu0 0
    %403 = vmatpush1.bf16.xpose.msra.mxu0 0
    %404 = vmatprep.subr.bf16.mxu0 0
    %405 = vmatpush1.bf16.xpose.msra.mxu0 0
    %406 = vmatprep.subr.bf16.mxu0 0
    %407 = vmatpush1.bf16.xpose.msra.mxu0 0
    %408 = vmatprep.subr.bf16.mxu0 0
    %409 = vmatpush1.bf16.xpose.msra.mxu0 0
    %410 = vmatprep.subr.bf16.mxu0 0
    %411 = vmatpush1.bf16.xpose.msra.mxu0 0
    %412 = vmatprep.mubr.bf16.mxu0 0
    %413 = vmatmul.mubr.bf16.gmra.mrb[0].mxu0 %v375
    %v414 = vpop.f32.mrb[0].mxu0
    %v415 = vadd.f32 %v155, %v414
    %v416 = vpop.f32.mrb[0].mxu0
    %v417 = vpop.f32.mrb[0].mxu0
    %v418 = vadd.f32 %v156, %v417
    %v419 = vpop.f32.mrb[0].mxu0
    %420 = vdwg.mxu0
    %v421 = vsel %vm299, %v415, -inf
    %422 = vmax.xlane.f32.xlu0 %v421
    %v423 = vpop.xlane.xlu0 %422
    %v424 = vsel %vm299, %v418, -inf
    %425 = vmax.xlane.f32.xlu0 %v424
    %v426 = vpop.xlane.xlu0 %425
    %v427 = vsub.f32 %v415, %v423
    %v428 = vsub.f32 %v418, %v426
    %v429 = vmul.f32 %v427, 1.442695
    %v430 = vpow.pop %v429
    %v431 = vmul.f32 %v428, 1.442695
    %v432 = vpow.pop %v431
    %v433 = vsel %vm299, %v430, 0.0
    %434 = vadd.xlane.f32.xlu0 %v433
    %v435 = vpop.xlane.xlu0 %434
    %v436 = vsel %vm299, %v432, 0.0
    %437 = vadd.xlane.f32.xlu0 %v436
    %v438 = vpop.xlane.xlu0 %437
    %v439 = vrcp.pop %v435
    %v440 = vrcp.pop %v438
    %v441 = vmul.f32 %v430, %v439
    %v442 = vmul.f32 %v432, %v440
    %v443 = vpack.c.bf16 %v442, %v441
    %444 = vrot.lane.b32.xlu0 %v247, 56
    %v445 = vpop.permute.xlu0 %444
    %v448 = vsel %vm299, %v443, 0
    %450 = vmatprep.subr.bf16.mxu0 0
    %451 = vmatpush1.bf16.msra.mxu0 %v445
    %452 = vmatprep.subr.bf16.mxu0 0
    %453 = vmatpush1.bf16.msra.mxu0 0
    %454 = vmatprep.subr.bf16.mxu0 0
    %455 = vmatpush1.bf16.msra.mxu0 0
    %456 = vmatprep.subr.bf16.mxu0 0
    %457 = vmatpush1.bf16.msra.mxu0 0
    %458 = vmatprep.subr.bf16.mxu0 0
    %459 = vmatpush1.bf16.msra.mxu0 0
    %460 = vmatprep.subr.bf16.mxu0 0
    %461 = vmatpush1.bf16.msra.mxu0 0
    %462 = vmatprep.subr.bf16.mxu0 0
    %463 = vmatpush1.bf16.msra.mxu0 0
    %464 = vmatprep.subr.bf16.mxu0 0
    %465 = vmatpush1.bf16.msra.mxu0 0
    %466 = vmatprep.subr.bf16.mxu0 0
    %467 = vmatpush1.bf16.msra.mxu0 0
    %468 = vmatprep.subr.bf16.mxu0 0
    %469 = vmatpush1.bf16.msra.mxu0 0
    %470 = vmatprep.subr.bf16.mxu0 0
    %471 = vmatpush1.bf16.msra.mxu0 0
    %472 = vmatprep.subr.bf16.mxu0 0
    %473 = vmatpush1.bf16.msra.mxu0 0
    %474 = vmatprep.subr.bf16.mxu0 0
    %475 = vmatpush1.bf16.msra.mxu0 0
    %476 = vmatprep.subr.bf16.mxu0 0
    %477 = vmatpush1.bf16.msra.mxu0 0
    %478 = vmatprep.subr.bf16.mxu0 0
    %479 = vmatpush1.bf16.msra.mxu0 0
    %480 = vmatprep.subr.bf16.mxu0 0
    %481 = vmatpush1.bf16.msra.mxu0 0
    %482 = vmatprep.mubr.bf16.mxu0 0
    %483 = vmatmul.mubr.bf16.gmra.mrb[0].mxu0 %v448
    %v484 = vpop.f32.mrb[0].mxu0
    %v485 = vadd.f32 0.0, %v484
    %v486 = vpop.f32.mrb[0].mxu0
    %v487 = vpop.f32.mrb[0].mxu0
    %v488 = vadd.f32 0.0, %v487
    %v489 = vpop.f32.mrb[0].mxu0
    %490 = vdwg.mxu0
    %491 = vrot.lane.b32.xlu0 %v247, 112
    %v492 = vpop.permute.xlu0 %491
    %493 = vrot.lane.b32.xlu0 %v247, 80
    %v494 = vpop.permute.xlu0 %493
    %v496 = vsel %vm251, %v492, 0
    %v499 = vsel %vm251, %v494, 0
    %501 = vmatprep.subr.bf16.mxu0 0
    %502 = vmatpush1.bf16.xpose.msra.mxu0 %v499
    %503 = vmatprep.subr.bf16.mxu0 0
    %504 = vmatpush1.bf16.xpose.msra.mxu0 0
    %505 = vmatprep.subr.bf16.mxu0 0
    %506 = vmatpush1.bf16.xpose.msra.mxu0 0
    %507 = vmatprep.subr.bf16.mxu0 0
    %508 = vmatpush1.bf16.xpose.msra.mxu0 0
    %509 = vmatprep.subr.bf16.mxu0 0
    %510 = vmatpush1.bf16.xpose.msra.mxu0 0
    %511 = vmatprep.subr.bf16.mxu0 0
    %512 = vmatpush1.bf16.xpose.msra.mxu0 0
    %513 = vmatprep.subr.bf16.mxu0 0
    %514 = vmatpush1.bf16.xpose.msra.mxu0 0
    %515 = vmatprep.subr.bf16.mxu0 0
    %516 = vmatpush1.bf16.xpose.msra.mxu0 0
    %517 = vmatprep.subr.bf16.mxu0 0
    %518 = vmatpush1.bf16.xpose.msra.mxu0 0
    %519 = vmatprep.subr.bf16.mxu0 0
    %520 = vmatpush1.bf16.xpose.msra.mxu0 0
    %521 = vmatprep.subr.bf16.mxu0 0
    %522 = vmatpush1.bf16.xpose.msra.mxu0 0
    %523 = vmatprep.subr.bf16.mxu0 0
    %524 = vmatpush1.bf16.xpose.msra.mxu0 0
    %525 = vmatprep.subr.bf16.mxu0 0
    %526 = vmatpush1.bf16.xpose.msra.mxu0 0
    %527 = vmatprep.subr.bf16.mxu0 0
    %528 = vmatpush1.bf16.xpose.msra.mxu0 0
    %529 = vmatprep.subr.bf16.mxu0 0
    %530 = vmatpush1.bf16.xpose.msra.mxu0 0
    %531 = vmatprep.subr.bf16.mxu0 0
    %532 = vmatpush1.bf16.xpose.msra.mxu0 0
    %533 = vmatprep.mubr.bf16.mxu0 0
    %534 = vmatmul.mubr.bf16.gmra.mrb[0].mxu0 %v496
    %v535 = vpop.f32.mrb[0].mxu0
    %v536 = vadd.f32 %v155, %v535
    %v537 = vpop.f32.mrb[0].mxu0
    %v538 = vpop.f32.mrb[0].mxu0
    %v539 = vadd.f32 %v156, %v538
    %v540 = vpop.f32.mrb[0].mxu0
    %541 = vdwg.mxu0
    %v542 = vsel %vm299, %v536, -inf
    %543 = vmax.xlane.f32.xlu0 %v542
    %v544 = vpop.xlane.xlu0 %543
    %v545 = vsel %vm299, %v539, -inf
    %546 = vmax.xlane.f32.xlu0 %v545
    %v547 = vpop.xlane.xlu0 %546
    %v548 = vsub.f32 %v536, %v544
    %v549 = vsub.f32 %v539, %v547
    %v550 = vmul.f32 %v548, 1.442695
    %v551 = vpow.pop %v550
    %v552 = vmul.f32 %v549, 1.442695
    %v553 = vpow.pop %v552
    %v554 = vsel %vm299, %v551, 0.0
    %555 = vadd.xlane.f32.xlu0 %v554
    %v556 = vpop.xlane.xlu0 %555
    %v557 = vsel %vm299, %v553, 0.0
    %558 = vadd.xlane.f32.xlu0 %v557
    %v559 = vpop.xlane.xlu0 %558
    %v560 = vrcp.pop %v556
    %v561 = vrcp.pop %v559
    %v562 = vmul.f32 %v551, %v560
    %v563 = vmul.f32 %v553, %v561
    %v564 = vpack.c.bf16 %v563, %v562
    %565 = vrot.lane.b32.xlu0 %v247, 48
    %v566 = vpop.permute.xlu0 %565
    %v569 = vsel %vm299, %v564, 0
    %571 = vmatprep.subr.bf16.mxu0 0
    %572 = vmatpush1.bf16.msra.mxu0 %v566
    %573 = vmatprep.subr.bf16.mxu0 0
    %574 = vmatpush1.bf16.msra.mxu0 0
    %575 = vmatprep.subr.bf16.mxu0 0
    %576 = vmatpush1.bf16.msra.mxu0 0
    %577 = vmatprep.subr.bf16.mxu0 0
    %578 = vmatpush1.bf16.msra.mxu0 0
    %579 = vmatprep.subr.bf16.mxu0 0
    %580 = vmatpush1.bf16.msra.mxu0 0
    %581 = vmatprep.subr.bf16.mxu0 0
    %582 = vmatpush1.bf16.msra.mxu0 0
    %583 = vmatprep.subr.bf16.mxu0 0
    %584 = vmatpush1.bf16.msra.mxu0 0
    %585 = vmatprep.subr.bf16.mxu0 0
    %586 = vmatpush1.bf16.msra.mxu0 0
    %587 = vmatprep.subr.bf16.mxu0 0
    %588 = vmatpush1.bf16.msra.mxu0 0
    %589 = vmatprep.subr.bf16.mxu0 0
    %590 = vmatpush1.bf16.msra.mxu0 0
    %591 = vmatprep.subr.bf16.mxu0 0
    %592 = vmatpush1.bf16.msra.mxu0 0
    %593 = vmatprep.subr.bf16.mxu0 0
    %594 = vmatpush1.bf16.msra.mxu0 0
    %595 = vmatprep.subr.bf16.mxu0 0
    %596 = vmatpush1.bf16.msra.mxu0 0
    %597 = vmatprep.subr.bf16.mxu0 0
    %598 = vmatpush1.bf16.msra.mxu0 0
    %599 = vmatprep.subr.bf16.mxu0 0
    %600 = vmatpush1.bf16.msra.mxu0 0
    %601 = vmatprep.subr.bf16.mxu0 0
    %602 = vmatpush1.bf16.msra.mxu0 0
    %603 = vmatprep.mubr.bf16.mxu0 0
    %604 = vmatmul.mubr.bf16.gmra.mrb[0].mxu0 %v569
    %v605 = vpop.f32.mrb[0].mxu0
    %v606 = vadd.f32 0.0, %v605
    %v607 = vpop.f32.mrb[0].mxu0
    %v608 = vpop.f32.mrb[0].mxu0
    %v609 = vadd.f32 0.0, %v608
    %v610 = vpop.f32.mrb[0].mxu0
    %611 = vdwg.mxu0
    %612 = vrot.lane.b32.xlu0 %v247, 104
    %v613 = vpop.permute.xlu0 %612
    %614 = vrot.lane.b32.xlu0 %v247, 72
    %v615 = vpop.permute.xlu0 %614
    %v617 = vsel %vm251, %v613, 0
    %v620 = vsel %vm251, %v615, 0
    %622 = vmatprep.subr.bf16.mxu0 0
    %623 = vmatpush1.bf16.xpose.msra.mxu0 %v620
    %624 = vmatprep.subr.bf16.mxu0 0
    %625 = vmatpush1.bf16.xpose.msra.mxu0 0
    %626 = vmatprep.subr.bf16.mxu0 0
    %627 = vmatpush1.bf16.xpose.msra.mxu0 0
    %628 = vmatprep.subr.bf16.mxu0 0
    %629 = vmatpush1.bf16.xpose.msra.mxu0 0
    %630 = vmatprep.subr.bf16.mxu0 0
    %631 = vmatpush1.bf16.xpose.msra.mxu0 0
    %632 = vmatprep.subr.bf16.mxu0 0
    %633 = vmatpush1.bf16.xpose.msra.mxu0 0
    %634 = vmatprep.subr.bf16.mxu0 0
    %635 = vmatpush1.bf16.xpose.msra.mxu0 0
    %636 = vmatprep.subr.bf16.mxu0 0
    %637 = vmatpush1.bf16.xpose.msra.mxu0 0
    %638 = vmatprep.subr.bf16.mxu0 0
    %639 = vmatpush1.bf16.xpose.msra.mxu0 0
    %640 = vmatprep.subr.bf16.mxu0 0
    %641 = vmatpush1.bf16.xpose.msra.mxu0 0
    %642 = vmatprep.subr.bf16.mxu0 0
    %643 = vmatpush1.bf16.xpose.msra.mxu0 0
    %644 = vmatprep.subr.bf16.mxu0 0
    %645 = vmatpush1.bf16.xpose.msra.mxu0 0
    %646 = vmatprep.subr.bf16.mxu0 0
    %647 = vmatpush1.bf16.xpose.msra.mxu0 0
    %648 = vmatprep.subr.bf16.mxu0 0
    %649 = vmatpush1.bf16.xpose.msra.mxu0 0
    %650 = vmatprep.subr.bf16.mxu0 0
    %651 = vmatpush1.bf16.xpose.msra.mxu0 0
    %652 = vmatprep.subr.bf16.mxu0 0
    %653 = vmatpush1.bf16.xpose.msra.mxu0 0
    %654 = vmatprep.mubr.bf16.mxu0 0
    %655 = vmatmul.mubr.bf16.gmra.mrb[0].mxu0 %v617
    %v656 = vpop.f32.mrb[0].mxu0
    %v657 = vadd.f32 %v155, %v656
    %v658 = vpop.f32.mrb[0].mxu0
    %v659 = vpop.f32.mrb[0].mxu0
    %v660 = vadd.f32 %v156, %v659
    %v661 = vpop.f32.mrb[0].mxu0
    %662 = vdwg.mxu0
    %v663 = vsel %vm299, %v657, -inf
    %664 = vmax.xlane.f32.xlu0 %v663
    %v665 = vpop.xlane.xlu0 %664
    %v666 = vsel %vm299, %v660, -inf
    %667 = vmax.xlane.f32.xlu0 %v666
    %v668 = vpop.xlane.xlu0 %667
    %v669 = vsub.f32 %v657, %v665
    %v670 = vsub.f32 %v660, %v668
    %v671 = vmul.f32 %v669, 1.442695
    %v672 = vpow.pop %v671
    %v673 = vmul.f32 %v670, 1.442695
    %v674 = vpow.pop %v673
    %v675 = vsel %vm299, %v672, 0.0
    %676 = vadd.xlane.f32.xlu0 %v675
    %v677 = vpop.xlane.xlu0 %676
    %v678 = vsel %vm299, %v674, 0.0
    %679 = vadd.xlane.f32.xlu0 %v678
    %v680 = vpop.xlane.xlu0 %679
    %v681 = vrcp.pop %v677
    %v682 = vrcp.pop %v680
    %v683 = vmul.f32 %v672, %v681
    %v684 = vmul.f32 %v674, %v682
    %v685 = vpack.c.bf16 %v684, %v683
    %686 = vrot.lane.b32.xlu0 %v247, 40
    %v687 = vpop.permute.xlu0 %686
    %v690 = vsel %vm299, %v685, 0
    %692 = vmatprep.subr.bf16.mxu0 0
    %693 = vmatpush1.bf16.msra.mxu0 %v687
    %694 = vmatprep.subr.bf16.mxu0 0
    %695 = vmatpush1.bf16.msra.mxu0 0
    %696 = vmatprep.subr.bf16.mxu0 0
    %697 = vmatpush1.bf16.msra.mxu0 0
    %698 = vmatprep.subr.bf16.mxu0 0
    %699 = vmatpush1.bf16.msra.mxu0 0
    %700 = vmatprep.subr.bf16.mxu0 0
    %701 = vmatpush1.bf16.msra.mxu0 0
    %702 = vmatprep.subr.bf16.mxu0 0
    %703 = vmatpush1.bf16.msra.mxu0 0
    %704 = vmatprep.subr.bf16.mxu0 0
    %705 = vmatpush1.bf16.msra.mxu0 0
    %706 = vmatprep.subr.bf16.mxu0 0
    %707 = vmatpush1.bf16.msra.mxu0 0
    %708 = vmatprep.subr.bf16.mxu0 0
    %709 = vmatpush1.bf16.msra.mxu0 0
    %710 = vmatprep.subr.bf16.mxu0 0
    %711 = vmatpush1.bf16.msra.mxu0 0
    %712 = vmatprep.subr.bf16.mxu0 0
    %713 = vmatpush1.bf16.msra.mxu0 0
    %714 = vmatprep.subr.bf16.mxu0 0
    %715 = vmatpush1.bf16.msra.mxu0 0
    %716 = vmatprep.subr.bf16.mxu0 0
    %717 = vmatpush1.bf16.msra.mxu0 0
    %718 = vmatprep.subr.bf16.mxu0 0
    %719 = vmatpush1.bf16.msra.mxu0 0
    %720 = vmatprep.subr.bf16.mxu0 0
    %721 = vmatpush1.bf16.msra.mxu0 0
    %722 = vmatprep.subr.bf16.mxu0 0
    %723 = vmatpush1.bf16.msra.mxu0 0
    %724 = vmatprep.mubr.bf16.mxu0 0
    %725 = vmatmul.mubr.bf16.gmra.mrb[0].mxu0 %v690
    %v726 = vpop.f32.mrb[0].mxu0
    %v727 = vadd.f32 0.0, %v726
    %v728 = vpop.f32.mrb[0].mxu0
    %v729 = vpop.f32.mrb[0].mxu0
    %v730 = vadd.f32 0.0, %v729
    %v731 = vpop.f32.mrb[0].mxu0
    %732 = vdwg.mxu0
    %735 = vrot.lane.b32.xlu0 %v485, 8
    %v736 = vpop.permute.xlu0 %735
    %737 = vrot.lane.b32.xlu0 %v488, 8
    %v738 = vpop.permute.xlu0 %737
    %743 = vrot.lane.b32.xlu0 %v606, 16
    %v744 = vpop.permute.xlu0 %743
    %745 = vrot.lane.b32.xlu0 %v609, 16
    %v746 = vpop.permute.xlu0 %745
    %751 = vrot.lane.b32.xlu0 %v727, 24
    %v752 = vpop.permute.xlu0 %751
    %753 = vrot.lane.b32.xlu0 %v730, 24
    %v754 = vpop.permute.xlu0 %753
    %v757 = vsel %vm251, %v364, %v736
    %v758 = vsel %vm251, %v367, %v738
    %v759 = vsel %vm299, %v757, %v744
    %v760 = vsel %vm299, %v758, %v746
    %vm761 = vcmask 195584
    %v762 = vsel %vm761, %v759, %v752
    %v763 = vsel %vm761, %v760, %v754
    %v764 = vpack.c.bf16 %v763, %v762
    %765 = vrot.lane.b32.xlu0 %v199, 32
    %v766 = vpop.permute.xlu0 %765
    %767 = vrot.lane.b32.xlu0 %v200, 32
    %v768 = vpop.permute.xlu0 %767
    %v772 = vsel %vm168, %v764, 0
    %774 = vmatprep.subr.bf16.mxu0 0
    %775 = vmatpush1.bf16.msra.mxu0 %v766
    %776 = vmatprep.subr.bf16.mxu0 0
    %777 = vmatpush1.bf16.msra.mxu0 %v768
    %778 = vmatprep.subr.bf16.mxu0 0
    %779 = vmatpush1.bf16.msra.mxu0 0
    %780 = vmatprep.subr.bf16.mxu0 0
    %781 = vmatpush1.bf16.msra.mxu0 0
    %782 = vmatprep.subr.bf16.mxu0 0
    %783 = vmatpush1.bf16.msra.mxu0 0
    %784 = vmatprep.subr.bf16.mxu0 0
    %785 = vmatpush1.bf16.msra.mxu0 0
    %786 = vmatprep.subr.bf16.mxu0 0
    %787 = vmatpush1.bf16.msra.mxu0 0
    %788 = vmatprep.subr.bf16.mxu0 0
    %789 = vmatpush1.bf16.msra.mxu0 0
    %790 = vmatprep.subr.bf16.mxu0 0
    %791 = vmatpush1.bf16.msra.mxu0 0
    %792 = vmatprep.subr.bf16.mxu0 0
    %793 = vmatpush1.bf16.msra.mxu0 0
    %794 = vmatprep.subr.bf16.mxu0 0
    %795 = vmatpush1.bf16.msra.mxu0 0
    %796 = vmatprep.subr.bf16.mxu0 0
    %797 = vmatpush1.bf16.msra.mxu0 0
    %798 = vmatprep.subr.bf16.mxu0 0
    %799 = vmatpush1.bf16.msra.mxu0 0
    %800 = vmatprep.subr.bf16.mxu0 0
    %801 = vmatpush1.bf16.msra.mxu0 0
    %802 = vmatprep.subr.bf16.mxu0 0
    %803 = vmatpush1.bf16.msra.mxu0 0
    %804 = vmatprep.subr.bf16.mxu0 0
    %805 = vmatpush1.bf16.msra.mxu0 0
    %806 = vmatprep.mubr.bf16.mxu0 0
    %807 = vmatmul.mubr.bf16.gmra.mrb[0].mxu0 %v772
    %v808 = vpop.f32.mrb[0].mxu0
    %v809 = vadd.f32 0.0, %v808
    %v810 = vpop.f32.mrb[0].mxu0
    %v811 = vpop.f32.mrb[0].mxu0
    %v812 = vadd.f32 0.0, %v811
    %v813 = vpop.f32.mrb[0].mxu0
    %814 = vdwg.mxu0
    %v815 = vadd.f32 %v153, %v809
    %v816 = vadd.f32 %v154, %v812
    %v817 = vld [vmem:[%s7 + $0x1] sm:$0x1]
    %v818 = vmul.f32 %v815, %v815
    %v819 = vmul.f32 %v816, %v816
    %v820 = vsel %vm168, %v818, 0.0
    %821 = vadd.xlane.f32.xlu0 %v820
    %v822 = vpop.xlane.xlu0 %821
    %v823 = vsel %vm168, %v819, 0.0
    %824 = vadd.xlane.f32.xlu0 %v823
    %v825 = vpop.xlane.xlu0 %824
    %v826 = vmul.f32 %v822, %v175
    %v827 = vmul.f32 %v825, %v175
    %v828 = vadd.f32 %v826, 1e-06
    %v829 = vadd.f32 %v827, 1e-06
    %v830 = vrsqrt.pop %v828
    %v831 = vrsqrt.pop %v829
    %v832 = vmul.f32 %v815, %v830
    %v833 = vmul.f32 %v816, %v831
    %v834 = vlaneseq
    %v835 = vshrl.u32 %v834, 7
    %v836 = vsub.s32 0, %v835
    %v837 = vrot.slane %v817, %v836
    %v838 = vmul.f32 %v832, %v837
    %v839 = vmul.f32 %v833, %v837
    %v840 = vpack.c.bf16 %v839, %v838
    %v841 = vunpack.c.h.b16 %v161
    %v842 = vunpack.c.h.b16 %v162
    %v843 = vunpack.c.h.b16 %v163
    %v844 = vunpack.c.h.b16 %v164
    %v845 = vpack.c.b16 %v842, %v841
    %v846 = vpack.c.b16 %v844, %v843
    %v850 = vsel %vm168, %v840, 0
    %852 = vmatprep.subr.bf16.mxu0 0
    %853 = vmatpush1.bf16.msra.mxu0 %v845
    %854 = vmatprep.subr.bf16.mxu0 0
    %855 = vmatpush1.bf16.msra.mxu0 %v846
    %856 = vmatprep.subr.bf16.mxu0 0
    %857 = vmatpush1.bf16.msra.mxu0 0
    %858 = vmatprep.subr.bf16.mxu0 0
    %859 = vmatpush1.bf16.msra.mxu0 0
    %860 = vmatprep.subr.bf16.mxu0 0
    %861 = vmatpush1.bf16.msra.mxu0 0
    %862 = vmatprep.subr.bf16.mxu0 0
    %863 = vmatpush1.bf16.msra.mxu0 0
    %864 = vmatprep.subr.bf16.mxu0 0
    %865 = vmatpush1.bf16.msra.mxu0 0
    %866 = vmatprep.subr.bf16.mxu0 0
    %867 = vmatpush1.bf16.msra.mxu0 0
    %868 = vmatprep.subr.bf16.mxu0 0
    %869 = vmatpush1.bf16.msra.mxu0 0
    %870 = vmatprep.subr.bf16.mxu0 0
    %871 = vmatpush1.bf16.msra.mxu0 0
    %872 = vmatprep.subr.bf16.mxu0 0
    %873 = vmatpush1.bf16.msra.mxu0 0
    %874 = vmatprep.subr.bf16.mxu0 0
    %875 = vmatpush1.bf16.msra.mxu0 0
    %876 = vmatprep.subr.bf16.mxu0 0
    %877 = vmatpush1.bf16.msra.mxu0 0
    %878 = vmatprep.subr.bf16.mxu0 0
    %879 = vmatpush1.bf16.msra.mxu0 0
    %880 = vmatprep.subr.bf16.mxu0 0
    %881 = vmatpush1.bf16.msra.mxu0 0
    %882 = vmatprep.subr.bf16.mxu0 0
    %883 = vmatpush1.bf16.msra.mxu0 0
    %884 = vmatprep.mubr.bf16.mxu0 0
    %885 = vmatmul.mubr.bf16.gmra.mrb[0].mxu0 %v850
    %v886 = vpop.f32.mrb[0].mxu0
    %v887 = vadd.f32 0.0, %v886
    %v888 = vpop.f32.mrb[0].mxu0
    %v889 = vpop.f32.mrb[0].mxu0
    %v890 = vadd.f32 0.0, %v889
    %v891 = vpop.f32.mrb[0].mxu0
    %892 = vdwg.mxu0
    %v893 = vmax.f32 %v887, 0.0
    %v894 = vmax.f32 %v890, 0.0
    %v895 = vpack.c.bf16 %v894, %v893
    %896 = vrot.lane.b32.xlu0 %v845, 64
    %v897 = vpop.permute.xlu0 %896
    %898 = vrot.lane.b32.xlu0 %v846, 64
    %v899 = vpop.permute.xlu0 %898
    %vm900 = vcmask 523264
    %v902 = vsel %vm900, %v895, 0
    %v905 = vsel %vm900, %v897, 0
    %v908 = vsel %vm900, %v899, 0
    %910 = vmatprep.subr.bf16.mxu0 0
    %911 = vmatpush1.bf16.xpose.msra.mxu0 %v905
    %912 = vmatprep.subr.bf16.mxu0 0
    %913 = vmatpush1.bf16.xpose.msra.mxu0 %v908
    %914 = vmatprep.subr.bf16.mxu0 0
    %915 = vmatpush1.bf16.xpose.msra.mxu0 0
    %916 = vmatprep.subr.bf16.mxu0 0
    %917 = vmatpush1.bf16.xpose.msra.mxu0 0
    %918 = vmatprep.subr.bf16.mxu0 0
    %919 = vmatpush1.bf16.xpose.msra.mxu0 0
    %920 = vmatprep.subr.bf16.mxu0 0
    %921 = vmatpush1.bf16.xpose.msra.mxu0 0
    %922 = vmatprep.subr.bf16.mxu0 0
    %923 = vmatpush1.bf16.xpose.msra.mxu0 0
    %924 = vmatprep.subr.bf16.mxu0 0
    %925 = vmatpush1.bf16.xpose.msra.mxu0 0
    %926 = vmatprep.subr.bf16.mxu0 0
    %927 = vmatpush1.bf16.xpose.msra.mxu0 0
    %928 = vmatprep.subr.bf16.mxu0 0
    %929 = vmatpush1.bf16.xpose.msra.mxu0 0
    %930 = vmatprep.subr.bf16.mxu0 0
    %931 = vmatpush1.bf16.xpose.msra.mxu0 0
    %932 = vmatprep.subr.bf16.mxu0 0
    %933 = vmatpush1.bf16.xpose.msra.mxu0 0
    %934 = vmatprep.subr.bf16.mxu0 0
    %935 = vmatpush1.bf16.xpose.msra.mxu0 0
    %936 = vmatprep.subr.bf16.mxu0 0
    %937 = vmatpush1.bf16.xpose.msra.mxu0 0
    %938 = vmatprep.subr.bf16.mxu0 0
    %939 = vmatpush1.bf16.xpose.msra.mxu0 0
    %940 = vmatprep.subr.bf16.mxu0 0
    %941 = vmatpush1.bf16.xpose.msra.mxu0 0
    %942 = vmatprep.mubr.bf16.mxu0 0
    %943 = vmatmul.mubr.bf16.gmra.mrb[0].mxu0 %v902
    %v944 = vpop.f32.mrb[0].mxu0
    %v945 = vadd.f32 0.0, %v944
    %v946 = vpop.f32.mrb[0].mxu0
    %v947 = vpop.f32.mrb[0].mxu0
    %v948 = vadd.f32 0.0, %v947
    %v949 = vpop.f32.mrb[0].mxu0
    %950 = vdwg.mxu0
    %v951 = vadd.f32 %v815, %v945
    %v952 = vadd.f32 %v816, %v948
    %s953 = scalar_lea.vmem %s8, 32
    %v954 = vld [vmem:[%s953] sm:$0xff]
    %v955 = vld [vmem:[%s953 + $0x8] sm:$0xff]
    %v956 = vld [vmem:[%s953 + $0x10] sm:$0xff]
    %v957 = vld [vmem:[%s953 + $0x18] sm:$0xff]
    %v958 = vld [vmem:[%s7 + $0x2] sm:$0x1]
    %v959 = vmul.f32 %v951, %v951
    %v960 = vmul.f32 %v952, %v952
    %v961 = vsel %vm168, %v959, 0.0
    %962 = vadd.xlane.f32.xlu0 %v961
    %v963 = vpop.xlane.xlu0 %962
    %v964 = vsel %vm168, %v960, 0.0
    %965 = vadd.xlane.f32.xlu0 %v964
    %v966 = vpop.xlane.xlu0 %965
    %v967 = vmul.f32 %v963, %v175
    %v968 = vmul.f32 %v966, %v175
    %v969 = vadd.f32 %v967, 1e-06
    %v970 = vadd.f32 %v968, 1e-06
    %v971 = vrsqrt.pop %v969
    %v972 = vrsqrt.pop %v970
    %v973 = vmul.f32 %v951, %v971
    %v974 = vmul.f32 %v952, %v972
    %v975 = vlaneseq
    %v976 = vshrl.u32 %v975, 7
    %v977 = vsub.s32 0, %v976
    %v978 = vrot.slane %v958, %v977
    %v979 = vmul.f32 %v973, %v978
    %v980 = vmul.f32 %v974, %v978
    %v981 = vpack.c.bf16 %v980, %v979
    %v986 = vunpack.c.l.b16 %v954
    %v987 = vunpack.c.l.b16 %v955
    %v988 = vunpack.c.l.b16 %v956
    %v989 = vunpack.c.l.b16 %v957
    %v990 = vpack.c.b16 %v987, %v986
    %v991 = vpack.c.b16 %v989, %v988
    %v995 = vsel %vm168, %v981, 0
    %997 = vmatprep.subr.bf16.mxu0 0
    %998 = vmatpush1.bf16.msra.mxu0 %v990
    %999 = vmatprep.subr.bf16.mxu0 0
    %1000 = vmatpush1.bf16.msra.mxu0 %v991
    %1001 = vmatprep.subr.bf16.mxu0 0
    %1002 = vmatpush1.bf16.msra.mxu0 0
    %1003 = vmatprep.subr.bf16.mxu0 0
    %1004 = vmatpush1.bf16.msra.mxu0 0
    %1005 = vmatprep.subr.bf16.mxu0 0
    %1006 = vmatpush1.bf16.msra.mxu0 0
    %1007 = vmatprep.subr.bf16.mxu0 0
    %1008 = vmatpush1.bf16.msra.mxu0 0
    %1009 = vmatprep.subr.bf16.mxu0 0
    %1010 = vmatpush1.bf16.msra.mxu0 0
    %1011 = vmatprep.subr.bf16.mxu0 0
    %1012 = vmatpush1.bf16.msra.mxu0 0
    %1013 = vmatprep.subr.bf16.mxu0 0
    %1014 = vmatpush1.bf16.msra.mxu0 0
    %1015 = vmatprep.subr.bf16.mxu0 0
    %1016 = vmatpush1.bf16.msra.mxu0 0
    %1017 = vmatprep.subr.bf16.mxu0 0
    %1018 = vmatpush1.bf16.msra.mxu0 0
    %1019 = vmatprep.subr.bf16.mxu0 0
    %1020 = vmatpush1.bf16.msra.mxu0 0
    %1021 = vmatprep.subr.bf16.mxu0 0
    %1022 = vmatpush1.bf16.msra.mxu0 0
    %1023 = vmatprep.subr.bf16.mxu0 0
    %1024 = vmatpush1.bf16.msra.mxu0 0
    %1025 = vmatprep.subr.bf16.mxu0 0
    %1026 = vmatpush1.bf16.msra.mxu0 0
    %1027 = vmatprep.subr.bf16.mxu0 0
    %1028 = vmatpush1.bf16.msra.mxu0 0
    %1029 = vmatprep.mubr.bf16.mxu0 0
    %1030 = vmatmul.mubr.bf16.gmra.mrb[0].mxu0 %v995
    %v1031 = vpop.f32.mrb[0].mxu0
    %v1032 = vadd.f32 0.0, %v1031
    %v1033 = vpop.f32.mrb[0].mxu0
    %v1034 = vpop.f32.mrb[0].mxu0
    %v1035 = vadd.f32 0.0, %v1034
    %v1036 = vpop.f32.mrb[0].mxu0
    %1037 = vdwg.mxu0
    %v1038 = vpack.c.bf16 %v1035, %v1032
    %1040 = vrot.lane.b32.xlu0 %v1038, 96
    %v1041 = vpop.permute.xlu0 %1040
    %v1043 = vsel %vm251, %v1038, 0
    %v1046 = vsel %vm251, %v1041, 0
    %1048 = vmatprep.subr.bf16.mxu0 0
    %1049 = vmatpush1.bf16.xpose.msra.mxu0 %v1046
    %1050 = vmatprep.subr.bf16.mxu0 0
    %1051 = vmatpush1.bf16.xpose.msra.mxu0 0
    %1052 = vmatprep.subr.bf16.mxu0 0
    %1053 = vmatpush1.bf16.xpose.msra.mxu0 0
    %1054 = vmatprep.subr.bf16.mxu0 0
    %1055 = vmatpush1.bf16.xpose.msra.mxu0 0
    %1056 = vmatprep.subr.bf16.mxu0 0
    %1057 = vmatpush1.bf16.xpose.msra.mxu0 0
    %1058 = vmatprep.subr.bf16.mxu0 0
    %1059 = vmatpush1.bf16.xpose.msra.mxu0 0
    %1060 = vmatprep.subr.bf16.mxu0 0
    %1061 = vmatpush1.bf16.xpose.msra.mxu0 0
    %1062 = vmatprep.subr.bf16.mxu0 0
    %1063 = vmatpush1.bf16.xpose.msra.mxu0 0
    %1064 = vmatprep.subr.bf16.mxu0 0
    %1065 = vmatpush1.bf16.xpose.msra.mxu0 0
    %1066 = vmatprep.subr.bf16.mxu0 0
    %1067 = vmatpush1.bf16.xpose.msra.mxu0 0
    %1068 = vmatprep.subr.bf16.mxu0 0
    %1069 = vmatpush1.bf16.xpose.msra.mxu0 0
    %1070 = vmatprep.subr.bf16.mxu0 0
    %1071 = vmatpush1.bf16.xpose.msra.mxu0 0
    %1072 = vmatprep.subr.bf16.mxu0 0
    %1073 = vmatpush1.bf16.xpose.msra.mxu0 0
    %1074 = vmatprep.subr.bf16.mxu0 0
    %1075 = vmatpush1.bf16.xpose.msra.mxu0 0
    %1076 = vmatprep.subr.bf16.mxu0 0
    %1077 = vmatpush1.bf16.xpose.msra.mxu0 0
    %1078 = vmatprep.subr.bf16.mxu0 0
    %1079 = vmatpush1.bf16.xpose.msra.mxu0 0
    %1080 = vmatprep.mubr.bf16.mxu0 0
    %1081 = vmatmul.mubr.bf16.gmra.mrb[0].mxu0 %v1043
    %v1082 = vpop.f32.mrb[0].mxu0
    %v1083 = vadd.f32 %v155, %v1082
    %v1084 = vpop.f32.mrb[0].mxu0
    %v1085 = vpop.f32.mrb[0].mxu0
    %v1086 = vadd.f32 %v156, %v1085
    %v1087 = vpop.f32.mrb[0].mxu0
    %1088 = vdwg.mxu0
    %v1089 = vsel %vm299, %v1083, -inf
    %1090 = vmax.xlane.f32.xlu0 %v1089
    %v1091 = vpop.xlane.xlu0 %1090
    %v1092 = vsel %vm299, %v1086, -inf
    %1093 = vmax.xlane.f32.xlu0 %v1092
    %v1094 = vpop.xlane.xlu0 %1093
    %v1095 = vsub.f32 %v1083, %v1091
    %v1096 = vsub.f32 %v1086, %v1094
    %v1097 = vmul.f32 %v1095, 1.442695
    %v1098 = vpow.pop %v1097
    %v1099 = vmul.f32 %v1096, 1.442695
    %v1100 = vpow.pop %v1099
    %v1101 = vsel %vm299, %v1098, 0.0
    %1102 = vadd.xlane.f32.xlu0 %v1101
    %v1103 = vpop.xlane.xlu0 %1102
    %v1104 = vsel %vm299, %v1100, 0.0
    %1105 = vadd.xlane.f32.xlu0 %v1104
    %v1106 = vpop.xlane.xlu0 %1105
    %v1107 = vrcp.pop %v1103
    %v1108 = vrcp.pop %v1106
    %v1109 = vmul.f32 %v1098, %v1107
    %v1110 = vmul.f32 %v1100, %v1108
    %v1111 = vpack.c.bf16 %v1110, %v1109
    %1112 = vrot.lane.b32.xlu0 %v1038, 64
    %v1113 = vpop.permute.xlu0 %1112
    %v1116 = vsel %vm299, %v1111, 0
    %1118 = vmatprep.subr.bf16.mxu0 0
    %1119 = vmatpush1.bf16.msra.mxu0 %v1113
    %1120 = vmatprep.subr.bf16.mxu0 0
    %1121 = vmatpush1.bf16.msra.mxu0 0
    %1122 = vmatprep.subr.bf16.mxu0 0
    %1123 = vmatpush1.bf16.msra.mxu0 0
    %1124 = vmatprep.subr.bf16.mxu0 0
    %1125 = vmatpush1.bf16.msra.mxu0 0
    %1126 = vmatprep.subr.bf16.mxu0 0
    %1127 = vmatpush1.bf16.msra.mxu0 0
    %1128 = vmatprep.subr.bf16.mxu0 0
    %1129 = vmatpush1.bf16.msra.mxu0 0
    %1130 = vmatprep.subr.bf16.mxu0 0
    %1131 = vmatpush1.bf16.msra.mxu0 0
    %1132 = vmatprep.subr.bf16.mxu0 0
    %1133 = vmatpush1.bf16.msra.mxu0 0
    %1134 = vmatprep.subr.bf16.mxu0 0
    %1135 = vmatpush1.bf16.msra.mxu0 0
    %1136 = vmatprep.subr.bf16.mxu0 0
    %1137 = vmatpush1.bf16.msra.mxu0 0
    %1138 = vmatprep.subr.bf16.mxu0 0
    %1139 = vmatpush1.bf16.msra.mxu0 0
    %1140 = vmatprep.subr.bf16.mxu0 0
    %1141 = vmatpush1.bf16.msra.mxu0 0
    %1142 = vmatprep.subr.bf16.mxu0 0
    %1143 = vmatpush1.bf16.msra.mxu0 0
    %1144 = vmatprep.subr.bf16.mxu0 0
    %1145 = vmatpush1.bf16.msra.mxu0 0
    %1146 = vmatprep.subr.bf16.mxu0 0
    %1147 = vmatpush1.bf16.msra.mxu0 0
    %1148 = vmatprep.subr.bf16.mxu0 0
    %1149 = vmatpush1.bf16.msra.mxu0 0
    %1150 = vmatprep.mubr.bf16.mxu0 0
    %1151 = vmatmul.mubr.bf16.gmra.mrb[0].mxu0 %v1116
    %v1152 = vpop.f32.mrb[0].mxu0
    %v1153 = vadd.f32 0.0, %v1152
    %v1154 = vpop.f32.mrb[0].mxu0
    %v1155 = vpop.f32.mrb[0].mxu0
    %v1156 = vadd.f32 0.0, %v1155
    %v1157 = vpop.f32.mrb[0].mxu0
    %1158 = vdwg.mxu0
    %1159 = vrot.lane.b32.xlu0 %v1038, 120
    %v1160 = vpop.permute.xlu0 %1159
    %1161 = vrot.lane.b32.xlu0 %v1038, 88
    %v1162 = vpop.permute.xlu0 %1161
    %v1164 = vsel %vm251, %v1160, 0
    %v1167 = vsel %vm251, %v1162, 0
    %1169 = vmatprep.subr.bf16.mxu0 0
    %1170 = vmatpush1.bf16.xpose.msra.mxu0 %v1167
    %1171 = vmatprep.subr.bf16.mxu0 0
    %1172 = vmatpush1.bf16.xpose.msra.mxu0 0
    %1173 = vmatprep.subr.bf16.mxu0 0
    %1174 = vmatpush1.bf16.xpose.msra.mxu0 0
    %1175 = vmatprep.subr.bf16.mxu0 0
    %1176 = vmatpush1.bf16.xpose.msra.mxu0 0
    %1177 = vmatprep.subr.bf16.mxu0 0
    %1178 = vmatpush1.bf16.xpose.msra.mxu0 0
    %1179 = vmatprep.subr.bf16.mxu0 0
    %1180 = vmatpush1.bf16.xpose.msra.mxu0 0
    %1181 = vmatprep.subr.bf16.mxu0 0
    %1182 = vmatpush1.bf16.xpose.msra.mxu0 0
    %1183 = vmatprep.subr.bf16.mxu0 0
    %1184 = vmatpush1.bf16.xpose.msra.mxu0 0
    %1185 = vmatprep.subr.bf16.mxu0 0
    %1186 = vmatpush1.bf16.xpose.msra.mxu0 0
    %1187 = vmatprep.subr.bf16.mxu0 0
    %1188 = vmatpush1.bf16.xpose.msra.mxu0 0
    %1189 = vmatprep.subr.bf16.mxu0 0
    %1190 = vmatpush1.bf16.xpose.msra.mxu0 0
    %1191 = vmatprep.subr.bf16.mxu0 0
    %1192 = vmatpush1.bf16.xpose.msra.mxu0 0
    %1193 = vmatprep.subr.bf16.mxu0 0
    %1194 = vmatpush1.bf16.xpose.msra.mxu0 0
    %1195 = vmatprep.subr.bf16.mxu0 0
    %1196 = vmatpush1.bf16.xpose.msra.mxu0 0
    %1197 = vmatprep.subr.bf16.mxu0 0
    %1198 = vmatpush1.bf16.xpose.msra.mxu0 0
    %1199 = vmatprep.subr.bf16.mxu0 0
    %1200 = vmatpush1.bf16.xpose.msra.mxu0 0
    %1201 = vmatprep.mubr.bf16.mxu0 0
    %1202 = vmatmul.mubr.bf16.gmra.mrb[0].mxu0 %v1164
    %v1203 = vpop.f32.mrb[0].mxu0
    %v1204 = vadd.f32 %v155, %v1203
    %v1205 = vpop.f32.mrb[0].mxu0
    %v1206 = vpop.f32.mrb[0].mxu0
    %v1207 = vadd.f32 %v156, %v1206
    %v1208 = vpop.f32.mrb[0].mxu0
    %1209 = vdwg.mxu0
    %v1210 = vsel %vm299, %v1204, -inf
    %1211 = vmax.xlane.f32.xlu0 %v1210
    %v1212 = vpop.xlane.xlu0 %1211
    %v1213 = vsel %vm299, %v1207, -inf
    %1214 = vmax.xlane.f32.xlu0 %v1213
    %v1215 = vpop.xlane.xlu0 %1214
    %v1216 = vsub.f32 %v1204, %v1212
    %v1217 = vsub.f32 %v1207, %v1215
    %v1218 = vmul.f32 %v1216, 1.442695
    %v1219 = vpow.pop %v1218
    %v1220 = vmul.f32 %v1217, 1.442695
    %v1221 = vpow.pop %v1220
    %v1222 = vsel %vm299, %v1219, 0.0
    %1223 = vadd.xlane.f32.xlu0 %v1222
    %v1224 = vpop.xlane.xlu0 %1223
    %v1225 = vsel %vm299, %v1221, 0.0
    %1226 = vadd.xlane.f32.xlu0 %v1225
    %v1227 = vpop.xlane.xlu0 %1226
    %v1228 = vrcp.pop %v1224
    %v1229 = vrcp.pop %v1227
    %v1230 = vmul.f32 %v1219, %v1228
    %v1231 = vmul.f32 %v1221, %v1229
    %v1232 = vpack.c.bf16 %v1231, %v1230
    %1233 = vrot.lane.b32.xlu0 %v1038, 56
    %v1234 = vpop.permute.xlu0 %1233
    %v1237 = vsel %vm299, %v1232, 0
    %1239 = vmatprep.subr.bf16.mxu0 0
    %1240 = vmatpush1.bf16.msra.mxu0 %v1234
    %1241 = vmatprep.subr.bf16.mxu0 0
    %1242 = vmatpush1.bf16.msra.mxu0 0
    %1243 = vmatprep.subr.bf16.mxu0 0
    %1244 = vmatpush1.bf16.msra.mxu0 0
    %1245 = vmatprep.subr.bf16.mxu0 0
    %1246 = vmatpush1.bf16.msra.mxu0 0
    %1247 = vmatprep.subr.bf16.mxu0 0
    %1248 = vmatpush1.bf16.msra.mxu0 0
    %1249 = vmatprep.subr.bf16.mxu0 0
    %1250 = vmatpush1.bf16.msra.mxu0 0
    %1251 = vmatprep.subr.bf16.mxu0 0
    %1252 = vmatpush1.bf16.msra.mxu0 0
    %1253 = vmatprep.subr.bf16.mxu0 0
    %1254 = vmatpush1.bf16.msra.mxu0 0
    %1255 = vmatprep.subr.bf16.mxu0 0
    %1256 = vmatpush1.bf16.msra.mxu0 0
    %1257 = vmatprep.subr.bf16.mxu0 0
    %1258 = vmatpush1.bf16.msra.mxu0 0
    %1259 = vmatprep.subr.bf16.mxu0 0
    %1260 = vmatpush1.bf16.msra.mxu0 0
    %1261 = vmatprep.subr.bf16.mxu0 0
    %1262 = vmatpush1.bf16.msra.mxu0 0
    %1263 = vmatprep.subr.bf16.mxu0 0
    %1264 = vmatpush1.bf16.msra.mxu0 0
    %1265 = vmatprep.subr.bf16.mxu0 0
    %1266 = vmatpush1.bf16.msra.mxu0 0
    %1267 = vmatprep.subr.bf16.mxu0 0
    %1268 = vmatpush1.bf16.msra.mxu0 0
    %1269 = vmatprep.subr.bf16.mxu0 0
    %1270 = vmatpush1.bf16.msra.mxu0 0
    %1271 = vmatprep.mubr.bf16.mxu0 0
    %1272 = vmatmul.mubr.bf16.gmra.mrb[0].mxu0 %v1237
    %v1273 = vpop.f32.mrb[0].mxu0
    %v1274 = vadd.f32 0.0, %v1273
    %v1275 = vpop.f32.mrb[0].mxu0
    %v1276 = vpop.f32.mrb[0].mxu0
    %v1277 = vadd.f32 0.0, %v1276
    %v1278 = vpop.f32.mrb[0].mxu0
    %1279 = vdwg.mxu0
    %1280 = vrot.lane.b32.xlu0 %v1038, 112
    %v1281 = vpop.permute.xlu0 %1280
    %1282 = vrot.lane.b32.xlu0 %v1038, 80
    %v1283 = vpop.permute.xlu0 %1282
    %v1285 = vsel %vm251, %v1281, 0
    %v1288 = vsel %vm251, %v1283, 0
    %1290 = vmatprep.subr.bf16.mxu0 0
    %1291 = vmatpush1.bf16.xpose.msra.mxu0 %v1288
    %1292 = vmatprep.subr.bf16.mxu0 0
    %1293 = vmatpush1.bf16.xpose.msra.mxu0 0
    %1294 = vmatprep.subr.bf16.mxu0 0
    %1295 = vmatpush1.bf16.xpose.msra.mxu0 0
    %1296 = vmatprep.subr.bf16.mxu0 0
    %1297 = vmatpush1.bf16.xpose.msra.mxu0 0
    %1298 = vmatprep.subr.bf16.mxu0 0
    %1299 = vmatpush1.bf16.xpose.msra.mxu0 0
    %1300 = vmatprep.subr.bf16.mxu0 0
    %1301 = vmatpush1.bf16.xpose.msra.mxu0 0
    %1302 = vmatprep.subr.bf16.mxu0 0
    %1303 = vmatpush1.bf16.xpose.msra.mxu0 0
    %1304 = vmatprep.subr.bf16.mxu0 0
    %1305 = vmatpush1.bf16.xpose.msra.mxu0 0
    %1306 = vmatprep.subr.bf16.mxu0 0
    %1307 = vmatpush1.bf16.xpose.msra.mxu0 0
    %1308 = vmatprep.subr.bf16.mxu0 0
    %1309 = vmatpush1.bf16.xpose.msra.mxu0 0
    %1310 = vmatprep.subr.bf16.mxu0 0
    %1311 = vmatpush1.bf16.xpose.msra.mxu0 0
    %1312 = vmatprep.subr.bf16.mxu0 0
    %1313 = vmatpush1.bf16.xpose.msra.mxu0 0
    %1314 = vmatprep.subr.bf16.mxu0 0
    %1315 = vmatpush1.bf16.xpose.msra.mxu0 0
    %1316 = vmatprep.subr.bf16.mxu0 0
    %1317 = vmatpush1.bf16.xpose.msra.mxu0 0
    %1318 = vmatprep.subr.bf16.mxu0 0
    %1319 = vmatpush1.bf16.xpose.msra.mxu0 0
    %1320 = vmatprep.subr.bf16.mxu0 0
    %1321 = vmatpush1.bf16.xpose.msra.mxu0 0
    %1322 = vmatprep.mubr.bf16.mxu0 0
    %1323 = vmatmul.mubr.bf16.gmra.mrb[0].mxu0 %v1285
    %v1324 = vpop.f32.mrb[0].mxu0
    %v1325 = vadd.f32 %v155, %v1324
    %v1326 = vpop.f32.mrb[0].mxu0
    %v1327 = vpop.f32.mrb[0].mxu0
    %v1328 = vadd.f32 %v156, %v1327
    %v1329 = vpop.f32.mrb[0].mxu0
    %1330 = vdwg.mxu0
    %v1331 = vsel %vm299, %v1325, -inf
    %1332 = vmax.xlane.f32.xlu0 %v1331
    %v1333 = vpop.xlane.xlu0 %1332
    %v1334 = vsel %vm299, %v1328, -inf
    %1335 = vmax.xlane.f32.xlu0 %v1334
    %v1336 = vpop.xlane.xlu0 %1335
    %v1337 = vsub.f32 %v1325, %v1333
    %v1338 = vsub.f32 %v1328, %v1336
    %v1339 = vmul.f32 %v1337, 1.442695
    %v1340 = vpow.pop %v1339
    %v1341 = vmul.f32 %v1338, 1.442695
    %v1342 = vpow.pop %v1341
    %v1343 = vsel %vm299, %v1340, 0.0
    %1344 = vadd.xlane.f32.xlu0 %v1343
    %v1345 = vpop.xlane.xlu0 %1344
    %v1346 = vsel %vm299, %v1342, 0.0
    %1347 = vadd.xlane.f32.xlu0 %v1346
    %v1348 = vpop.xlane.xlu0 %1347
    %v1349 = vrcp.pop %v1345
    %v1350 = vrcp.pop %v1348
    %v1351 = vmul.f32 %v1340, %v1349
    %v1352 = vmul.f32 %v1342, %v1350
    %v1353 = vpack.c.bf16 %v1352, %v1351
    %1354 = vrot.lane.b32.xlu0 %v1038, 48
    %v1355 = vpop.permute.xlu0 %1354
    %v1358 = vsel %vm299, %v1353, 0
    %1360 = vmatprep.subr.bf16.mxu0 0
    %1361 = vmatpush1.bf16.msra.mxu0 %v1355
    %1362 = vmatprep.subr.bf16.mxu0 0
    %1363 = vmatpush1.bf16.msra.mxu0 0
    %1364 = vmatprep.subr.bf16.mxu0 0
    %1365 = vmatpush1.bf16.msra.mxu0 0
    %1366 = vmatprep.subr.bf16.mxu0 0
    %1367 = vmatpush1.bf16.msra.mxu0 0
    %1368 = vmatprep.subr.bf16.mxu0 0
    %1369 = vmatpush1.bf16.msra.mxu0 0
    %1370 = vmatprep.subr.bf16.mxu0 0
    %1371 = vmatpush1.bf16.msra.mxu0 0
    %1372 = vmatprep.subr.bf16.mxu0 0
    %1373 = vmatpush1.bf16.msra.mxu0 0
    %1374 = vmatprep.subr.bf16.mxu0 0
    %1375 = vmatpush1.bf16.msra.mxu0 0
    %1376 = vmatprep.subr.bf16.mxu0 0
    %1377 = vmatpush1.bf16.msra.mxu0 0
    %1378 = vmatprep.subr.bf16.mxu0 0
    %1379 = vmatpush1.bf16.msra.mxu0 0
    %1380 = vmatprep.subr.bf16.mxu0 0
    %1381 = vmatpush1.bf16.msra.mxu0 0
    %1382 = vmatprep.subr.bf16.mxu0 0
    %1383 = vmatpush1.bf16.msra.mxu0 0
    %1384 = vmatprep.subr.bf16.mxu0 0
    %1385 = vmatpush1.bf16.msra.mxu0 0
    %1386 = vmatprep.subr.bf16.mxu0 0
    %1387 = vmatpush1.bf16.msra.mxu0 0
    %1388 = vmatprep.subr.bf16.mxu0 0
    %1389 = vmatpush1.bf16.msra.mxu0 0
    %1390 = vmatprep.subr.bf16.mxu0 0
    %1391 = vmatpush1.bf16.msra.mxu0 0
    %1392 = vmatprep.mubr.bf16.mxu0 0
    %1393 = vmatmul.mubr.bf16.gmra.mrb[0].mxu0 %v1358
    %v1394 = vpop.f32.mrb[0].mxu0
    %v1395 = vadd.f32 0.0, %v1394
    %v1396 = vpop.f32.mrb[0].mxu0
    %v1397 = vpop.f32.mrb[0].mxu0
    %v1398 = vadd.f32 0.0, %v1397
    %v1399 = vpop.f32.mrb[0].mxu0
    %1400 = vdwg.mxu0
    %1401 = vrot.lane.b32.xlu0 %v1038, 104
    %v1402 = vpop.permute.xlu0 %1401
    %1403 = vrot.lane.b32.xlu0 %v1038, 72
    %v1404 = vpop.permute.xlu0 %1403
    %v1406 = vsel %vm251, %v1402, 0
    %v1409 = vsel %vm251, %v1404, 0
    %1411 = vmatprep.subr.bf16.mxu0 0
    %1412 = vmatpush1.bf16.xpose.msra.mxu0 %v1409
    %1413 = vmatprep.subr.bf16.mxu0 0
    %1414 = vmatpush1.bf16.xpose.msra.mxu0 0
    %1415 = vmatprep.subr.bf16.mxu0 0
    %1416 = vmatpush1.bf16.xpose.msra.mxu0 0
    %1417 = vmatprep.subr.bf16.mxu0 0
    %1418 = vmatpush1.bf16.xpose.msra.mxu0 0
    %1419 = vmatprep.subr.bf16.mxu0 0
    %1420 = vmatpush1.bf16.xpose.msra.mxu0 0
    %1421 = vmatprep.subr.bf16.mxu0 0
    %1422 = vmatpush1.bf16.xpose.msra.mxu0 0
    %1423 = vmatprep.subr.bf16.mxu0 0
    %1424 = vmatpush1.bf16.xpose.msra.mxu0 0
    %1425 = vmatprep.subr.bf16.mxu0 0
    %1426 = vmatpush1.bf16.xpose.msra.mxu0 0
    %1427 = vmatprep.subr.bf16.mxu0 0
    %1428 = vmatpush1.bf16.xpose.msra.mxu0 0
    %1429 = vmatprep.subr.bf16.mxu0 0
    %1430 = vmatpush1.bf16.xpose.msra.mxu0 0
    %1431 = vmatprep.subr.bf16.mxu0 0
    %1432 = vmatpush1.bf16.xpose.msra.mxu0 0
    %1433 = vmatprep.subr.bf16.mxu0 0
    %1434 = vmatpush1.bf16.xpose.msra.mxu0 0
    %1435 = vmatprep.subr.bf16.mxu0 0
    %1436 = vmatpush1.bf16.xpose.msra.mxu0 0
    %1437 = vmatprep.subr.bf16.mxu0 0
    %1438 = vmatpush1.bf16.xpose.msra.mxu0 0
    %1439 = vmatprep.subr.bf16.mxu0 0
    %1440 = vmatpush1.bf16.xpose.msra.mxu0 0
    %1441 = vmatprep.subr.bf16.mxu0 0
    %1442 = vmatpush1.bf16.xpose.msra.mxu0 0
    %1443 = vmatprep.mubr.bf16.mxu0 0
    %1444 = vmatmul.mubr.bf16.gmra.mrb[0].mxu0 %v1406
    %v1445 = vpop.f32.mrb[0].mxu0
    %v1446 = vadd.f32 %v155, %v1445
    %v1447 = vpop.f32.mrb[0].mxu0
    %v1448 = vpop.f32.mrb[0].mxu0
    %v1449 = vadd.f32 %v156, %v1448
    %v1450 = vpop.f32.mrb[0].mxu0
    %1451 = vdwg.mxu0
    %v1452 = vsel %vm299, %v1446, -inf
    %1453 = vmax.xlane.f32.xlu0 %v1452
    %v1454 = vpop.xlane.xlu0 %1453
    %v1455 = vsel %vm299, %v1449, -inf
    %1456 = vmax.xlane.f32.xlu0 %v1455
    %v1457 = vpop.xlane.xlu0 %1456
    %v1458 = vsub.f32 %v1446, %v1454
    %v1459 = vsub.f32 %v1449, %v1457
    %v1460 = vmul.f32 %v1458, 1.442695
    %v1461 = vpow.pop %v1460
    %v1462 = vmul.f32 %v1459, 1.442695
    %v1463 = vpow.pop %v1462
    %v1464 = vsel %vm299, %v1461, 0.0
    %1465 = vadd.xlane.f32.xlu0 %v1464
    %v1466 = vpop.xlane.xlu0 %1465
    %v1467 = vsel %vm299, %v1463, 0.0
    %1468 = vadd.xlane.f32.xlu0 %v1467
    %v1469 = vpop.xlane.xlu0 %1468
    %v1470 = vrcp.pop %v1466
    %v1471 = vrcp.pop %v1469
    %v1472 = vmul.f32 %v1461, %v1470
    %v1473 = vmul.f32 %v1463, %v1471
    %v1474 = vpack.c.bf16 %v1473, %v1472
    %1475 = vrot.lane.b32.xlu0 %v1038, 40
    %v1476 = vpop.permute.xlu0 %1475
    %v1479 = vsel %vm299, %v1474, 0
    %1481 = vmatprep.subr.bf16.mxu0 0
    %1482 = vmatpush1.bf16.msra.mxu0 %v1476
    %1483 = vmatprep.subr.bf16.mxu0 0
    %1484 = vmatpush1.bf16.msra.mxu0 0
    %1485 = vmatprep.subr.bf16.mxu0 0
    %1486 = vmatpush1.bf16.msra.mxu0 0
    %1487 = vmatprep.subr.bf16.mxu0 0
    %1488 = vmatpush1.bf16.msra.mxu0 0
    %1489 = vmatprep.subr.bf16.mxu0 0
    %1490 = vmatpush1.bf16.msra.mxu0 0
    %1491 = vmatprep.subr.bf16.mxu0 0
    %1492 = vmatpush1.bf16.msra.mxu0 0
    %1493 = vmatprep.subr.bf16.mxu0 0
    %1494 = vmatpush1.bf16.msra.mxu0 0
    %1495 = vmatprep.subr.bf16.mxu0 0
    %1496 = vmatpush1.bf16.msra.mxu0 0
    %1497 = vmatprep.subr.bf16.mxu0 0
    %1498 = vmatpush1.bf16.msra.mxu0 0
    %1499 = vmatprep.subr.bf16.mxu0 0
    %1500 = vmatpush1.bf16.msra.mxu0 0
    %1501 = vmatprep.subr.bf16.mxu0 0
    %1502 = vmatpush1.bf16.msra.mxu0 0
    %1503 = vmatprep.subr.bf16.mxu0 0
    %1504 = vmatpush1.bf16.msra.mxu0 0
    %1505 = vmatprep.subr.bf16.mxu0 0
    %1506 = vmatpush1.bf16.msra.mxu0 0
    %1507 = vmatprep.subr.bf16.mxu0 0
    %1508 = vmatpush1.bf16.msra.mxu0 0
    %1509 = vmatprep.subr.bf16.mxu0 0
    %1510 = vmatpush1.bf16.msra.mxu0 0
    %1511 = vmatprep.subr.bf16.mxu0 0
    %1512 = vmatpush1.bf16.msra.mxu0 0
    %1513 = vmatprep.mubr.bf16.mxu0 0
    %1514 = vmatmul.mubr.bf16.gmra.mrb[0].mxu0 %v1479
    %v1515 = vpop.f32.mrb[0].mxu0
    %v1516 = vadd.f32 0.0, %v1515
    %v1517 = vpop.f32.mrb[0].mxu0
    %v1518 = vpop.f32.mrb[0].mxu0
    %v1519 = vadd.f32 0.0, %v1518
    %v1520 = vpop.f32.mrb[0].mxu0
    %1521 = vdwg.mxu0
    %1524 = vrot.lane.b32.xlu0 %v1274, 8
    %v1525 = vpop.permute.xlu0 %1524
    %1526 = vrot.lane.b32.xlu0 %v1277, 8
    %v1527 = vpop.permute.xlu0 %1526
    %1532 = vrot.lane.b32.xlu0 %v1395, 16
    %v1533 = vpop.permute.xlu0 %1532
    %1534 = vrot.lane.b32.xlu0 %v1398, 16
    %v1535 = vpop.permute.xlu0 %1534
    %1540 = vrot.lane.b32.xlu0 %v1516, 24
    %v1541 = vpop.permute.xlu0 %1540
    %1542 = vrot.lane.b32.xlu0 %v1519, 24
    %v1543 = vpop.permute.xlu0 %1542
    %v1546 = vsel %vm251, %v1153, %v1525
    %v1547 = vsel %vm251, %v1156, %v1527
    %v1548 = vsel %vm299, %v1546, %v1533
    %v1549 = vsel %vm299, %v1547, %v1535
    %v1550 = vsel %vm761, %v1548, %v1541
    %v1551 = vsel %vm761, %v1549, %v1543
    %v1552 = vpack.c.bf16 %v1551, %v1550
    %1553 = vrot.lane.b32.xlu0 %v990, 32
    %v1554 = vpop.permute.xlu0 %1553
    %1555 = vrot.lane.b32.xlu0 %v991, 32
    %v1556 = vpop.permute.xlu0 %1555
    %v1560 = vsel %vm168, %v1552, 0
    %1562 = vmatprep.subr.bf16.mxu0 0
    %1563 = vmatpush1.bf16.msra.mxu0 %v1554
    %1564 = vmatprep.subr.bf16.mxu0 0
    %1565 = vmatpush1.bf16.msra.mxu0 %v1556
    %1566 = vmatprep.subr.bf16.mxu0 0
    %1567 = vmatpush1.bf16.msra.mxu0 0
    %1568 = vmatprep.subr.bf16.mxu0 0
    %1569 = vmatpush1.bf16.msra.mxu0 0
    %1570 = vmatprep.subr.bf16.mxu0 0
    %1571 = vmatpush1.bf16.msra.mxu0 0
    %1572 = vmatprep.subr.bf16.mxu0 0
    %1573 = vmatpush1.bf16.msra.mxu0 0
    %1574 = vmatprep.subr.bf16.mxu0 0
    %1575 = vmatpush1.bf16.msra.mxu0 0
    %1576 = vmatprep.subr.bf16.mxu0 0
    %1577 = vmatpush1.bf16.msra.mxu0 0
    %1578 = vmatprep.subr.bf16.mxu0 0
    %1579 = vmatpush1.bf16.msra.mxu0 0
    %1580 = vmatprep.subr.bf16.mxu0 0
    %1581 = vmatpush1.bf16.msra.mxu0 0
    %1582 = vmatprep.subr.bf16.mxu0 0
    %1583 = vmatpush1.bf16.msra.mxu0 0
    %1584 = vmatprep.subr.bf16.mxu0 0
    %1585 = vmatpush1.bf16.msra.mxu0 0
    %1586 = vmatprep.subr.bf16.mxu0 0
    %1587 = vmatpush1.bf16.msra.mxu0 0
    %1588 = vmatprep.subr.bf16.mxu0 0
    %1589 = vmatpush1.bf16.msra.mxu0 0
    %1590 = vmatprep.subr.bf16.mxu0 0
    %1591 = vmatpush1.bf16.msra.mxu0 0
    %1592 = vmatprep.subr.bf16.mxu0 0
    %1593 = vmatpush1.bf16.msra.mxu0 0
    %1594 = vmatprep.mubr.bf16.mxu0 0
    %1595 = vmatmul.mubr.bf16.gmra.mrb[0].mxu0 %v1560
    %v1596 = vpop.f32.mrb[0].mxu0
    %v1597 = vadd.f32 0.0, %v1596
    %v1598 = vpop.f32.mrb[0].mxu0
    %v1599 = vpop.f32.mrb[0].mxu0
    %v1600 = vadd.f32 0.0, %v1599
    %v1601 = vpop.f32.mrb[0].mxu0
    %1602 = vdwg.mxu0
    %v1603 = vadd.f32 %v951, %v1597
    %v1604 = vadd.f32 %v952, %v1600
    %v1605 = vld [vmem:[%s7 + $0x3] sm:$0x1]
    %v1606 = vmul.f32 %v1603, %v1603
    %v1607 = vmul.f32 %v1604, %v1604
    %v1608 = vsel %vm168, %v1606, 0.0
    %1609 = vadd.xlane.f32.xlu0 %v1608
    %v1610 = vpop.xlane.xlu0 %1609
    %v1611 = vsel %vm168, %v1607, 0.0
    %1612 = vadd.xlane.f32.xlu0 %v1611
    %v1613 = vpop.xlane.xlu0 %1612
    %v1614 = vmul.f32 %v1610, %v175
    %v1615 = vmul.f32 %v1613, %v175
    %v1616 = vadd.f32 %v1614, 1e-06
    %v1617 = vadd.f32 %v1615, 1e-06
    %v1618 = vrsqrt.pop %v1616
    %v1619 = vrsqrt.pop %v1617
    %v1620 = vmul.f32 %v1603, %v1618
    %v1621 = vmul.f32 %v1604, %v1619
    %v1622 = vlaneseq
    %v1623 = vshrl.u32 %v1622, 7
    %v1624 = vsub.s32 0, %v1623
    %v1625 = vrot.slane %v1605, %v1624
    %v1626 = vmul.f32 %v1620, %v1625
    %v1627 = vmul.f32 %v1621, %v1625
    %v1628 = vpack.c.bf16 %v1627, %v1626
    %v1629 = vunpack.c.h.b16 %v954
    %v1630 = vunpack.c.h.b16 %v955
    %v1631 = vunpack.c.h.b16 %v956
    %v1632 = vunpack.c.h.b16 %v957
    %v1633 = vpack.c.b16 %v1630, %v1629
    %v1634 = vpack.c.b16 %v1632, %v1631
    %v1638 = vsel %vm168, %v1628, 0
    %1640 = vmatprep.subr.bf16.mxu0 0
    %1641 = vmatpush1.bf16.msra.mxu0 %v1633
    %1642 = vmatprep.subr.bf16.mxu0 0
    %1643 = vmatpush1.bf16.msra.mxu0 %v1634
    %1644 = vmatprep.subr.bf16.mxu0 0
    %1645 = vmatpush1.bf16.msra.mxu0 0
    %1646 = vmatprep.subr.bf16.mxu0 0
    %1647 = vmatpush1.bf16.msra.mxu0 0
    %1648 = vmatprep.subr.bf16.mxu0 0
    %1649 = vmatpush1.bf16.msra.mxu0 0
    %1650 = vmatprep.subr.bf16.mxu0 0
    %1651 = vmatpush1.bf16.msra.mxu0 0
    %1652 = vmatprep.subr.bf16.mxu0 0
    %1653 = vmatpush1.bf16.msra.mxu0 0
    %1654 = vmatprep.subr.bf16.mxu0 0
    %1655 = vmatpush1.bf16.msra.mxu0 0
    %1656 = vmatprep.subr.bf16.mxu0 0
    %1657 = vmatpush1.bf16.msra.mxu0 0
    %1658 = vmatprep.subr.bf16.mxu0 0
    %1659 = vmatpush1.bf16.msra.mxu0 0
    %1660 = vmatprep.subr.bf16.mxu0 0
    %1661 = vmatpush1.bf16.msra.mxu0 0
    %1662 = vmatprep.subr.bf16.mxu0 0
    %1663 = vmatpush1.bf16.msra.mxu0 0
    %1664 = vmatprep.subr.bf16.mxu0 0
    %1665 = vmatpush1.bf16.msra.mxu0 0
    %1666 = vmatprep.subr.bf16.mxu0 0
    %1667 = vmatpush1.bf16.msra.mxu0 0
    %1668 = vmatprep.subr.bf16.mxu0 0
    %1669 = vmatpush1.bf16.msra.mxu0 0
    %1670 = vmatprep.subr.bf16.mxu0 0
    %1671 = vmatpush1.bf16.msra.mxu0 0
    %1672 = vmatprep.mubr.bf16.mxu0 0
    %1673 = vmatmul.mubr.bf16.gmra.mrb[0].mxu0 %v1638
    %v1674 = vpop.f32.mrb[0].mxu0
    %v1675 = vadd.f32 0.0, %v1674
    %v1676 = vpop.f32.mrb[0].mxu0
    %v1677 = vpop.f32.mrb[0].mxu0
    %v1678 = vadd.f32 0.0, %v1677
    %v1679 = vpop.f32.mrb[0].mxu0
    %1680 = vdwg.mxu0
    %v1681 = vmax.f32 %v1675, 0.0
    %v1682 = vmax.f32 %v1678, 0.0
    %v1683 = vpack.c.bf16 %v1682, %v1681
    %1684 = vrot.lane.b32.xlu0 %v1633, 64
    %v1685 = vpop.permute.xlu0 %1684
    %1686 = vrot.lane.b32.xlu0 %v1634, 64
    %v1687 = vpop.permute.xlu0 %1686
    %v1689 = vsel %vm900, %v1683, 0
    %v1692 = vsel %vm900, %v1685, 0
    %v1695 = vsel %vm900, %v1687, 0
    %1697 = vmatprep.subr.bf16.mxu0 0
    %1698 = vmatpush1.bf16.xpose.msra.mxu0 %v1692
    %1699 = vmatprep.subr.bf16.mxu0 0
    %1700 = vmatpush1.bf16.xpose.msra.mxu0 %v1695
    %1701 = vmatprep.subr.bf16.mxu0 0
    %1702 = vmatpush1.bf16.xpose.msra.mxu0 0
    %1703 = vmatprep.subr.bf16.mxu0 0
    %1704 = vmatpush1.bf16.xpose.msra.mxu0 0
    %1705 = vmatprep.subr.bf16.mxu0 0
    %1706 = vmatpush1.bf16.xpose.msra.mxu0 0
    %1707 = vmatprep.subr.bf16.mxu0 0
    %1708 = vmatpush1.bf16.xpose.msra.mxu0 0
    %1709 = vmatprep.subr.bf16.mxu0 0
    %1710 = vmatpush1.bf16.xpose.msra.mxu0 0
    %1711 = vmatprep.subr.bf16.mxu0 0
    %1712 = vmatpush1.bf16.xpose.msra.mxu0 0
    %1713 = vmatprep.subr.bf16.mxu0 0
    %1714 = vmatpush1.bf16.xpose.msra.mxu0 0
    %1715 = vmatprep.subr.bf16.mxu0 0
    %1716 = vmatpush1.bf16.xpose.msra.mxu0 0
    %1717 = vmatprep.subr.bf16.mxu0 0
    %1718 = vmatpush1.bf16.xpose.msra.mxu0 0
    %1719 = vmatprep.subr.bf16.mxu0 0
    %1720 = vmatpush1.bf16.xpose.msra.mxu0 0
    %1721 = vmatprep.subr.bf16.mxu0 0
    %1722 = vmatpush1.bf16.xpose.msra.mxu0 0
    %1723 = vmatprep.subr.bf16.mxu0 0
    %1724 = vmatpush1.bf16.xpose.msra.mxu0 0
    %1725 = vmatprep.subr.bf16.mxu0 0
    %1726 = vmatpush1.bf16.xpose.msra.mxu0 0
    %1727 = vmatprep.subr.bf16.mxu0 0
    %1728 = vmatpush1.bf16.xpose.msra.mxu0 0
    %1729 = vmatprep.mubr.bf16.mxu0 0
    %1730 = vmatmul.mubr.bf16.gmra.mrb[0].mxu0 %v1689
    %v1731 = vpop.f32.mrb[0].mxu0
    %v1732 = vadd.f32 0.0, %v1731
    %v1733 = vpop.f32.mrb[0].mxu0
    %v1734 = vpop.f32.mrb[0].mxu0
    %v1735 = vadd.f32 0.0, %v1734
    %v1736 = vpop.f32.mrb[0].mxu0
    %1737 = vdwg.mxu0
    %v1738 = vadd.f32 %v1603, %v1732
    %v1739 = vadd.f32 %v1604, %v1735
    %v1740 = vld [vmem:[%s7 + $0x4] sm:$0x1]
    %v1741 = vmul.f32 %v1738, %v1738
    %v1742 = vmul.f32 %v1739, %v1739
    %v1743 = vsel %vm168, %v1741, 0.0
    %1744 = vadd.xlane.f32.xlu0 %v1743
    %v1745 = vpop.xlane.xlu0 %1744
    %v1746 = vsel %vm168, %v1742, 0.0
    %1747 = vadd.xlane.f32.xlu0 %v1746
    %v1748 = vpop.xlane.xlu0 %1747
    %v1749 = vmul.f32 %v1745, %v175
    %v1750 = vmul.f32 %v1748, %v175
    %v1751 = vadd.f32 %v1749, 1e-06
    %v1752 = vadd.f32 %v1750, 1e-06
    %v1753 = vrsqrt.pop %v1751
    %v1754 = vrsqrt.pop %v1752
    %v1755 = vmul.f32 %v1738, %v1753
    %v1756 = vmul.f32 %v1739, %v1754
    %v1757 = vlaneseq
    %v1758 = vshrl.u32 %v1757, 7
    %v1759 = vsub.s32 0, %v1758
    %v1760 = vrot.slane %v1740, %v1759
    %v1761 = vmul.f32 %v1755, %v1760
    %v1762 = vmul.f32 %v1756, %v1760
    %1763 = vst.msk [vmem:[#allocation2] sm:$0xff] %vm168, %v1761
    %1764 = vst.msk [vmem:[#allocation2 + $0x8] sm:$0xff] %vm168, %v1762
    %v1765 = vld [vmem:[%s3] sm:$0xff]
    %v1766 = vld [vmem:[%s3 + $0x8] sm:$0xf]
    %v1767 = vld [vmem:[%s9] sm:$0xff]
    %v1768 = vld [vmem:[%s9 + $0x8] sm:$0xf]
    %v1769 = vld [vmem:[%s9 + $0xc] sm:$0xff]
    %v1770 = vld [vmem:[%s9 + $0x14] sm:$0xf]
    %v1771 = vld [vmem:[%s9 + $0x18] sm:$0xff]
    %v1772 = vld [vmem:[%s9 + $0x20] sm:$0xf]
    %v1773 = vld [vmem:[%s9 + $0x24] sm:$0xff]
    %v1774 = vld [vmem:[%s9 + $0x2c] sm:$0xf]
    %v1775 = vld [vmem:[%s7 + $0x5] sm:$0x1]
    %v1776 = vmul.f32 %v1765, %v1765
    %v1777 = vmul.f32 %v1766, %v1766
    %v1778 = vsel %vm168, %v1776, 0.0
    %1779 = vadd.xlane.f32.xlu0 %v1778
    %v1780 = vpop.xlane.xlu0 %1779
    %vm1781 = vcmask 257024
    %v1782 = vsel %vm1781, %v1777, 0.0
    %1783 = vadd.xlane.f32.xlu0 %v1782
    %v1784 = vpop.xlane.xlu0 %1783
    %v1785 = vmul.f32 %v1780, %v175
    %v1786 = vmul.f32 %v1784, %v175
    %v1787 = vadd.f32 %v1785, 1e-06
    %v1788 = vadd.f32 %v1786, 1e-06
    %v1789 = vrsqrt.pop %v1787
    %v1790 = vrsqrt.pop %v1788
    %v1791 = vmul.f32 %v1765, %v1789
    %v1792 = vmul.f32 %v1766, %v1790
    %v1793 = vlaneseq
    %v1794 = vshrl.u32 %v1793, 7
    %v1795 = vsub.s32 0, %v1794
    %v1796 = vrot.slane %v1775, %v1795
    %v1797 = vmul.f32 %v1791, %v1796
    %v1798 = vmul.f32 %v1792, %v1796
    %v1799 = vpack.c.bf16 %v1798, %v1797
    %v1804 = vunpack.c.l.b16 %v1767
    %v1805 = vunpack.c.l.b16 %v1769
    %v1806 = vunpack.c.l.b16 %v1771
    %v1807 = vunpack.c.l.b16 %v1773
    %v1808 = vpack.c.b16 %v1805, %v1804
    %v1809 = vpack.c.b16 %v1807, %v1806
    %v1813 = vsel %vm168, %v1799, 0
    %1815 = vmatprep.subr.bf16.mxu0 0
    %1816 = vmatpush1.bf16.msra.mxu0 %v1808
    %1817 = vmatprep.subr.bf16.mxu0 0
    %1818 = vmatpush1.bf16.msra.mxu0 %v1809
    %1819 = vmatprep.subr.bf16.mxu0 0
    %1820 = vmatpush1.bf16.msra.mxu0 0
    %1821 = vmatprep.subr.bf16.mxu0 0
    %1822 = vmatpush1.bf16.msra.mxu0 0
    %1823 = vmatprep.subr.bf16.mxu0 0
    %1824 = vmatpush1.bf16.msra.mxu0 0
    %1825 = vmatprep.subr.bf16.mxu0 0
    %1826 = vmatpush1.bf16.msra.mxu0 0
    %1827 = vmatprep.subr.bf16.mxu0 0
    %1828 = vmatpush1.bf16.msra.mxu0 0
    %1829 = vmatprep.subr.bf16.mxu0 0
    %1830 = vmatpush1.bf16.msra.mxu0 0
    %1831 = vmatprep.subr.bf16.mxu0 0
    %1832 = vmatpush1.bf16.msra.mxu0 0
    %1833 = vmatprep.subr.bf16.mxu0 0
    %1834 = vmatpush1.bf16.msra.mxu0 0
    %1835 = vmatprep.subr.bf16.mxu0 0
    %1836 = vmatpush1.bf16.msra.mxu0 0
    %1837 = vmatprep.subr.bf16.mxu0 0
    %1838 = vmatpush1.bf16.msra.mxu0 0
    %1839 = vmatprep.subr.bf16.mxu0 0
    %1840 = vmatpush1.bf16.msra.mxu0 0
    %1841 = vmatprep.subr.bf16.mxu0 0
    %1842 = vmatpush1.bf16.msra.mxu0 0
    %1843 = vmatprep.subr.bf16.mxu0 0
    %1844 = vmatpush1.bf16.msra.mxu0 0
    %1845 = vmatprep.subr.bf16.mxu0 0
    %1846 = vmatpush1.bf16.msra.mxu0 0
    %1847 = vmatprep.mubr.bf16.mxu0 0
    %1848 = vmatmul.mubr.bf16.gmra.mrb[0].mxu0 %v1813
    %v1849 = vpop.f32.mrb[0].mxu0
    %v1850 = vadd.f32 0.0, %v1849
    %v1851 = vpop.f32.mrb[0].mxu0
    %v1852 = vpop.f32.mrb[0].mxu0
    %v1853 = vadd.f32 0.0, %v1852
    %v1854 = vpop.f32.mrb[0].mxu0
    %1855 = vdwg.mxu0
    %v1856 = vpack.c.bf16 %v1853, %v1850
    %1858 = vrot.lane.b32.xlu0 %v1856, 96
    %v1859 = vpop.permute.xlu0 %1858
    %v1861 = vsel %vm251, %v1856, 0
    %v1864 = vsel %vm251, %v1859, 0
    %1866 = vmatprep.subr.bf16.mxu0 0
    %1867 = vmatpush1.bf16.xpose.msra.mxu0 %v1864
    %1868 = vmatprep.subr.bf16.mxu0 0
    %1869 = vmatpush1.bf16.xpose.msra.mxu0 0
    %1870 = vmatprep.subr.bf16.mxu0 0
    %1871 = vmatpush1.bf16.xpose.msra.mxu0 0
    %1872 = vmatprep.subr.bf16.mxu0 0
    %1873 = vmatpush1.bf16.xpose.msra.mxu0 0
    %1874 = vmatprep.subr.bf16.mxu0 0
    %1875 = vmatpush1.bf16.xpose.msra.mxu0 0
    %1876 = vmatprep.subr.bf16.mxu0 0
    %1877 = vmatpush1.bf16.xpose.msra.mxu0 0
    %1878 = vmatprep.subr.bf16.mxu0 0
    %1879 = vmatpush1.bf16.xpose.msra.mxu0 0
    %1880 = vmatprep.subr.bf16.mxu0 0
    %1881 = vmatpush1.bf16.xpose.msra.mxu0 0
    %1882 = vmatprep.subr.bf16.mxu0 0
    %1883 = vmatpush1.bf16.xpose.msra.mxu0 0
    %1884 = vmatprep.subr.bf16.mxu0 0
    %1885 = vmatpush1.bf16.xpose.msra.mxu0 0
    %1886 = vmatprep.subr.bf16.mxu0 0
    %1887 = vmatpush1.bf16.xpose.msra.mxu0 0
    %1888 = vmatprep.subr.bf16.mxu0 0
    %1889 = vmatpush1.bf16.xpose.msra.mxu0 0
    %1890 = vmatprep.subr.bf16.mxu0 0
    %1891 = vmatpush1.bf16.xpose.msra.mxu0 0
    %1892 = vmatprep.subr.bf16.mxu0 0
    %1893 = vmatpush1.bf16.xpose.msra.mxu0 0
    %1894 = vmatprep.subr.bf16.mxu0 0
    %1895 = vmatpush1.bf16.xpose.msra.mxu0 0
    %1896 = vmatprep.subr.bf16.mxu0 0
    %1897 = vmatpush1.bf16.xpose.msra.mxu0 0
    %1898 = vmatprep.mubr.bf16.mxu0 0
    %1899 = vmatmul.mubr.bf16.gmra.mrb[0].mxu0 %v1861
    %v1900 = vpop.f32.mrb[0].mxu0
    %v1901 = vadd.f32 %v159, %v1900
    %v1902 = vpop.f32.mrb[0].mxu0
    %v1903 = vpop.f32.mrb[0].mxu0
    %v1904 = vadd.f32 %v160, %v1903
    %v1905 = vpop.f32.mrb[0].mxu0
    %1906 = vdwg.mxu0
    %vm1907 = vcmask 97280
    %v1908 = vsel %vm1907, %v1901, -inf
    %1909 = vmax.xlane.f32.xlu0 %v1908
    %v1910 = vpop.xlane.xlu0 %1909
    %vm1911 = vcmask 93184
    %v1912 = vsel %vm1911, %v1904, -inf
    %1913 = vmax.xlane.f32.xlu0 %v1912
    %v1914 = vpop.xlane.xlu0 %1913
    %v1915 = vsub.f32 %v1901, %v1910
    %v1916 = vsub.f32 %v1904, %v1914
    %v1917 = vmul.f32 %v1915, 1.442695
    %v1918 = vpow.pop %v1917
    %v1919 = vmul.f32 %v1916, 1.442695
    %v1920 = vpow.pop %v1919
    %v1921 = vsel %vm1907, %v1918, 0.0
    %1922 = vadd.xlane.f32.xlu0 %v1921
    %v1923 = vpop.xlane.xlu0 %1922
    %v1924 = vsel %vm1911, %v1920, 0.0
    %1925 = vadd.xlane.f32.xlu0 %v1924
    %v1926 = vpop.xlane.xlu0 %1925
    %v1927 = vrcp.pop %v1923
    %v1928 = vrcp.pop %v1926
    %v1929 = vmul.f32 %v1918, %v1927
    %v1930 = vmul.f32 %v1920, %v1928
    %v1931 = vpack.c.bf16 %v1930, %v1929
    %1932 = vrot.lane.b32.xlu0 %v1856, 64
    %v1933 = vpop.permute.xlu0 %1932
    %v1935 = vsel %vm1907, %v1931, 0
    %vm1937 = vcmask 1045504
    %v1939 = vsel %vm1937, %v1933, 0
    %1941 = vmatprep.subr.bf16.mxu0 0
    %1942 = vmatpush1.bf16.msra.mxu0 %v1939
    %1943 = vmatprep.subr.bf16.mxu0 0
    %1944 = vmatpush1.bf16.msra.mxu0 0
    %1945 = vmatprep.subr.bf16.mxu0 0
    %1946 = vmatpush1.bf16.msra.mxu0 0
    %1947 = vmatprep.subr.bf16.mxu0 0
    %1948 = vmatpush1.bf16.msra.mxu0 0
    %1949 = vmatprep.subr.bf16.mxu0 0
    %1950 = vmatpush1.bf16.msra.mxu0 0
    %1951 = vmatprep.subr.bf16.mxu0 0
    %1952 = vmatpush1.bf16.msra.mxu0 0
    %1953 = vmatprep.subr.bf16.mxu0 0
    %1954 = vmatpush1.bf16.msra.mxu0 0
    %1955 = vmatprep.subr.bf16.mxu0 0
    %1956 = vmatpush1.bf16.msra.mxu0 0
    %1957 = vmatprep.subr.bf16.mxu0 0
    %1958 = vmatpush1.bf16.msra.mxu0 0
    %1959 = vmatprep.subr.bf16.mxu0 0
    %1960 = vmatpush1.bf16.msra.mxu0 0
    %1961 = vmatprep.subr.bf16.mxu0 0
    %1962 = vmatpush1.bf16.msra.mxu0 0
    %1963 = vmatprep.subr.bf16.mxu0 0
    %1964 = vmatpush1.bf16.msra.mxu0 0
    %1965 = vmatprep.subr.bf16.mxu0 0
    %1966 = vmatpush1.bf16.msra.mxu0 0
    %1967 = vmatprep.subr.bf16.mxu0 0
    %1968 = vmatpush1.bf16.msra.mxu0 0
    %1969 = vmatprep.subr.bf16.mxu0 0
    %1970 = vmatpush1.bf16.msra.mxu0 0
    %1971 = vmatprep.subr.bf16.mxu0 0
    %1972 = vmatpush1.bf16.msra.mxu0 0
    %1973 = vmatprep.mubr.bf16.mxu0 0
    %1974 = vmatmul.mubr.bf16.gmra.mrb[0].mxu0 %v1935
    %v1975 = vpop.f32.mrb[0].mxu0
    %v1976 = vadd.f32 0.0, %v1975
    %v1977 = vpop.f32.mrb[0].mxu0
    %v1978 = vpop.f32.mrb[0].mxu0
    %v1979 = vadd.f32 0.0, %v1978
    %v1980 = vpop.f32.mrb[0].mxu0
    %1981 = vdwg.mxu0
    %1982 = vrot.lane.b32.xlu0 %v1856, 120
    %v1983 = vpop.permute.xlu0 %1982
    %1984 = vrot.lane.b32.xlu0 %v1856, 88
    %v1985 = vpop.permute.xlu0 %1984
    %v1987 = vsel %vm251, %v1983, 0
    %v1990 = vsel %vm251, %v1985, 0
    %1992 = vmatprep.subr.bf16.mxu0 0
    %1993 = vmatpush1.bf16.xpose.msra.mxu0 %v1990
    %1994 = vmatprep.subr.bf16.mxu0 0
    %1995 = vmatpush1.bf16.xpose.msra.mxu0 0
    %1996 = vmatprep.subr.bf16.mxu0 0
    %1997 = vmatpush1.bf16.xpose.msra.mxu0 0
    %1998 = vmatprep.subr.bf16.mxu0 0
    %1999 = vmatpush1.bf16.xpose.msra.mxu0 0
    %2000 = vmatprep.subr.bf16.mxu0 0
    %2001 = vmatpush1.bf16.xpose.msra.mxu0 0
    %2002 = vmatprep.subr.bf16.mxu0 0
    %2003 = vmatpush1.bf16.xpose.msra.mxu0 0
    %2004 = vmatprep.subr.bf16.mxu0 0
    %2005 = vmatpush1.bf16.xpose.msra.mxu0 0
    %2006 = vmatprep.subr.bf16.mxu0 0
    %2007 = vmatpush1.bf16.xpose.msra.mxu0 0
    %2008 = vmatprep.subr.bf16.mxu0 0
    %2009 = vmatpush1.bf16.xpose.msra.mxu0 0
    %2010 = vmatprep.subr.bf16.mxu0 0
    %2011 = vmatpush1.bf16.xpose.msra.mxu0 0
    %2012 = vmatprep.subr.bf16.mxu0 0
    %2013 = vmatpush1.bf16.xpose.msra.mxu0 0
    %2014 = vmatprep.subr.bf16.mxu0 0
    %2015 = vmatpush1.bf16.xpose.msra.mxu0 0
    %2016 = vmatprep.subr.bf16.mxu0 0
    %2017 = vmatpush1.bf16.xpose.msra.mxu0 0
    %2018 = vmatprep.subr.bf16.mxu0 0
    %2019 = vmatpush1.bf16.xpose.msra.mxu0 0
    %2020 = vmatprep.subr.bf16.mxu0 0
    %2021 = vmatpush1.bf16.xpose.msra.mxu0 0
    %2022 = vmatprep.subr.bf16.mxu0 0
    %2023 = vmatpush1.bf16.xpose.msra.mxu0 0
    %2024 = vmatprep.mubr.bf16.mxu0 0
    %2025 = vmatmul.mubr.bf16.gmra.mrb[0].mxu0 %v1987
    %v2026 = vpop.f32.mrb[0].mxu0
    %v2027 = vadd.f32 %v159, %v2026
    %v2028 = vpop.f32.mrb[0].mxu0
    %v2029 = vpop.f32.mrb[0].mxu0
    %v2030 = vadd.f32 %v160, %v2029
    %v2031 = vpop.f32.mrb[0].mxu0
    %2032 = vdwg.mxu0
    %v2033 = vsel %vm1907, %v2027, -inf
    %2034 = vmax.xlane.f32.xlu0 %v2033
    %v2035 = vpop.xlane.xlu0 %2034
    %v2036 = vsel %vm1911, %v2030, -inf
    %2037 = vmax.xlane.f32.xlu0 %v2036
    %v2038 = vpop.xlane.xlu0 %2037
    %v2039 = vsub.f32 %v2027, %v2035
    %v2040 = vsub.f32 %v2030, %v2038
    %v2041 = vmul.f32 %v2039, 1.442695
    %v2042 = vpow.pop %v2041
    %v2043 = vmul.f32 %v2040, 1.442695
    %v2044 = vpow.pop %v2043
    %v2045 = vsel %vm1907, %v2042, 0.0
    %2046 = vadd.xlane.f32.xlu0 %v2045
    %v2047 = vpop.xlane.xlu0 %2046
    %v2048 = vsel %vm1911, %v2044, 0.0
    %2049 = vadd.xlane.f32.xlu0 %v2048
    %v2050 = vpop.xlane.xlu0 %2049
    %v2051 = vrcp.pop %v2047
    %v2052 = vrcp.pop %v2050
    %v2053 = vmul.f32 %v2042, %v2051
    %v2054 = vmul.f32 %v2044, %v2052
    %v2055 = vpack.c.bf16 %v2054, %v2053
    %2056 = vrot.lane.b32.xlu0 %v1856, 56
    %v2057 = vpop.permute.xlu0 %2056
    %v2059 = vsel %vm1907, %v2055, 0
    %v2062 = vsel %vm1937, %v2057, 0
    %2064 = vmatprep.subr.bf16.mxu0 0
    %2065 = vmatpush1.bf16.msra.mxu0 %v2062
    %2066 = vmatprep.subr.bf16.mxu0 0
    %2067 = vmatpush1.bf16.msra.mxu0 0
    %2068 = vmatprep.subr.bf16.mxu0 0
    %2069 = vmatpush1.bf16.msra.mxu0 0
    %2070 = vmatprep.subr.bf16.mxu0 0
    %2071 = vmatpush1.bf16.msra.mxu0 0
    %2072 = vmatprep.subr.bf16.mxu0 0
    %2073 = vmatpush1.bf16.msra.mxu0 0
    %2074 = vmatprep.subr.bf16.mxu0 0
    %2075 = vmatpush1.bf16.msra.mxu0 0
    %2076 = vmatprep.subr.bf16.mxu0 0
    %2077 = vmatpush1.bf16.msra.mxu0 0
    %2078 = vmatprep.subr.bf16.mxu0 0
    %2079 = vmatpush1.bf16.msra.mxu0 0
    %2080 = vmatprep.subr.bf16.mxu0 0
    %2081 = vmatpush1.bf16.msra.mxu0 0
    %2082 = vmatprep.subr.bf16.mxu0 0
    %2083 = vmatpush1.bf16.msra.mxu0 0
    %2084 = vmatprep.subr.bf16.mxu0 0
    %2085 = vmatpush1.bf16.msra.mxu0 0
    %2086 = vmatprep.subr.bf16.mxu0 0
    %2087 = vmatpush1.bf16.msra.mxu0 0
    %2088 = vmatprep.subr.bf16.mxu0 0
    %2089 = vmatpush1.bf16.msra.mxu0 0
    %2090 = vmatprep.subr.bf16.mxu0 0
    %2091 = vmatpush1.bf16.msra.mxu0 0
    %2092 = vmatprep.subr.bf16.mxu0 0
    %2093 = vmatpush1.bf16.msra.mxu0 0
    %2094 = vmatprep.subr.bf16.mxu0 0
    %2095 = vmatpush1.bf16.msra.mxu0 0
    %2096 = vmatprep.mubr.bf16.mxu0 0
    %2097 = vmatmul.mubr.bf16.gmra.mrb[0].mxu0 %v2059
    %v2098 = vpop.f32.mrb[0].mxu0
    %v2099 = vadd.f32 0.0, %v2098
    %v2100 = vpop.f32.mrb[0].mxu0
    %v2101 = vpop.f32.mrb[0].mxu0
    %v2102 = vadd.f32 0.0, %v2101
    %v2103 = vpop.f32.mrb[0].mxu0
    %2104 = vdwg.mxu0
    %2105 = vrot.lane.b32.xlu0 %v1856, 112
    %v2106 = vpop.permute.xlu0 %2105
    %2107 = vrot.lane.b32.xlu0 %v1856, 80
    %v2108 = vpop.permute.xlu0 %2107
    %v2110 = vsel %vm251, %v2106, 0
    %v2113 = vsel %vm251, %v2108, 0
    %2115 = vmatprep.subr.bf16.mxu0 0
    %2116 = vmatpush1.bf16.xpose.msra.mxu0 %v2113
    %2117 = vmatprep.subr.bf16.mxu0 0
    %2118 = vmatpush1.bf16.xpose.msra.mxu0 0
    %2119 = vmatprep.subr.bf16.mxu0 0
    %2120 = vmatpush1.bf16.xpose.msra.mxu0 0
    %2121 = vmatprep.subr.bf16.mxu0 0
    %2122 = vmatpush1.bf16.xpose.msra.mxu0 0
    %2123 = vmatprep.subr.bf16.mxu0 0
    %2124 = vmatpush1.bf16.xpose.msra.mxu0 0
    %2125 = vmatprep.subr.bf16.mxu0 0
    %2126 = vmatpush1.bf16.xpose.msra.mxu0 0
    %2127 = vmatprep.subr.bf16.mxu0 0
    %2128 = vmatpush1.bf16.xpose.msra.mxu0 0
    %2129 = vmatprep.subr.bf16.mxu0 0
    %2130 = vmatpush1.bf16.xpose.msra.mxu0 0
    %2131 = vmatprep.subr.bf16.mxu0 0
    %2132 = vmatpush1.bf16.xpose.msra.mxu0 0
    %2133 = vmatprep.subr.bf16.mxu0 0
    %2134 = vmatpush1.bf16.xpose.msra.mxu0 0
    %2135 = vmatprep.subr.bf16.mxu0 0
    %2136 = vmatpush1.bf16.xpose.msra.mxu0 0
    %2137 = vmatprep.subr.bf16.mxu0 0
    %2138 = vmatpush1.bf16.xpose.msra.mxu0 0
    %2139 = vmatprep.subr.bf16.mxu0 0
    %2140 = vmatpush1.bf16.xpose.msra.mxu0 0
    %2141 = vmatprep.subr.bf16.mxu0 0
    %2142 = vmatpush1.bf16.xpose.msra.mxu0 0
    %2143 = vmatprep.subr.bf16.mxu0 0
    %2144 = vmatpush1.bf16.xpose.msra.mxu0 0
    %2145 = vmatprep.subr.bf16.mxu0 0
    %2146 = vmatpush1.bf16.xpose.msra.mxu0 0
    %2147 = vmatprep.mubr.bf16.mxu0 0
    %2148 = vmatmul.mubr.bf16.gmra.mrb[0].mxu0 %v2110
    %v2149 = vpop.f32.mrb[0].mxu0
    %v2150 = vadd.f32 %v159, %v2149
    %v2151 = vpop.f32.mrb[0].mxu0
    %v2152 = vpop.f32.mrb[0].mxu0
    %v2153 = vadd.f32 %v160, %v2152
    %v2154 = vpop.f32.mrb[0].mxu0
    %2155 = vdwg.mxu0
    %v2156 = vsel %vm1907, %v2150, -inf
    %2157 = vmax.xlane.f32.xlu0 %v2156
    %v2158 = vpop.xlane.xlu0 %2157
    %v2159 = vsel %vm1911, %v2153, -inf
    %2160 = vmax.xlane.f32.xlu0 %v2159
    %v2161 = vpop.xlane.xlu0 %2160
    %v2162 = vsub.f32 %v2150, %v2158
    %v2163 = vsub.f32 %v2153, %v2161
    %v2164 = vmul.f32 %v2162, 1.442695
    %v2165 = vpow.pop %v2164
    %v2166 = vmul.f32 %v2163, 1.442695
    %v2167 = vpow.pop %v2166
    %v2168 = vsel %vm1907, %v2165, 0.0
    %2169 = vadd.xlane.f32.xlu0 %v2168
    %v2170 = vpop.xlane.xlu0 %2169
    %v2171 = vsel %vm1911, %v2167, 0.0
    %2172 = vadd.xlane.f32.xlu0 %v2171
    %v2173 = vpop.xlane.xlu0 %2172
    %v2174 = vrcp.pop %v2170
    %v2175 = vrcp.pop %v2173
    %v2176 = vmul.f32 %v2165, %v2174
    %v2177 = vmul.f32 %v2167, %v2175
    %v2178 = vpack.c.bf16 %v2177, %v2176
    %2179 = vrot.lane.b32.xlu0 %v1856, 48
    %v2180 = vpop.permute.xlu0 %2179
    %v2182 = vsel %vm1907, %v2178, 0
    %v2185 = vsel %vm1937, %v2180, 0
    %2187 = vmatprep.subr.bf16.mxu0 0
    %2188 = vmatpush1.bf16.msra.mxu0 %v2185
    %2189 = vmatprep.subr.bf16.mxu0 0
    %2190 = vmatpush1.bf16.msra.mxu0 0
    %2191 = vmatprep.subr.bf16.mxu0 0
    %2192 = vmatpush1.bf16.msra.mxu0 0
    %2193 = vmatprep.subr.bf16.mxu0 0
    %2194 = vmatpush1.bf16.msra.mxu0 0
    %2195 = vmatprep.subr.bf16.mxu0 0
    %2196 = vmatpush1.bf16.msra.mxu0 0
    %2197 = vmatprep.subr.bf16.mxu0 0
    %2198 = vmatpush1.bf16.msra.mxu0 0
    %2199 = vmatprep.subr.bf16.mxu0 0
    %2200 = vmatpush1.bf16.msra.mxu0 0
    %2201 = vmatprep.subr.bf16.mxu0 0
    %2202 = vmatpush1.bf16.msra.mxu0 0
    %2203 = vmatprep.subr.bf16.mxu0 0
    %2204 = vmatpush1.bf16.msra.mxu0 0
    %2205 = vmatprep.subr.bf16.mxu0 0
    %2206 = vmatpush1.bf16.msra.mxu0 0
    %2207 = vmatprep.subr.bf16.mxu0 0
    %2208 = vmatpush1.bf16.msra.mxu0 0
    %2209 = vmatprep.subr.bf16.mxu0 0
    %2210 = vmatpush1.bf16.msra.mxu0 0
    %2211 = vmatprep.subr.bf16.mxu0 0
    %2212 = vmatpush1.bf16.msra.mxu0 0
    %2213 = vmatprep.subr.bf16.mxu0 0
    %2214 = vmatpush1.bf16.msra.mxu0 0
    %2215 = vmatprep.subr.bf16.mxu0 0
    %2216 = vmatpush1.bf16.msra.mxu0 0
    %2217 = vmatprep.subr.bf16.mxu0 0
    %2218 = vmatpush1.bf16.msra.mxu0 0
    %2219 = vmatprep.mubr.bf16.mxu0 0
    %2220 = vmatmul.mubr.bf16.gmra.mrb[0].mxu0 %v2182
    %v2221 = vpop.f32.mrb[0].mxu0
    %v2222 = vadd.f32 0.0, %v2221
    %v2223 = vpop.f32.mrb[0].mxu0
    %v2224 = vpop.f32.mrb[0].mxu0
    %v2225 = vadd.f32 0.0, %v2224
    %v2226 = vpop.f32.mrb[0].mxu0
    %2227 = vdwg.mxu0
    %2228 = vrot.lane.b32.xlu0 %v1856, 104
    %v2229 = vpop.permute.xlu0 %2228
    %2230 = vrot.lane.b32.xlu0 %v1856, 72
    %v2231 = vpop.permute.xlu0 %2230
    %v2233 = vsel %vm251, %v2229, 0
    %v2236 = vsel %vm251, %v2231, 0
    %2238 = vmatprep.subr.bf16.mxu0 0
    %2239 = vmatpush1.bf16.xpose.msra.mxu0 %v2236
    %2240 = vmatprep.subr.bf16.mxu0 0
    %2241 = vmatpush1.bf16.xpose.msra.mxu0 0
    %2242 = vmatprep.subr.bf16.mxu0 0
    %2243 = vmatpush1.bf16.xpose.msra.mxu0 0
    %2244 = vmatprep.subr.bf16.mxu0 0
    %2245 = vmatpush1.bf16.xpose.msra.mxu0 0
    %2246 = vmatprep.subr.bf16.mxu0 0
    %2247 = vmatpush1.bf16.xpose.msra.mxu0 0
    %2248 = vmatprep.subr.bf16.mxu0 0
    %2249 = vmatpush1.bf16.xpose.msra.mxu0 0
    %2250 = vmatprep.subr.bf16.mxu0 0
    %2251 = vmatpush1.bf16.xpose.msra.mxu0 0
    %2252 = vmatprep.subr.bf16.mxu0 0
    %2253 = vmatpush1.bf16.xpose.msra.mxu0 0
    %2254 = vmatprep.subr.bf16.mxu0 0
    %2255 = vmatpush1.bf16.xpose.msra.mxu0 0
    %2256 = vmatprep.subr.bf16.mxu0 0
    %2257 = vmatpush1.bf16.xpose.msra.mxu0 0
    %2258 = vmatprep.subr.bf16.mxu0 0
    %2259 = vmatpush1.bf16.xpose.msra.mxu0 0
    %2260 = vmatprep.subr.bf16.mxu0 0
    %2261 = vmatpush1.bf16.xpose.msra.mxu0 0
    %2262 = vmatprep.subr.bf16.mxu0 0
    %2263 = vmatpush1.bf16.xpose.msra.mxu0 0
    %2264 = vmatprep.subr.bf16.mxu0 0
    %2265 = vmatpush1.bf16.xpose.msra.mxu0 0
    %2266 = vmatprep.subr.bf16.mxu0 0
    %2267 = vmatpush1.bf16.xpose.msra.mxu0 0
    %2268 = vmatprep.subr.bf16.mxu0 0
    %2269 = vmatpush1.bf16.xpose.msra.mxu0 0
    %2270 = vmatprep.mubr.bf16.mxu0 0
    %2271 = vmatmul.mubr.bf16.gmra.mrb[0].mxu0 %v2233
    %v2272 = vpop.f32.mrb[0].mxu0
    %v2273 = vadd.f32 %v159, %v2272
    %v2274 = vpop.f32.mrb[0].mxu0
    %v2275 = vpop.f32.mrb[0].mxu0
    %v2276 = vadd.f32 %v160, %v2275
    %v2277 = vpop.f32.mrb[0].mxu0
    %2278 = vdwg.mxu0
    %v2279 = vsel %vm1907, %v2273, -inf
    %2280 = vmax.xlane.f32.xlu0 %v2279
    %v2281 = vpop.xlane.xlu0 %2280
    %v2282 = vsel %vm1911, %v2276, -inf
    %2283 = vmax.xlane.f32.xlu0 %v2282
    %v2284 = vpop.xlane.xlu0 %2283
    %v2285 = vsub.f32 %v2273, %v2281
    %v2286 = vsub.f32 %v2276, %v2284
    %v2287 = vmul.f32 %v2285, 1.442695
    %v2288 = vpow.pop %v2287
    %v2289 = vmul.f32 %v2286, 1.442695
    %v2290 = vpow.pop %v2289
    %v2291 = vsel %vm1907, %v2288, 0.0
    %2292 = vadd.xlane.f32.xlu0 %v2291
    %v2293 = vpop.xlane.xlu0 %2292
    %v2294 = vsel %vm1911, %v2290, 0.0
    %2295 = vadd.xlane.f32.xlu0 %v2294
    %v2296 = vpop.xlane.xlu0 %2295
    %v2297 = vrcp.pop %v2293
    %v2298 = vrcp.pop %v2296
    %v2299 = vmul.f32 %v2288, %v2297
    %v2300 = vmul.f32 %v2290, %v2298
    %v2301 = vpack.c.bf16 %v2300, %v2299
    %2302 = vrot.lane.b32.xlu0 %v1856, 40
    %v2303 = vpop.permute.xlu0 %2302
    %v2305 = vsel %vm1907, %v2301, 0
    %v2308 = vsel %vm1937, %v2303, 0
    %2310 = vmatprep.subr.bf16.mxu0 0
    %2311 = vmatpush1.bf16.msra.mxu0 %v2308
    %2312 = vmatprep.subr.bf16.mxu0 0
    %2313 = vmatpush1.bf16.msra.mxu0 0
    %2314 = vmatprep.subr.bf16.mxu0 0
    %2315 = vmatpush1.bf16.msra.mxu0 0
    %2316 = vmatprep.subr.bf16.mxu0 0
    %2317 = vmatpush1.bf16.msra.mxu0 0
    %2318 = vmatprep.subr.bf16.mxu0 0
    %2319 = vmatpush1.bf16.msra.mxu0 0
    %2320 = vmatprep.subr.bf16.mxu0 0
    %2321 = vmatpush1.bf16.msra.mxu0 0
    %2322 = vmatprep.subr.bf16.mxu0 0
    %2323 = vmatpush1.bf16.msra.mxu0 0
    %2324 = vmatprep.subr.bf16.mxu0 0
    %2325 = vmatpush1.bf16.msra.mxu0 0
    %2326 = vmatprep.subr.bf16.mxu0 0
    %2327 = vmatpush1.bf16.msra.mxu0 0
    %2328 = vmatprep.subr.bf16.mxu0 0
    %2329 = vmatpush1.bf16.msra.mxu0 0
    %2330 = vmatprep.subr.bf16.mxu0 0
    %2331 = vmatpush1.bf16.msra.mxu0 0
    %2332 = vmatprep.subr.bf16.mxu0 0
    %2333 = vmatpush1.bf16.msra.mxu0 0
    %2334 = vmatprep.subr.bf16.mxu0 0
    %2335 = vmatpush1.bf16.msra.mxu0 0
    %2336 = vmatprep.subr.bf16.mxu0 0
    %2337 = vmatpush1.bf16.msra.mxu0 0
    %2338 = vmatprep.subr.bf16.mxu0 0
    %2339 = vmatpush1.bf16.msra.mxu0 0
    %2340 = vmatprep.subr.bf16.mxu0 0
    %2341 = vmatpush1.bf16.msra.mxu0 0
    %2342 = vmatprep.mubr.bf16.mxu0 0
    %2343 = vmatmul.mubr.bf16.gmra.mrb[0].mxu0 %v2305
    %v2344 = vpop.f32.mrb[0].mxu0
    %v2345 = vadd.f32 0.0, %v2344
    %v2346 = vpop.f32.mrb[0].mxu0
    %v2347 = vpop.f32.mrb[0].mxu0
    %v2348 = vadd.f32 0.0, %v2347
    %v2349 = vpop.f32.mrb[0].mxu0
    %2350 = vdwg.mxu0
    %2353 = vrot.lane.b32.xlu0 %v2099, 8
    %v2354 = vpop.permute.xlu0 %2353
    %2355 = vrot.lane.b32.xlu0 %v2102, 8
    %v2356 = vpop.permute.xlu0 %2355
    %2361 = vrot.lane.b32.xlu0 %v2222, 16
    %v2362 = vpop.permute.xlu0 %2361
    %2363 = vrot.lane.b32.xlu0 %v2225, 16
    %v2364 = vpop.permute.xlu0 %2363
    %2369 = vrot.lane.b32.xlu0 %v2345, 24
    %v2370 = vpop.permute.xlu0 %2369
    %2371 = vrot.lane.b32.xlu0 %v2348, 24
    %v2372 = vpop.permute.xlu0 %2371
    %v2375 = vsel %vm251, %v1976, %v2354
    %v2376 = vsel %vm251, %v1979, %v2356
    %v2377 = vsel %vm299, %v2375, %v2362
    %v2378 = vsel %vm299, %v2376, %v2364
    %v2379 = vsel %vm761, %v2377, %v2370
    %v2380 = vsel %vm761, %v2378, %v2372
    %v2381 = vpack.c.bf16 %v2380, %v2379
    %2382 = vrot.lane.b32.xlu0 %v1808, 32
    %v2383 = vpop.permute.xlu0 %2382
    %2384 = vrot.lane.b32.xlu0 %v1809, 32
    %v2385 = vpop.permute.xlu0 %2384
    %v2389 = vsel %vm168, %v2381, 0
    %2391 = vmatprep.subr.bf16.mxu0 0
    %2392 = vmatpush1.bf16.msra.mxu0 %v2383
    %2393 = vmatprep.subr.bf16.mxu0 0
    %2394 = vmatpush1.bf16.msra.mxu0 %v2385
    %2395 = vmatprep.subr.bf16.mxu0 0
    %2396 = vmatpush1.bf16.msra.mxu0 0
    %2397 = vmatprep.subr.bf16.mxu0 0
    %2398 = vmatpush1.bf16.msra.mxu0 0
    %2399 = vmatprep.subr.bf16.mxu0 0
    %2400 = vmatpush1.bf16.msra.mxu0 0
    %2401 = vmatprep.subr.bf16.mxu0 0
    %2402 = vmatpush1.bf16.msra.mxu0 0
    %2403 = vmatprep.subr.bf16.mxu0 0
    %2404 = vmatpush1.bf16.msra.mxu0 0
    %2405 = vmatprep.subr.bf16.mxu0 0
    %2406 = vmatpush1.bf16.msra.mxu0 0
    %2407 = vmatprep.subr.bf16.mxu0 0
    %2408 = vmatpush1.bf16.msra.mxu0 0
    %2409 = vmatprep.subr.bf16.mxu0 0
    %2410 = vmatpush1.bf16.msra.mxu0 0
    %2411 = vmatprep.subr.bf16.mxu0 0
    %2412 = vmatpush1.bf16.msra.mxu0 0
    %2413 = vmatprep.subr.bf16.mxu0 0
    %2414 = vmatpush1.bf16.msra.mxu0 0
    %2415 = vmatprep.subr.bf16.mxu0 0
    %2416 = vmatpush1.bf16.msra.mxu0 0
    %2417 = vmatprep.subr.bf16.mxu0 0
    %2418 = vmatpush1.bf16.msra.mxu0 0
    %2419 = vmatprep.subr.bf16.mxu0 0
    %2420 = vmatpush1.bf16.msra.mxu0 0
    %2421 = vmatprep.subr.bf16.mxu0 0
    %2422 = vmatpush1.bf16.msra.mxu0 0
    %2423 = vmatprep.mubr.bf16.mxu0 0
    %2424 = vmatmul.mubr.bf16.gmra.mrb[0].mxu0 %v2389
    %v2425 = vpop.f32.mrb[0].mxu0
    %v2426 = vadd.f32 0.0, %v2425
    %v2427 = vpop.f32.mrb[0].mxu0
    %v2428 = vpop.f32.mrb[0].mxu0
    %v2429 = vadd.f32 0.0, %v2428
    %v2430 = vpop.f32.mrb[0].mxu0
    %2431 = vdwg.mxu0
    %v2432 = vadd.f32 %v1765, %v2426
    %v2433 = vadd.f32 %v1766, %v2429
    %v2434 = vld [vmem:[%s7 + $0x6] sm:$0x1]
    %v2435 = vmul.f32 %v2432, %v2432
    %v2436 = vmul.f32 %v2433, %v2433
    %v2437 = vsel %vm168, %v2435, 0.0
    %2438 = vadd.xlane.f32.xlu0 %v2437
    %v2439 = vpop.xlane.xlu0 %2438
    %v2440 = vsel %vm1781, %v2436, 0.0
    %2441 = vadd.xlane.f32.xlu0 %v2440
    %v2442 = vpop.xlane.xlu0 %2441
    %v2443 = vmul.f32 %v2439, %v175
    %v2444 = vmul.f32 %v2442, %v175
    %v2445 = vadd.f32 %v2443, 1e-06
    %v2446 = vadd.f32 %v2444, 1e-06
    %v2447 = vrsqrt.pop %v2445
    %v2448 = vrsqrt.pop %v2446
    %v2449 = vmul.f32 %v2432, %v2447
    %v2450 = vmul.f32 %v2433, %v2448
    %v2451 = vlaneseq
    %v2452 = vshrl.u32 %v2451, 7
    %v2453 = vsub.s32 0, %v2452
    %v2454 = vrot.slane %v2434, %v2453
    %v2455 = vmul.f32 %v2449, %v2454
    %v2456 = vmul.f32 %v2450, %v2454
    %v2457 = vpack.c.bf16 %v2456, %v2455
    %v2462 = vunpack.c.l.b16 %v1768
    %v2463 = vunpack.c.l.b16 %v1770
    %v2464 = vunpack.c.l.b16 %v1772
    %v2465 = vunpack.c.l.b16 %v1774
    %v2466 = vpack.c.b16 %v2463, %v2462
    %v2467 = vpack.c.b16 %v2465, %v2464
    %v2471 = vsel %vm168, %v2457, 0
    %2473 = vmatprep.subr.bf16.mxu0 0
    %2474 = vmatpush1.bf16.msra.mxu0 %v2466
    %2475 = vmatprep.subr.bf16.mxu0 0
    %2476 = vmatpush1.bf16.msra.mxu0 %v2467
    %2477 = vmatprep.subr.bf16.mxu0 0
    %2478 = vmatpush1.bf16.msra.mxu0 0
    %2479 = vmatprep.subr.bf16.mxu0 0
    %2480 = vmatpush1.bf16.msra.mxu0 0
    %2481 = vmatprep.subr.bf16.mxu0 0
    %2482 = vmatpush1.bf16.msra.mxu0 0
    %2483 = vmatprep.subr.bf16.mxu0 0
    %2484 = vmatpush1.bf16.msra.mxu0 0
    %2485 = vmatprep.subr.bf16.mxu0 0
    %2486 = vmatpush1.bf16.msra.mxu0 0
    %2487 = vmatprep.subr.bf16.mxu0 0
    %2488 = vmatpush1.bf16.msra.mxu0 0
    %2489 = vmatprep.subr.bf16.mxu0 0
    %2490 = vmatpush1.bf16.msra.mxu0 0
    %2491 = vmatprep.subr.bf16.mxu0 0
    %2492 = vmatpush1.bf16.msra.mxu0 0
    %2493 = vmatprep.subr.bf16.mxu0 0
    %2494 = vmatpush1.bf16.msra.mxu0 0
    %2495 = vmatprep.subr.bf16.mxu0 0
    %2496 = vmatpush1.bf16.msra.mxu0 0
    %2497 = vmatprep.subr.bf16.mxu0 0
    %2498 = vmatpush1.bf16.msra.mxu0 0
    %2499 = vmatprep.subr.bf16.mxu0 0
    %2500 = vmatpush1.bf16.msra.mxu0 0
    %2501 = vmatprep.subr.bf16.mxu0 0
    %2502 = vmatpush1.bf16.msra.mxu0 0
    %2503 = vmatprep.subr.bf16.mxu0 0
    %2504 = vmatpush1.bf16.msra.mxu0 0
    %2505 = vmatprep.mubr.bf16.mxu0 0
    %2506 = vmatmul.mubr.bf16.gmra.mrb[0].mxu0 %v2471
    %v2507 = vpop.f32.mrb[0].mxu0
    %v2508 = vadd.f32 0.0, %v2507
    %v2509 = vpop.f32.mrb[0].mxu0
    %v2510 = vpop.f32.mrb[0].mxu0
    %v2511 = vadd.f32 0.0, %v2510
    %v2512 = vpop.f32.mrb[0].mxu0
    %2513 = vdwg.mxu0
    %v2514 = vpack.c.bf16 %v1762, %v1761
    %2515 = vrot.lane.b32.xlu0 %v2466, 96
    %v2516 = vpop.permute.xlu0 %2515
    %2517 = vrot.lane.b32.xlu0 %v2467, 96
    %v2518 = vpop.permute.xlu0 %2517
    %v2522 = vsel %vm168, %v2514, 0
    %2524 = vmatprep.subr.bf16.mxu0 0
    %2525 = vmatpush1.bf16.msra.mxu0 %v2516
    %2526 = vmatprep.subr.bf16.mxu0 0
    %2527 = vmatpush1.bf16.msra.mxu0 %v2518
    %2528 = vmatprep.subr.bf16.mxu0 0
    %2529 = vmatpush1.bf16.msra.mxu0 0
    %2530 = vmatprep.subr.bf16.mxu0 0
    %2531 = vmatpush1.bf16.msra.mxu0 0
    %2532 = vmatprep.subr.bf16.mxu0 0
    %2533 = vmatpush1.bf16.msra.mxu0 0
    %2534 = vmatprep.subr.bf16.mxu0 0
    %2535 = vmatpush1.bf16.msra.mxu0 0
    %2536 = vmatprep.subr.bf16.mxu0 0
    %2537 = vmatpush1.bf16.msra.mxu0 0
    %2538 = vmatprep.subr.bf16.mxu0 0
    %2539 = vmatpush1.bf16.msra.mxu0 0
    %2540 = vmatprep.subr.bf16.mxu0 0
    %2541 = vmatpush1.bf16.msra.mxu0 0
    %2542 = vmatprep.subr.bf16.mxu0 0
    %2543 = vmatpush1.bf16.msra.mxu0 0
    %2544 = vmatprep.subr.bf16.mxu0 0
    %2545 = vmatpush1.bf16.msra.mxu0 0
    %2546 = vmatprep.subr.bf16.mxu0 0
    %2547 = vmatpush1.bf16.msra.mxu0 0
    %2548 = vmatprep.subr.bf16.mxu0 0
    %2549 = vmatpush1.bf16.msra.mxu0 0
    %2550 = vmatprep.subr.bf16.mxu0 0
    %2551 = vmatpush1.bf16.msra.mxu0 0
    %2552 = vmatprep.subr.bf16.mxu0 0
    %2553 = vmatpush1.bf16.msra.mxu0 0
    %2554 = vmatprep.subr.bf16.mxu0 0
    %2555 = vmatpush1.bf16.msra.mxu0 0
    %2556 = vmatprep.mubr.bf16.mxu0 0
    %2557 = vmatmul.mubr.bf16.gmra.mrb[0].mxu0 %v2522
    %v2558 = vpop.f32.mrb[0].mxu0
    %v2559 = vadd.f32 0.0, %v2558
    %v2560 = vpop.f32.mrb[0].mxu0
    %v2561 = vpop.f32.mrb[0].mxu0
    %v2562 = vadd.f32 0.0, %v2561
    %v2563 = vpop.f32.mrb[0].mxu0
    %2564 = vdwg.mxu0
    %v2565 = vpack.c.bf16 %v2511, %v2508
    %v2566 = vpack.c.bf16 %v2562, %v2559
    %v2568 = vsel %vm251, %v2565, 0
    %v2571 = vsel %vm251, %v2566, 0
    %2573 = vmatprep.subr.bf16.mxu0 0
    %2574 = vmatpush1.bf16.xpose.msra.mxu0 %v2571
    %2575 = vmatprep.subr.bf16.mxu0 0
    %2576 = vmatpush1.bf16.xpose.msra.mxu0 0
    %2577 = vmatprep.subr.bf16.mxu0 0
    %2578 = vmatpush1.bf16.xpose.msra.mxu0 0
    %2579 = vmatprep.subr.bf16.mxu0 0
    %2580 = vmatpush1.bf16.xpose.msra.mxu0 0
    %2581 = vmatprep.subr.bf16.mxu0 0
    %2582 = vmatpush1.bf16.xpose.msra.mxu0 0
    %2583 = vmatprep.subr.bf16.mxu0 0
    %2584 = vmatpush1.bf16.xpose.msra.mxu0 0
    %2585 = vmatprep.subr.bf16.mxu0 0
    %2586 = vmatpush1.bf16.xpose.msra.mxu0 0
    %2587 = vmatprep.subr.bf16.mxu0 0
    %2588 = vmatpush1.bf16.xpose.msra.mxu0 0
    %2589 = vmatprep.subr.bf16.mxu0 0
    %2590 = vmatpush1.bf16.xpose.msra.mxu0 0
    %2591 = vmatprep.subr.bf16.mxu0 0
    %2592 = vmatpush1.bf16.xpose.msra.mxu0 0
    %2593 = vmatprep.subr.bf16.mxu0 0
    %2594 = vmatpush1.bf16.xpose.msra.mxu0 0
    %2595 = vmatprep.subr.bf16.mxu0 0
    %2596 = vmatpush1.bf16.xpose.msra.mxu0 0
    %2597 = vmatprep.subr.bf16.mxu0 0
    %2598 = vmatpush1.bf16.xpose.msra.mxu0 0
    %2599 = vmatprep.subr.bf16.mxu0 0
    %2600 = vmatpush1.bf16.xpose.msra.mxu0 0
    %2601 = vmatprep.subr.bf16.mxu0 0
    %2602 = vmatpush1.bf16.xpose.msra.mxu0 0
    %2603 = vmatprep.subr.bf16.mxu0 0
    %2604 = vmatpush1.bf16.xpose.msra.mxu0 0
    %2605 = vmatprep.mubr.bf16.mxu0 0
    %2606 = vmatmul.mubr.bf16.gmra.mrb[0].mxu0 %v2568
    %v2607 = vpop.f32.mrb[0].mxu0
    %v2608 = vadd.f32 %v157, %v2607
    %v2609 = vpop.f32.mrb[0].mxu0
    %v2610 = vpop.f32.mrb[0].mxu0
    %v2611 = vadd.f32 %v158, %v2610
    %v2612 = vpop.f32.mrb[0].mxu0
    %2613 = vdwg.mxu0
    %v2614 = vsel %vm299, %v2608, -inf
    %2615 = vmax.xlane.f32.xlu0 %v2614
    %v2616 = vpop.xlane.xlu0 %2615
    %vm2617 = vcmask 125952
    %v2618 = vsel %vm2617, %v2611, -inf
    %2619 = vmax.xlane.f32.xlu0 %v2618
    %v2620 = vpop.xlane.xlu0 %2619
    %v2621 = vsub.f32 %v2608, %v2616
    %v2622 = vsub.f32 %v2611, %v2620
    %v2623 = vmul.f32 %v2621, 1.442695
    %v2624 = vpow.pop %v2623
    %v2625 = vmul.f32 %v2622, 1.442695
    %v2626 = vpow.pop %v2625
    %v2627 = vsel %vm299, %v2624, 0.0
    %2628 = vadd.xlane.f32.xlu0 %v2627
    %v2629 = vpop.xlane.xlu0 %2628
    %v2630 = vsel %vm2617, %v2626, 0.0
    %2631 = vadd.xlane.f32.xlu0 %v2630
    %v2632 = vpop.xlane.xlu0 %2631
    %v2633 = vrcp.pop %v2629
    %v2634 = vrcp.pop %v2632
    %v2635 = vmul.f32 %v2624, %v2633
    %v2636 = vmul.f32 %v2626, %v2634
    %v2637 = vpack.c.bf16 %v2636, %v2635
    %2639 = vrot.lane.b32.xlu0 %v2566, 96
    %v2640 = vpop.permute.xlu0 %2639
    %v2643 = vsel %vm299, %v2637, 0
    %2645 = vmatprep.subr.bf16.mxu0 0
    %2646 = vmatpush1.bf16.msra.mxu0 %v2640
    %2647 = vmatprep.subr.bf16.mxu0 0
    %2648 = vmatpush1.bf16.msra.mxu0 0
    %2649 = vmatprep.subr.bf16.mxu0 0
    %2650 = vmatpush1.bf16.msra.mxu0 0
    %2651 = vmatprep.subr.bf16.mxu0 0
    %2652 = vmatpush1.bf16.msra.mxu0 0
    %2653 = vmatprep.subr.bf16.mxu0 0
    %2654 = vmatpush1.bf16.msra.mxu0 0
    %2655 = vmatprep.subr.bf16.mxu0 0
    %2656 = vmatpush1.bf16.msra.mxu0 0
    %2657 = vmatprep.subr.bf16.mxu0 0
    %2658 = vmatpush1.bf16.msra.mxu0 0
    %2659 = vmatprep.subr.bf16.mxu0 0
    %2660 = vmatpush1.bf16.msra.mxu0 0
    %2661 = vmatprep.subr.bf16.mxu0 0
    %2662 = vmatpush1.bf16.msra.mxu0 0
    %2663 = vmatprep.subr.bf16.mxu0 0
    %2664 = vmatpush1.bf16.msra.mxu0 0
    %2665 = vmatprep.subr.bf16.mxu0 0
    %2666 = vmatpush1.bf16.msra.mxu0 0
    %2667 = vmatprep.subr.bf16.mxu0 0
    %2668 = vmatpush1.bf16.msra.mxu0 0
    %2669 = vmatprep.subr.bf16.mxu0 0
    %2670 = vmatpush1.bf16.msra.mxu0 0
    %2671 = vmatprep.subr.bf16.mxu0 0
    %2672 = vmatpush1.bf16.msra.mxu0 0
    %2673 = vmatprep.subr.bf16.mxu0 0
    %2674 = vmatpush1.bf16.msra.mxu0 0
    %2675 = vmatprep.subr.bf16.mxu0 0
    %2676 = vmatpush1.bf16.msra.mxu0 0
    %2677 = vmatprep.mubr.bf16.mxu0 0
    %2678 = vmatmul.mubr.bf16.gmra.mrb[0].mxu0 %v2643
    %v2679 = vpop.f32.mrb[0].mxu0
    %v2680 = vadd.f32 0.0, %v2679
    %v2681 = vpop.f32.mrb[0].mxu0
    %v2682 = vpop.f32.mrb[0].mxu0
    %v2683 = vadd.f32 0.0, %v2682
    %v2684 = vpop.f32.mrb[0].mxu0
    %2685 = vdwg.mxu0
    %2687 = vrot.lane.b32.xlu0 %v2565, 120
    %v2688 = vpop.permute.xlu0 %2687
    %2689 = vrot.lane.b32.xlu0 %v2566, 120
    %v2690 = vpop.permute.xlu0 %2689
    %v2692 = vsel %vm251, %v2688, 0
    %v2695 = vsel %vm251, %v2690, 0
    %2697 = vmatprep.subr.bf16.mxu0 0
    %2698 = vmatpush1.bf16.xpose.msra.mxu0 %v2695
    %2699 = vmatprep.subr.bf16.mxu0 0
    %2700 = vmatpush1.bf16.xpose.msra.mxu0 0
    %2701 = vmatprep.subr.bf16.mxu0 0
    %2702 = vmatpush1.bf16.xpose.msra.mxu0 0
    %2703 = vmatprep.subr.bf16.mxu0 0
    %2704 = vmatpush1.bf16.xpose.msra.mxu0 0
    %2705 = vmatprep.subr.bf16.mxu0 0
    %2706 = vmatpush1.bf16.xpose.msra.mxu0 0
    %2707 = vmatprep.subr.bf16.mxu0 0
    %2708 = vmatpush1.bf16.xpose.msra.mxu0 0
    %2709 = vmatprep.subr.bf16.mxu0 0
    %2710 = vmatpush1.bf16.xpose.msra.mxu0 0
    %2711 = vmatprep.subr.bf16.mxu0 0
    %2712 = vmatpush1.bf16.xpose.msra.mxu0 0
    %2713 = vmatprep.subr.bf16.mxu0 0
    %2714 = vmatpush1.bf16.xpose.msra.mxu0 0
    %2715 = vmatprep.subr.bf16.mxu0 0
    %2716 = vmatpush1.bf16.xpose.msra.mxu0 0
    %2717 = vmatprep.subr.bf16.mxu0 0
    %2718 = vmatpush1.bf16.xpose.msra.mxu0 0
    %2719 = vmatprep.subr.bf16.mxu0 0
    %2720 = vmatpush1.bf16.xpose.msra.mxu0 0
    %2721 = vmatprep.subr.bf16.mxu0 0
    %2722 = vmatpush1.bf16.xpose.msra.mxu0 0
    %2723 = vmatprep.subr.bf16.mxu0 0
    %2724 = vmatpush1.bf16.xpose.msra.mxu0 0
    %2725 = vmatprep.subr.bf16.mxu0 0
    %2726 = vmatpush1.bf16.xpose.msra.mxu0 0
    %2727 = vmatprep.subr.bf16.mxu0 0
    %2728 = vmatpush1.bf16.xpose.msra.mxu0 0
    %2729 = vmatprep.mubr.bf16.mxu0 0
    %2730 = vmatmul.mubr.bf16.gmra.mrb[0].mxu0 %v2692
    %v2731 = vpop.f32.mrb[0].mxu0
    %v2732 = vadd.f32 %v157, %v2731
    %v2733 = vpop.f32.mrb[0].mxu0
    %v2734 = vpop.f32.mrb[0].mxu0
    %v2735 = vadd.f32 %v158, %v2734
    %v2736 = vpop.f32.mrb[0].mxu0
    %2737 = vdwg.mxu0
    %v2738 = vsel %vm299, %v2732, -inf
    %2739 = vmax.xlane.f32.xlu0 %v2738
    %v2740 = vpop.xlane.xlu0 %2739
    %v2741 = vsel %vm2617, %v2735, -inf
    %2742 = vmax.xlane.f32.xlu0 %v2741
    %v2743 = vpop.xlane.xlu0 %2742
    %v2744 = vsub.f32 %v2732, %v2740
    %v2745 = vsub.f32 %v2735, %v2743
    %v2746 = vmul.f32 %v2744, 1.442695
    %v2747 = vpow.pop %v2746
    %v2748 = vmul.f32 %v2745, 1.442695
    %v2749 = vpow.pop %v2748
    %v2750 = vsel %vm299, %v2747, 0.0
    %2751 = vadd.xlane.f32.xlu0 %v2750
    %v2752 = vpop.xlane.xlu0 %2751
    %v2753 = vsel %vm2617, %v2749, 0.0
    %2754 = vadd.xlane.f32.xlu0 %v2753
    %v2755 = vpop.xlane.xlu0 %2754
    %v2756 = vrcp.pop %v2752
    %v2757 = vrcp.pop %v2755
    %v2758 = vmul.f32 %v2747, %v2756
    %v2759 = vmul.f32 %v2749, %v2757
    %v2760 = vpack.c.bf16 %v2759, %v2758
    %2761 = vrot.lane.b32.xlu0 %v2566, 88
    %v2762 = vpop.permute.xlu0 %2761
    %v2765 = vsel %vm299, %v2760, 0
    %2767 = vmatprep.subr.bf16.mxu0 0
    %2768 = vmatpush1.bf16.msra.mxu0 %v2762
    %2769 = vmatprep.subr.bf16.mxu0 0
    %2770 = vmatpush1.bf16.msra.mxu0 0
    %2771 = vmatprep.subr.bf16.mxu0 0
    %2772 = vmatpush1.bf16.msra.mxu0 0
    %2773 = vmatprep.subr.bf16.mxu0 0
    %2774 = vmatpush1.bf16.msra.mxu0 0
    %2775 = vmatprep.subr.bf16.mxu0 0
    %2776 = vmatpush1.bf16.msra.mxu0 0
    %2777 = vmatprep.subr.bf16.mxu0 0
    %2778 = vmatpush1.bf16.msra.mxu0 0
    %2779 = vmatprep.subr.bf16.mxu0 0
    %2780 = vmatpush1.bf16.msra.mxu0 0
    %2781 = vmatprep.subr.bf16.mxu0 0
    %2782 = vmatpush1.bf16.msra.mxu0 0
    %2783 = vmatprep.subr.bf16.mxu0 0
    %2784 = vmatpush1.bf16.msra.mxu0 0
    %2785 = vmatprep.subr.bf16.mxu0 0
    %2786 = vmatpush1.bf16.msra.mxu0 0
    %2787 = vmatprep.subr.bf16.mxu0 0
    %2788 = vmatpush1.bf16.msra.mxu0 0
    %2789 = vmatprep.subr.bf16.mxu0 0
    %2790 = vmatpush1.bf16.msra.mxu0 0
    %2791 = vmatprep.subr.bf16.mxu0 0
    %2792 = vmatpush1.bf16.msra.mxu0 0
    %2793 = vmatprep.subr.bf16.mxu0 0
    %2794 = vmatpush1.bf16.msra.mxu0 0
    %2795 = vmatprep.subr.bf16.mxu0 0
    %2796 = vmatpush1.bf16.msra.mxu0 0
    %2797 = vmatprep.subr.bf16.mxu0 0
    %2798 = vmatpush1.bf16.msra.mxu0 0
    %2799 = vmatprep.mubr.bf16.mxu0 0
    %2800 = vmatmul.mubr.bf16.gmra.mrb[0].mxu0 %v2765
    %v2801 = vpop.f32.mrb[0].mxu0
    %v2802 = vadd.f32 0.0, %v2801
    %v2803 = vpop.f32.mrb[0].mxu0
    %v2804 = vpop.f32.mrb[0].mxu0
    %v2805 = vadd.f32 0.0, %v2804
    %v2806 = vpop.f32.mrb[0].mxu0
    %2807 = vdwg.mxu0
    %2808 = vrot.lane.b32.xlu0 %v2565, 112
    %v2809 = vpop.permute.xlu0 %2808
    %2810 = vrot.lane.b32.xlu0 %v2566, 112
    %v2811 = vpop.permute.xlu0 %2810
    %v2813 = vsel %vm251, %v2809, 0
    %v2816 = vsel %vm251, %v2811, 0
    %2818 = vmatprep.subr.bf16.mxu0 0
    %2819 = vmatpush1.bf16.xpose.msra.mxu0 %v2816
    %2820 = vmatprep.subr.bf16.mxu0 0
    %2821 = vmatpush1.bf16.xpose.msra.mxu0 0
    %2822 = vmatprep.subr.bf16.mxu0 0
    %2823 = vmatpush1.bf16.xpose.msra.mxu0 0
    %2824 = vmatprep.subr.bf16.mxu0 0
    %2825 = vmatpush1.bf16.xpose.msra.mxu0 0
    %2826 = vmatprep.subr.bf16.mxu0 0
    %2827 = vmatpush1.bf16.xpose.msra.mxu0 0
    %2828 = vmatprep.subr.bf16.mxu0 0
    %2829 = vmatpush1.bf16.xpose.msra.mxu0 0
    %2830 = vmatprep.subr.bf16.mxu0 0
    %2831 = vmatpush1.bf16.xpose.msra.mxu0 0
    %2832 = vmatprep.subr.bf16.mxu0 0
    %2833 = vmatpush1.bf16.xpose.msra.mxu0 0
    %2834 = vmatprep.subr.bf16.mxu0 0
    %2835 = vmatpush1.bf16.xpose.msra.mxu0 0
    %2836 = vmatprep.subr.bf16.mxu0 0
    %2837 = vmatpush1.bf16.xpose.msra.mxu0 0
    %2838 = vmatprep.subr.bf16.mxu0 0
    %2839 = vmatpush1.bf16.xpose.msra.mxu0 0
    %2840 = vmatprep.subr.bf16.mxu0 0
    %2841 = vmatpush1.bf16.xpose.msra.mxu0 0
    %2842 = vmatprep.subr.bf16.mxu0 0
    %2843 = vmatpush1.bf16.xpose.msra.mxu0 0
    %2844 = vmatprep.subr.bf16.mxu0 0
    %2845 = vmatpush1.bf16.xpose.msra.mxu0 0
    %2846 = vmatprep.subr.bf16.mxu0 0
    %2847 = vmatpush1.bf16.xpose.msra.mxu0 0
    %2848 = vmatprep.subr.bf16.mxu0 0
    %2849 = vmatpush1.bf16.xpose.msra.mxu0 0
    %2850 = vmatprep.mubr.bf16.mxu0 0
    %2851 = vmatmul.mubr.bf16.gmra.mrb[0].mxu0 %v2813
    %v2852 = vpop.f32.mrb[0].mxu0
    %v2853 = vadd.f32 %v157, %v2852
    %v2854 = vpop.f32.mrb[0].mxu0
    %v2855 = vpop.f32.mrb[0].mxu0
    %v2856 = vadd.f32 %v158, %v2855
    %v2857 = vpop.f32.mrb[0].mxu0
    %2858 = vdwg.mxu0
    %v2859 = vsel %vm299, %v2853, -inf
    %2860 = vmax.xlane.f32.xlu0 %v2859
    %v2861 = vpop.xlane.xlu0 %2860
    %v2862 = vsel %vm2617, %v2856, -inf
    %2863 = vmax.xlane.f32.xlu0 %v2862
    %v2864 = vpop.xlane.xlu0 %2863
    %v2865 = vsub.f32 %v2853, %v2861
    %v2866 = vsub.f32 %v2856, %v2864
    %v2867 = vmul.f32 %v2865, 1.442695
    %v2868 = vpow.pop %v2867
    %v2869 = vmul.f32 %v2866, 1.442695
    %v2870 = vpow.pop %v2869
    %v2871 = vsel %vm299, %v2868, 0.0
    %2872 = vadd.xlane.f32.xlu0 %v2871
    %v2873 = vpop.xlane.xlu0 %2872
    %v2874 = vsel %vm2617, %v2870, 0.0
    %2875 = vadd.xlane.f32.xlu0 %v2874
    %v2876 = vpop.xlane.xlu0 %2875
    %v2877 = vrcp.pop %v2873
    %v2878 = vrcp.pop %v2876
    %v2879 = vmul.f32 %v2868, %v2877
    %v2880 = vmul.f32 %v2870, %v2878
    %v2881 = vpack.c.bf16 %v2880, %v2879
    %2882 = vrot.lane.b32.xlu0 %v2566, 80
    %v2883 = vpop.permute.xlu0 %2882
    %v2886 = vsel %vm299, %v2881, 0
    %2888 = vmatprep.subr.bf16.mxu0 0
    %2889 = vmatpush1.bf16.msra.mxu0 %v2883
    %2890 = vmatprep.subr.bf16.mxu0 0
    %2891 = vmatpush1.bf16.msra.mxu0 0
    %2892 = vmatprep.subr.bf16.mxu0 0
    %2893 = vmatpush1.bf16.msra.mxu0 0
    %2894 = vmatprep.subr.bf16.mxu0 0
    %2895 = vmatpush1.bf16.msra.mxu0 0
    %2896 = vmatprep.subr.bf16.mxu0 0
    %2897 = vmatpush1.bf16.msra.mxu0 0
    %2898 = vmatprep.subr.bf16.mxu0 0
    %2899 = vmatpush1.bf16.msra.mxu0 0
    %2900 = vmatprep.subr.bf16.mxu0 0
    %2901 = vmatpush1.bf16.msra.mxu0 0
    %2902 = vmatprep.subr.bf16.mxu0 0
    %2903 = vmatpush1.bf16.msra.mxu0 0
    %2904 = vmatprep.subr.bf16.mxu0 0
    %2905 = vmatpush1.bf16.msra.mxu0 0
    %2906 = vmatprep.subr.bf16.mxu0 0
    %2907 = vmatpush1.bf16.msra.mxu0 0
    %2908 = vmatprep.subr.bf16.mxu0 0
    %2909 = vmatpush1.bf16.msra.mxu0 0
    %2910 = vmatprep.subr.bf16.mxu0 0
    %2911 = vmatpush1.bf16.msra.mxu0 0
    %2912 = vmatprep.subr.bf16.mxu0 0
    %2913 = vmatpush1.bf16.msra.mxu0 0
    %2914 = vmatprep.subr.bf16.mxu0 0
    %2915 = vmatpush1.bf16.msra.mxu0 0
    %2916 = vmatprep.subr.bf16.mxu0 0
    %2917 = vmatpush1.bf16.msra.mxu0 0
    %2918 = vmatprep.subr.bf16.mxu0 0
    %2919 = vmatpush1.bf16.msra.mxu0 0
    %2920 = vmatprep.mubr.bf16.mxu0 0
    %2921 = vmatmul.mubr.bf16.gmra.mrb[0].mxu0 %v2886
    %v2922 = vpop.f32.mrb[0].mxu0
    %v2923 = vadd.f32 0.0, %v2922
    %v2924 = vpop.f32.mrb[0].mxu0
    %v2925 = vpop.f32.mrb[0].mxu0
    %v2926 = vadd.f32 0.0, %v2925
    %v2927 = vpop.f32.mrb[0].mxu0
    %2928 = vdwg.mxu0
    %2929 = vrot.lane.b32.xlu0 %v2565, 104
    %v2930 = vpop.permute.xlu0 %2929
    %2931 = vrot.lane.b32.xlu0 %v2566, 104
    %v2932 = vpop.permute.xlu0 %2931
    %v2934 = vsel %vm251, %v2930, 0
    %v2937 = vsel %vm251, %v2932, 0
    %2939 = vmatprep.subr.bf16.mxu0 0
    %2940 = vmatpush1.bf16.xpose.msra.mxu0 %v2937
    %2941 = vmatprep.subr.bf16.mxu0 0
    %2942 = vmatpush1.bf16.xpose.msra.mxu0 0
    %2943 = vmatprep.subr.bf16.mxu0 0
    %2944 = vmatpush1.bf16.xpose.msra.mxu0 0
    %2945 = vmatprep.subr.bf16.mxu0 0
    %2946 = vmatpush1.bf16.xpose.msra.mxu0 0
    %2947 = vmatprep.subr.bf16.mxu0 0
    %2948 = vmatpush1.bf16.xpose.msra.mxu0 0
    %2949 = vmatprep.subr.bf16.mxu0 0
    %2950 = vmatpush1.bf16.xpose.msra.mxu0 0
    %2951 = vmatprep.subr.bf16.mxu0 0
    %2952 = vmatpush1.bf16.xpose.msra.mxu0 0
    %2953 = vmatprep.subr.bf16.mxu0 0
    %2954 = vmatpush1.bf16.xpose.msra.mxu0 0
    %2955 = vmatprep.subr.bf16.mxu0 0
    %2956 = vmatpush1.bf16.xpose.msra.mxu0 0
    %2957 = vmatprep.subr.bf16.mxu0 0
    %2958 = vmatpush1.bf16.xpose.msra.mxu0 0
    %2959 = vmatprep.subr.bf16.mxu0 0
    %2960 = vmatpush1.bf16.xpose.msra.mxu0 0
    %2961 = vmatprep.subr.bf16.mxu0 0
    %2962 = vmatpush1.bf16.xpose.msra.mxu0 0
    %2963 = vmatprep.subr.bf16.mxu0 0
    %2964 = vmatpush1.bf16.xpose.msra.mxu0 0
    %2965 = vmatprep.subr.bf16.mxu0 0
    %2966 = vmatpush1.bf16.xpose.msra.mxu0 0
    %2967 = vmatprep.subr.bf16.mxu0 0
    %2968 = vmatpush1.bf16.xpose.msra.mxu0 0
    %2969 = vmatprep.subr.bf16.mxu0 0
    %2970 = vmatpush1.bf16.xpose.msra.mxu0 0
    %2971 = vmatprep.mubr.bf16.mxu0 0
    %2972 = vmatmul.mubr.bf16.gmra.mrb[0].mxu0 %v2934
    %v2973 = vpop.f32.mrb[0].mxu0
    %v2974 = vadd.f32 %v157, %v2973
    %v2975 = vpop.f32.mrb[0].mxu0
    %v2976 = vpop.f32.mrb[0].mxu0
    %v2977 = vadd.f32 %v158, %v2976
    %v2978 = vpop.f32.mrb[0].mxu0
    %2979 = vdwg.mxu0
    %v2980 = vsel %vm299, %v2974, -inf
    %2981 = vmax.xlane.f32.xlu0 %v2980
    %v2982 = vpop.xlane.xlu0 %2981
    %v2983 = vsel %vm2617, %v2977, -inf
    %2984 = vmax.xlane.f32.xlu0 %v2983
    %v2985 = vpop.xlane.xlu0 %2984
    %v2986 = vsub.f32 %v2974, %v2982
    %v2987 = vsub.f32 %v2977, %v2985
    %v2988 = vmul.f32 %v2986, 1.442695
    %v2989 = vpow.pop %v2988
    %v2990 = vmul.f32 %v2987, 1.442695
    %v2991 = vpow.pop %v2990
    %v2992 = vsel %vm299, %v2989, 0.0
    %2993 = vadd.xlane.f32.xlu0 %v2992
    %v2994 = vpop.xlane.xlu0 %2993
    %v2995 = vsel %vm2617, %v2991, 0.0
    %2996 = vadd.xlane.f32.xlu0 %v2995
    %v2997 = vpop.xlane.xlu0 %2996
    %v2998 = vrcp.pop %v2994
    %v2999 = vrcp.pop %v2997
    %v3000 = vmul.f32 %v2989, %v2998
    %v3001 = vmul.f32 %v2991, %v2999
    %v3002 = vpack.c.bf16 %v3001, %v3000
    %3003 = vrot.lane.b32.xlu0 %v2566, 72
    %v3004 = vpop.permute.xlu0 %3003
    %v3007 = vsel %vm299, %v3002, 0
    %3009 = vmatprep.subr.bf16.mxu0 0
    %3010 = vmatpush1.bf16.msra.mxu0 %v3004
    %3011 = vmatprep.subr.bf16.mxu0 0
    %3012 = vmatpush1.bf16.msra.mxu0 0
    %3013 = vmatprep.subr.bf16.mxu0 0
    %3014 = vmatpush1.bf16.msra.mxu0 0
    %3015 = vmatprep.subr.bf16.mxu0 0
    %3016 = vmatpush1.bf16.msra.mxu0 0
    %3017 = vmatprep.subr.bf16.mxu0 0
    %3018 = vmatpush1.bf16.msra.mxu0 0
    %3019 = vmatprep.subr.bf16.mxu0 0
    %3020 = vmatpush1.bf16.msra.mxu0 0
    %3021 = vmatprep.subr.bf16.mxu0 0
    %3022 = vmatpush1.bf16.msra.mxu0 0
    %3023 = vmatprep.subr.bf16.mxu0 0
    %3024 = vmatpush1.bf16.msra.mxu0 0
    %3025 = vmatprep.subr.bf16.mxu0 0
    %3026 = vmatpush1.bf16.msra.mxu0 0
    %3027 = vmatprep.subr.bf16.mxu0 0
    %3028 = vmatpush1.bf16.msra.mxu0 0
    %3029 = vmatprep.subr.bf16.mxu0 0
    %3030 = vmatpush1.bf16.msra.mxu0 0
    %3031 = vmatprep.subr.bf16.mxu0 0
    %3032 = vmatpush1.bf16.msra.mxu0 0
    %3033 = vmatprep.subr.bf16.mxu0 0
    %3034 = vmatpush1.bf16.msra.mxu0 0
    %3035 = vmatprep.subr.bf16.mxu0 0
    %3036 = vmatpush1.bf16.msra.mxu0 0
    %3037 = vmatprep.subr.bf16.mxu0 0
    %3038 = vmatpush1.bf16.msra.mxu0 0
    %3039 = vmatprep.subr.bf16.mxu0 0
    %3040 = vmatpush1.bf16.msra.mxu0 0
    %3041 = vmatprep.mubr.bf16.mxu0 0
    %3042 = vmatmul.mubr.bf16.gmra.mrb[0].mxu0 %v3007
    %v3043 = vpop.f32.mrb[0].mxu0
    %v3044 = vadd.f32 0.0, %v3043
    %v3045 = vpop.f32.mrb[0].mxu0
    %v3046 = vpop.f32.mrb[0].mxu0
    %v3047 = vadd.f32 0.0, %v3046
    %v3048 = vpop.f32.mrb[0].mxu0
    %3049 = vdwg.mxu0
    %3052 = vrot.lane.b32.xlu0 %v2802, 8
    %v3053 = vpop.permute.xlu0 %3052
    %3054 = vrot.lane.b32.xlu0 %v2805, 8
    %v3055 = vpop.permute.xlu0 %3054
    %3060 = vrot.lane.b32.xlu0 %v2923, 16
    %v3061 = vpop.permute.xlu0 %3060
    %3062 = vrot.lane.b32.xlu0 %v2926, 16
    %v3063 = vpop.permute.xlu0 %3062
    %3068 = vrot.lane.b32.xlu0 %v3044, 24
    %v3069 = vpop.permute.xlu0 %3068
    %3070 = vrot.lane.b32.xlu0 %v3047, 24
    %v3071 = vpop.permute.xlu0 %3070
    %v3074 = vsel %vm251, %v2680, %v3053
    %v3075 = vsel %vm251, %v2683, %v3055
    %v3076 = vsel %vm299, %v3074, %v3061
    %v3077 = vsel %vm299, %v3075, %v3063
    %v3078 = vsel %vm761, %v3076, %v3069
    %v3079 = vsel %vm761, %v3077, %v3071
    %v3080 = vpack.c.bf16 %v3079, %v3078
    %3081 = vrot.lane.b32.xlu0 %v2466, 32
    %v3082 = vpop.permute.xlu0 %3081
    %3083 = vrot.lane.b32.xlu0 %v2467, 32
    %v3084 = vpop.permute.xlu0 %3083
    %v3088 = vsel %vm168, %v3080, 0
    %3090 = vmatprep.subr.bf16.mxu0 0
    %3091 = vmatpush1.bf16.msra.mxu0 %v3082
    %3092 = vmatprep.subr.bf16.mxu0 0
    %3093 = vmatpush1.bf16.msra.mxu0 %v3084
    %3094 = vmatprep.subr.bf16.mxu0 0
    %3095 = vmatpush1.bf16.msra.mxu0 0
    %3096 = vmatprep.subr.bf16.mxu0 0
    %3097 = vmatpush1.bf16.msra.mxu0 0
    %3098 = vmatprep.subr.bf16.mxu0 0
    %3099 = vmatpush1.bf16.msra.mxu0 0
    %3100 = vmatprep.subr.bf16.mxu0 0
    %3101 = vmatpush1.bf16.msra.mxu0 0
    %3102 = vmatprep.subr.bf16.mxu0 0
    %3103 = vmatpush1.bf16.msra.mxu0 0
    %3104 = vmatprep.subr.bf16.mxu0 0
    %3105 = vmatpush1.bf16.msra.mxu0 0
    %3106 = vmatprep.subr.bf16.mxu0 0
    %3107 = vmatpush1.bf16.msra.mxu0 0
    %3108 = vmatprep.subr.bf16.mxu0 0
    %3109 = vmatpush1.bf16.msra.mxu0 0
    %3110 = vmatprep.subr.bf16.mxu0 0
    %3111 = vmatpush1.bf16.msra.mxu0 0
    %3112 = vmatprep.subr.bf16.mxu0 0
    %3113 = vmatpush1.bf16.msra.mxu0 0
    %3114 = vmatprep.subr.bf16.mxu0 0
    %3115 = vmatpush1.bf16.msra.mxu0 0
    %3116 = vmatprep.subr.bf16.mxu0 0
    %3117 = vmatpush1.bf16.msra.mxu0 0
    %3118 = vmatprep.subr.bf16.mxu0 0
    %3119 = vmatpush1.bf16.msra.mxu0 0
    %3120 = vmatprep.subr.bf16.mxu0 0
    %3121 = vmatpush1.bf16.msra.mxu0 0
    %3122 = vmatprep.mubr.bf16.mxu0 0
    %3123 = vmatmul.mubr.bf16.gmra.mrb[0].mxu0 %v3088
    %v3124 = vpop.f32.mrb[0].mxu0
    %v3125 = vadd.f32 0.0, %v3124
    %v3126 = vpop.f32.mrb[0].mxu0
    %v3127 = vpop.f32.mrb[0].mxu0
    %v3128 = vadd.f32 0.0, %v3127
    %v3129 = vpop.f32.mrb[0].mxu0
    %3130 = vdwg.mxu0
    %v3131 = vadd.f32 %v2432, %v3125
    %v3132 = vadd.f32 %v2433, %v3128
    %v3133 = vld [vmem:[%s7 + $0x7] sm:$0x1]
    %v3134 = vmul.f32 %v3131, %v3131
    %v3135 = vmul.f32 %v3132, %v3132
    %v3136 = vsel %vm168, %v3134, 0.0
    %3137 = vadd.xlane.f32.xlu0 %v3136
    %v3138 = vpop.xlane.xlu0 %3137
    %v3139 = vsel %vm1781, %v3135, 0.0
    %3140 = vadd.xlane.f32.xlu0 %v3139
    %v3141 = vpop.xlane.xlu0 %3140
    %v3142 = vmul.f32 %v3138, %v175
    %v3143 = vmul.f32 %v3141, %v175
    %v3144 = vadd.f32 %v3142, 1e-06
    %v3145 = vadd.f32 %v3143, 1e-06
    %v3146 = vrsqrt.pop %v3144
    %v3147 = vrsqrt.pop %v3145
    %v3148 = vmul.f32 %v3131, %v3146
    %v3149 = vmul.f32 %v3132, %v3147
    %v3150 = vlaneseq
    %v3151 = vshrl.u32 %v3150, 7
    %v3152 = vsub.s32 0, %v3151
    %v3153 = vrot.slane %v3133, %v3152
    %v3154 = vmul.f32 %v3148, %v3153
    %v3155 = vmul.f32 %v3149, %v3153
    %v3156 = vpack.c.bf16 %v3155, %v3154
    %v3157 = vunpack.c.h.b16 %v1767
    %v3158 = vunpack.c.h.b16 %v1769
    %v3159 = vunpack.c.h.b16 %v1771
    %v3160 = vunpack.c.h.b16 %v1773
    %v3161 = vpack.c.b16 %v3158, %v3157
    %v3162 = vpack.c.b16 %v3160, %v3159
    %v3166 = vsel %vm168, %v3156, 0
    %3168 = vmatprep.subr.bf16.mxu0 0
    %3169 = vmatpush1.bf16.msra.mxu0 %v3161
    %3170 = vmatprep.subr.bf16.mxu0 0
    %3171 = vmatpush1.bf16.msra.mxu0 %v3162
    %3172 = vmatprep.subr.bf16.mxu0 0
    %3173 = vmatpush1.bf16.msra.mxu0 0
    %3174 = vmatprep.subr.bf16.mxu0 0
    %3175 = vmatpush1.bf16.msra.mxu0 0
    %3176 = vmatprep.subr.bf16.mxu0 0
    %3177 = vmatpush1.bf16.msra.mxu0 0
    %3178 = vmatprep.subr.bf16.mxu0 0
    %3179 = vmatpush1.bf16.msra.mxu0 0
    %3180 = vmatprep.subr.bf16.mxu0 0
    %3181 = vmatpush1.bf16.msra.mxu0 0
    %3182 = vmatprep.subr.bf16.mxu0 0
    %3183 = vmatpush1.bf16.msra.mxu0 0
    %3184 = vmatprep.subr.bf16.mxu0 0
    %3185 = vmatpush1.bf16.msra.mxu0 0
    %3186 = vmatprep.subr.bf16.mxu0 0
    %3187 = vmatpush1.bf16.msra.mxu0 0
    %3188 = vmatprep.subr.bf16.mxu0 0
    %3189 = vmatpush1.bf16.msra.mxu0 0
    %3190 = vmatprep.subr.bf16.mxu0 0
    %3191 = vmatpush1.bf16.msra.mxu0 0
    %3192 = vmatprep.subr.bf16.mxu0 0
    %3193 = vmatpush1.bf16.msra.mxu0 0
    %3194 = vmatprep.subr.bf16.mxu0 0
    %3195 = vmatpush1.bf16.msra.mxu0 0
    %3196 = vmatprep.subr.bf16.mxu0 0
    %3197 = vmatpush1.bf16.msra.mxu0 0
    %3198 = vmatprep.subr.bf16.mxu0 0
    %3199 = vmatpush1.bf16.msra.mxu0 0
    %3200 = vmatprep.mubr.bf16.mxu0 0
    %3201 = vmatmul.mubr.bf16.gmra.mrb[0].mxu0 %v3166
    %v3202 = vpop.f32.mrb[0].mxu0
    %v3203 = vadd.f32 0.0, %v3202
    %v3204 = vpop.f32.mrb[0].mxu0
    %v3205 = vpop.f32.mrb[0].mxu0
    %v3206 = vadd.f32 0.0, %v3205
    %v3207 = vpop.f32.mrb[0].mxu0
    %3208 = vdwg.mxu0
    %v3209 = vmax.f32 %v3203, 0.0
    %v3210 = vmax.f32 %v3206, 0.0
    %v3211 = vpack.c.bf16 %v3210, %v3209
    %3212 = vrot.lane.b32.xlu0 %v3161, 64
    %v3213 = vpop.permute.xlu0 %3212
    %3214 = vrot.lane.b32.xlu0 %v3162, 64
    %v3215 = vpop.permute.xlu0 %3214
    %v3217 = vsel %vm900, %v3211, 0
    %v3220 = vsel %vm900, %v3213, 0
    %v3223 = vsel %vm900, %v3215, 0
    %3225 = vmatprep.subr.bf16.mxu0 0
    %3226 = vmatpush1.bf16.xpose.msra.mxu0 %v3220
    %3227 = vmatprep.subr.bf16.mxu0 0
    %3228 = vmatpush1.bf16.xpose.msra.mxu0 %v3223
    %3229 = vmatprep.subr.bf16.mxu0 0
    %3230 = vmatpush1.bf16.xpose.msra.mxu0 0
    %3231 = vmatprep.subr.bf16.mxu0 0
    %3232 = vmatpush1.bf16.xpose.msra.mxu0 0
    %3233 = vmatprep.subr.bf16.mxu0 0
    %3234 = vmatpush1.bf16.xpose.msra.mxu0 0
    %3235 = vmatprep.subr.bf16.mxu0 0
    %3236 = vmatpush1.bf16.xpose.msra.mxu0 0
    %3237 = vmatprep.subr.bf16.mxu0 0
    %3238 = vmatpush1.bf16.xpose.msra.mxu0 0
    %3239 = vmatprep.subr.bf16.mxu0 0
    %3240 = vmatpush1.bf16.xpose.msra.mxu0 0
    %3241 = vmatprep.subr.bf16.mxu0 0
    %3242 = vmatpush1.bf16.xpose.msra.mxu0 0
    %3243 = vmatprep.subr.bf16.mxu0 0
    %3244 = vmatpush1.bf16.xpose.msra.mxu0 0
    %3245 = vmatprep.subr.bf16.mxu0 0
    %3246 = vmatpush1.bf16.xpose.msra.mxu0 0
    %3247 = vmatprep.subr.bf16.mxu0 0
    %3248 = vmatpush1.bf16.xpose.msra.mxu0 0
    %3249 = vmatprep.subr.bf16.mxu0 0
    %3250 = vmatpush1.bf16.xpose.msra.mxu0 0
    %3251 = vmatprep.subr.bf16.mxu0 0
    %3252 = vmatpush1.bf16.xpose.msra.mxu0 0
    %3253 = vmatprep.subr.bf16.mxu0 0
    %3254 = vmatpush1.bf16.xpose.msra.mxu0 0
    %3255 = vmatprep.subr.bf16.mxu0 0
    %3256 = vmatpush1.bf16.xpose.msra.mxu0 0
    %3257 = vmatprep.mubr.bf16.mxu0 0
    %3258 = vmatmul.mubr.bf16.gmra.mrb[0].mxu0 %v3217
    %v3259 = vpop.f32.mrb[0].mxu0
    %v3260 = vadd.f32 0.0, %v3259
    %v3261 = vpop.f32.mrb[0].mxu0
    %v3262 = vpop.f32.mrb[0].mxu0
    %v3263 = vadd.f32 0.0, %v3262
    %v3264 = vpop.f32.mrb[0].mxu0
    %3265 = vdwg.mxu0
    %v3266 = vadd.f32 %v3131, %v3260
    %v3267 = vadd.f32 %v3132, %v3263
    %s3268 = scalar_lea.vmem %s9, 48
    %v3269 = vld [vmem:[%s3268] sm:$0xff]
    %v3270 = vld [vmem:[%s3268 + $0x8] sm:$0xf]
    %v3271 = vld [vmem:[%s3268 + $0xc] sm:$0xff]
    %v3272 = vld [vmem:[%s3268 + $0x14] sm:$0xf]
    %v3273 = vld [vmem:[%s3268 + $0x18] sm:$0xff]
    %v3274 = vld [vmem:[%s3268 + $0x20] sm:$0xf]
    %v3275 = vld [vmem:[%s3268 + $0x24] sm:$0xff]
    %v3276 = vld [vmem:[%s3268 + $0x2c] sm:$0xf]
    %v3277 = vld [vmem:[%s7 + $0x8] sm:$0x1]
    %v3278 = vmul.f32 %v3266, %v3266
    %v3279 = vmul.f32 %v3267, %v3267
    %v3280 = vsel %vm168, %v3278, 0.0
    %3281 = vadd.xlane.f32.xlu0 %v3280
    %v3282 = vpop.xlane.xlu0 %3281
    %v3283 = vsel %vm1781, %v3279, 0.0
    %3284 = vadd.xlane.f32.xlu0 %v3283
    %v3285 = vpop.xlane.xlu0 %3284
    %v3286 = vmul.f32 %v3282, %v175
    %v3287 = vmul.f32 %v3285, %v175
    %v3288 = vadd.f32 %v3286, 1e-06
    %v3289 = vadd.f32 %v3287, 1e-06
    %v3290 = vrsqrt.pop %v3288
    %v3291 = vrsqrt.pop %v3289
    %v3292 = vmul.f32 %v3266, %v3290
    %v3293 = vmul.f32 %v3267, %v3291
    %v3294 = vlaneseq
    %v3295 = vshrl.u32 %v3294, 7
    %v3296 = vsub.s32 0, %v3295
    %v3297 = vrot.slane %v3277, %v3296
    %v3298 = vmul.f32 %v3292, %v3297
    %v3299 = vmul.f32 %v3293, %v3297
    %v3300 = vpack.c.bf16 %v3299, %v3298
    %v3305 = vunpack.c.l.b16 %v3269
    %v3306 = vunpack.c.l.b16 %v3271
    %v3307 = vunpack.c.l.b16 %v3273
    %v3308 = vunpack.c.l.b16 %v3275
    %v3309 = vpack.c.b16 %v3306, %v3305
    %v3310 = vpack.c.b16 %v3308, %v3307
    %v3314 = vsel %vm168, %v3300, 0
    %3316 = vmatprep.subr.bf16.mxu0 0
    %3317 = vmatpush1.bf16.msra.mxu0 %v3309
    %3318 = vmatprep.subr.bf16.mxu0 0
    %3319 = vmatpush1.bf16.msra.mxu0 %v3310
    %3320 = vmatprep.subr.bf16.mxu0 0
    %3321 = vmatpush1.bf16.msra.mxu0 0
    %3322 = vmatprep.subr.bf16.mxu0 0
    %3323 = vmatpush1.bf16.msra.mxu0 0
    %3324 = vmatprep.subr.bf16.mxu0 0
    %3325 = vmatpush1.bf16.msra.mxu0 0
    %3326 = vmatprep.subr.bf16.mxu0 0
    %3327 = vmatpush1.bf16.msra.mxu0 0
    %3328 = vmatprep.subr.bf16.mxu0 0
    %3329 = vmatpush1.bf16.msra.mxu0 0
    %3330 = vmatprep.subr.bf16.mxu0 0
    %3331 = vmatpush1.bf16.msra.mxu0 0
    %3332 = vmatprep.subr.bf16.mxu0 0
    %3333 = vmatpush1.bf16.msra.mxu0 0
    %3334 = vmatprep.subr.bf16.mxu0 0
    %3335 = vmatpush1.bf16.msra.mxu0 0
    %3336 = vmatprep.subr.bf16.mxu0 0
    %3337 = vmatpush1.bf16.msra.mxu0 0
    %3338 = vmatprep.subr.bf16.mxu0 0
    %3339 = vmatpush1.bf16.msra.mxu0 0
    %3340 = vmatprep.subr.bf16.mxu0 0
    %3341 = vmatpush1.bf16.msra.mxu0 0
    %3342 = vmatprep.subr.bf16.mxu0 0
    %3343 = vmatpush1.bf16.msra.mxu0 0
    %3344 = vmatprep.subr.bf16.mxu0 0
    %3345 = vmatpush1.bf16.msra.mxu0 0
    %3346 = vmatprep.subr.bf16.mxu0 0
    %3347 = vmatpush1.bf16.msra.mxu0 0
    %3348 = vmatprep.mubr.bf16.mxu0 0
    %3349 = vmatmul.mubr.bf16.gmra.mrb[0].mxu0 %v3314
    %v3350 = vpop.f32.mrb[0].mxu0
    %v3351 = vadd.f32 0.0, %v3350
    %v3352 = vpop.f32.mrb[0].mxu0
    %v3353 = vpop.f32.mrb[0].mxu0
    %v3354 = vadd.f32 0.0, %v3353
    %v3355 = vpop.f32.mrb[0].mxu0
    %3356 = vdwg.mxu0
    %v3357 = vpack.c.bf16 %v3354, %v3351
    %3359 = vrot.lane.b32.xlu0 %v3357, 96
    %v3360 = vpop.permute.xlu0 %3359
    %v3362 = vsel %vm251, %v3357, 0
    %v3365 = vsel %vm251, %v3360, 0
    %3367 = vmatprep.subr.bf16.mxu0 0
    %3368 = vmatpush1.bf16.xpose.msra.mxu0 %v3365
    %3369 = vmatprep.subr.bf16.mxu0 0
    %3370 = vmatpush1.bf16.xpose.msra.mxu0 0
    %3371 = vmatprep.subr.bf16.mxu0 0
    %3372 = vmatpush1.bf16.xpose.msra.mxu0 0
    %3373 = vmatprep.subr.bf16.mxu0 0
    %3374 = vmatpush1.bf16.xpose.msra.mxu0 0
    %3375 = vmatprep.subr.bf16.mxu0 0
    %3376 = vmatpush1.bf16.xpose.msra.mxu0 0
    %3377 = vmatprep.subr.bf16.mxu0 0
    %3378 = vmatpush1.bf16.xpose.msra.mxu0 0
    %3379 = vmatprep.subr.bf16.mxu0 0
    %3380 = vmatpush1.bf16.xpose.msra.mxu0 0
    %3381 = vmatprep.subr.bf16.mxu0 0
    %3382 = vmatpush1.bf16.xpose.msra.mxu0 0
    %3383 = vmatprep.subr.bf16.mxu0 0
    %3384 = vmatpush1.bf16.xpose.msra.mxu0 0
    %3385 = vmatprep.subr.bf16.mxu0 0
    %3386 = vmatpush1.bf16.xpose.msra.mxu0 0
    %3387 = vmatprep.subr.bf16.mxu0 0
    %3388 = vmatpush1.bf16.xpose.msra.mxu0 0
    %3389 = vmatprep.subr.bf16.mxu0 0
    %3390 = vmatpush1.bf16.xpose.msra.mxu0 0
    %3391 = vmatprep.subr.bf16.mxu0 0
    %3392 = vmatpush1.bf16.xpose.msra.mxu0 0
    %3393 = vmatprep.subr.bf16.mxu0 0
    %3394 = vmatpush1.bf16.xpose.msra.mxu0 0
    %3395 = vmatprep.subr.bf16.mxu0 0
    %3396 = vmatpush1.bf16.xpose.msra.mxu0 0
    %3397 = vmatprep.subr.bf16.mxu0 0
    %3398 = vmatpush1.bf16.xpose.msra.mxu0 0
    %3399 = vmatprep.mubr.bf16.mxu0 0
    %3400 = vmatmul.mubr.bf16.gmra.mrb[0].mxu0 %v3362
    %v3401 = vpop.f32.mrb[0].mxu0
    %v3402 = vadd.f32 %v159, %v3401
    %v3403 = vpop.f32.mrb[0].mxu0
    %v3404 = vpop.f32.mrb[0].mxu0
    %v3405 = vadd.f32 %v160, %v3404
    %v3406 = vpop.f32.mrb[0].mxu0
    %3407 = vdwg.mxu0
    %v3408 = vsel %vm1907, %v3402, -inf
    %3409 = vmax.xlane.f32.xlu0 %v3408
    %v3410 = vpop.xlane.xlu0 %3409
    %v3411 = vsel %vm1911, %v3405, -inf
    %3412 = vmax.xlane.f32.xlu0 %v3411
    %v3413 = vpop.xlane.xlu0 %3412
    %v3414 = vsub.f32 %v3402, %v3410
    %v3415 = vsub.f32 %v3405, %v3413
    %v3416 = vmul.f32 %v3414, 1.442695
    %v3417 = vpow.pop %v3416
    %v3418 = vmul.f32 %v3415, 1.442695
    %v3419 = vpow.pop %v3418
    %v3420 = vsel %vm1907, %v3417, 0.0
    %3421 = vadd.xlane.f32.xlu0 %v3420
    %v3422 = vpop.xlane.xlu0 %3421
    %v3423 = vsel %vm1911, %v3419, 0.0
    %3424 = vadd.xlane.f32.xlu0 %v3423
    %v3425 = vpop.xlane.xlu0 %3424
    %v3426 = vrcp.pop %v3422
    %v3427 = vrcp.pop %v3425
    %v3428 = vmul.f32 %v3417, %v3426
    %v3429 = vmul.f32 %v3419, %v3427
    %v3430 = vpack.c.bf16 %v3429, %v3428
    %3431 = vrot.lane.b32.xlu0 %v3357, 64
    %v3432 = vpop.permute.xlu0 %3431
    %v3434 = vsel %vm1907, %v3430, 0
    %v3437 = vsel %vm1937, %v3432, 0
    %3439 = vmatprep.subr.bf16.mxu0 0
    %3440 = vmatpush1.bf16.msra.mxu0 %v3437
    %3441 = vmatprep.subr.bf16.mxu0 0
    %3442 = vmatpush1.bf16.msra.mxu0 0
    %3443 = vmatprep.subr.bf16.mxu0 0
    %3444 = vmatpush1.bf16.msra.mxu0 0
    %3445 = vmatprep.subr.bf16.mxu0 0
    %3446 = vmatpush1.bf16.msra.mxu0 0
    %3447 = vmatprep.subr.bf16.mxu0 0
    %3448 = vmatpush1.bf16.msra.mxu0 0
    %3449 = vmatprep.subr.bf16.mxu0 0
    %3450 = vmatpush1.bf16.msra.mxu0 0
    %3451 = vmatprep.subr.bf16.mxu0 0
    %3452 = vmatpush1.bf16.msra.mxu0 0
    %3453 = vmatprep.subr.bf16.mxu0 0
    %3454 = vmatpush1.bf16.msra.mxu0 0
    %3455 = vmatprep.subr.bf16.mxu0 0
    %3456 = vmatpush1.bf16.msra.mxu0 0
    %3457 = vmatprep.subr.bf16.mxu0 0
    %3458 = vmatpush1.bf16.msra.mxu0 0
    %3459 = vmatprep.subr.bf16.mxu0 0
    %3460 = vmatpush1.bf16.msra.mxu0 0
    %3461 = vmatprep.subr.bf16.mxu0 0
    %3462 = vmatpush1.bf16.msra.mxu0 0
    %3463 = vmatprep.subr.bf16.mxu0 0
    %3464 = vmatpush1.bf16.msra.mxu0 0
    %3465 = vmatprep.subr.bf16.mxu0 0
    %3466 = vmatpush1.bf16.msra.mxu0 0
    %3467 = vmatprep.subr.bf16.mxu0 0
    %3468 = vmatpush1.bf16.msra.mxu0 0
    %3469 = vmatprep.subr.bf16.mxu0 0
    %3470 = vmatpush1.bf16.msra.mxu0 0
    %3471 = vmatprep.mubr.bf16.mxu0 0
    %3472 = vmatmul.mubr.bf16.gmra.mrb[0].mxu0 %v3434
    %v3473 = vpop.f32.mrb[0].mxu0
    %v3474 = vadd.f32 0.0, %v3473
    %v3475 = vpop.f32.mrb[0].mxu0
    %v3476 = vpop.f32.mrb[0].mxu0
    %v3477 = vadd.f32 0.0, %v3476
    %v3478 = vpop.f32.mrb[0].mxu0
    %3479 = vdwg.mxu0
    %3480 = vrot.lane.b32.xlu0 %v3357, 120
    %v3481 = vpop.permute.xlu0 %3480
    %3482 = vrot.lane.b32.xlu0 %v3357, 88
    %v3483 = vpop.permute.xlu0 %3482
    %v3485 = vsel %vm251, %v3481, 0
    %v3488 = vsel %vm251, %v3483, 0
    %3490 = vmatprep.subr.bf16.mxu0 0
    %3491 = vmatpush1.bf16.xpose.msra.mxu0 %v3488
    %3492 = vmatprep.subr.bf16.mxu0 0
    %3493 = vmatpush1.bf16.xpose.msra.mxu0 0
    %3494 = vmatprep.subr.bf16.mxu0 0
    %3495 = vmatpush1.bf16.xpose.msra.mxu0 0
    %3496 = vmatprep.subr.bf16.mxu0 0
    %3497 = vmatpush1.bf16.xpose.msra.mxu0 0
    %3498 = vmatprep.subr.bf16.mxu0 0
    %3499 = vmatpush1.bf16.xpose.msra.mxu0 0
    %3500 = vmatprep.subr.bf16.mxu0 0
    %3501 = vmatpush1.bf16.xpose.msra.mxu0 0
    %3502 = vmatprep.subr.bf16.mxu0 0
    %3503 = vmatpush1.bf16.xpose.msra.mxu0 0
    %3504 = vmatprep.subr.bf16.mxu0 0
    %3505 = vmatpush1.bf16.xpose.msra.mxu0 0
    %3506 = vmatprep.subr.bf16.mxu0 0
    %3507 = vmatpush1.bf16.xpose.msra.mxu0 0
    %3508 = vmatprep.subr.bf16.mxu0 0
    %3509 = vmatpush1.bf16.xpose.msra.mxu0 0
    %3510 = vmatprep.subr.bf16.mxu0 0
    %3511 = vmatpush1.bf16.xpose.msra.mxu0 0
    %3512 = vmatprep.subr.bf16.mxu0 0
    %3513 = vmatpush1.bf16.xpose.msra.mxu0 0
    %3514 = vmatprep.subr.bf16.mxu0 0
    %3515 = vmatpush1.bf16.xpose.msra.mxu0 0
    %3516 = vmatprep.subr.bf16.mxu0 0
    %3517 = vmatpush1.bf16.xpose.msra.mxu0 0
    %3518 = vmatprep.subr.bf16.mxu0 0
    %3519 = vmatpush1.bf16.xpose.msra.mxu0 0
    %3520 = vmatprep.subr.bf16.mxu0 0
    %3521 = vmatpush1.bf16.xpose.msra.mxu0 0
    %3522 = vmatprep.mubr.bf16.mxu0 0
    %3523 = vmatmul.mubr.bf16.gmra.mrb[0].mxu0 %v3485
    %v3524 = vpop.f32.mrb[0].mxu0
    %v3525 = vadd.f32 %v159, %v3524
    %v3526 = vpop.f32.mrb[0].mxu0
    %v3527 = vpop.f32.mrb[0].mxu0
    %v3528 = vadd.f32 %v160, %v3527
    %v3529 = vpop.f32.mrb[0].mxu0
    %3530 = vdwg.mxu0
    %v3531 = vsel %vm1907, %v3525, -inf
    %3532 = vmax.xlane.f32.xlu0 %v3531
    %v3533 = vpop.xlane.xlu0 %3532
    %v3534 = vsel %vm1911, %v3528, -inf
    %3535 = vmax.xlane.f32.xlu0 %v3534
    %v3536 = vpop.xlane.xlu0 %3535
    %v3537 = vsub.f32 %v3525, %v3533
    %v3538 = vsub.f32 %v3528, %v3536
    %v3539 = vmul.f32 %v3537, 1.442695
    %v3540 = vpow.pop %v3539
    %v3541 = vmul.f32 %v3538, 1.442695
    %v3542 = vpow.pop %v3541
    %v3543 = vsel %vm1907, %v3540, 0.0
    %3544 = vadd.xlane.f32.xlu0 %v3543
    %v3545 = vpop.xlane.xlu0 %3544
    %v3546 = vsel %vm1911, %v3542, 0.0
    %3547 = vadd.xlane.f32.xlu0 %v3546
    %v3548 = vpop.xlane.xlu0 %3547
    %v3549 = vrcp.pop %v3545
    %v3550 = vrcp.pop %v3548
    %v3551 = vmul.f32 %v3540, %v3549
    %v3552 = vmul.f32 %v3542, %v3550
    %v3553 = vpack.c.bf16 %v3552, %v3551
    %3554 = vrot.lane.b32.xlu0 %v3357, 56
    %v3555 = vpop.permute.xlu0 %3554
    %v3557 = vsel %vm1907, %v3553, 0
    %v3560 = vsel %vm1937, %v3555, 0
    %3562 = vmatprep.subr.bf16.mxu0 0
    %3563 = vmatpush1.bf16.msra.mxu0 %v3560
    %3564 = vmatprep.subr.bf16.mxu0 0
    %3565 = vmatpush1.bf16.msra.mxu0 0
    %3566 = vmatprep.subr.bf16.mxu0 0
    %3567 = vmatpush1.bf16.msra.mxu0 0
    %3568 = vmatprep.subr.bf16.mxu0 0
    %3569 = vmatpush1.bf16.msra.mxu0 0
    %3570 = vmatprep.subr.bf16.mxu0 0
    %3571 = vmatpush1.bf16.msra.mxu0 0
    %3572 = vmatprep.subr.bf16.mxu0 0
    %3573 = vmatpush1.bf16.msra.mxu0 0
    %3574 = vmatprep.subr.bf16.mxu0 0
    %3575 = vmatpush1.bf16.msra.mxu0 0
    %3576 = vmatprep.subr.bf16.mxu0 0
    %3577 = vmatpush1.bf16.msra.mxu0 0
    %3578 = vmatprep.subr.bf16.mxu0 0
    %3579 = vmatpush1.bf16.msra.mxu0 0
    %3580 = vmatprep.subr.bf16.mxu0 0
    %3581 = vmatpush1.bf16.msra.mxu0 0
    %3582 = vmatprep.subr.bf16.mxu0 0
    %3583 = vmatpush1.bf16.msra.mxu0 0
    %3584 = vmatprep.subr.bf16.mxu0 0
    %3585 = vmatpush1.bf16.msra.mxu0 0
    %3586 = vmatprep.subr.bf16.mxu0 0
    %3587 = vmatpush1.bf16.msra.mxu0 0
    %3588 = vmatprep.subr.bf16.mxu0 0
    %3589 = vmatpush1.bf16.msra.mxu0 0
    %3590 = vmatprep.subr.bf16.mxu0 0
    %3591 = vmatpush1.bf16.msra.mxu0 0
    %3592 = vmatprep.subr.bf16.mxu0 0
    %3593 = vmatpush1.bf16.msra.mxu0 0
    %3594 = vmatprep.mubr.bf16.mxu0 0
    %3595 = vmatmul.mubr.bf16.gmra.mrb[0].mxu0 %v3557
    %v3596 = vpop.f32.mrb[0].mxu0
    %v3597 = vadd.f32 0.0, %v3596
    %v3598 = vpop.f32.mrb[0].mxu0
    %v3599 = vpop.f32.mrb[0].mxu0
    %v3600 = vadd.f32 0.0, %v3599
    %v3601 = vpop.f32.mrb[0].mxu0
    %3602 = vdwg.mxu0
    %3603 = vrot.lane.b32.xlu0 %v3357, 112
    %v3604 = vpop.permute.xlu0 %3603
    %3605 = vrot.lane.b32.xlu0 %v3357, 80
    %v3606 = vpop.permute.xlu0 %3605
    %v3608 = vsel %vm251, %v3604, 0
    %v3611 = vsel %vm251, %v3606, 0
    %3613 = vmatprep.subr.bf16.mxu0 0
    %3614 = vmatpush1.bf16.xpose.msra.mxu0 %v3611
    %3615 = vmatprep.subr.bf16.mxu0 0
    %3616 = vmatpush1.bf16.xpose.msra.mxu0 0
    %3617 = vmatprep.subr.bf16.mxu0 0
    %3618 = vmatpush1.bf16.xpose.msra.mxu0 0
    %3619 = vmatprep.subr.bf16.mxu0 0
    %3620 = vmatpush1.bf16.xpose.msra.mxu0 0
    %3621 = vmatprep.subr.bf16.mxu0 0
    %3622 = vmatpush1.bf16.xpose.msra.mxu0 0
    %3623 = vmatprep.subr.bf16.mxu0 0
    %3624 = vmatpush1.bf16.xpose.msra.mxu0 0
    %3625 = vmatprep.subr.bf16.mxu0 0
    %3626 = vmatpush1.bf16.xpose.msra.mxu0 0
    %3627 = vmatprep.subr.bf16.mxu0 0
    %3628 = vmatpush1.bf16.xpose.msra.mxu0 0
    %3629 = vmatprep.subr.bf16.mxu0 0
    %3630 = vmatpush1.bf16.xpose.msra.mxu0 0
    %3631 = vmatprep.subr.bf16.mxu0 0
    %3632 = vmatpush1.bf16.xpose.msra.mxu0 0
    %3633 = vmatprep.subr.bf16.mxu0 0
    %3634 = vmatpush1.bf16.xpose.msra.mxu0 0
    %3635 = vmatprep.subr.bf16.mxu0 0
    %3636 = vmatpush1.bf16.xpose.msra.mxu0 0
    %3637 = vmatprep.subr.bf16.mxu0 0
    %3638 = vmatpush1.bf16.xpose.msra.mxu0 0
    %3639 = vmatprep.subr.bf16.mxu0 0
    %3640 = vmatpush1.bf16.xpose.msra.mxu0 0
    %3641 = vmatprep.subr.bf16.mxu0 0
    %3642 = vmatpush1.bf16.xpose.msra.mxu0 0
    %3643 = vmatprep.subr.bf16.mxu0 0
    %3644 = vmatpush1.bf16.xpose.msra.mxu0 0
    %3645 = vmatprep.mubr.bf16.mxu0 0
    %3646 = vmatmul.mubr.bf16.gmra.mrb[0].mxu0 %v3608
    %v3647 = vpop.f32.mrb[0].mxu0
    %v3648 = vadd.f32 %v159, %v3647
    %v3649 = vpop.f32.mrb[0].mxu0
    %v3650 = vpop.f32.mrb[0].mxu0
    %v3651 = vadd.f32 %v160, %v3650
    %v3652 = vpop.f32.mrb[0].mxu0
    %3653 = vdwg.mxu0
    %v3654 = vsel %vm1907, %v3648, -inf
    %3655 = vmax.xlane.f32.xlu0 %v3654
    %v3656 = vpop.xlane.xlu0 %3655
    %v3657 = vsel %vm1911, %v3651, -inf
    %3658 = vmax.xlane.f32.xlu0 %v3657
    %v3659 = vpop.xlane.xlu0 %3658
    %v3660 = vsub.f32 %v3648, %v3656
    %v3661 = vsub.f32 %v3651, %v3659
    %v3662 = vmul.f32 %v3660, 1.442695
    %v3663 = vpow.pop %v3662
    %v3664 = vmul.f32 %v3661, 1.442695
    %v3665 = vpow.pop %v3664
    %v3666 = vsel %vm1907, %v3663, 0.0
    %3667 = vadd.xlane.f32.xlu0 %v3666
    %v3668 = vpop.xlane.xlu0 %3667
    %v3669 = vsel %vm1911, %v3665, 0.0
    %3670 = vadd.xlane.f32.xlu0 %v3669
    %v3671 = vpop.xlane.xlu0 %3670
    %v3672 = vrcp.pop %v3668
    %v3673 = vrcp.pop %v3671
    %v3674 = vmul.f32 %v3663, %v3672
    %v3675 = vmul.f32 %v3665, %v3673
    %v3676 = vpack.c.bf16 %v3675, %v3674
    %3677 = vrot.lane.b32.xlu0 %v3357, 48
    %v3678 = vpop.permute.xlu0 %3677
    %v3680 = vsel %vm1907, %v3676, 0
    %v3683 = vsel %vm1937, %v3678, 0
    %3685 = vmatprep.subr.bf16.mxu0 0
    %3686 = vmatpush1.bf16.msra.mxu0 %v3683
    %3687 = vmatprep.subr.bf16.mxu0 0
    %3688 = vmatpush1.bf16.msra.mxu0 0
    %3689 = vmatprep.subr.bf16.mxu0 0
    %3690 = vmatpush1.bf16.msra.mxu0 0
    %3691 = vmatprep.subr.bf16.mxu0 0
    %3692 = vmatpush1.bf16.msra.mxu0 0
    %3693 = vmatprep.subr.bf16.mxu0 0
    %3694 = vmatpush1.bf16.msra.mxu0 0
    %3695 = vmatprep.subr.bf16.mxu0 0
    %3696 = vmatpush1.bf16.msra.mxu0 0
    %3697 = vmatprep.subr.bf16.mxu0 0
    %3698 = vmatpush1.bf16.msra.mxu0 0
    %3699 = vmatprep.subr.bf16.mxu0 0
    %3700 = vmatpush1.bf16.msra.mxu0 0
    %3701 = vmatprep.subr.bf16.mxu0 0
    %3702 = vmatpush1.bf16.msra.mxu0 0
    %3703 = vmatprep.subr.bf16.mxu0 0
    %3704 = vmatpush1.bf16.msra.mxu0 0
    %3705 = vmatprep.subr.bf16.mxu0 0
    %3706 = vmatpush1.bf16.msra.mxu0 0
    %3707 = vmatprep.subr.bf16.mxu0 0
    %3708 = vmatpush1.bf16.msra.mxu0 0
    %3709 = vmatprep.subr.bf16.mxu0 0
    %3710 = vmatpush1.bf16.msra.mxu0 0
    %3711 = vmatprep.subr.bf16.mxu0 0
    %3712 = vmatpush1.bf16.msra.mxu0 0
    %3713 = vmatprep.subr.bf16.mxu0 0
    %3714 = vmatpush1.bf16.msra.mxu0 0
    %3715 = vmatprep.subr.bf16.mxu0 0
    %3716 = vmatpush1.bf16.msra.mxu0 0
    %3717 = vmatprep.mubr.bf16.mxu0 0
    %3718 = vmatmul.mubr.bf16.gmra.mrb[0].mxu0 %v3680
    %v3719 = vpop.f32.mrb[0].mxu0
    %v3720 = vadd.f32 0.0, %v3719
    %v3721 = vpop.f32.mrb[0].mxu0
    %v3722 = vpop.f32.mrb[0].mxu0
    %v3723 = vadd.f32 0.0, %v3722
    %v3724 = vpop.f32.mrb[0].mxu0
    %3725 = vdwg.mxu0
    %3726 = vrot.lane.b32.xlu0 %v3357, 104
    %v3727 = vpop.permute.xlu0 %3726
    %3728 = vrot.lane.b32.xlu0 %v3357, 72
    %v3729 = vpop.permute.xlu0 %3728
    %v3731 = vsel %vm251, %v3727, 0
    %v3734 = vsel %vm251, %v3729, 0
    %3736 = vmatprep.subr.bf16.mxu0 0
    %3737 = vmatpush1.bf16.xpose.msra.mxu0 %v3734
    %3738 = vmatprep.subr.bf16.mxu0 0
    %3739 = vmatpush1.bf16.xpose.msra.mxu0 0
    %3740 = vmatprep.subr.bf16.mxu0 0
    %3741 = vmatpush1.bf16.xpose.msra.mxu0 0
    %3742 = vmatprep.subr.bf16.mxu0 0
    %3743 = vmatpush1.bf16.xpose.msra.mxu0 0
    %3744 = vmatprep.subr.bf16.mxu0 0
    %3745 = vmatpush1.bf16.xpose.msra.mxu0 0
    %3746 = vmatprep.subr.bf16.mxu0 0
    %3747 = vmatpush1.bf16.xpose.msra.mxu0 0
    %3748 = vmatprep.subr.bf16.mxu0 0
    %3749 = vmatpush1.bf16.xpose.msra.mxu0 0
    %3750 = vmatprep.subr.bf16.mxu0 0
    %3751 = vmatpush1.bf16.xpose.msra.mxu0 0
    %3752 = vmatprep.subr.bf16.mxu0 0
    %3753 = vmatpush1.bf16.xpose.msra.mxu0 0
    %3754 = vmatprep.subr.bf16.mxu0 0
    %3755 = vmatpush1.bf16.xpose.msra.mxu0 0
    %3756 = vmatprep.subr.bf16.mxu0 0
    %3757 = vmatpush1.bf16.xpose.msra.mxu0 0
    %3758 = vmatprep.subr.bf16.mxu0 0
    %3759 = vmatpush1.bf16.xpose.msra.mxu0 0
    %3760 = vmatprep.subr.bf16.mxu0 0
    %3761 = vmatpush1.bf16.xpose.msra.mxu0 0
    %3762 = vmatprep.subr.bf16.mxu0 0
    %3763 = vmatpush1.bf16.xpose.msra.mxu0 0
    %3764 = vmatprep.subr.bf16.mxu0 0
    %3765 = vmatpush1.bf16.xpose.msra.mxu0 0
    %3766 = vmatprep.subr.bf16.mxu0 0
    %3767 = vmatpush1.bf16.xpose.msra.mxu0 0
    %3768 = vmatprep.mubr.bf16.mxu0 0
    %3769 = vmatmul.mubr.bf16.gmra.mrb[0].mxu0 %v3731
    %v3770 = vpop.f32.mrb[0].mxu0
    %v3771 = vadd.f32 %v159, %v3770
    %v3772 = vpop.f32.mrb[0].mxu0
    %v3773 = vpop.f32.mrb[0].mxu0
    %v3774 = vadd.f32 %v160, %v3773
    %v3775 = vpop.f32.mrb[0].mxu0
    %3776 = vdwg.mxu0
    %v3777 = vsel %vm1907, %v3771, -inf
    %3778 = vmax.xlane.f32.xlu0 %v3777
    %v3779 = vpop.xlane.xlu0 %3778
    %v3780 = vsel %vm1911, %v3774, -inf
    %3781 = vmax.xlane.f32.xlu0 %v3780
    %v3782 = vpop.xlane.xlu0 %3781
    %v3783 = vsub.f32 %v3771, %v3779
    %v3784 = vsub.f32 %v3774, %v3782
    %v3785 = vmul.f32 %v3783, 1.442695
    %v3786 = vpow.pop %v3785
    %v3787 = vmul.f32 %v3784, 1.442695
    %v3788 = vpow.pop %v3787
    %v3789 = vsel %vm1907, %v3786, 0.0
    %3790 = vadd.xlane.f32.xlu0 %v3789
    %v3791 = vpop.xlane.xlu0 %3790
    %v3792 = vsel %vm1911, %v3788, 0.0
    %3793 = vadd.xlane.f32.xlu0 %v3792
    %v3794 = vpop.xlane.xlu0 %3793
    %v3795 = vrcp.pop %v3791
    %v3796 = vrcp.pop %v3794
    %v3797 = vmul.f32 %v3786, %v3795
    %v3798 = vmul.f32 %v3788, %v3796
    %v3799 = vpack.c.bf16 %v3798, %v3797
    %3800 = vrot.lane.b32.xlu0 %v3357, 40
    %v3801 = vpop.permute.xlu0 %3800
    %v3803 = vsel %vm1907, %v3799, 0
    %v3806 = vsel %vm1937, %v3801, 0
    %3808 = vmatprep.subr.bf16.mxu0 0
    %3809 = vmatpush1.bf16.msra.mxu0 %v3806
    %3810 = vmatprep.subr.bf16.mxu0 0
    %3811 = vmatpush1.bf16.msra.mxu0 0
    %3812 = vmatprep.subr.bf16.mxu0 0
    %3813 = vmatpush1.bf16.msra.mxu0 0
    %3814 = vmatprep.subr.bf16.mxu0 0
    %3815 = vmatpush1.bf16.msra.mxu0 0
    %3816 = vmatprep.subr.bf16.mxu0 0
    %3817 = vmatpush1.bf16.msra.mxu0 0
    %3818 = vmatprep.subr.bf16.mxu0 0
    %3819 = vmatpush1.bf16.msra.mxu0 0
    %3820 = vmatprep.subr.bf16.mxu0 0
    %3821 = vmatpush1.bf16.msra.mxu0 0
    %3822 = vmatprep.subr.bf16.mxu0 0
    %3823 = vmatpush1.bf16.msra.mxu0 0
    %3824 = vmatprep.subr.bf16.mxu0 0
    %3825 = vmatpush1.bf16.msra.mxu0 0
    %3826 = vmatprep.subr.bf16.mxu0 0
    %3827 = vmatpush1.bf16.msra.mxu0 0
    %3828 = vmatprep.subr.bf16.mxu0 0
    %3829 = vmatpush1.bf16.msra.mxu0 0
    %3830 = vmatprep.subr.bf16.mxu0 0
    %3831 = vmatpush1.bf16.msra.mxu0 0
    %3832 = vmatprep.subr.bf16.mxu0 0
    %3833 = vmatpush1.bf16.msra.mxu0 0
    %3834 = vmatprep.subr.bf16.mxu0 0
    %3835 = vmatpush1.bf16.msra.mxu0 0
    %3836 = vmatprep.subr.bf16.mxu0 0
    %3837 = vmatpush1.bf16.msra.mxu0 0
    %3838 = vmatprep.subr.bf16.mxu0 0
    %3839 = vmatpush1.bf16.msra.mxu0 0
    %3840 = vmatprep.mubr.bf16.mxu0 0
    %3841 = vmatmul.mubr.bf16.gmra.mrb[0].mxu0 %v3803
    %v3842 = vpop.f32.mrb[0].mxu0
    %v3843 = vadd.f32 0.0, %v3842
    %v3844 = vpop.f32.mrb[0].mxu0
    %v3845 = vpop.f32.mrb[0].mxu0
    %v3846 = vadd.f32 0.0, %v3845
    %v3847 = vpop.f32.mrb[0].mxu0
    %3848 = vdwg.mxu0
    %3851 = vrot.lane.b32.xlu0 %v3597, 8
    %v3852 = vpop.permute.xlu0 %3851
    %3853 = vrot.lane.b32.xlu0 %v3600, 8
    %v3854 = vpop.permute.xlu0 %3853
    %3859 = vrot.lane.b32.xlu0 %v3720, 16
    %v3860 = vpop.permute.xlu0 %3859
    %3861 = vrot.lane.b32.xlu0 %v3723, 16
    %v3862 = vpop.permute.xlu0 %3861
    %3867 = vrot.lane.b32.xlu0 %v3843, 24
    %v3868 = vpop.permute.xlu0 %3867
    %3869 = vrot.lane.b32.xlu0 %v3846, 24
    %v3870 = vpop.permute.xlu0 %3869
    %v3873 = vsel %vm251, %v3474, %v3852
    %v3874 = vsel %vm251, %v3477, %v3854
    %v3875 = vsel %vm299, %v3873, %v3860
    %v3876 = vsel %vm299, %v3874, %v3862
    %v3877 = vsel %vm761, %v3875, %v3868
    %v3878 = vsel %vm761, %v3876, %v3870
    %v3879 = vpack.c.bf16 %v3878, %v3877
    %3880 = vrot.lane.b32.xlu0 %v3309, 32
    %v3881 = vpop.permute.xlu0 %3880
    %3882 = vrot.lane.b32.xlu0 %v3310, 32
    %v3883 = vpop.permute.xlu0 %3882
    %v3887 = vsel %vm168, %v3879, 0
    %3889 = vmatprep.subr.bf16.mxu0 0
    %3890 = vmatpush1.bf16.msra.mxu0 %v3881
    %3891 = vmatprep.subr.bf16.mxu0 0
    %3892 = vmatpush1.bf16.msra.mxu0 %v3883
    %3893 = vmatprep.subr.bf16.mxu0 0
    %3894 = vmatpush1.bf16.msra.mxu0 0
    %3895 = vmatprep.subr.bf16.mxu0 0
    %3896 = vmatpush1.bf16.msra.mxu0 0
    %3897 = vmatprep.subr.bf16.mxu0 0
    %3898 = vmatpush1.bf16.msra.mxu0 0
    %3899 = vmatprep.subr.bf16.mxu0 0
    %3900 = vmatpush1.bf16.msra.mxu0 0
    %3901 = vmatprep.subr.bf16.mxu0 0
    %3902 = vmatpush1.bf16.msra.mxu0 0
    %3903 = vmatprep.subr.bf16.mxu0 0
    %3904 = vmatpush1.bf16.msra.mxu0 0
    %3905 = vmatprep.subr.bf16.mxu0 0
    %3906 = vmatpush1.bf16.msra.mxu0 0
    %3907 = vmatprep.subr.bf16.mxu0 0
    %3908 = vmatpush1.bf16.msra.mxu0 0
    %3909 = vmatprep.subr.bf16.mxu0 0
    %3910 = vmatpush1.bf16.msra.mxu0 0
    %3911 = vmatprep.subr.bf16.mxu0 0
    %3912 = vmatpush1.bf16.msra.mxu0 0
    %3913 = vmatprep.subr.bf16.mxu0 0
    %3914 = vmatpush1.bf16.msra.mxu0 0
    %3915 = vmatprep.subr.bf16.mxu0 0
    %3916 = vmatpush1.bf16.msra.mxu0 0
    %3917 = vmatprep.subr.bf16.mxu0 0
    %3918 = vmatpush1.bf16.msra.mxu0 0
    %3919 = vmatprep.subr.bf16.mxu0 0
    %3920 = vmatpush1.bf16.msra.mxu0 0
    %3921 = vmatprep.mubr.bf16.mxu0 0
    %3922 = vmatmul.mubr.bf16.gmra.mrb[0].mxu0 %v3887
    %v3923 = vpop.f32.mrb[0].mxu0
    %v3924 = vadd.f32 0.0, %v3923
    %v3925 = vpop.f32.mrb[0].mxu0
    %v3926 = vpop.f32.mrb[0].mxu0
    %v3927 = vadd.f32 0.0, %v3926
    %v3928 = vpop.f32.mrb[0].mxu0
    %3929 = vdwg.mxu0
    %v3930 = vadd.f32 %v3266, %v3924
    %v3931 = vadd.f32 %v3267, %v3927
    %v3932 = vld [vmem:[%s7 + $0x9] sm:$0x1]
    %v3933 = vmul.f32 %v3930, %v3930
    %v3934 = vmul.f32 %v3931, %v3931
    %v3935 = vsel %vm168, %v3933, 0.0
    %3936 = vadd.xlane.f32.xlu0 %v3935
    %v3937 = vpop.xlane.xlu0 %3936
    %v3938 = vsel %vm1781, %v3934, 0.0
    %3939 = vadd.xlane.f32.xlu0 %v3938
    %v3940 = vpop.xlane.xlu0 %3939
    %v3941 = vmul.f32 %v3937, %v175
    %v3942 = vmul.f32 %v3940, %v175
    %v3943 = vadd.f32 %v3941, 1e-06
    %v3944 = vadd.f32 %v3942, 1e-06
    %v3945 = vrsqrt.pop %v3943
    %v3946 = vrsqrt.pop %v3944
    %v3947 = vmul.f32 %v3930, %v3945
    %v3948 = vmul.f32 %v3931, %v3946
    %v3949 = vlaneseq
    %v3950 = vshrl.u32 %v3949, 7
    %v3951 = vsub.s32 0, %v3950
    %v3952 = vrot.slane %v3932, %v3951
    %v3953 = vmul.f32 %v3947, %v3952
    %v3954 = vmul.f32 %v3948, %v3952
    %v3955 = vpack.c.bf16 %v3954, %v3953
    %v3960 = vunpack.c.l.b16 %v3270
    %v3961 = vunpack.c.l.b16 %v3272
    %v3962 = vunpack.c.l.b16 %v3274
    %v3963 = vunpack.c.l.b16 %v3276
    %v3964 = vpack.c.b16 %v3961, %v3960
    %v3965 = vpack.c.b16 %v3963, %v3962
    %v3969 = vsel %vm168, %v3955, 0
    %3971 = vmatprep.subr.bf16.mxu0 0
    %3972 = vmatpush1.bf16.msra.mxu0 %v3964
    %3973 = vmatprep.subr.bf16.mxu0 0
    %3974 = vmatpush1.bf16.msra.mxu0 %v3965
    %3975 = vmatprep.subr.bf16.mxu0 0
    %3976 = vmatpush1.bf16.msra.mxu0 0
    %3977 = vmatprep.subr.bf16.mxu0 0
    %3978 = vmatpush1.bf16.msra.mxu0 0
    %3979 = vmatprep.subr.bf16.mxu0 0
    %3980 = vmatpush1.bf16.msra.mxu0 0
    %3981 = vmatprep.subr.bf16.mxu0 0
    %3982 = vmatpush1.bf16.msra.mxu0 0
    %3983 = vmatprep.subr.bf16.mxu0 0
    %3984 = vmatpush1.bf16.msra.mxu0 0
    %3985 = vmatprep.subr.bf16.mxu0 0
    %3986 = vmatpush1.bf16.msra.mxu0 0
    %3987 = vmatprep.subr.bf16.mxu0 0
    %3988 = vmatpush1.bf16.msra.mxu0 0
    %3989 = vmatprep.subr.bf16.mxu0 0
    %3990 = vmatpush1.bf16.msra.mxu0 0
    %3991 = vmatprep.subr.bf16.mxu0 0
    %3992 = vmatpush1.bf16.msra.mxu0 0
    %3993 = vmatprep.subr.bf16.mxu0 0
    %3994 = vmatpush1.bf16.msra.mxu0 0
    %3995 = vmatprep.subr.bf16.mxu0 0
    %3996 = vmatpush1.bf16.msra.mxu0 0
    %3997 = vmatprep.subr.bf16.mxu0 0
    %3998 = vmatpush1.bf16.msra.mxu0 0
    %3999 = vmatprep.subr.bf16.mxu0 0
    %4000 = vmatpush1.bf16.msra.mxu0 0
    %4001 = vmatprep.subr.bf16.mxu0 0
    %4002 = vmatpush1.bf16.msra.mxu0 0
    %4003 = vmatprep.mubr.bf16.mxu0 0
    %4004 = vmatmul.mubr.bf16.gmra.mrb[0].mxu0 %v3969
    %v4005 = vpop.f32.mrb[0].mxu0
    %v4006 = vadd.f32 0.0, %v4005
    %v4007 = vpop.f32.mrb[0].mxu0
    %v4008 = vpop.f32.mrb[0].mxu0
    %v4009 = vadd.f32 0.0, %v4008
    %v4010 = vpop.f32.mrb[0].mxu0
    %4011 = vdwg.mxu0
    %4012 = vrot.lane.b32.xlu0 %v3964, 96
    %v4013 = vpop.permute.xlu0 %4012
    %4014 = vrot.lane.b32.xlu0 %v3965, 96
    %v4015 = vpop.permute.xlu0 %4014
    %4018 = vmatprep.subr.bf16.mxu0 0
    %4019 = vmatpush1.bf16.msra.mxu0 %v4013
    %4020 = vmatprep.subr.bf16.mxu0 0
    %4021 = vmatpush1.bf16.msra.mxu0 %v4015
    %4022 = vmatprep.subr.bf16.mxu0 0
    %4023 = vmatpush1.bf16.msra.mxu0 0
    %4024 = vmatprep.subr.bf16.mxu0 0
    %4025 = vmatpush1.bf16.msra.mxu0 0
    %4026 = vmatprep.subr.bf16.mxu0 0
    %4027 = vmatpush1.bf16.msra.mxu0 0
    %4028 = vmatprep.subr.bf16.mxu0 0
    %4029 = vmatpush1.bf16.msra.mxu0 0
    %4030 = vmatprep.subr.bf16.mxu0 0
    %4031 = vmatpush1.bf16.msra.mxu0 0
    %4032 = vmatprep.subr.bf16.mxu0 0
    %4033 = vmatpush1.bf16.msra.mxu0 0
    %4034 = vmatprep.subr.bf16.mxu0 0
    %4035 = vmatpush1.bf16.msra.mxu0 0
    %4036 = vmatprep.subr.bf16.mxu0 0
    %4037 = vmatpush1.bf16.msra.mxu0 0
    %4038 = vmatprep.subr.bf16.mxu0 0
    %4039 = vmatpush1.bf16.msra.mxu0 0
    %4040 = vmatprep.subr.bf16.mxu0 0
    %4041 = vmatpush1.bf16.msra.mxu0 0
    %4042 = vmatprep.subr.bf16.mxu0 0
    %4043 = vmatpush1.bf16.msra.mxu0 0
    %4044 = vmatprep.subr.bf16.mxu0 0
    %4045 = vmatpush1.bf16.msra.mxu0 0
    %4046 = vmatprep.subr.bf16.mxu0 0
    %4047 = vmatpush1.bf16.msra.mxu0 0
    %4048 = vmatprep.subr.bf16.mxu0 0
    %4049 = vmatpush1.bf16.msra.mxu0 0
    %4050 = vmatprep.mubr.bf16.mxu0 0
    %4051 = vmatmul.mubr.bf16.gmra.mrb[0].mxu0 %v2522
    %v4052 = vpop.f32.mrb[0].mxu0
    %v4053 = vadd.f32 0.0, %v4052
    %v4054 = vpop.f32.mrb[0].mxu0
    %v4055 = vpop.f32.mrb[0].mxu0
    %v4056 = vadd.f32 0.0, %v4055
    %v4057 = vpop.f32.mrb[0].mxu0
    %4058 = vdwg.mxu0
    %v4059 = vpack.c.bf16 %v4009, %v4006
    %v4060 = vpack.c.bf16 %v4056, %v4053
    %v4062 = vsel %vm251, %v4059, 0
    %v4065 = vsel %vm251, %v4060, 0
    %4067 = vmatprep.subr.bf16.mxu0 0
    %4068 = vmatpush1.bf16.xpose.msra.mxu0 %v4065
    %4069 = vmatprep.subr.bf16.mxu0 0
    %4070 = vmatpush1.bf16.xpose.msra.mxu0 0
    %4071 = vmatprep.subr.bf16.mxu0 0
    %4072 = vmatpush1.bf16.xpose.msra.mxu0 0
    %4073 = vmatprep.subr.bf16.mxu0 0
    %4074 = vmatpush1.bf16.xpose.msra.mxu0 0
    %4075 = vmatprep.subr.bf16.mxu0 0
    %4076 = vmatpush1.bf16.xpose.msra.mxu0 0
    %4077 = vmatprep.subr.bf16.mxu0 0
    %4078 = vmatpush1.bf16.xpose.msra.mxu0 0
    %4079 = vmatprep.subr.bf16.mxu0 0
    %4080 = vmatpush1.bf16.xpose.msra.mxu0 0
    %4081 = vmatprep.subr.bf16.mxu0 0
    %4082 = vmatpush1.bf16.xpose.msra.mxu0 0
    %4083 = vmatprep.subr.bf16.mxu0 0
    %4084 = vmatpush1.bf16.xpose.msra.mxu0 0
    %4085 = vmatprep.subr.bf16.mxu0 0
    %4086 = vmatpush1.bf16.xpose.msra.mxu0 0
    %4087 = vmatprep.subr.bf16.mxu0 0
    %4088 = vmatpush1.bf16.xpose.msra.mxu0 0
    %4089 = vmatprep.subr.bf16.mxu0 0
    %4090 = vmatpush1.bf16.xpose.msra.mxu0 0
    %4091 = vmatprep.subr.bf16.mxu0 0
    %4092 = vmatpush1.bf16.xpose.msra.mxu0 0
    %4093 = vmatprep.subr.bf16.mxu0 0
    %4094 = vmatpush1.bf16.xpose.msra.mxu0 0
    %4095 = vmatprep.subr.bf16.mxu0 0
    %4096 = vmatpush1.bf16.xpose.msra.mxu0 0
    %4097 = vmatprep.subr.bf16.mxu0 0
    %4098 = vmatpush1.bf16.xpose.msra.mxu0 0
    %4099 = vmatprep.mubr.bf16.mxu0 0
    %4100 = vmatmul.mubr.bf16.gmra.mrb[0].mxu0 %v4062
    %v4101 = vpop.f32.mrb[0].mxu0
    %v4102 = vadd.f32 %v157, %v4101
    %v4103 = vpop.f32.mrb[0].mxu0
    %v4104 = vpop.f32.mrb[0].mxu0
    %v4105 = vadd.f32 %v158, %v4104
    %v4106 = vpop.f32.mrb[0].mxu0
    %4107 = vdwg.mxu0
    %v4108 = vsel %vm299, %v4102, -inf
    %4109 = vmax.xlane.f32.xlu0 %v4108
    %v4110 = vpop.xlane.xlu0 %4109
    %v4111 = vsel %vm2617, %v4105, -inf
    %4112 = vmax.xlane.f32.xlu0 %v4111
    %v4113 = vpop.xlane.xlu0 %4112
    %v4114 = vsub.f32 %v4102, %v4110
    %v4115 = vsub.f32 %v4105, %v4113
    %v4116 = vmul.f32 %v4114, 1.442695
    %v4117 = vpow.pop %v4116
    %v4118 = vmul.f32 %v4115, 1.442695
    %v4119 = vpow.pop %v4118
    %v4120 = vsel %vm299, %v4117, 0.0
    %4121 = vadd.xlane.f32.xlu0 %v4120
    %v4122 = vpop.xlane.xlu0 %4121
    %v4123 = vsel %vm2617, %v4119, 0.0
    %4124 = vadd.xlane.f32.xlu0 %v4123
    %v4125 = vpop.xlane.xlu0 %4124
    %v4126 = vrcp.pop %v4122
    %v4127 = vrcp.pop %v4125
    %v4128 = vmul.f32 %v4117, %v4126
    %v4129 = vmul.f32 %v4119, %v4127
    %v4130 = vpack.c.bf16 %v4129, %v4128
    %4132 = vrot.lane.b32.xlu0 %v4060, 96
    %v4133 = vpop.permute.xlu0 %4132
    %v4136 = vsel %vm299, %v4130, 0
    %4138 = vmatprep.subr.bf16.mxu0 0
    %4139 = vmatpush1.bf16.msra.mxu0 %v4133
    %4140 = vmatprep.subr.bf16.mxu0 0
    %4141 = vmatpush1.bf16.msra.mxu0 0
    %4142 = vmatprep.subr.bf16.mxu0 0
    %4143 = vmatpush1.bf16.msra.mxu0 0
    %4144 = vmatprep.subr.bf16.mxu0 0
    %4145 = vmatpush1.bf16.msra.mxu0 0
    %4146 = vmatprep.subr.bf16.mxu0 0
    %4147 = vmatpush1.bf16.msra.mxu0 0
    %4148 = vmatprep.subr.bf16.mxu0 0
    %4149 = vmatpush1.bf16.msra.mxu0 0
    %4150 = vmatprep.subr.bf16.mxu0 0
    %4151 = vmatpush1.bf16.msra.mxu0 0
    %4152 = vmatprep.subr.bf16.mxu0 0
    %4153 = vmatpush1.bf16.msra.mxu0 0
    %4154 = vmatprep.subr.bf16.mxu0 0
    %4155 = vmatpush1.bf16.msra.mxu0 0
    %4156 = vmatprep.subr.bf16.mxu0 0
    %4157 = vmatpush1.bf16.msra.mxu0 0
    %4158 = vmatprep.subr.bf16.mxu0 0
    %4159 = vmatpush1.bf16.msra.mxu0 0
    %4160 = vmatprep.subr.bf16.mxu0 0
    %4161 = vmatpush1.bf16.msra.mxu0 0
    %4162 = vmatprep.subr.bf16.mxu0 0
    %4163 = vmatpush1.bf16.msra.mxu0 0
    %4164 = vmatprep.subr.bf16.mxu0 0
    %4165 = vmatpush1.bf16.msra.mxu0 0
    %4166 = vmatprep.subr.bf16.mxu0 0
    %4167 = vmatpush1.bf16.msra.mxu0 0
    %4168 = vmatprep.subr.bf16.mxu0 0
    %4169 = vmatpush1.bf16.msra.mxu0 0
    %4170 = vmatprep.mubr.bf16.mxu0 0
    %4171 = vmatmul.mubr.bf16.gmra.mrb[0].mxu0 %v4136
    %v4172 = vpop.f32.mrb[0].mxu0
    %v4173 = vadd.f32 0.0, %v4172
    %v4174 = vpop.f32.mrb[0].mxu0
    %v4175 = vpop.f32.mrb[0].mxu0
    %v4176 = vadd.f32 0.0, %v4175
    %v4177 = vpop.f32.mrb[0].mxu0
    %4178 = vdwg.mxu0
    %4180 = vrot.lane.b32.xlu0 %v4059, 120
    %v4181 = vpop.permute.xlu0 %4180
    %4182 = vrot.lane.b32.xlu0 %v4060, 120
    %v4183 = vpop.permute.xlu0 %4182
    %v4185 = vsel %vm251, %v4181, 0
    %v4188 = vsel %vm251, %v4183, 0
    %4190 = vmatprep.subr.bf16.mxu0 0
    %4191 = vmatpush1.bf16.xpose.msra.mxu0 %v4188
    %4192 = vmatprep.subr.bf16.mxu0 0
    %4193 = vmatpush1.bf16.xpose.msra.mxu0 0
    %4194 = vmatprep.subr.bf16.mxu0 0
    %4195 = vmatpush1.bf16.xpose.msra.mxu0 0
    %4196 = vmatprep.subr.bf16.mxu0 0
    %4197 = vmatpush1.bf16.xpose.msra.mxu0 0
    %4198 = vmatprep.subr.bf16.mxu0 0
    %4199 = vmatpush1.bf16.xpose.msra.mxu0 0
    %4200 = vmatprep.subr.bf16.mxu0 0
    %4201 = vmatpush1.bf16.xpose.msra.mxu0 0
    %4202 = vmatprep.subr.bf16.mxu0 0
    %4203 = vmatpush1.bf16.xpose.msra.mxu0 0
    %4204 = vmatprep.subr.bf16.mxu0 0
    %4205 = vmatpush1.bf16.xpose.msra.mxu0 0
    %4206 = vmatprep.subr.bf16.mxu0 0
    %4207 = vmatpush1.bf16.xpose.msra.mxu0 0
    %4208 = vmatprep.subr.bf16.mxu0 0
    %4209 = vmatpush1.bf16.xpose.msra.mxu0 0
    %4210 = vmatprep.subr.bf16.mxu0 0
    %4211 = vmatpush1.bf16.xpose.msra.mxu0 0
    %4212 = vmatprep.subr.bf16.mxu0 0
    %4213 = vmatpush1.bf16.xpose.msra.mxu0 0
    %4214 = vmatprep.subr.bf16.mxu0 0
    %4215 = vmatpush1.bf16.xpose.msra.mxu0 0
    %4216 = vmatprep.subr.bf16.mxu0 0
    %4217 = vmatpush1.bf16.xpose.msra.mxu0 0
    %4218 = vmatprep.subr.bf16.mxu0 0
    %4219 = vmatpush1.bf16.xpose.msra.mxu0 0
    %4220 = vmatprep.subr.bf16.mxu0 0
    %4221 = vmatpush1.bf16.xpose.msra.mxu0 0
    %4222 = vmatprep.mubr.bf16.mxu0 0
    %4223 = vmatmul.mubr.bf16.gmra.mrb[0].mxu0 %v4185
    %v4224 = vpop.f32.mrb[0].mxu0
    %v4225 = vadd.f32 %v157, %v4224
    %v4226 = vpop.f32.mrb[0].mxu0
    %v4227 = vpop.f32.mrb[0].mxu0
    %v4228 = vadd.f32 %v158, %v4227
    %v4229 = vpop.f32.mrb[0].mxu0
    %4230 = vdwg.mxu0
    %v4231 = vsel %vm299, %v4225, -inf
    %4232 = vmax.xlane.f32.xlu0 %v4231
    %v4233 = vpop.xlane.xlu0 %4232
    %v4234 = vsel %vm2617, %v4228, -inf
    %4235 = vmax.xlane.f32.xlu0 %v4234
    %v4236 = vpop.xlane.xlu0 %4235
    %v4237 = vsub.f32 %v4225, %v4233
    %v4238 = vsub.f32 %v4228, %v4236
    %v4239 = vmul.f32 %v4237, 1.442695
    %v4240 = vpow.pop %v4239
    %v4241 = vmul.f32 %v4238, 1.442695
    %v4242 = vpow.pop %v4241
    %v4243 = vsel %vm299, %v4240, 0.0
    %4244 = vadd.xlane.f32.xlu0 %v4243
    %v4245 = vpop.xlane.xlu0 %4244
    %v4246 = vsel %vm2617, %v4242, 0.0
    %4247 = vadd.xlane.f32.xlu0 %v4246
    %v4248 = vpop.xlane.xlu0 %4247
    %v4249 = vrcp.pop %v4245
    %v4250 = vrcp.pop %v4248
    %v4251 = vmul.f32 %v4240, %v4249
    %v4252 = vmul.f32 %v4242, %v4250
    %v4253 = vpack.c.bf16 %v4252, %v4251
    %4254 = vrot.lane.b32.xlu0 %v4060, 88
    %v4255 = vpop.permute.xlu0 %4254
    %v4258 = vsel %vm299, %v4253, 0
    %4260 = vmatprep.subr.bf16.mxu0 0
    %4261 = vmatpush1.bf16.msra.mxu0 %v4255
    %4262 = vmatprep.subr.bf16.mxu0 0
    %4263 = vmatpush1.bf16.msra.mxu0 0
    %4264 = vmatprep.subr.bf16.mxu0 0
    %4265 = vmatpush1.bf16.msra.mxu0 0
    %4266 = vmatprep.subr.bf16.mxu0 0
    %4267 = vmatpush1.bf16.msra.mxu0 0
    %4268 = vmatprep.subr.bf16.mxu0 0
    %4269 = vmatpush1.bf16.msra.mxu0 0
    %4270 = vmatprep.subr.bf16.mxu0 0
    %4271 = vmatpush1.bf16.msra.mxu0 0
    %4272 = vmatprep.subr.bf16.mxu0 0
    %4273 = vmatpush1.bf16.msra.mxu0 0
    %4274 = vmatprep.subr.bf16.mxu0 0
    %4275 = vmatpush1.bf16.msra.mxu0 0
    %4276 = vmatprep.subr.bf16.mxu0 0
    %4277 = vmatpush1.bf16.msra.mxu0 0
    %4278 = vmatprep.subr.bf16.mxu0 0
    %4279 = vmatpush1.bf16.msra.mxu0 0
    %4280 = vmatprep.subr.bf16.mxu0 0
    %4281 = vmatpush1.bf16.msra.mxu0 0
    %4282 = vmatprep.subr.bf16.mxu0 0
    %4283 = vmatpush1.bf16.msra.mxu0 0
    %4284 = vmatprep.subr.bf16.mxu0 0
    %4285 = vmatpush1.bf16.msra.mxu0 0
    %4286 = vmatprep.subr.bf16.mxu0 0
    %4287 = vmatpush1.bf16.msra.mxu0 0
    %4288 = vmatprep.subr.bf16.mxu0 0
    %4289 = vmatpush1.bf16.msra.mxu0 0
    %4290 = vmatprep.subr.bf16.mxu0 0
    %4291 = vmatpush1.bf16.msra.mxu0 0
    %4292 = vmatprep.mubr.bf16.mxu0 0
    %4293 = vmatmul.mubr.bf16.gmra.mrb[0].mxu0 %v4258
    %v4294 = vpop.f32.mrb[0].mxu0
    %v4295 = vadd.f32 0.0, %v4294
    %v4296 = vpop.f32.mrb[0].mxu0
    %v4297 = vpop.f32.mrb[0].mxu0
    %v4298 = vadd.f32 0.0, %v4297
    %v4299 = vpop.f32.mrb[0].mxu0
    %4300 = vdwg.mxu0
    %4301 = vrot.lane.b32.xlu0 %v4059, 112
    %v4302 = vpop.permute.xlu0 %4301
    %4303 = vrot.lane.b32.xlu0 %v4060, 112
    %v4304 = vpop.permute.xlu0 %4303
    %v4306 = vsel %vm251, %v4302, 0
    %v4309 = vsel %vm251, %v4304, 0
    %4311 = vmatprep.subr.bf16.mxu0 0
    %4312 = vmatpush1.bf16.xpose.msra.mxu0 %v4309
    %4313 = vmatprep.subr.bf16.mxu0 0
    %4314 = vmatpush1.bf16.xpose.msra.mxu0 0
    %4315 = vmatprep.subr.bf16.mxu0 0
    %4316 = vmatpush1.bf16.xpose.msra.mxu0 0
    %4317 = vmatprep.subr.bf16.mxu0 0
    %4318 = vmatpush1.bf16.xpose.msra.mxu0 0
    %4319 = vmatprep.subr.bf16.mxu0 0
    %4320 = vmatpush1.bf16.xpose.msra.mxu0 0
    %4321 = vmatprep.subr.bf16.mxu0 0
    %4322 = vmatpush1.bf16.xpose.msra.mxu0 0
    %4323 = vmatprep.subr.bf16.mxu0 0
    %4324 = vmatpush1.bf16.xpose.msra.mxu0 0
    %4325 = vmatprep.subr.bf16.mxu0 0
    %4326 = vmatpush1.bf16.xpose.msra.mxu0 0
    %4327 = vmatprep.subr.bf16.mxu0 0
    %4328 = vmatpush1.bf16.xpose.msra.mxu0 0
    %4329 = vmatprep.subr.bf16.mxu0 0
    %4330 = vmatpush1.bf16.xpose.msra.mxu0 0
    %4331 = vmatprep.subr.bf16.mxu0 0
    %4332 = vmatpush1.bf16.xpose.msra.mxu0 0
    %4333 = vmatprep.subr.bf16.mxu0 0
    %4334 = vmatpush1.bf16.xpose.msra.mxu0 0
    %4335 = vmatprep.subr.bf16.mxu0 0
    %4336 = vmatpush1.bf16.xpose.msra.mxu0 0
    %4337 = vmatprep.subr.bf16.mxu0 0
    %4338 = vmatpush1.bf16.xpose.msra.mxu0 0
    %4339 = vmatprep.subr.bf16.mxu0 0
    %4340 = vmatpush1.bf16.xpose.msra.mxu0 0
    %4341 = vmatprep.subr.bf16.mxu0 0
    %4342 = vmatpush1.bf16.xpose.msra.mxu0 0
    %4343 = vmatprep.mubr.bf16.mxu0 0
    %4344 = vmatmul.mubr.bf16.gmra.mrb[0].mxu0 %v4306
    %v4345 = vpop.f32.mrb[0].mxu0
    %v4346 = vadd.f32 %v157, %v4345
    %v4347 = vpop.f32.mrb[0].mxu0
    %v4348 = vpop.f32.mrb[0].mxu0
    %v4349 = vadd.f32 %v158, %v4348
    %v4350 = vpop.f32.mrb[0].mxu0
    %4351 = vdwg.mxu0
    %v4352 = vsel %vm299, %v4346, -inf
    %4353 = vmax.xlane.f32.xlu0 %v4352
    %v4354 = vpop.xlane.xlu0 %4353
    %v4355 = vsel %vm2617, %v4349, -inf
    %4356 = vmax.xlane.f32.xlu0 %v4355
    %v4357 = vpop.xlane.xlu0 %4356
    %v4358 = vsub.f32 %v4346, %v4354
    %v4359 = vsub.f32 %v4349, %v4357
    %v4360 = vmul.f32 %v4358, 1.442695
    %v4361 = vpow.pop %v4360
    %v4362 = vmul.f32 %v4359, 1.442695
    %v4363 = vpow.pop %v4362
    %v4364 = vsel %vm299, %v4361, 0.0
    %4365 = vadd.xlane.f32.xlu0 %v4364
    %v4366 = vpop.xlane.xlu0 %4365
    %v4367 = vsel %vm2617, %v4363, 0.0
    %4368 = vadd.xlane.f32.xlu0 %v4367
    %v4369 = vpop.xlane.xlu0 %4368
    %v4370 = vrcp.pop %v4366
    %v4371 = vrcp.pop %v4369
    %v4372 = vmul.f32 %v4361, %v4370
    %v4373 = vmul.f32 %v4363, %v4371
    %v4374 = vpack.c.bf16 %v4373, %v4372
    %4375 = vrot.lane.b32.xlu0 %v4060, 80
    %v4376 = vpop.permute.xlu0 %4375
    %v4379 = vsel %vm299, %v4374, 0
    %4381 = vmatprep.subr.bf16.mxu0 0
    %4382 = vmatpush1.bf16.msra.mxu0 %v4376
    %4383 = vmatprep.subr.bf16.mxu0 0
    %4384 = vmatpush1.bf16.msra.mxu0 0
    %4385 = vmatprep.subr.bf16.mxu0 0
    %4386 = vmatpush1.bf16.msra.mxu0 0
    %4387 = vmatprep.subr.bf16.mxu0 0
    %4388 = vmatpush1.bf16.msra.mxu0 0
    %4389 = vmatprep.subr.bf16.mxu0 0
    %4390 = vmatpush1.bf16.msra.mxu0 0
    %4391 = vmatprep.subr.bf16.mxu0 0
    %4392 = vmatpush1.bf16.msra.mxu0 0
    %4393 = vmatprep.subr.bf16.mxu0 0
    %4394 = vmatpush1.bf16.msra.mxu0 0
    %4395 = vmatprep.subr.bf16.mxu0 0
    %4396 = vmatpush1.bf16.msra.mxu0 0
    %4397 = vmatprep.subr.bf16.mxu0 0
    %4398 = vmatpush1.bf16.msra.mxu0 0
    %4399 = vmatprep.subr.bf16.mxu0 0
    %4400 = vmatpush1.bf16.msra.mxu0 0
    %4401 = vmatprep.subr.bf16.mxu0 0
    %4402 = vmatpush1.bf16.msra.mxu0 0
    %4403 = vmatprep.subr.bf16.mxu0 0
    %4404 = vmatpush1.bf16.msra.mxu0 0
    %4405 = vmatprep.subr.bf16.mxu0 0
    %4406 = vmatpush1.bf16.msra.mxu0 0
    %4407 = vmatprep.subr.bf16.mxu0 0
    %4408 = vmatpush1.bf16.msra.mxu0 0
    %4409 = vmatprep.subr.bf16.mxu0 0
    %4410 = vmatpush1.bf16.msra.mxu0 0
    %4411 = vmatprep.subr.bf16.mxu0 0
    %4412 = vmatpush1.bf16.msra.mxu0 0
    %4413 = vmatprep.mubr.bf16.mxu0 0
    %4414 = vmatmul.mubr.bf16.gmra.mrb[0].mxu0 %v4379
    %v4415 = vpop.f32.mrb[0].mxu0
    %v4416 = vadd.f32 0.0, %v4415
    %v4417 = vpop.f32.mrb[0].mxu0
    %v4418 = vpop.f32.mrb[0].mxu0
    %v4419 = vadd.f32 0.0, %v4418
    %v4420 = vpop.f32.mrb[0].mxu0
    %4421 = vdwg.mxu0
    %4422 = vrot.lane.b32.xlu0 %v4059, 104
    %v4423 = vpop.permute.xlu0 %4422
    %4424 = vrot.lane.b32.xlu0 %v4060, 104
    %v4425 = vpop.permute.xlu0 %4424
    %v4427 = vsel %vm251, %v4423, 0
    %v4430 = vsel %vm251, %v4425, 0
    %4432 = vmatprep.subr.bf16.mxu0 0
    %4433 = vmatpush1.bf16.xpose.msra.mxu0 %v4430
    %4434 = vmatprep.subr.bf16.mxu0 0
    %4435 = vmatpush1.bf16.xpose.msra.mxu0 0
    %4436 = vmatprep.subr.bf16.mxu0 0
    %4437 = vmatpush1.bf16.xpose.msra.mxu0 0
    %4438 = vmatprep.subr.bf16.mxu0 0
    %4439 = vmatpush1.bf16.xpose.msra.mxu0 0
    %4440 = vmatprep.subr.bf16.mxu0 0
    %4441 = vmatpush1.bf16.xpose.msra.mxu0 0
    %4442 = vmatprep.subr.bf16.mxu0 0
    %4443 = vmatpush1.bf16.xpose.msra.mxu0 0
    %4444 = vmatprep.subr.bf16.mxu0 0
    %4445 = vmatpush1.bf16.xpose.msra.mxu0 0
    %4446 = vmatprep.subr.bf16.mxu0 0
    %4447 = vmatpush1.bf16.xpose.msra.mxu0 0
    %4448 = vmatprep.subr.bf16.mxu0 0
    %4449 = vmatpush1.bf16.xpose.msra.mxu0 0
    %4450 = vmatprep.subr.bf16.mxu0 0
    %4451 = vmatpush1.bf16.xpose.msra.mxu0 0
    %4452 = vmatprep.subr.bf16.mxu0 0
    %4453 = vmatpush1.bf16.xpose.msra.mxu0 0
    %4454 = vmatprep.subr.bf16.mxu0 0
    %4455 = vmatpush1.bf16.xpose.msra.mxu0 0
    %4456 = vmatprep.subr.bf16.mxu0 0
    %4457 = vmatpush1.bf16.xpose.msra.mxu0 0
    %4458 = vmatprep.subr.bf16.mxu0 0
    %4459 = vmatpush1.bf16.xpose.msra.mxu0 0
    %4460 = vmatprep.subr.bf16.mxu0 0
    %4461 = vmatpush1.bf16.xpose.msra.mxu0 0
    %4462 = vmatprep.subr.bf16.mxu0 0
    %4463 = vmatpush1.bf16.xpose.msra.mxu0 0
    %4464 = vmatprep.mubr.bf16.mxu0 0
    %4465 = vmatmul.mubr.bf16.gmra.mrb[0].mxu0 %v4427
    %v4466 = vpop.f32.mrb[0].mxu0
    %v4467 = vadd.f32 %v157, %v4466
    %v4468 = vpop.f32.mrb[0].mxu0
    %v4469 = vpop.f32.mrb[0].mxu0
    %v4470 = vadd.f32 %v158, %v4469
    %v4471 = vpop.f32.mrb[0].mxu0
    %4472 = vdwg.mxu0
    %v4473 = vsel %vm299, %v4467, -inf
    %4474 = vmax.xlane.f32.xlu0 %v4473
    %v4475 = vpop.xlane.xlu0 %4474
    %v4476 = vsel %vm2617, %v4470, -inf
    %4477 = vmax.xlane.f32.xlu0 %v4476
    %v4478 = vpop.xlane.xlu0 %4477
    %v4479 = vsub.f32 %v4467, %v4475
    %v4480 = vsub.f32 %v4470, %v4478
    %v4481 = vmul.f32 %v4479, 1.442695
    %v4482 = vpow.pop %v4481
    %v4483 = vmul.f32 %v4480, 1.442695
    %v4484 = vpow.pop %v4483
    %v4485 = vsel %vm299, %v4482, 0.0
    %4486 = vadd.xlane.f32.xlu0 %v4485
    %v4487 = vpop.xlane.xlu0 %4486
    %v4488 = vsel %vm2617, %v4484, 0.0
    %4489 = vadd.xlane.f32.xlu0 %v4488
    %v4490 = vpop.xlane.xlu0 %4489
    %v4491 = vrcp.pop %v4487
    %v4492 = vrcp.pop %v4490
    %v4493 = vmul.f32 %v4482, %v4491
    %v4494 = vmul.f32 %v4484, %v4492
    %v4495 = vpack.c.bf16 %v4494, %v4493
    %4496 = vrot.lane.b32.xlu0 %v4060, 72
    %v4497 = vpop.permute.xlu0 %4496
    %v4500 = vsel %vm299, %v4495, 0
    %4502 = vmatprep.subr.bf16.mxu0 0
    %4503 = vmatpush1.bf16.msra.mxu0 %v4497
    %4504 = vmatprep.subr.bf16.mxu0 0
    %4505 = vmatpush1.bf16.msra.mxu0 0
    %4506 = vmatprep.subr.bf16.mxu0 0
    %4507 = vmatpush1.bf16.msra.mxu0 0
    %4508 = vmatprep.subr.bf16.mxu0 0
    %4509 = vmatpush1.bf16.msra.mxu0 0
    %4510 = vmatprep.subr.bf16.mxu0 0
    %4511 = vmatpush1.bf16.msra.mxu0 0
    %4512 = vmatprep.subr.bf16.mxu0 0
    %4513 = vmatpush1.bf16.msra.mxu0 0
    %4514 = vmatprep.subr.bf16.mxu0 0
    %4515 = vmatpush1.bf16.msra.mxu0 0
    %4516 = vmatprep.subr.bf16.mxu0 0
    %4517 = vmatpush1.bf16.msra.mxu0 0
    %4518 = vmatprep.subr.bf16.mxu0 0
    %4519 = vmatpush1.bf16.msra.mxu0 0
    %4520 = vmatprep.subr.bf16.mxu0 0
    %4521 = vmatpush1.bf16.msra.mxu0 0
    %4522 = vmatprep.subr.bf16.mxu0 0
    %4523 = vmatpush1.bf16.msra.mxu0 0
    %4524 = vmatprep.subr.bf16.mxu0 0
    %4525 = vmatpush1.bf16.msra.mxu0 0
    %4526 = vmatprep.subr.bf16.mxu0 0
    %4527 = vmatpush1.bf16.msra.mxu0 0
    %4528 = vmatprep.subr.bf16.mxu0 0
    %4529 = vmatpush1.bf16.msra.mxu0 0
    %4530 = vmatprep.subr.bf16.mxu0 0
    %4531 = vmatpush1.bf16.msra.mxu0 0
    %4532 = vmatprep.subr.bf16.mxu0 0
    %4533 = vmatpush1.bf16.msra.mxu0 0
    %4534 = vmatprep.mubr.bf16.mxu0 0
    %4535 = vmatmul.mubr.bf16.gmra.mrb[0].mxu0 %v4500
    %v4536 = vpop.f32.mrb[0].mxu0
    %v4537 = vadd.f32 0.0, %v4536
    %v4538 = vpop.f32.mrb[0].mxu0
    %v4539 = vpop.f32.mrb[0].mxu0
    %v4540 = vadd.f32 0.0, %v4539
    %v4541 = vpop.f32.mrb[0].mxu0
    %4542 = vdwg.mxu0
    %4545 = vrot.lane.b32.xlu0 %v4295, 8
    %v4546 = vpop.permute.xlu0 %4545
    %4547 = vrot.lane.b32.xlu0 %v4298, 8
    %v4548 = vpop.permute.xlu0 %4547
    %4553 = vrot.lane.b32.xlu0 %v4416, 16
    %v4554 = vpop.permute.xlu0 %4553
    %4555 = vrot.lane.b32.xlu0 %v4419, 16
    %v4556 = vpop.permute.xlu0 %4555
    %4561 = vrot.lane.b32.xlu0 %v4537, 24
    %v4562 = vpop.permute.xlu0 %4561
    %4563 = vrot.lane.b32.xlu0 %v4540, 24
    %v4564 = vpop.permute.xlu0 %4563
    %v4567 = vsel %vm251, %v4173, %v4546
    %v4568 = vsel %vm251, %v4176, %v4548
    %v4569 = vsel %vm299, %v4567, %v4554
    %v4570 = vsel %vm299, %v4568, %v4556
    %v4571 = vsel %vm761, %v4569, %v4562
    %v4572 = vsel %vm761, %v4570, %v4564
    %v4573 = vpack.c.bf16 %v4572, %v4571
    %4574 = vrot.lane.b32.xlu0 %v3964, 32
    %v4575 = vpop.permute.xlu0 %4574
    %4576 = vrot.lane.b32.xlu0 %v3965, 32
    %v4577 = vpop.permute.xlu0 %4576
    %v4581 = vsel %vm168, %v4573, 0
    %4583 = vmatprep.subr.bf16.mxu0 0
    %4584 = vmatpush1.bf16.msra.mxu0 %v4575
    %4585 = vmatprep.subr.bf16.mxu0 0
    %4586 = vmatpush1.bf16.msra.mxu0 %v4577
    %4587 = vmatprep.subr.bf16.mxu0 0
    %4588 = vmatpush1.bf16.msra.mxu0 0
    %4589 = vmatprep.subr.bf16.mxu0 0
    %4590 = vmatpush1.bf16.msra.mxu0 0
    %4591 = vmatprep.subr.bf16.mxu0 0
    %4592 = vmatpush1.bf16.msra.mxu0 0
    %4593 = vmatprep.subr.bf16.mxu0 0
    %4594 = vmatpush1.bf16.msra.mxu0 0
    %4595 = vmatprep.subr.bf16.mxu0 0
    %4596 = vmatpush1.bf16.msra.mxu0 0
    %4597 = vmatprep.subr.bf16.mxu0 0
    %4598 = vmatpush1.bf16.msra.mxu0 0
    %4599 = vmatprep.subr.bf16.mxu0 0
    %4600 = vmatpush1.bf16.msra.mxu0 0
    %4601 = vmatprep.subr.bf16.mxu0 0
    %4602 = vmatpush1.bf16.msra.mxu0 0
    %4603 = vmatprep.subr.bf16.mxu0 0
    %4604 = vmatpush1.bf16.msra.mxu0 0
    %4605 = vmatprep.subr.bf16.mxu0 0
    %4606 = vmatpush1.bf16.msra.mxu0 0
    %4607 = vmatprep.subr.bf16.mxu0 0
    %4608 = vmatpush1.bf16.msra.mxu0 0
    %4609 = vmatprep.subr.bf16.mxu0 0
    %4610 = vmatpush1.bf16.msra.mxu0 0
    %4611 = vmatprep.subr.bf16.mxu0 0
    %4612 = vmatpush1.bf16.msra.mxu0 0
    %4613 = vmatprep.subr.bf16.mxu0 0
    %4614 = vmatpush1.bf16.msra.mxu0 0
    %4615 = vmatprep.mubr.bf16.mxu0 0
    %4616 = vmatmul.mubr.bf16.gmra.mrb[0].mxu0 %v4581
    %v4617 = vpop.f32.mrb[0].mxu0
    %v4618 = vadd.f32 0.0, %v4617
    %v4619 = vpop.f32.mrb[0].mxu0
    %v4620 = vpop.f32.mrb[0].mxu0
    %v4621 = vadd.f32 0.0, %v4620
    %v4622 = vpop.f32.mrb[0].mxu0
    %4623 = vdwg.mxu0
    %v4624 = vadd.f32 %v3930, %v4618
    %v4625 = vadd.f32 %v3931, %v4621
    %v4626 = vld [vmem:[%s7 + $0xa] sm:$0x1]
    %v4627 = vmul.f32 %v4624, %v4624
    %v4628 = vmul.f32 %v4625, %v4625
    %v4629 = vsel %vm168, %v4627, 0.0
    %4630 = vadd.xlane.f32.xlu0 %v4629
    %v4631 = vpop.xlane.xlu0 %4630
    %v4632 = vsel %vm1781, %v4628, 0.0
    %4633 = vadd.xlane.f32.xlu0 %v4632
    %v4634 = vpop.xlane.xlu0 %4633
    %v4635 = vmul.f32 %v4631, %v175
    %v4636 = vmul.f32 %v4634, %v175
    %v4637 = vadd.f32 %v4635, 1e-06
    %v4638 = vadd.f32 %v4636, 1e-06
    %v4639 = vrsqrt.pop %v4637
    %v4640 = vrsqrt.pop %v4638
    %v4641 = vmul.f32 %v4624, %v4639
    %v4642 = vmul.f32 %v4625, %v4640
    %v4643 = vlaneseq
    %v4644 = vshrl.u32 %v4643, 7
    %v4645 = vsub.s32 0, %v4644
    %v4646 = vrot.slane %v4626, %v4645
    %v4647 = vmul.f32 %v4641, %v4646
    %v4648 = vmul.f32 %v4642, %v4646
    %v4649 = vpack.c.bf16 %v4648, %v4647
    %v4650 = vunpack.c.h.b16 %v3269
    %v4651 = vunpack.c.h.b16 %v3271
    %v4652 = vunpack.c.h.b16 %v3273
    %v4653 = vunpack.c.h.b16 %v3275
    %v4654 = vpack.c.b16 %v4651, %v4650
    %v4655 = vpack.c.b16 %v4653, %v4652
    %v4659 = vsel %vm168, %v4649, 0
    %4661 = vmatprep.subr.bf16.mxu0 0
    %4662 = vmatpush1.bf16.msra.mxu0 %v4654
    %4663 = vmatprep.subr.bf16.mxu0 0
    %4664 = vmatpush1.bf16.msra.mxu0 %v4655
    %4665 = vmatprep.subr.bf16.mxu0 0
    %4666 = vmatpush1.bf16.msra.mxu0 0
    %4667 = vmatprep.subr.bf16.mxu0 0
    %4668 = vmatpush1.bf16.msra.mxu0 0
    %4669 = vmatprep.subr.bf16.mxu0 0
    %4670 = vmatpush1.bf16.msra.mxu0 0
    %4671 = vmatprep.subr.bf16.mxu0 0
    %4672 = vmatpush1.bf16.msra.mxu0 0
    %4673 = vmatprep.subr.bf16.mxu0 0
    %4674 = vmatpush1.bf16.msra.mxu0 0
    %4675 = vmatprep.subr.bf16.mxu0 0
    %4676 = vmatpush1.bf16.msra.mxu0 0
    %4677 = vmatprep.subr.bf16.mxu0 0
    %4678 = vmatpush1.bf16.msra.mxu0 0
    %4679 = vmatprep.subr.bf16.mxu0 0
    %4680 = vmatpush1.bf16.msra.mxu0 0
    %4681 = vmatprep.subr.bf16.mxu0 0
    %4682 = vmatpush1.bf16.msra.mxu0 0
    %4683 = vmatprep.subr.bf16.mxu0 0
    %4684 = vmatpush1.bf16.msra.mxu0 0
    %4685 = vmatprep.subr.bf16.mxu0 0
    %4686 = vmatpush1.bf16.msra.mxu0 0
    %4687 = vmatprep.subr.bf16.mxu0 0
    %4688 = vmatpush1.bf16.msra.mxu0 0
    %4689 = vmatprep.subr.bf16.mxu0 0
    %4690 = vmatpush1.bf16.msra.mxu0 0
    %4691 = vmatprep.subr.bf16.mxu0 0
    %4692 = vmatpush1.bf16.msra.mxu0 0
    %4693 = vmatprep.mubr.bf16.mxu0 0
    %4694 = vmatmul.mubr.bf16.gmra.mrb[0].mxu0 %v4659
    %v4695 = vpop.f32.mrb[0].mxu0
    %v4696 = vadd.f32 0.0, %v4695
    %v4697 = vpop.f32.mrb[0].mxu0
    %v4698 = vpop.f32.mrb[0].mxu0
    %v4699 = vadd.f32 0.0, %v4698
    %v4700 = vpop.f32.mrb[0].mxu0
    %4701 = vdwg.mxu0
    %v4702 = vmax.f32 %v4696, 0.0
    %v4703 = vmax.f32 %v4699, 0.0
    %v4704 = vpack.c.bf16 %v4703, %v4702
    %4705 = vrot.lane.b32.xlu0 %v4654, 64
    %v4706 = vpop.permute.xlu0 %4705
    %4707 = vrot.lane.b32.xlu0 %v4655, 64
    %v4708 = vpop.permute.xlu0 %4707
    %v4710 = vsel %vm900, %v4704, 0
    %v4713 = vsel %vm900, %v4706, 0
    %v4716 = vsel %vm900, %v4708, 0
    %4718 = vmatprep.subr.bf16.mxu0 0
    %4719 = vmatpush1.bf16.xpose.msra.mxu0 %v4713
    %4720 = vmatprep.subr.bf16.mxu0 0
    %4721 = vmatpush1.bf16.xpose.msra.mxu0 %v4716
    %4722 = vmatprep.subr.bf16.mxu0 0
    %4723 = vmatpush1.bf16.xpose.msra.mxu0 0
    %4724 = vmatprep.subr.bf16.mxu0 0
    %4725 = vmatpush1.bf16.xpose.msra.mxu0 0
    %4726 = vmatprep.subr.bf16.mxu0 0
    %4727 = vmatpush1.bf16.xpose.msra.mxu0 0
    %4728 = vmatprep.subr.bf16.mxu0 0
    %4729 = vmatpush1.bf16.xpose.msra.mxu0 0
    %4730 = vmatprep.subr.bf16.mxu0 0
    %4731 = vmatpush1.bf16.xpose.msra.mxu0 0
    %4732 = vmatprep.subr.bf16.mxu0 0
    %4733 = vmatpush1.bf16.xpose.msra.mxu0 0
    %4734 = vmatprep.subr.bf16.mxu0 0
    %4735 = vmatpush1.bf16.xpose.msra.mxu0 0
    %4736 = vmatprep.subr.bf16.mxu0 0
    %4737 = vmatpush1.bf16.xpose.msra.mxu0 0
    %4738 = vmatprep.subr.bf16.mxu0 0
    %4739 = vmatpush1.bf16.xpose.msra.mxu0 0
    %4740 = vmatprep.subr.bf16.mxu0 0
    %4741 = vmatpush1.bf16.xpose.msra.mxu0 0
    %4742 = vmatprep.subr.bf16.mxu0 0
    %4743 = vmatpush1.bf16.xpose.msra.mxu0 0
    %4744 = vmatprep.subr.bf16.mxu0 0
    %4745 = vmatpush1.bf16.xpose.msra.mxu0 0
    %4746 = vmatprep.subr.bf16.mxu0 0
    %4747 = vmatpush1.bf16.xpose.msra.mxu0 0
    %4748 = vmatprep.subr.bf16.mxu0 0
    %4749 = vmatpush1.bf16.xpose.msra.mxu0 0
    %4750 = vmatprep.mubr.bf16.mxu0 0
    %4751 = vmatmul.mubr.bf16.gmra.mrb[0].mxu0 %v4710
    %v4752 = vpop.f32.mrb[0].mxu0
    %v4753 = vadd.f32 0.0, %v4752
    %v4754 = vpop.f32.mrb[0].mxu0
    %v4755 = vpop.f32.mrb[0].mxu0
    %v4756 = vadd.f32 0.0, %v4755
    %v4757 = vpop.f32.mrb[0].mxu0
    %4758 = vdwg.mxu0
    %v4759 = vadd.f32 %v4624, %v4753
    %v4760 = vadd.f32 %v4625, %v4756
    %v4761 = vld [vmem:[%s7 + $0xb] sm:$0x1]
    %v4762 = vmul.f32 %v4759, %v4759
    %v4763 = vmul.f32 %v4760, %v4760
    %v4764 = vsel %vm168, %v4762, 0.0
    %4765 = vadd.xlane.f32.xlu0 %v4764
    %v4766 = vpop.xlane.xlu0 %4765
    %v4767 = vsel %vm1781, %v4763, 0.0
    %4768 = vadd.xlane.f32.xlu0 %v4767
    %v4769 = vpop.xlane.xlu0 %4768
    %v4770 = vmul.f32 %v4766, %v175
    %v4771 = vmul.f32 %v4769, %v175
    %v4772 = vadd.f32 %v4770, 1e-06
    %v4773 = vadd.f32 %v4771, 1e-06
    %v4774 = vrsqrt.pop %v4772
    %v4775 = vrsqrt.pop %v4773
    %v4776 = vmul.f32 %v4759, %v4774
    %v4777 = vmul.f32 %v4760, %v4775
    %v4778 = vlaneseq
    %v4779 = vshrl.u32 %v4778, 7
    %v4780 = vsub.s32 0, %v4779
    %v4781 = vrot.slane %v4761, %v4780
    %v4782 = vmul.f32 %v4776, %v4781
    %v4783 = vmul.f32 %v4777, %v4781
    %v4784 = vmul.f32 %v4782, 0.17677669
    %v4785 = vmul.f32 %v4783, 0.17677669
    %v4786 = vld [vmem:[%s10] sm:$0xf]
    %v4787 = vld [vmem:[%s10 + $0x4] sm:$0xf]
    %v4788 = vld [vmem:[%s10 + $0x8] sm:$0xf]
    %v4789 = vld [vmem:[%s10 + $0xc] sm:$0xf]
    %v4790 = vpack.c.bf16 %v4785, %v4784
    %v4795 = vunpack.c.l.b16 %v4786
    %v4796 = vunpack.c.l.b16 %v4787
    %v4797 = vunpack.c.l.b16 %v4788
    %v4798 = vunpack.c.l.b16 %v4789
    %v4799 = vpack.c.b16 %v4796, %v4795
    %v4800 = vpack.c.b16 %v4798, %v4797
    %v4804 = vsel %vm168, %v4790, 0
    %4806 = vmatprep.subr.bf16.mxu0 0
    %4807 = vmatpush1.bf16.msra.mxu0 %v4799
    %4808 = vmatprep.subr.bf16.mxu0 0
    %4809 = vmatpush1.bf16.msra.mxu0 %v4800
    %4810 = vmatprep.subr.bf16.mxu0 0
    %4811 = vmatpush1.bf16.msra.mxu0 0
    %4812 = vmatprep.subr.bf16.mxu0 0
    %4813 = vmatpush1.bf16.msra.mxu0 0
    %4814 = vmatprep.subr.bf16.mxu0 0
    %4815 = vmatpush1.bf16.msra.mxu0 0
    %4816 = vmatprep.subr.bf16.mxu0 0
    %4817 = vmatpush1.bf16.msra.mxu0 0
    %4818 = vmatprep.subr.bf16.mxu0 0
    %4819 = vmatpush1.bf16.msra.mxu0 0
    %4820 = vmatprep.subr.bf16.mxu0 0
    %4821 = vmatpush1.bf16.msra.mxu0 0
    %4822 = vmatprep.subr.bf16.mxu0 0
    %4823 = vmatpush1.bf16.msra.mxu0 0
    %4824 = vmatprep.subr.bf16.mxu0 0
    %4825 = vmatpush1.bf16.msra.mxu0 0
    %4826 = vmatprep.subr.bf16.mxu0 0
    %4827 = vmatpush1.bf16.msra.mxu0 0
    %4828 = vmatprep.subr.bf16.mxu0 0
    %4829 = vmatpush1.bf16.msra.mxu0 0
    %4830 = vmatprep.subr.bf16.mxu0 0
    %4831 = vmatpush1.bf16.msra.mxu0 0
    %4832 = vmatprep.subr.bf16.mxu0 0
    %4833 = vmatpush1.bf16.msra.mxu0 0
    %4834 = vmatprep.subr.bf16.mxu0 0
    %4835 = vmatpush1.bf16.msra.mxu0 0
    %4836 = vmatprep.subr.bf16.mxu0 0
    %4837 = vmatpush1.bf16.msra.mxu0 0
    %4838 = vmatprep.mubr.bf16.mxu0 0
    %4839 = vmatmul.mubr.bf16.gmra.mrb[0].mxu0 %v4804
    %v4840 = vpop.f32.mrb[0].mxu0
    %v4841 = vadd.f32 0.0, %v4840
    %v4842 = vpop.f32.mrb[0].mxu0
    %v4843 = vpop.f32.mrb[0].mxu0
    %v4844 = vadd.f32 0.0, %v4843
    %v4845 = vpop.f32.mrb[0].mxu0
    %4846 = vdwg.mxu0
    %4847 = vst [vmem:[%s13] sm:$0xff] %v4841
    %4848 = vst [vmem:[%s13 + $0x8] sm:$0xf] %v4844
    %v4849 = vld [vmem:[%s11] sm:$0xff]
    %v4850 = vld [vmem:[%s11 + $0x8] sm:$0xf]
    %4851 = vadd.xlane.f32.xlu0 %v4849
    %v4852 = vpop.xlane.xlu0 %4851
    %vm4853 = vcmask 1043456
    %v4854 = vsel %vm4853, %v4850, 0.0
    %4855 = vadd.xlane.f32.xlu0 %v4854
    %v4856 = vpop.xlane.xlu0 %4855
    %4857 = vmax.xlane.f32.xlu0 %v4841
    %v4858 = vpop.xlane.xlu0 %4857
    %v4859 = vsel %vm4853, %v4844, -inf
    %4860 = vmax.xlane.f32.xlu0 %v4859
    %v4861 = vpop.xlane.xlu0 %4860
    %v4862 = vsub.f32 %v4841, %v4858
    %v4863 = vsub.f32 %v4844, %v4861
    %v4864 = vmul.f32 %v4862, 1.442695
    %v4865 = vpow.pop %v4864
    %v4866 = vmul.f32 %v4863, 1.442695
    %v4867 = vpow.pop %v4866
    %4868 = vadd.xlane.f32.xlu0 %v4865
    %v4869 = vpop.xlane.xlu0 %4868
    %v4870 = vsel %vm4853, %v4867, 0.0
    %4871 = vadd.xlane.f32.xlu0 %v4870
    %v4872 = vpop.xlane.xlu0 %4871
    %v4873 = vlog2.pop %v4869
    %v4874 = vmul.f32 %v4873, 0.6931472
    %v4875 = vlog2.pop %v4872
    %v4876 = vmul.f32 %v4875, 0.6931472
    %v4877 = vadd.f32 %v4858, %v4874
    %v4878 = vadd.f32 %v4861, %v4876
    %v4879 = vmul.f32 %v4841, %v4849
    %v4880 = vmul.f32 %v4844, %v4850
    %4881 = vadd.xlane.f32.xlu0 %v4879
    %v4882 = vpop.xlane.xlu0 %4881
    %v4883 = vsel %vm4853, %v4880, 0.0
    %4884 = vadd.xlane.f32.xlu0 %v4883
    %v4885 = vpop.xlane.xlu0 %4884
    %v4886 = vsub.f32 %v4877, %v4882
    %v4887 = vsub.f32 %v4878, %v4885
    %v4888 = vmul.f32 %v4886, %v4852
    %v4889 = vmul.f32 %v4887, %v4856
    %v4890 = vsel %vm4853, %v4889, 0.0
    %v4891 = vadd.f32 %v4888, %v4890
    %v4892 = vrot.slane %v4891, 4
    %v4893 = vadd.f32 %v4891, %v4892
    %v4894 = vrot.slane %v4893, 2
    %v4895 = vadd.f32 %v4893, %v4894
    %v4896 = vrot.slane %v4895, 1
    %v4897 = vadd.f32 %v4895, %v4896
    %v4898 = vsel %vm4853, %v4856, 0.0
    %v4899 = vadd.f32 %v4852, %v4898
    %v4900 = vrot.slane %v4899, 4
    %v4901 = vadd.f32 %v4899, %v4900
    %v4902 = vrot.slane %v4901, 2
    %v4903 = vadd.f32 %v4901, %v4902
    %v4904 = vrot.slane %v4903, 1
    %v4905 = vadd.f32 %v4903, %v4904
    %v4906 = vmax.f32 %v4905, 1.0
    %v4907 = vrcp.pop %v4906
    %v4908 = vmul.f32 %v4897, %v4907
    %vm4909 = vcmask 0
    %4910 = vst.msk [vmem:[#allocation4] sm:$0x1] %vm4909, %v4908
    // Predicated region
    $region50: #{chart_reader_t5_forward.1} parent=1 // pred_check
      _
    $region51: #{chart_reader_t5_forward.1} parent=1 // pred_check_branch
      %4912 = sbr.rel (0) target = $region53
    $region52: #{chart_reader_t5_forward.1} parent=1 // pred_region
      %s4914 = ssub.s32 256, 256
      %4915 = vsyncadd [#allocation3], %s4914
      %s4916 = sshll.u32 [#allocation2], 4
      %s4917 = int_to_ptr.vmem [resolvable:$true] %s4916
      %4922 = dma.vmem_to_hbm [thread:$0]  %s4917, 256, %s12, [#allocation3], 128, 128, 8
    $region53: #{chart_reader_t5_forward.1} parent=1 // pred_fallthru
      _
    // Predicated region
    $region54: #{chart_reader_t5_forward.1} parent=1 // pred_check
      _
    $region55: #{chart_reader_t5_forward.1} parent=1 // pred_check_branch
      %4924 = sbr.rel (0) target = $region57
    $region56: #{chart_reader_t5_forward.1} parent=1 // pred_region
      _
    $region57: #{chart_reader_t5_forward.1} parent=1 // pred_fallthru
      _
    // Predicated region
    $region58: #{chart_reader_t5_forward.1} parent=1 // pred_check
      _
    $region59: #{chart_reader_t5_forward.1} parent=1 // pred_check_branch
      %4926 = sbr.rel (0) target = $region61
    $region60: #{chart_reader_t5_forward.1} parent=1 // pred_region
      %s4928 = ssub.s32 16, 16
      %4929 = vsyncadd [#allocation5], %s4928
      %s4931 = sshll.u32 [#allocation4], 4
      %s4932 = int_to_ptr.vmem [resolvable:$true] %s4931
      %4934 = dma.vmem_to_hbm [thread:$0]  %s4932, 16, %s14, [#allocation5]
    $region61: #{chart_reader_t5_forward.1} parent=1 // pred_fallthru
      _
    // Predicated region
    $region62: #{chart_reader_t5_forward.1} parent=1 // pred_check
      _
    $region63: #{chart_reader_t5_forward.1} parent=1 // pred_check_branch
      %4936 = sbr.rel (0) target = $region65
    $region64: #{chart_reader_t5_forward.1} parent=1 // pred_region
      %4937 = dma.done [#allocation3], 256
    $region65: #{chart_reader_t5_forward.1} parent=1 // pred_fallthru
      _
    // Predicated region
    $region66: #{chart_reader_t5_forward.1} parent=1 // pred_check
      _
    $region67: #{chart_reader_t5_forward.1} parent=1 // pred_check_branch
      %4939 = sbr.rel (0) target = $region69
    $region68: #{chart_reader_t5_forward.1} parent=1 // pred_region
      _
    $region69: #{chart_reader_t5_forward.1} parent=1 // pred_fallthru
      _
    // Predicated region
    $region70: #{chart_reader_t5_forward.1} parent=1 // pred_check
      _
    $region71: #{chart_reader_t5_forward.1} parent=1 // pred_check_branch
      %4941 = sbr.rel (0) target = $region73
    $region72: #{chart_reader_t5_forward.1} parent=1 // pred_region
      %4942 = dma.done [#allocation5], 16
    $region73: #{chart_reader_t5_forward.1} parent=1 // pred_fallthru
      _
    %4943 = vsyncpa [#allocation3], 1
    %4944 = vsyncpa [#allocation5], 1

</llo_original>
